<compile_context>
chip_gen: v6e
topology: v6e:2x2x1
jax: 0.10.0
libtpu: 0.0.40
codegen_flags: <defaults>
</compile_context>

<pallas_src>
import functools

import jax
import jax.numpy as jnp
from jax.experimental import pallas as pl
from jax.experimental.pallas import tpu as pltpu

EPS = 1e-5   # nn.GroupNorm default
LANE = 128


def _round_up(v, m):
    return ((v + m - 1) // m) * m


def _group_norm(x, gamma, beta, n_real, n_pad):
    """GroupNorm(num_groups=1) on a channel-padded tensor.

    Padded channels are zero on input; zero gamma/beta keep them zero on output.
    mean/var are computed over the *real* elements only (padding-corrected).
    """
    mean = jnp.sum(x) / n_real
    d = x - mean
    var = (jnp.sum(d * d) - n_pad * mean * mean) / n_real
    return d * jax.lax.rsqrt(var + EPS) * gamma + beta


def _residual_block_kernel(x_ref, g1_ref, b1_ref, w1_ref, c1b_ref,
                           g2_ref, b2_ref, w2_ref, c2b_ref, *rest,
                           K, H, W, Cin, Cout, Cp, has_projection):
    if has_projection:
        wsc_ref, bsc_ref, o_ref, pad1_ref, pad2_ref, acc_ref = rest
    else:
        o_ref, pad1_ref, pad2_ref, acc_ref = rest

    P = K // 2
    Hp, Wp = H + 2 * P, W + 2 * P
    HW = H * W

    x = x_ref[0].astype(jnp.float32)                     # (H, W, Cp), lane-dense

    # ---- GroupNorm 1 (over real C*H*W of this sample) + affine ----
    xn = _group_norm(x, g1_ref[0], b1_ref[0], H * W * Cin, H * W * (Cp - Cin))

    # ---- zero only the halo ring of the padded scratches (interior rewritten below) ----
    def zero_halo(pad_ref):
        if P > 0:
            pad_ref[0:P, :, :] = jnp.zeros((P, Wp, Cp), jnp.float32)
            pad_ref[P + H:, :, :] = jnp.zeros((P, Wp, Cp), jnp.float32)
            pad_ref[:, 0:P, :] = jnp.zeros((Hp, P, Cp), jnp.float32)
            pad_ref[:, P + W:, :] = jnp.zeros((Hp, P, Cp), jnp.float32)

    zero_halo(pad1_ref)
    zero_halo(pad2_ref)

    # ---- "same" conv as K*K shifted matmuls; accumulator lives in VMEM scratch ----
    def conv(pad_ref, w_ref, bias_ref):
        acc_ref[...] = jnp.broadcast_to(bias_ref[...], (HW, Cp))   # init with bias
        for dx in range(K):
            # one sublane-shifted band read per dx (instead of per (dy, dx) tap)
            band = pad_ref[:, dx:dx + W, :]                         # (Hp, W, Cp)
            for dy in range(K):
                patch = band[dy:dy + H].reshape(HW, Cp)
                acc_ref[...] += jnp.dot(patch, w_ref[dy, dx],
                                        preferred_element_type=jnp.float32)
        return acc_ref[...]

    # ---- conv1 + ReLU ----
    pad1_ref[P:P + H, P:P + W, :] = xn
    out1 = jnp.maximum(conv(pad1_ref, w1_ref, c1b_ref), 0.0)        # (HW, Cp)

    # ---- GroupNorm 2 + affine ----
    on = _group_norm(out1, g2_ref[0], b2_ref[0], H * W * Cout, H * W * (Cp - Cout))

    # ---- conv2 ----
    pad2_ref[P:P + H, P:P + W, :] = on.reshape(H, W, Cp)
    out2 = conv(pad2_ref, w2_ref, c2b_ref)

    # ---- shortcut (trace-time branch: identity vs 1x1 projection conv) ----
    if has_projection:
        sc = jnp.dot(x.reshape(HW, Cp), wsc_ref[...],
                     preferred_element_type=jnp.float32) + bsc_ref[...]
    else:
        sc = x.reshape(HW, Cp)

    out = jnp.maximum(out2 + sc, 0.0)                               # final ReLU
    o_ref[0] = out.reshape(H, W, Cp).astype(o_ref.dtype)


def residual_block(x_nchw, params, kernel_size):
    """x_nchw: (N, Cin, H, W) float32, PyTorch layout. Returns (N, Cout, H, W)."""
    K = kernel_size
    P = K // 2
    x = jnp.transpose(x_nchw, (0, 2, 3, 1)).astype(jnp.float32)      # NCHW -> NHWC
    N, H, W, Cin = x.shape
    Cout = params["w1"].shape[-1]
    Cp = _round_up(max(Cin, Cout), LANE)                             # lane-dense channels
    has_projection = (Cin != Cout)

    # zero-pad channel (lane) axis; zeros + zero-padded params keep the math exact
    xp = jnp.pad(x, ((0, 0), (0, 0), (0, 0), (0, Cp - Cin)))

    def pad_vec(v, c):                                               # (1, c) -> (1, Cp)
        return jnp.pad(v, ((0, 0), (0, Cp - c)))

    g1 = pad_vec(params["gamma1"], Cin)
    b1 = pad_vec(params["beta1"], Cin)
    w1 = jnp.pad(params["w1"], ((0, 0), (0, 0), (0, Cp - Cin), (0, Cp - Cout)))
    c1b = pad_vec(params["b1"], Cout)
    g2 = pad_vec(params["gamma2"], Cout)
    b2 = pad_vec(params["beta2"], Cout)
    w2 = jnp.pad(params["w2"], ((0, 0), (0, 0), (0, Cp - Cout), (0, Cp - Cout)))
    c2b = pad_vec(params["b2"], Cout)

    inputs = [xp, g1, b1, w1, c1b, g2, b2, w2, c2b]
    in_specs = [
        pl.BlockSpec((1, H, W, Cp), lambda n: (n, 0, 0, 0)),         # x (lane-dense)
        pl.BlockSpec((1, Cp), lambda n: (0, 0)),                     # gamma1
        pl.BlockSpec((1, Cp), lambda n: (0, 0)),                     # beta1
        pl.BlockSpec((K, K, Cp, Cp), lambda n: (0, 0, 0, 0)),        # w1 (HWIO, padded)
        pl.BlockSpec((1, Cp), lambda n: (0, 0)),                     # conv1 bias
        pl.BlockSpec((1, Cp), lambda n: (0, 0)),                     # gamma2
        pl.BlockSpec((1, Cp), lambda n: (0, 0)),                     # beta2
        pl.BlockSpec((K, K, Cp, Cp), lambda n: (0, 0, 0, 0)),        # w2 (HWIO, padded)
        pl.BlockSpec((1, Cp), lambda n: (0, 0)),                     # conv2 bias
    ]
    if has_projection:
        wsc = jnp.pad(params["wsc"], ((0, Cp - Cin), (0, Cp - Cout)))
        bsc = pad_vec(params["bsc"], Cout)
        inputs += [wsc, bsc]
        in_specs += [pl.BlockSpec((Cp, Cp), lambda n: (0, 0)),       # shortcut w
                     pl.BlockSpec((1, Cp), lambda n: (0, 0))]        # shortcut b

    kern = functools.partial(_residual_block_kernel, K=K, H=H, W=W,
                             Cin=Cin, Cout=Cout, Cp=Cp,
                             has_projection=has_projection)

    Hp, Wp = H + 2 * P, W + 2 * P
    grid_spec = pltpu.PrefetchScalarGridSpec(
        num_scalar_prefetch=0,
        grid=(N,),
        in_specs=in_specs,
        out_specs=pl.BlockSpec((1, H, W, Cp), lambda n: (n, 0, 0, 0)),   # lane-dense out
        scratch_shapes=[
            pltpu.VMEM((Hp, Wp, Cp), jnp.float32),   # padded conv1 input
            pltpu.VMEM((Hp, Wp, Cp), jnp.float32),   # padded conv2 input
            pltpu.VMEM((H * W, Cp), jnp.float32),    # shared conv accumulator
        ],
    )

    y = pl.pallas_call(
        kern,
        out_shape=jax.ShapeDtypeStruct((N, H, W, Cp), jnp.float32),
        grid_spec=grid_spec,
        compiler_params=pltpu.CompilerParams(
            dimension_semantics=("parallel",)),      # batch is independent -> v7x 2-TC
    )(*inputs)

    return jnp.transpose(y[..., :Cout], (0, 3, 1, 2))                # NHWC -> NCHW


def make_params(key, in_channels, out_channels, kernel_size):
    """Deterministic synthetic parameters matching the module's shapes (HWIO conv weights)."""
    K = kernel_size
    ks = jax.random.split(key, 8)
    p = {
        "gamma1": 1.0 + 0.1 * jax.random.normal(ks[0], (1, in_channels), jnp.float32),
        "beta1": 0.1 * jax.random.normal(ks[1], (1, in_channels), jnp.float32),
        "w1": 0.1 * jax.random.normal(ks[2], (K, K, in_channels, out_channels), jnp.float32),
        "b1": 0.1 * jax.random.normal(ks[3], (1, out_channels), jnp.float32),
        "gamma2": 1.0 + 0.1 * jax.random.normal(ks[4], (1, out_channels), jnp.float32),
        "beta2": 0.1 * jax.random.normal(ks[5], (1, out_channels), jnp.float32),
        "w2": 0.1 * jax.random.normal(ks[6], (K, K, out_channels, out_channels), jnp.float32),
        "b2": 0.1 * jax.random.normal(ks[7], (1, out_channels), jnp.float32),
    }
    if in_channels != out_channels:
        ks2 = jax.random.split(ks[7], 2)
        p["wsc"] = 0.1 * jax.random.normal(ks2[0], (in_channels, out_channels), jnp.float32)
        p["bsc"] = 0.1 * jax.random.normal(ks2[1], (1, out_channels), jnp.float32)
    else:
        p["wsc"] = jnp.eye(in_channels, dtype=jnp.float32)  # nn.Sequential() identity shortcut
        p["bsc"] = jnp.zeros((1, out_channels), jnp.float32)
    return p


def reference_forward(x_nchw, params, kernel_size):
    """Pure-JAX reference with the same semantics as the PyTorch forward."""
    K = kernel_size
    x = jnp.transpose(x_nchw, (0, 2, 3, 1))

    def gn(v, g, b):
        m = jnp.mean(v, axis=(1, 2, 3), keepdims=True)
        var = jnp.mean((v - m) ** 2, axis=(1, 2, 3), keepdims=True)
        return (v - m) * jax.lax.rsqrt(var + EPS) * g[0] + b[0]

    def conv(v, w, b, pad):
        y = jax.lax.conv_general_dilated(
            v, w, (1, 1), [(pad, pad), (pad, pad)],
            dimension_numbers=("NHWC", "HWIO", "NHWC"))
        return y + b[0]

    out = gn(x, params["gamma1"], params["beta1"])
    out = jnp.maximum(conv(out, params["w1"], params["b1"], K // 2), 0.0)
    out = gn(out, params["gamma2"], params["beta2"])
    out = conv(out, params["w2"], params["b2"], K // 2)
    cin, cout = params["wsc"].shape
    sc = conv(x, params["wsc"].reshape(1, 1, cin, cout), params["bsc"], 0)
    out = jnp.maximum(out + sc, 0.0)
    return jnp.transpose(out, (0, 3, 1, 2))


if __name__ == "__main__":
    key = jax.random.PRNGKey(0)
    kx, kp = jax.random.split(key)

    # Case 1: projection shortcut (Cin != Cout) — the shapes from the spec.
    N, Cin, Cout, H, W, K = 2, 4, 8, 16, 16, 3
    x = jax.random.normal(kx, (N, Cin, H, W), jnp.float32)           # NCHW, like PyTorch
    params = make_params(kp, Cin, Cout, K)
    y = jax.block_until_ready(residual_block(x, params, K))
    y_ref = reference_forward(x, params, K)
    assert y.shape == (N, Cout, H, W)
    assert jnp.allclose(y, y_ref, atol=1e-4, rtol=1e-4), "mismatch vs JAX reference (projection)"

    # Case 2: identity shortcut (Cin == Cout) — exercises the trace-time identity branch.
    x2 = jax.random.normal(kx, (N, Cout, H, W), jnp.float32)
    params2 = make_params(kp, Cout, Cout, K)
    y2 = jax.block_until_ready(residual_block(x2, params2, K))
    y2_ref = reference_forward(x2, params2, K)
    assert jnp.allclose(y2, y2_ref, atol=1e-4, rtol=1e-4), "mismatch vs JAX reference (identity)"

    print("KERNEL_OK")
</pallas_src>

<mosaic_0001>
module attributes {stable_mosaic.version = 11 : i64} {
  func.func @_residual_block_kernel(%arg0: i32, %arg1: memref<1x16x16x128xf32, #tpu.memory_space<vmem>>, %arg2: memref<1x128xf32, #tpu.memory_space<vmem>>, %arg3: memref<1x128xf32, #tpu.memory_space<vmem>>, %arg4: memref<3x3x128x128xf32, #tpu.memory_space<vmem>>, %arg5: memref<1x128xf32, #tpu.memory_space<vmem>>, %arg6: memref<1x128xf32, #tpu.memory_space<vmem>>, %arg7: memref<1x128xf32, #tpu.memory_space<vmem>>, %arg8: memref<3x3x128x128xf32, #tpu.memory_space<vmem>>, %arg9: memref<1x128xf32, #tpu.memory_space<vmem>>, %arg10: memref<128x128xf32, #tpu.memory_space<vmem>>, %arg11: memref<1x128xf32, #tpu.memory_space<vmem>>, %arg12: memref<1x16x16x128xf32, #tpu.memory_space<vmem>>, %arg13: memref<18x18x128xf32, #tpu.memory_space<vmem>>, %arg14: memref<18x18x128xf32, #tpu.memory_space<vmem>>, %arg15: memref<256x128xf32, #tpu.memory_space<vmem>>) attributes {dimension_semantics = [#tpu.dimension_semantics<parallel>], iteration_bounds = array<i64: 2>, scalar_prefetch = 0 : i64, scratch_operands = 3 : i64, tpu.core_type = #tpu.core_type<tc>, window_params = [{transform_indices = @transform_0, window_bounds = array<i64: 1, 16, 16, 128>}, {pipeline_mode = #tpu.pipeline_mode<synchronous>, transform_indices = @transform_1, window_bounds = array<i64: 1, 128>}, {pipeline_mode = #tpu.pipeline_mode<synchronous>, transform_indices = @transform_2, window_bounds = array<i64: 1, 128>}, {pipeline_mode = #tpu.pipeline_mode<synchronous>, transform_indices = @transform_3, window_bounds = array<i64: 3, 3, 128, 128>}, {pipeline_mode = #tpu.pipeline_mode<synchronous>, transform_indices = @transform_4, window_bounds = array<i64: 1, 128>}, {pipeline_mode = #tpu.pipeline_mode<synchronous>, transform_indices = @transform_5, window_bounds = array<i64: 1, 128>}, {pipeline_mode = #tpu.pipeline_mode<synchronous>, transform_indices = @transform_6, window_bounds = array<i64: 1, 128>}, {pipeline_mode = #tpu.pipeline_mode<synchronous>, transform_indices = @transform_7, window_bounds = array<i64: 3, 3, 128, 128>}, {pipeline_mode = #tpu.pipeline_mode<synchronous>, transform_indices = @transform_8, window_bounds = array<i64: 1, 128>}, {pipeline_mode = #tpu.pipeline_mode<synchronous>, transform_indices = @transform_9, window_bounds = array<i64: 128, 128>}, {pipeline_mode = #tpu.pipeline_mode<synchronous>, transform_indices = @transform_10, window_bounds = array<i64: 1, 128>}, {transform_indices = @transform_11, window_bounds = array<i64: 1, 16, 16, 128>}]} {
    %c0 = arith.constant 0 : index
    %c0_0 = arith.constant 0 : index
    %c0_1 = arith.constant 0 : index
    %c0_2 = arith.constant 0 : index
    %0 = vector.load %arg1[%c0, %c0_0, %c0_1, %c0_2] : memref<1x16x16x128xf32, #tpu.memory_space<vmem>>, vector<1x16x16x128xf32>
    %1 = vector.shape_cast %0 : vector<1x16x16x128xf32> to vector<16x16x128xf32>
    %c0_3 = arith.constant 0 : index
    %c0_4 = arith.constant 0 : index
    %2 = vector.load %arg2[%c0_3, %c0_4] : memref<1x128xf32, #tpu.memory_space<vmem>>, vector<1x128xf32>
    %3 = vector.shape_cast %2 : vector<1x128xf32> to vector<128xf32>
    %c0_5 = arith.constant 0 : index
    %c0_6 = arith.constant 0 : index
    %4 = vector.load %arg3[%c0_5, %c0_6] : memref<1x128xf32, #tpu.memory_space<vmem>>, vector<1x128xf32>
    %5 = vector.shape_cast %4 : vector<1x128xf32> to vector<128xf32>
    %6 = vector.shape_cast %1 : vector<16x16x128xf32> to vector<1x16x16x128xf32>
    %cst = arith.constant dense<0.000000e+00> : vector<1xf32>
    %7 = vector.multi_reduction <add>, %6, %cst [1, 2, 3] : vector<1x16x16x128xf32> to vector<1xf32>
    %8 = vector.shape_cast %7 : vector<1xf32> to vector<1x1x1x1xf32>
    %9 = vector.extract %8[0, 0, 0, 0] : f32 from vector<1x1x1x1xf32>
    %cst_7 = arith.constant 1.024000e+03 : f32
    %10 = arith.divf %9, %cst_7 : f32
    %11 = vector.broadcast %10 : f32 to vector<16x16x128xf32>
    %12 = arith.subf %1, %11 : vector<16x16x128xf32>
    %13 = arith.mulf %12, %12 : vector<16x16x128xf32>
    %14 = vector.shape_cast %13 : vector<16x16x128xf32> to vector<1x16x16x128xf32>
    %cst_8 = arith.constant dense<0.000000e+00> : vector<1xf32>
    %15 = vector.multi_reduction <add>, %14, %cst_8 [1, 2, 3] : vector<1x16x16x128xf32> to vector<1xf32>
    %16 = vector.shape_cast %15 : vector<1xf32> to vector<1x1x1x1xf32>
    %17 = vector.extract %16[0, 0, 0, 0] : f32 from vector<1x1x1x1xf32>
    %cst_9 = arith.constant 3.174400e+04 : f32
    %18 = arith.mulf %cst_9, %10 : f32
    %19 = arith.mulf %18, %10 : f32
    %20 = arith.subf %17, %19 : f32
    %cst_10 = arith.constant 1.024000e+03 : f32
    %21 = arith.divf %20, %cst_10 : f32
    %cst_11 = arith.constant 9.99999974E-6 : f32
    %22 = arith.addf %21, %cst_11 : f32
    %23 = math.rsqrt %22 : f32
    %24 = vector.broadcast %23 : f32 to vector<16x16x128xf32>
    %25 = arith.mulf %12, %24 : vector<16x16x128xf32>
    %26 = vector.shape_cast %3 : vector<128xf32> to vector<1x1x128xf32>
    %27 = vector.broadcast %26 : vector<1x1x128xf32> to vector<16x16x128xf32>
    %28 = arith.mulf %25, %27 : vector<16x16x128xf32>
    %29 = vector.shape_cast %5 : vector<128xf32> to vector<1x1x128xf32>
    %30 = vector.broadcast %29 : vector<1x1x128xf32> to vector<16x16x128xf32>
    %31 = arith.addf %28, %30 : vector<16x16x128xf32>
    %cst_12 = arith.constant 0.000000e+00 : f32
    %32 = vector.broadcast %cst_12 : f32 to vector<1x18x128xf32>
    %c0_13 = arith.constant 0 : index
    %c0_14 = arith.constant 0 : index
    %c0_15 = arith.constant 0 : index
    %33 = vector.load %arg13[%c0_13, %c0_14, %c0_15] : memref<18x18x128xf32, #tpu.memory_space<vmem>>, vector<1x18x128xf32>
    tpu.vector_store %arg13[%c0_13, %c0_14, %c0_15], %32 {strides = array<i32>} : memref<18x18x128xf32, #tpu.memory_space<vmem>>, vector<1x18x128xf32>,
    %cst_16 = arith.constant 0.000000e+00 : f32
    %34 = vector.broadcast %cst_16 : f32 to vector<1x18x128xf32>
    %c17 = arith.constant 17 : index
    %c0_17 = arith.constant 0 : index
    %c0_18 = arith.constant 0 : index
    %35 = vector.load %arg13[%c17, %c0_17, %c0_18] : memref<18x18x128xf32, #tpu.memory_space<vmem>>, vector<1x18x128xf32>
    tpu.vector_store %arg13[%c17, %c0_17, %c0_18], %34 {strides = array<i32>} : memref<18x18x128xf32, #tpu.memory_space<vmem>>, vector<1x18x128xf32>,
    %cst_19 = arith.constant 0.000000e+00 : f32
    %36 = vector.broadcast %cst_19 : f32 to vector<18x1x128xf32>
    %c0_20 = arith.constant 0 : index
    %c0_21 = arith.constant 0 : index
    %c0_22 = arith.constant 0 : index
    %37 = vector.load %arg13[%c0_20, %c0_21, %c0_22] : memref<18x18x128xf32, #tpu.memory_space<vmem>>, vector<18x1x128xf32>
    tpu.vector_store %arg13[%c0_20, %c0_21, %c0_22], %36 {strides = array<i32>} : memref<18x18x128xf32, #tpu.memory_space<vmem>>, vector<18x1x128xf32>,
    %cst_23 = arith.constant 0.000000e+00 : f32
    %38 = vector.broadcast %cst_23 : f32 to vector<18x1x128xf32>
    %c0_24 = arith.constant 0 : index
    %c17_25 = arith.constant 17 : index
    %c0_26 = arith.constant 0 : index
    %39 = vector.load %arg13[%c0_24, %c17_25, %c0_26] : memref<18x18x128xf32, #tpu.memory_space<vmem>>, vector<18x1x128xf32>
    tpu.vector_store %arg13[%c0_24, %c17_25, %c0_26], %38 {strides = array<i32>} : memref<18x18x128xf32, #tpu.memory_space<vmem>>, vector<18x1x128xf32>,
    %cst_27 = arith.constant 0.000000e+00 : f32
    %40 = vector.broadcast %cst_27 : f32 to vector<1x18x128xf32>
    %c0_28 = arith.constant 0 : index
    %c0_29 = arith.constant 0 : index
    %c0_30 = arith.constant 0 : index
    %41 = vector.load %arg14[%c0_28, %c0_29, %c0_30] : memref<18x18x128xf32, #tpu.memory_space<vmem>>, vector<1x18x128xf32>
    tpu.vector_store %arg14[%c0_28, %c0_29, %c0_30], %40 {strides = array<i32>} : memref<18x18x128xf32, #tpu.memory_space<vmem>>, vector<1x18x128xf32>,
    %cst_31 = arith.constant 0.000000e+00 : f32
    %42 = vector.broadcast %cst_31 : f32 to vector<1x18x128xf32>
    %c17_32 = arith.constant 17 : index
    %c0_33 = arith.constant 0 : index
    %c0_34 = arith.constant 0 : index
    %43 = vector.load %arg14[%c17_32, %c0_33, %c0_34] : memref<18x18x128xf32, #tpu.memory_space<vmem>>, vector<1x18x128xf32>
    tpu.vector_store %arg14[%c17_32, %c0_33, %c0_34], %42 {strides = array<i32>} : memref<18x18x128xf32, #tpu.memory_space<vmem>>, vector<1x18x128xf32>,
    %cst_35 = arith.constant 0.000000e+00 : f32
    %44 = vector.broadcast %cst_35 : f32 to vector<18x1x128xf32>
    %c0_36 = arith.constant 0 : index
    %c0_37 = arith.constant 0 : index
    %c0_38 = arith.constant 0 : index
    %45 = vector.load %arg14[%c0_36, %c0_37, %c0_38] : memref<18x18x128xf32, #tpu.memory_space<vmem>>, vector<18x1x128xf32>
    tpu.vector_store %arg14[%c0_36, %c0_37, %c0_38], %44 {strides = array<i32>} : memref<18x18x128xf32, #tpu.memory_space<vmem>>, vector<18x1x128xf32>,
    %cst_39 = arith.constant 0.000000e+00 : f32
    %46 = vector.broadcast %cst_39 : f32 to vector<18x1x128xf32>
    %c0_40 = arith.constant 0 : index
    %c17_41 = arith.constant 17 : index
    %c0_42 = arith.constant 0 : index
    %47 = vector.load %arg14[%c0_40, %c17_41, %c0_42] : memref<18x18x128xf32, #tpu.memory_space<vmem>>, vector<18x1x128xf32>
    tpu.vector_store %arg14[%c0_40, %c17_41, %c0_42], %46 {strides = array<i32>} : memref<18x18x128xf32, #tpu.memory_space<vmem>>, vector<18x1x128xf32>,
    %c1 = arith.constant 1 : index
    %c1_43 = arith.constant 1 : index
    %c0_44 = arith.constant 0 : index
    %48 = vector.load %arg13[%c1, %c1_43, %c0_44] : memref<18x18x128xf32, #tpu.memory_space<vmem>>, vector<16x16x128xf32>
    tpu.vector_store %arg13[%c1, %c1_43, %c0_44], %31 {strides = array<i32>} : memref<18x18x128xf32, #tpu.memory_space<vmem>>, vector<16x16x128xf32>,
    %c0_45 = arith.constant 0 : index
    %c0_46 = arith.constant 0 : index
    %49 = vector.load %arg5[%c0_45, %c0_46] : memref<1x128xf32, #tpu.memory_space<vmem>>, vector<1x128xf32>
    %50 = vector.shape_cast %49 : vector<1x128xf32> to vector<1x128xf32>
    %51 = vector.broadcast %50 : vector<1x128xf32> to vector<256x128xf32>
    %c0_47 = arith.constant 0 : index
    %c0_48 = arith.constant 0 : index
    %52 = vector.load %arg15[%c0_47, %c0_48] : memref<256x128xf32, #tpu.memory_space<vmem>>, vector<256x128xf32>
    tpu.vector_store %arg15[%c0_47, %c0_48], %51 {strides = array<i32>} : memref<256x128xf32, #tpu.memory_space<vmem>>, vector<256x128xf32>,
    %c0_49 = arith.constant 0 : index
    %c0_50 = arith.constant 0 : index
    %c0_51 = arith.constant 0 : index
    %53 = vector.load %arg13[%c0_49, %c0_50, %c0_51] : memref<18x18x128xf32, #tpu.memory_space<vmem>>, vector<18x16x128xf32>
    %54 = vector.extract_strided_slice %53 {offsets = [0, 0, 0], sizes = [16, 16, 128], strides = [1, 1, 1]} : vector<18x16x128xf32> to vector<16x16x128xf32>
    %55 = vector.shape_cast %54 : vector<16x16x128xf32> to vector<256x128xf32>
    %c0_52 = arith.constant 0 : index
    %c0_53 = arith.constant 0 : index
    %56 = vector.load %arg15[%c0_52, %c0_53] : memref<256x128xf32, #tpu.memory_space<vmem>>, vector<256x128xf32>
    %c0_54 = arith.constant 0 : index
    %c0_55 = arith.constant 0 : index
    %c0_56 = arith.constant 0 : index
    %c0_57 = arith.constant 0 : index
    %57 = vector.load %arg4[%c0_54, %c0_55, %c0_56, %c0_57] : memref<3x3x128x128xf32, #tpu.memory_space<vmem>>, vector<1x1x128x128xf32>
    %58 = vector.shape_cast %57 : vector<1x1x128x128xf32> to vector<128x128xf32>
    %cst_58 = arith.constant dense<0.000000e+00> : vector<256x128xf32>
    %59 = tpu.matmul %55, %58, %cst_58 {dimension_numbers = #tpu.dot_dimension_numbers<[1], [0], [0], [1], [0, 0, 1, 1], [], []>} : vector<256x128xf32>, vector<128x128xf32>, vector<256x128xf32> -> vector<256x128xf32>
    %60 = arith.addf %56, %59 : vector<256x128xf32>
    %c0_59 = arith.constant 0 : index
    %c0_60 = arith.constant 0 : index
    %61 = vector.load %arg15[%c0_59, %c0_60] : memref<256x128xf32, #tpu.memory_space<vmem>>, vector<256x128xf32>
    tpu.vector_store %arg15[%c0_59, %c0_60], %60 {strides = array<i32>} : memref<256x128xf32, #tpu.memory_space<vmem>>, vector<256x128xf32>,
    %62 = vector.extract_strided_slice %53 {offsets = [1, 0, 0], sizes = [16, 16, 128], strides = [1, 1, 1]} : vector<18x16x128xf32> to vector<16x16x128xf32>
    %63 = vector.shape_cast %62 : vector<16x16x128xf32> to vector<256x128xf32>
    %c0_61 = arith.constant 0 : index
    %c0_62 = arith.constant 0 : index
    %64 = vector.load %arg15[%c0_61, %c0_62] : memref<256x128xf32, #tpu.memory_space<vmem>>, vector<256x128xf32>
    %c1_63 = arith.constant 1 : index
    %c0_64 = arith.constant 0 : index
    %c0_65 = arith.constant 0 : index
    %c0_66 = arith.constant 0 : index
    %65 = vector.load %arg4[%c1_63, %c0_64, %c0_65, %c0_66] : memref<3x3x128x128xf32, #tpu.memory_space<vmem>>, vector<1x1x128x128xf32>
    %66 = vector.shape_cast %65 : vector<1x1x128x128xf32> to vector<128x128xf32>
    %cst_67 = arith.constant dense<0.000000e+00> : vector<256x128xf32>
    %67 = tpu.matmul %63, %66, %cst_67 {dimension_numbers = #tpu.dot_dimension_numbers<[1], [0], [0], [1], [0, 0, 1, 1], [], []>} : vector<256x128xf32>, vector<128x128xf32>, vector<256x128xf32> -> vector<256x128xf32>
    %68 = arith.addf %64, %67 : vector<256x128xf32>
    %c0_68 = arith.constant 0 : index
    %c0_69 = arith.constant 0 : index
    %69 = vector.load %arg15[%c0_68, %c0_69] : memref<256x128xf32, #tpu.memory_space<vmem>>, vector<256x128xf32>
    tpu.vector_store %arg15[%c0_68, %c0_69], %68 {strides = array<i32>} : memref<256x128xf32, #tpu.memory_space<vmem>>, vector<256x128xf32>,
    %70 = vector.extract_strided_slice %53 {offsets = [2, 0, 0], sizes = [16, 16, 128], strides = [1, 1, 1]} : vector<18x16x128xf32> to vector<16x16x128xf32>
    %71 = vector.shape_cast %70 : vector<16x16x128xf32> to vector<256x128xf32>
    %c0_70 = arith.constant 0 : index
    %c0_71 = arith.constant 0 : index
    %72 = vector.load %arg15[%c0_70, %c0_71] : memref<256x128xf32, #tpu.memory_space<vmem>>, vector<256x128xf32>
    %c2 = arith.constant 2 : index
    %c0_72 = arith.constant 0 : index
    %c0_73 = arith.constant 0 : index
    %c0_74 = arith.constant 0 : index
    %73 = vector.load %arg4[%c2, %c0_72, %c0_73, %c0_74] : memref<3x3x128x128xf32, #tpu.memory_space<vmem>>, vector<1x1x128x128xf32>
    %74 = vector.shape_cast %73 : vector<1x1x128x128xf32> to vector<128x128xf32>
    %cst_75 = arith.constant dense<0.000000e+00> : vector<256x128xf32>
    %75 = tpu.matmul %71, %74, %cst_75 {dimension_numbers = #tpu.dot_dimension_numbers<[1], [0], [0], [1], [0, 0, 1, 1], [], []>} : vector<256x128xf32>, vector<128x128xf32>, vector<256x128xf32> -> vector<256x128xf32>
    %76 = arith.addf %72, %75 : vector<256x128xf32>
    %c0_76 = arith.constant 0 : index
    %c0_77 = arith.constant 0 : index
    %77 = vector.load %arg15[%c0_76, %c0_77] : memref<256x128xf32, #tpu.memory_space<vmem>>, vector<256x128xf32>
    tpu.vector_store %arg15[%c0_76, %c0_77], %76 {strides = array<i32>} : memref<256x128xf32, #tpu.memory_space<vmem>>, vector<256x128xf32>,
    %c0_78 = arith.constant 0 : index
    %c1_79 = arith.constant 1 : index
    %c0_80 = arith.constant 0 : index
    %78 = vector.load %arg13[%c0_78, %c1_79, %c0_80] : memref<18x18x128xf32, #tpu.memory_space<vmem>>, vector<18x16x128xf32>
    %79 = vector.extract_strided_slice %78 {offsets = [0, 0, 0], sizes = [16, 16, 128], strides = [1, 1, 1]} : vector<18x16x128xf32> to vector<16x16x128xf32>
    %80 = vector.shape_cast %79 : vector<16x16x128xf32> to vector<256x128xf32>
    %c0_81 = arith.constant 0 : index
    %c0_82 = arith.constant 0 : index
    %81 = vector.load %arg15[%c0_81, %c0_82] : memref<256x128xf32, #tpu.memory_space<vmem>>, vector<256x128xf32>
    %c0_83 = arith.constant 0 : index
    %c1_84 = arith.constant 1 : index
    %c0_85 = arith.constant 0 : index
    %c0_86 = arith.constant 0 : index
    %82 = vector.load %arg4[%c0_83, %c1_84, %c0_85, %c0_86] : memref<3x3x128x128xf32, #tpu.memory_space<vmem>>, vector<1x1x128x128xf32>
    %83 = vector.shape_cast %82 : vector<1x1x128x128xf32> to vector<128x128xf32>
    %cst_87 = arith.constant dense<0.000000e+00> : vector<256x128xf32>
    %84 = tpu.matmul %80, %83, %cst_87 {dimension_numbers = #tpu.dot_dimension_numbers<[1], [0], [0], [1], [0, 0, 1, 1], [], []>} : vector<256x128xf32>, vector<128x128xf32>, vector<256x128xf32> -> vector<256x128xf32>
    %85 = arith.addf %81, %84 : vector<256x128xf32>
    %c0_88 = arith.constant 0 : index
    %c0_89 = arith.constant 0 : index
    %86 = vector.load %arg15[%c0_88, %c0_89] : memref<256x128xf32, #tpu.memory_space<vmem>>, vector<256x128xf32>
    tpu.vector_store %arg15[%c0_88, %c0_89], %85 {strides = array<i32>} : memref<256x128xf32, #tpu.memory_space<vmem>>, vector<256x128xf32>,
    %87 = vector.extract_strided_slice %78 {offsets = [1, 0, 0], sizes = [16, 16, 128], strides = [1, 1, 1]} : vector<18x16x128xf32> to vector<16x16x128xf32>
    %88 = vector.shape_cast %87 : vector<16x16x128xf32> to vector<256x128xf32>
    %c0_90 = arith.constant 0 : index
    %c0_91 = arith.constant 0 : index
    %89 = vector.load %arg15[%c0_90, %c0_91] : memref<256x128xf32, #tpu.memory_space<vmem>>, vector<256x128xf32>
    %c1_92 = arith.constant 1 : index
    %c1_93 = arith.constant 1 : index
    %c0_94 = arith.constant 0 : index
    %c0_95 = arith.constant 0 : index
    %90 = vector.load %arg4[%c1_92, %c1_93, %c0_94, %c0_95] : memref<3x3x128x128xf32, #tpu.memory_space<vmem>>, vector<1x1x128x128xf32>
    %91 = vector.shape_cast %90 : vector<1x1x128x128xf32> to vector<128x128xf32>
    %cst_96 = arith.constant dense<0.000000e+00> : vector<256x128xf32>
    %92 = tpu.matmul %88, %91, %cst_96 {dimension_numbers = #tpu.dot_dimension_numbers<[1], [0], [0], [1], [0, 0, 1, 1], [], []>} : vector<256x128xf32>, vector<128x128xf32>, vector<256x128xf32> -> vector<256x128xf32>
    %93 = arith.addf %89, %92 : vector<256x128xf32>
    %c0_97 = arith.constant 0 : index
    %c0_98 = arith.constant 0 : index
    %94 = vector.load %arg15[%c0_97, %c0_98] : memref<256x128xf32, #tpu.memory_space<vmem>>, vector<256x128xf32>
    tpu.vector_store %arg15[%c0_97, %c0_98], %93 {strides = array<i32>} : memref<256x128xf32, #tpu.memory_space<vmem>>, vector<256x128xf32>,
    %95 = vector.extract_strided_slice %78 {offsets = [2, 0, 0], sizes = [16, 16, 128], strides = [1, 1, 1]} : vector<18x16x128xf32> to vector<16x16x128xf32>
    %96 = vector.shape_cast %95 : vector<16x16x128xf32> to vector<256x128xf32>
    %c0_99 = arith.constant 0 : index
    %c0_100 = arith.constant 0 : index
    %97 = vector.load %arg15[%c0_99, %c0_100] : memref<256x128xf32, #tpu.memory_space<vmem>>, vector<256x128xf32>
    %c2_101 = arith.constant 2 : index
    %c1_102 = arith.constant 1 : index
    %c0_103 = arith.constant 0 : index
    %c0_104 = arith.constant 0 : index
    %98 = vector.load %arg4[%c2_101, %c1_102, %c0_103, %c0_104] : memref<3x3x128x128xf32, #tpu.memory_space<vmem>>, vector<1x1x128x128xf32>
    %99 = vector.shape_cast %98 : vector<1x1x128x128xf32> to vector<128x128xf32>
    %cst_105 = arith.constant dense<0.000000e+00> : vector<256x128xf32>
    %100 = tpu.matmul %96, %99, %cst_105 {dimension_numbers = #tpu.dot_dimension_numbers<[1], [0], [0], [1], [0, 0, 1, 1], [], []>} : vector<256x128xf32>, vector<128x128xf32>, vector<256x128xf32> -> vector<256x128xf32>
    %101 = arith.addf %97, %100 : vector<256x128xf32>
    %c0_106 = arith.constant 0 : index
    %c0_107 = arith.constant 0 : index
    %102 = vector.load %arg15[%c0_106, %c0_107] : memref<256x128xf32, #tpu.memory_space<vmem>>, vector<256x128xf32>
    tpu.vector_store %arg15[%c0_106, %c0_107], %101 {strides = array<i32>} : memref<256x128xf32, #tpu.memory_space<vmem>>, vector<256x128xf32>,
    %c0_108 = arith.constant 0 : index
    %c2_109 = arith.constant 2 : index
    %c0_110 = arith.constant 0 : index
    %103 = vector.load %arg13[%c0_108, %c2_109, %c0_110] : memref<18x18x128xf32, #tpu.memory_space<vmem>>, vector<18x16x128xf32>
    %104 = vector.extract_strided_slice %103 {offsets = [0, 0, 0], sizes = [16, 16, 128], strides = [1, 1, 1]} : vector<18x16x128xf32> to vector<16x16x128xf32>
    %105 = vector.shape_cast %104 : vector<16x16x128xf32> to vector<256x128xf32>
    %c0_111 = arith.constant 0 : index
    %c0_112 = arith.constant 0 : index
    %106 = vector.load %arg15[%c0_111, %c0_112] : memref<256x128xf32, #tpu.memory_space<vmem>>, vector<256x128xf32>
    %c0_113 = arith.constant 0 : index
    %c2_114 = arith.constant 2 : index
    %c0_115 = arith.constant 0 : index
    %c0_116 = arith.constant 0 : index
    %107 = vector.load %arg4[%c0_113, %c2_114, %c0_115, %c0_116] : memref<3x3x128x128xf32, #tpu.memory_space<vmem>>, vector<1x1x128x128xf32>
    %108 = vector.shape_cast %107 : vector<1x1x128x128xf32> to vector<128x128xf32>
    %cst_117 = arith.constant dense<0.000000e+00> : vector<256x128xf32>
    %109 = tpu.matmul %105, %108, %cst_117 {dimension_numbers = #tpu.dot_dimension_numbers<[1], [0], [0], [1], [0, 0, 1, 1], [], []>} : vector<256x128xf32>, vector<128x128xf32>, vector<256x128xf32> -> vector<256x128xf32>
    %110 = arith.addf %106, %109 : vector<256x128xf32>
    %c0_118 = arith.constant 0 : index
    %c0_119 = arith.constant 0 : index
    %111 = vector.load %arg15[%c0_118, %c0_119] : memref<256x128xf32, #tpu.memory_space<vmem>>, vector<256x128xf32>
    tpu.vector_store %arg15[%c0_118, %c0_119], %110 {strides = array<i32>} : memref<256x128xf32, #tpu.memory_space<vmem>>, vector<256x128xf32>,
    %112 = vector.extract_strided_slice %103 {offsets = [1, 0, 0], sizes = [16, 16, 128], strides = [1, 1, 1]} : vector<18x16x128xf32> to vector<16x16x128xf32>
    %113 = vector.shape_cast %112 : vector<16x16x128xf32> to vector<256x128xf32>
    %c0_120 = arith.constant 0 : index
    %c0_121 = arith.constant 0 : index
    %114 = vector.load %arg15[%c0_120, %c0_121] : memref<256x128xf32, #tpu.memory_space<vmem>>, vector<256x128xf32>
    %c1_122 = arith.constant 1 : index
    %c2_123 = arith.constant 2 : index
    %c0_124 = arith.constant 0 : index
    %c0_125 = arith.constant 0 : index
    %115 = vector.load %arg4[%c1_122, %c2_123, %c0_124, %c0_125] : memref<3x3x128x128xf32, #tpu.memory_space<vmem>>, vector<1x1x128x128xf32>
    %116 = vector.shape_cast %115 : vector<1x1x128x128xf32> to vector<128x128xf32>
    %cst_126 = arith.constant dense<0.000000e+00> : vector<256x128xf32>
    %117 = tpu.matmul %113, %116, %cst_126 {dimension_numbers = #tpu.dot_dimension_numbers<[1], [0], [0], [1], [0, 0, 1, 1], [], []>} : vector<256x128xf32>, vector<128x128xf32>, vector<256x128xf32> -> vector<256x128xf32>
    %118 = arith.addf %114, %117 : vector<256x128xf32>
    %c0_127 = arith.constant 0 : index
    %c0_128 = arith.constant 0 : index
    %119 = vector.load %arg15[%c0_127, %c0_128] : memref<256x128xf32, #tpu.memory_space<vmem>>, vector<256x128xf32>
    tpu.vector_store %arg15[%c0_127, %c0_128], %118 {strides = array<i32>} : memref<256x128xf32, #tpu.memory_space<vmem>>, vector<256x128xf32>,
    %120 = vector.extract_strided_slice %103 {offsets = [2, 0, 0], sizes = [16, 16, 128], strides = [1, 1, 1]} : vector<18x16x128xf32> to vector<16x16x128xf32>
    %121 = vector.shape_cast %120 : vector<16x16x128xf32> to vector<256x128xf32>
    %c0_129 = arith.constant 0 : index
    %c0_130 = arith.constant 0 : index
    %122 = vector.load %arg15[%c0_129, %c0_130] : memref<256x128xf32, #tpu.memory_space<vmem>>, vector<256x128xf32>
    %c2_131 = arith.constant 2 : index
    %c2_132 = arith.constant 2 : index
    %c0_133 = arith.constant 0 : index
    %c0_134 = arith.constant 0 : index
    %123 = vector.load %arg4[%c2_131, %c2_132, %c0_133, %c0_134] : memref<3x3x128x128xf32, #tpu.memory_space<vmem>>, vector<1x1x128x128xf32>
    %124 = vector.shape_cast %123 : vector<1x1x128x128xf32> to vector<128x128xf32>
    %cst_135 = arith.constant dense<0.000000e+00> : vector<256x128xf32>
    %125 = tpu.matmul %121, %124, %cst_135 {dimension_numbers = #tpu.dot_dimension_numbers<[1], [0], [0], [1], [0, 0, 1, 1], [], []>} : vector<256x128xf32>, vector<128x128xf32>, vector<256x128xf32> -> vector<256x128xf32>
    %126 = arith.addf %122, %125 : vector<256x128xf32>
    %c0_136 = arith.constant 0 : index
    %c0_137 = arith.constant 0 : index
    %127 = vector.load %arg15[%c0_136, %c0_137] : memref<256x128xf32, #tpu.memory_space<vmem>>, vector<256x128xf32>
    tpu.vector_store %arg15[%c0_136, %c0_137], %126 {strides = array<i32>} : memref<256x128xf32, #tpu.memory_space<vmem>>, vector<256x128xf32>,
    %c0_138 = arith.constant 0 : index
    %c0_139 = arith.constant 0 : index
    %128 = vector.load %arg15[%c0_138, %c0_139] : memref<256x128xf32, #tpu.memory_space<vmem>>, vector<256x128xf32>
    %cst_140 = arith.constant 0.000000e+00 : f32
    %129 = vector.broadcast %cst_140 : f32 to vector<256x128xf32>
    %130 = arith.maximumf %128, %129 : vector<256x128xf32>
    %c0_141 = arith.constant 0 : index
    %c0_142 = arith.constant 0 : index
    %131 = vector.load %arg6[%c0_141, %c0_142] : memref<1x128xf32, #tpu.memory_space<vmem>>, vector<1x128xf32>
    %132 = vector.shape_cast %131 : vector<1x128xf32> to vector<128xf32>
    %c0_143 = arith.constant 0 : index
    %c0_144 = arith.constant 0 : index
    %133 = vector.load %arg7[%c0_143, %c0_144] : memref<1x128xf32, #tpu.memory_space<vmem>>, vector<1x128xf32>
    %134 = vector.shape_cast %133 : vector<1x128xf32> to vector<128xf32>
    %135 = vector.shape_cast %130 : vector<256x128xf32> to vector<1x256x128xf32>
    %cst_145 = arith.constant dense<0.000000e+00> : vector<1xf32>
    %136 = vector.multi_reduction <add>, %135, %cst_145 [1, 2] : vector<1x256x128xf32> to vector<1xf32>
    %137 = vector.shape_cast %136 : vector<1xf32> to vector<1x1x1xf32>
    %138 = vector.extract %137[0, 0, 0] : f32 from vector<1x1x1xf32>
    %cst_146 = arith.constant 2.048000e+03 : f32
    %139 = arith.divf %138, %cst_146 : f32
    %140 = vector.broadcast %139 : f32 to vector<256x128xf32>
    %141 = arith.subf %130, %140 : vector<256x128xf32>
    %142 = arith.mulf %141, %141 : vector<256x128xf32>
    %143 = vector.shape_cast %142 : vector<256x128xf32> to vector<1x256x128xf32>
    %cst_147 = arith.constant dense<0.000000e+00> : vector<1xf32>
    %144 = vector.multi_reduction <add>, %143, %cst_147 [1, 2] : vector<1x256x128xf32> to vector<1xf32>
    %145 = vector.shape_cast %144 : vector<1xf32> to vector<1x1x1xf32>
    %146 = vector.extract %145[0, 0, 0] : f32 from vector<1x1x1xf32>
    %cst_148 = arith.constant 3.072000e+04 : f32
    %147 = arith.mulf %cst_148, %139 : f32
    %148 = arith.mulf %147, %139 : f32
    %149 = arith.subf %146, %148 : f32
    %cst_149 = arith.constant 2.048000e+03 : f32
    %150 = arith.divf %149, %cst_149 : f32
    %cst_150 = arith.constant 9.99999974E-6 : f32
    %151 = arith.addf %150, %cst_150 : f32
    %152 = math.rsqrt %151 : f32
    %153 = vector.broadcast %152 : f32 to vector<256x128xf32>
    %154 = arith.mulf %141, %153 : vector<256x128xf32>
    %155 = vector.shape_cast %132 : vector<128xf32> to vector<1x128xf32>
    %156 = vector.broadcast %155 : vector<1x128xf32> to vector<256x128xf32>
    %157 = arith.mulf %154, %156 : vector<256x128xf32>
    %158 = vector.shape_cast %134 : vector<128xf32> to vector<1x128xf32>
    %159 = vector.broadcast %158 : vector<1x128xf32> to vector<256x128xf32>
    %160 = arith.addf %157, %159 : vector<256x128xf32>
    %161 = vector.shape_cast %160 : vector<256x128xf32> to vector<16x16x128xf32>
    %c1_151 = arith.constant 1 : index
    %c1_152 = arith.constant 1 : index
    %c0_153 = arith.constant 0 : index
    %162 = vector.load %arg14[%c1_151, %c1_152, %c0_153] : memref<18x18x128xf32, #tpu.memory_space<vmem>>, vector<16x16x128xf32>
    tpu.vector_store %arg14[%c1_151, %c1_152, %c0_153], %161 {strides = array<i32>} : memref<18x18x128xf32, #tpu.memory_space<vmem>>, vector<16x16x128xf32>,
    %c0_154 = arith.constant 0 : index
    %c0_155 = arith.constant 0 : index
    %163 = vector.load %arg9[%c0_154, %c0_155] : memref<1x128xf32, #tpu.memory_space<vmem>>, vector<1x128xf32>
    %164 = vector.shape_cast %163 : vector<1x128xf32> to vector<1x128xf32>
    %165 = vector.broadcast %164 : vector<1x128xf32> to vector<256x128xf32>
    %c0_156 = arith.constant 0 : index
    %c0_157 = arith.constant 0 : index
    %166 = vector.load %arg15[%c0_156, %c0_157] : memref<256x128xf32, #tpu.memory_space<vmem>>, vector<256x128xf32>
    tpu.vector_store %arg15[%c0_156, %c0_157], %165 {strides = array<i32>} : memref<256x128xf32, #tpu.memory_space<vmem>>, vector<256x128xf32>,
    %c0_158 = arith.constant 0 : index
    %c0_159 = arith.constant 0 : index
    %c0_160 = arith.constant 0 : index
    %167 = vector.load %arg14[%c0_158, %c0_159, %c0_160] : memref<18x18x128xf32, #tpu.memory_space<vmem>>, vector<18x16x128xf32>
    %168 = vector.extract_strided_slice %167 {offsets = [0, 0, 0], sizes = [16, 16, 128], strides = [1, 1, 1]} : vector<18x16x128xf32> to vector<16x16x128xf32>
    %169 = vector.shape_cast %168 : vector<16x16x128xf32> to vector<256x128xf32>
    %c0_161 = arith.constant 0 : index
    %c0_162 = arith.constant 0 : index
    %170 = vector.load %arg15[%c0_161, %c0_162] : memref<256x128xf32, #tpu.memory_space<vmem>>, vector<256x128xf32>
    %c0_163 = arith.constant 0 : index
    %c0_164 = arith.constant 0 : index
    %c0_165 = arith.constant 0 : index
    %c0_166 = arith.constant 0 : index
    %171 = vector.load %arg8[%c0_163, %c0_164, %c0_165, %c0_166] : memref<3x3x128x128xf32, #tpu.memory_space<vmem>>, vector<1x1x128x128xf32>
    %172 = vector.shape_cast %171 : vector<1x1x128x128xf32> to vector<128x128xf32>
    %cst_167 = arith.constant dense<0.000000e+00> : vector<256x128xf32>
    %173 = tpu.matmul %169, %172, %cst_167 {dimension_numbers = #tpu.dot_dimension_numbers<[1], [0], [0], [1], [0, 0, 1, 1], [], []>} : vector<256x128xf32>, vector<128x128xf32>, vector<256x128xf32> -> vector<256x128xf32>
    %174 = arith.addf %170, %173 : vector<256x128xf32>
    %c0_168 = arith.constant 0 : index
    %c0_169 = arith.constant 0 : index
    %175 = vector.load %arg15[%c0_168, %c0_169] : memref<256x128xf32, #tpu.memory_space<vmem>>, vector<256x128xf32>
    tpu.vector_store %arg15[%c0_168, %c0_169], %174 {strides = array<i32>} : memref<256x128xf32, #tpu.memory_space<vmem>>, vector<256x128xf32>,
    %176 = vector.extract_strided_slice %167 {offsets = [1, 0, 0], sizes = [16, 16, 128], strides = [1, 1, 1]} : vector<18x16x128xf32> to vector<16x16x128xf32>
    %177 = vector.shape_cast %176 : vector<16x16x128xf32> to vector<256x128xf32>
    %c0_170 = arith.constant 0 : index
    %c0_171 = arith.constant 0 : index
    %178 = vector.load %arg15[%c0_170, %c0_171] : memref<256x128xf32, #tpu.memory_space<vmem>>, vector<256x128xf32>
    %c1_172 = arith.constant 1 : index
    %c0_173 = arith.constant 0 : index
    %c0_174 = arith.constant 0 : index
    %c0_175 = arith.constant 0 : index
    %179 = vector.load %arg8[%c1_172, %c0_173, %c0_174, %c0_175] : memref<3x3x128x128xf32, #tpu.memory_space<vmem>>, vector<1x1x128x128xf32>
    %180 = vector.shape_cast %179 : vector<1x1x128x128xf32> to vector<128x128xf32>
    %cst_176 = arith.constant dense<0.000000e+00> : vector<256x128xf32>
    %181 = tpu.matmul %177, %180, %cst_176 {dimension_numbers = #tpu.dot_dimension_numbers<[1], [0], [0], [1], [0, 0, 1, 1], [], []>} : vector<256x128xf32>, vector<128x128xf32>, vector<256x128xf32> -> vector<256x128xf32>
    %182 = arith.addf %178, %181 : vector<256x128xf32>
    %c0_177 = arith.constant 0 : index
    %c0_178 = arith.constant 0 : index
    %183 = vector.load %arg15[%c0_177, %c0_178] : memref<256x128xf32, #tpu.memory_space<vmem>>, vector<256x128xf32>
    tpu.vector_store %arg15[%c0_177, %c0_178], %182 {strides = array<i32>} : memref<256x128xf32, #tpu.memory_space<vmem>>, vector<256x128xf32>,
    %184 = vector.extract_strided_slice %167 {offsets = [2, 0, 0], sizes = [16, 16, 128], strides = [1, 1, 1]} : vector<18x16x128xf32> to vector<16x16x128xf32>
    %185 = vector.shape_cast %184 : vector<16x16x128xf32> to vector<256x128xf32>
    %c0_179 = arith.constant 0 : index
    %c0_180 = arith.constant 0 : index
    %186 = vector.load %arg15[%c0_179, %c0_180] : memref<256x128xf32, #tpu.memory_space<vmem>>, vector<256x128xf32>
    %c2_181 = arith.constant 2 : index
    %c0_182 = arith.constant 0 : index
    %c0_183 = arith.constant 0 : index
    %c0_184 = arith.constant 0 : index
    %187 = vector.load %arg8[%c2_181, %c0_182, %c0_183, %c0_184] : memref<3x3x128x128xf32, #tpu.memory_space<vmem>>, vector<1x1x128x128xf32>
    %188 = vector.shape_cast %187 : vector<1x1x128x128xf32> to vector<128x128xf32>
    %cst_185 = arith.constant dense<0.000000e+00> : vector<256x128xf32>
    %189 = tpu.matmul %185, %188, %cst_185 {dimension_numbers = #tpu.dot_dimension_numbers<[1], [0], [0], [1], [0, 0, 1, 1], [], []>} : vector<256x128xf32>, vector<128x128xf32>, vector<256x128xf32> -> vector<256x128xf32>
    %190 = arith.addf %186, %189 : vector<256x128xf32>
    %c0_186 = arith.constant 0 : index
    %c0_187 = arith.constant 0 : index
    %191 = vector.load %arg15[%c0_186, %c0_187] : memref<256x128xf32, #tpu.memory_space<vmem>>, vector<256x128xf32>
    tpu.vector_store %arg15[%c0_186, %c0_187], %190 {strides = array<i32>} : memref<256x128xf32, #tpu.memory_space<vmem>>, vector<256x128xf32>,
    %c0_188 = arith.constant 0 : index
    %c1_189 = arith.constant 1 : index
    %c0_190 = arith.constant 0 : index
    %192 = vector.load %arg14[%c0_188, %c1_189, %c0_190] : memref<18x18x128xf32, #tpu.memory_space<vmem>>, vector<18x16x128xf32>
    %193 = vector.extract_strided_slice %192 {offsets = [0, 0, 0], sizes = [16, 16, 128], strides = [1, 1, 1]} : vector<18x16x128xf32> to vector<16x16x128xf32>
    %194 = vector.shape_cast %193 : vector<16x16x128xf32> to vector<256x128xf32>
    %c0_191 = arith.constant 0 : index
    %c0_192 = arith.constant 0 : index
    %195 = vector.load %arg15[%c0_191, %c0_192] : memref<256x128xf32, #tpu.memory_space<vmem>>, vector<256x128xf32>
    %c0_193 = arith.constant 0 : index
    %c1_194 = arith.constant 1 : index
    %c0_195 = arith.constant 0 : index
    %c0_196 = arith.constant 0 : index
    %196 = vector.load %arg8[%c0_193, %c1_194, %c0_195, %c0_196] : memref<3x3x128x128xf32, #tpu.memory_space<vmem>>, vector<1x1x128x128xf32>
    %197 = vector.shape_cast %196 : vector<1x1x128x128xf32> to vector<128x128xf32>
    %cst_197 = arith.constant dense<0.000000e+00> : vector<256x128xf32>
    %198 = tpu.matmul %194, %197, %cst_197 {dimension_numbers = #tpu.dot_dimension_numbers<[1], [0], [0], [1], [0, 0, 1, 1], [], []>} : vector<256x128xf32>, vector<128x128xf32>, vector<256x128xf32> -> vector<256x128xf32>
    %199 = arith.addf %195, %198 : vector<256x128xf32>
    %c0_198 = arith.constant 0 : index
    %c0_199 = arith.constant 0 : index
    %200 = vector.load %arg15[%c0_198, %c0_199] : memref<256x128xf32, #tpu.memory_space<vmem>>, vector<256x128xf32>
    tpu.vector_store %arg15[%c0_198, %c0_199], %199 {strides = array<i32>} : memref<256x128xf32, #tpu.memory_space<vmem>>, vector<256x128xf32>,
    %201 = vector.extract_strided_slice %192 {offsets = [1, 0, 0], sizes = [16, 16, 128], strides = [1, 1, 1]} : vector<18x16x128xf32> to vector<16x16x128xf32>
    %202 = vector.shape_cast %201 : vector<16x16x128xf32> to vector<256x128xf32>
    %c0_200 = arith.constant 0 : index
    %c0_201 = arith.constant 0 : index
    %203 = vector.load %arg15[%c0_200, %c0_201] : memref<256x128xf32, #tpu.memory_space<vmem>>, vector<256x128xf32>
    %c1_202 = arith.constant 1 : index
    %c1_203 = arith.constant 1 : index
    %c0_204 = arith.constant 0 : index
    %c0_205 = arith.constant 0 : index
    %204 = vector.load %arg8[%c1_202, %c1_203, %c0_204, %c0_205] : memref<3x3x128x128xf32, #tpu.memory_space<vmem>>, vector<1x1x128x128xf32>
    %205 = vector.shape_cast %204 : vector<1x1x128x128xf32> to vector<128x128xf32>
    %cst_206 = arith.constant dense<0.000000e+00> : vector<256x128xf32>
    %206 = tpu.matmul %202, %205, %cst_206 {dimension_numbers = #tpu.dot_dimension_numbers<[1], [0], [0], [1], [0, 0, 1, 1], [], []>} : vector<256x128xf32>, vector<128x128xf32>, vector<256x128xf32> -> vector<256x128xf32>
    %207 = arith.addf %203, %206 : vector<256x128xf32>
    %c0_207 = arith.constant 0 : index
    %c0_208 = arith.constant 0 : index
    %208 = vector.load %arg15[%c0_207, %c0_208] : memref<256x128xf32, #tpu.memory_space<vmem>>, vector<256x128xf32>
    tpu.vector_store %arg15[%c0_207, %c0_208], %207 {strides = array<i32>} : memref<256x128xf32, #tpu.memory_space<vmem>>, vector<256x128xf32>,
    %209 = vector.extract_strided_slice %192 {offsets = [2, 0, 0], sizes = [16, 16, 128], strides = [1, 1, 1]} : vector<18x16x128xf32> to vector<16x16x128xf32>
    %210 = vector.shape_cast %209 : vector<16x16x128xf32> to vector<256x128xf32>
    %c0_209 = arith.constant 0 : index
    %c0_210 = arith.constant 0 : index
    %211 = vector.load %arg15[%c0_209, %c0_210] : memref<256x128xf32, #tpu.memory_space<vmem>>, vector<256x128xf32>
    %c2_211 = arith.constant 2 : index
    %c1_212 = arith.constant 1 : index
    %c0_213 = arith.constant 0 : index
    %c0_214 = arith.constant 0 : index
    %212 = vector.load %arg8[%c2_211, %c1_212, %c0_213, %c0_214] : memref<3x3x128x128xf32, #tpu.memory_space<vmem>>, vector<1x1x128x128xf32>
    %213 = vector.shape_cast %212 : vector<1x1x128x128xf32> to vector<128x128xf32>
    %cst_215 = arith.constant dense<0.000000e+00> : vector<256x128xf32>
    %214 = tpu.matmul %210, %213, %cst_215 {dimension_numbers = #tpu.dot_dimension_numbers<[1], [0], [0], [1], [0, 0, 1, 1], [], []>} : vector<256x128xf32>, vector<128x128xf32>, vector<256x128xf32> -> vector<256x128xf32>
    %215 = arith.addf %211, %214 : vector<256x128xf32>
    %c0_216 = arith.constant 0 : index
    %c0_217 = arith.constant 0 : index
    %216 = vector.load %arg15[%c0_216, %c0_217] : memref<256x128xf32, #tpu.memory_space<vmem>>, vector<256x128xf32>
    tpu.vector_store %arg15[%c0_216, %c0_217], %215 {strides = array<i32>} : memref<256x128xf32, #tpu.memory_space<vmem>>, vector<256x128xf32>,
    %c0_218 = arith.constant 0 : index
    %c2_219 = arith.constant 2 : index
    %c0_220 = arith.constant 0 : index
    %217 = vector.load %arg14[%c0_218, %c2_219, %c0_220] : memref<18x18x128xf32, #tpu.memory_space<vmem>>, vector<18x16x128xf32>
    %218 = vector.extract_strided_slice %217 {offsets = [0, 0, 0], sizes = [16, 16, 128], strides = [1, 1, 1]} : vector<18x16x128xf32> to vector<16x16x128xf32>
    %219 = vector.shape_cast %218 : vector<16x16x128xf32> to vector<256x128xf32>
    %c0_221 = arith.constant 0 : index
    %c0_222 = arith.constant 0 : index
    %220 = vector.load %arg15[%c0_221, %c0_222] : memref<256x128xf32, #tpu.memory_space<vmem>>, vector<256x128xf32>
    %c0_223 = arith.constant 0 : index
    %c2_224 = arith.constant 2 : index
    %c0_225 = arith.constant 0 : index
    %c0_226 = arith.constant 0 : index
    %221 = vector.load %arg8[%c0_223, %c2_224, %c0_225, %c0_226] : memref<3x3x128x128xf32, #tpu.memory_space<vmem>>, vector<1x1x128x128xf32>
    %222 = vector.shape_cast %221 : vector<1x1x128x128xf32> to vector<128x128xf32>
    %cst_227 = arith.constant dense<0.000000e+00> : vector<256x128xf32>
    %223 = tpu.matmul %219, %222, %cst_227 {dimension_numbers = #tpu.dot_dimension_numbers<[1], [0], [0], [1], [0, 0, 1, 1], [], []>} : vector<256x128xf32>, vector<128x128xf32>, vector<256x128xf32> -> vector<256x128xf32>
    %224 = arith.addf %220, %223 : vector<256x128xf32>
    %c0_228 = arith.constant 0 : index
    %c0_229 = arith.constant 0 : index
    %225 = vector.load %arg15[%c0_228, %c0_229] : memref<256x128xf32, #tpu.memory_space<vmem>>, vector<256x128xf32>
    tpu.vector_store %arg15[%c0_228, %c0_229], %224 {strides = array<i32>} : memref<256x128xf32, #tpu.memory_space<vmem>>, vector<256x128xf32>,
    %226 = vector.extract_strided_slice %217 {offsets = [1, 0, 0], sizes = [16, 16, 128], strides = [1, 1, 1]} : vector<18x16x128xf32> to vector<16x16x128xf32>
    %227 = vector.shape_cast %226 : vector<16x16x128xf32> to vector<256x128xf32>
    %c0_230 = arith.constant 0 : index
    %c0_231 = arith.constant 0 : index
    %228 = vector.load %arg15[%c0_230, %c0_231] : memref<256x128xf32, #tpu.memory_space<vmem>>, vector<256x128xf32>
    %c1_232 = arith.constant 1 : index
    %c2_233 = arith.constant 2 : index
    %c0_234 = arith.constant 0 : index
    %c0_235 = arith.constant 0 : index
    %229 = vector.load %arg8[%c1_232, %c2_233, %c0_234, %c0_235] : memref<3x3x128x128xf32, #tpu.memory_space<vmem>>, vector<1x1x128x128xf32>
    %230 = vector.shape_cast %229 : vector<1x1x128x128xf32> to vector<128x128xf32>
    %cst_236 = arith.constant dense<0.000000e+00> : vector<256x128xf32>
    %231 = tpu.matmul %227, %230, %cst_236 {dimension_numbers = #tpu.dot_dimension_numbers<[1], [0], [0], [1], [0, 0, 1, 1], [], []>} : vector<256x128xf32>, vector<128x128xf32>, vector<256x128xf32> -> vector<256x128xf32>
    %232 = arith.addf %228, %231 : vector<256x128xf32>
    %c0_237 = arith.constant 0 : index
    %c0_238 = arith.constant 0 : index
    %233 = vector.load %arg15[%c0_237, %c0_238] : memref<256x128xf32, #tpu.memory_space<vmem>>, vector<256x128xf32>
    tpu.vector_store %arg15[%c0_237, %c0_238], %232 {strides = array<i32>} : memref<256x128xf32, #tpu.memory_space<vmem>>, vector<256x128xf32>,
    %234 = vector.extract_strided_slice %217 {offsets = [2, 0, 0], sizes = [16, 16, 128], strides = [1, 1, 1]} : vector<18x16x128xf32> to vector<16x16x128xf32>
    %235 = vector.shape_cast %234 : vector<16x16x128xf32> to vector<256x128xf32>
    %c0_239 = arith.constant 0 : index
    %c0_240 = arith.constant 0 : index
    %236 = vector.load %arg15[%c0_239, %c0_240] : memref<256x128xf32, #tpu.memory_space<vmem>>, vector<256x128xf32>
    %c2_241 = arith.constant 2 : index
    %c2_242 = arith.constant 2 : index
    %c0_243 = arith.constant 0 : index
    %c0_244 = arith.constant 0 : index
    %237 = vector.load %arg8[%c2_241, %c2_242, %c0_243, %c0_244] : memref<3x3x128x128xf32, #tpu.memory_space<vmem>>, vector<1x1x128x128xf32>
    %238 = vector.shape_cast %237 : vector<1x1x128x128xf32> to vector<128x128xf32>
    %cst_245 = arith.constant dense<0.000000e+00> : vector<256x128xf32>
    %239 = tpu.matmul %235, %238, %cst_245 {dimension_numbers = #tpu.dot_dimension_numbers<[1], [0], [0], [1], [0, 0, 1, 1], [], []>} : vector<256x128xf32>, vector<128x128xf32>, vector<256x128xf32> -> vector<256x128xf32>
    %240 = arith.addf %236, %239 : vector<256x128xf32>
    %c0_246 = arith.constant 0 : index
    %c0_247 = arith.constant 0 : index
    %241 = vector.load %arg15[%c0_246, %c0_247] : memref<256x128xf32, #tpu.memory_space<vmem>>, vector<256x128xf32>
    tpu.vector_store %arg15[%c0_246, %c0_247], %240 {strides = array<i32>} : memref<256x128xf32, #tpu.memory_space<vmem>>, vector<256x128xf32>,
    %c0_248 = arith.constant 0 : index
    %c0_249 = arith.constant 0 : index
    %242 = vector.load %arg15[%c0_248, %c0_249] : memref<256x128xf32, #tpu.memory_space<vmem>>, vector<256x128xf32>
    %243 = vector.shape_cast %1 : vector<16x16x128xf32> to vector<256x128xf32>
    %c0_250 = arith.constant 0 : index
    %c0_251 = arith.constant 0 : index
    %244 = vector.load %arg10[%c0_250, %c0_251] : memref<128x128xf32, #tpu.memory_space<vmem>>, vector<128x128xf32>
    %cst_252 = arith.constant dense<0.000000e+00> : vector<256x128xf32>
    %245 = tpu.matmul %243, %244, %cst_252 {dimension_numbers = #tpu.dot_dimension_numbers<[1], [0], [0], [1], [0, 0, 1, 1], [], []>} : vector<256x128xf32>, vector<128x128xf32>, vector<256x128xf32> -> vector<256x128xf32>
    %c0_253 = arith.constant 0 : index
    %c0_254 = arith.constant 0 : index
    %246 = vector.load %arg11[%c0_253, %c0_254] : memref<1x128xf32, #tpu.memory_space<vmem>>, vector<1x128xf32>
    %247 = vector.broadcast %246 : vector<1x128xf32> to vector<256x128xf32>
    %248 = arith.addf %245, %247 : vector<256x128xf32>
    %249 = arith.addf %242, %248 : vector<256x128xf32>
    %cst_255 = arith.constant 0.000000e+00 : f32
    %250 = vector.broadcast %cst_255 : f32 to vector<256x128xf32>
    %251 = arith.maximumf %249, %250 : vector<256x128xf32>
    %252 = vector.shape_cast %251 : vector<256x128xf32> to vector<16x16x128xf32>
    %c0_256 = arith.constant 0 : index
    %c0_257 = arith.constant 0 : index
    %c0_258 = arith.constant 0 : index
    %c0_259 = arith.constant 0 : index
    %253 = vector.load %arg12[%c0_256, %c0_257, %c0_258, %c0_259] : memref<1x16x16x128xf32, #tpu.memory_space<vmem>>, vector<1x16x16x128xf32>
    %254 = vector.shape_cast %253 : vector<1x16x16x128xf32> to vector<16x16x128xf32>
    %255 = vector.shape_cast %252 : vector<16x16x128xf32> to vector<1x16x16x128xf32>
    tpu.vector_store %arg12[%c0_256, %c0_257, %c0_258, %c0_259], %255 {strides = array<i32>} : memref<1x16x16x128xf32, #tpu.memory_space<vmem>>, vector<1x16x16x128xf32>,
    return
  }
  func.func @transform_0(%arg0: i32) -> (i32, i32, i32, i32) {
    %c0_i32 = arith.constant 0 : i32
    %c0_i32_0 = arith.constant 0 : i32
    %c0_i32_1 = arith.constant 0 : i32
    %c0_i32_2 = arith.constant 0 : i32
    return %arg0, %c0_i32, %c0_i32_0, %c0_i32_1 : i32, i32, i32, i32
  }
  func.func @transform_1(%arg0: i32) -> (i32, i32) {
    %c0_i32 = arith.constant 0 : i32
    %c0_i32_0 = arith.constant 0 : i32
    %c0_i32_1 = arith.constant 0 : i32
    return %c0_i32, %c0_i32_0 : i32, i32
  }
  func.func @transform_2(%arg0: i32) -> (i32, i32) {
    %c0_i32 = arith.constant 0 : i32
    %c0_i32_0 = arith.constant 0 : i32
    %c0_i32_1 = arith.constant 0 : i32
    return %c0_i32, %c0_i32_0 : i32, i32
  }
  func.func @transform_3(%arg0: i32) -> (i32, i32, i32, i32) {
    %c0_i32 = arith.constant 0 : i32
    %c0_i32_0 = arith.constant 0 : i32
    %c0_i32_1 = arith.constant 0 : i32
    %c0_i32_2 = arith.constant 0 : i32
    %c0_i32_3 = arith.constant 0 : i32
    return %c0_i32, %c0_i32_0, %c0_i32_1, %c0_i32_2 : i32, i32, i32, i32
  }
  func.func @transform_4(%arg0: i32) -> (i32, i32) {
    %c0_i32 = arith.constant 0 : i32
    %c0_i32_0 = arith.constant 0 : i32
    %c0_i32_1 = arith.constant 0 : i32
    return %c0_i32, %c0_i32_0 : i32, i32
  }
  func.func @transform_5(%arg0: i32) -> (i32, i32) {
    %c0_i32 = arith.constant 0 : i32
    %c0_i32_0 = arith.constant 0 : i32
    %c0_i32_1 = arith.constant 0 : i32
    return %c0_i32, %c0_i32_0 : i32, i32
  }
  func.func @transform_6(%arg0: i32) -> (i32, i32) {
    %c0_i32 = arith.constant 0 : i32
    %c0_i32_0 = arith.constant 0 : i32
    %c0_i32_1 = arith.constant 0 : i32
    return %c0_i32, %c0_i32_0 : i32, i32
  }
  func.func @transform_7(%arg0: i32) -> (i32, i32, i32, i32) {
    %c0_i32 = arith.constant 0 : i32
    %c0_i32_0 = arith.constant 0 : i32
    %c0_i32_1 = arith.constant 0 : i32
    %c0_i32_2 = arith.constant 0 : i32
    %c0_i32_3 = arith.constant 0 : i32
    return %c0_i32, %c0_i32_0, %c0_i32_1, %c0_i32_2 : i32, i32, i32, i32
  }
  func.func @transform_8(%arg0: i32) -> (i32, i32) {
    %c0_i32 = arith.constant 0 : i32
    %c0_i32_0 = arith.constant 0 : i32
    %c0_i32_1 = arith.constant 0 : i32
    return %c0_i32, %c0_i32_0 : i32, i32
  }
  func.func @transform_9(%arg0: i32) -> (i32, i32) {
    %c0_i32 = arith.constant 0 : i32
    %c0_i32_0 = arith.constant 0 : i32
    %c0_i32_1 = arith.constant 0 : i32
    return %c0_i32, %c0_i32_0 : i32, i32
  }
  func.func @transform_10(%arg0: i32) -> (i32, i32) {
    %c0_i32 = arith.constant 0 : i32
    %c0_i32_0 = arith.constant 0 : i32
    %c0_i32_1 = arith.constant 0 : i32
    return %c0_i32, %c0_i32_0 : i32, i32
  }
  func.func @transform_11(%arg0: i32) -> (i32, i32, i32, i32) {
    %c0_i32 = arith.constant 0 : i32
    %c0_i32_0 = arith.constant 0 : i32
    %c0_i32_1 = arith.constant 0 : i32
    %c0_i32_2 = arith.constant 0 : i32
    return %arg0, %c0_i32, %c0_i32_0, %c0_i32_1 : i32, i32, i32, i32
  }
}

</mosaic_0001>

<llo_original>
// kernel: tpu_custom_call.1
$region0: #{tpu_custom_call.1}
  #allocation0 [shape = 'u32[]', space=smem, size = 0x4, offset = 0x4, fixed_abs, tag = 'smem constant byte address 0x4 - core index']
  #allocation1 [shape = 'u32[144,128]{1,0:T(1,128)}', space=vmem, size = 0x12000, scoped, tag = 'internal scratch']
  #allocation2 [shape = 'f32[18,18,128]{2,1,0:T(8,128)}', space=vmem, size = 0x36000, scoped, tag = 'scratch operand']
  #allocation3 [shape = 'f32[18,18,128]{2,1,0:T(8,128)}', space=vmem, size = 0x36000, scoped, tag = 'scratch operand']
  #allocation4 [shape = 'f32[256,128]{1,0:T(8,128)}', space=vmem, size = 0x20000, scoped, tag = 'scratch operand']
  %s0 = inlined_call_operand.hbm [shape: f32[2,16,16,128], index: 0, kind: input, shape index: {}]
  %s1 = inlined_call_operand.vmem [shape: f32[1,128], index: 1, kind: input, shape index: {}]
  %s2 = inlined_call_operand.vmem [shape: f32[1,128], index: 2, kind: input, shape index: {}]
  %s3 = inlined_call_operand.hbm [shape: f32[3,3,128,128], index: 3, kind: input, shape index: {}]
  %s4 = inlined_call_operand.vmem [shape: f32[1,128], index: 4, kind: input, shape index: {}]
  %s5 = inlined_call_operand.vmem [shape: f32[1,128], index: 5, kind: input, shape index: {}]
  %s6 = inlined_call_operand.vmem [shape: f32[1,128], index: 6, kind: input, shape index: {}]
  %s7 = inlined_call_operand.hbm [shape: f32[3,3,128,128], index: 7, kind: input, shape index: {}]
  %s8 = inlined_call_operand.vmem [shape: f32[1,128], index: 8, kind: input, shape index: {}]
  %s9 = inlined_call_operand.hbm [shape: f32[128,128], index: 9, kind: input, shape index: {}]
  %s10 = inlined_call_operand.vmem [shape: f32[1,128], index: 10, kind: input, shape index: {}]
  %s11 = inlined_call_operand.hbm [shape: f32[2,16,16,128], index: 11, kind: output, shape index: {}]
  %s12 = sld [smem:[#allocation0]]
  $region93: #{tpu_custom_call.1} parent=0
    _
  %s14 = ssub.s32 1, %s12
  %s15 = scalar_select 0, %s14, %s12
  $region1: #{tpu_custom_call.1} parent=0
    #allocation5 [shape = 'u8[262144]{0}', space=vmem, size = 0x40000, scoped, tag = 'input window, operand 0']
    #allocation6 [shape = 's32[2]{0}', space=sflag, size = 0x8, scoped, tag = 'scoped memory for tpu_custom_call.1']
    #allocation7 [shape = 's32[2]{0}', space=sflag, size = 0x8, scoped, tag = 'scoped memory for tpu_custom_call.1']
    #allocation8 [shape = 'u8[589824]{0}', space=vmem, size = 0x90000, scoped, tag = 'input window, operand 3, single buffered']
    #allocation9 [shape = 's32[1]{0}', space=sflag, size = 0x4, scoped, tag = 'scoped memory for tpu_custom_call.1']
    #allocation10 [shape = 'u8[589824]{0}', space=vmem, size = 0x90000, scoped, tag = 'input window, operand 7, single buffered']
    #allocation11 [shape = 'u8[65536]{0}', space=vmem, size = 0x10000, scoped, tag = 'input window, operand 9, single buffered']
    #allocation12 [shape = 's32[1]{0}', space=sflag, size = 0x4, scoped, tag = 'scoped memory for tpu_custom_call.1']
    #allocation13 [shape = 'u8[262144]{0}', space=vmem, size = 0x40000, scoped, tag = 'output window, operand 0']
    %16 = vsyncpa [#allocation6], 0
    %s17 = scalar_lea.sflag [#allocation6], 1
    %18 = vsyncpa %s17, 0
    %19 = vsyncpa [#allocation9], 0
    %20 = vsyncpa [#allocation12], 0
    %21 = vsyncpa [#allocation7], 0
    %s22 = scalar_lea.sflag [#allocation7], 1
    %23 = vsyncpa %s22, 0
    loop: start=0, step=1, limit=4
    $region2: #{tpu_custom_call.1} parent=1 // loop_pre_header
      _
    $region3: #{tpu_custom_call.1} parent=1 // loop_header
      %s25 = sphi 0, %s29
      %p26 = scmp.ge.s32.totalorder %s25, 4
      %s35 = sphi 0, %s37
      %s38 = sphi 0, %s35
      %s39 = sphi 0, %s38
      %s55 = sphi 0, %s39
      %s59 = sphi 0, %s59
      %s61 = sphi 0, %s59
      %s62 = sphi 0, %s61
      %s76 = sphi 0, %s62
      %s80 = sphi 0, %s80
      %s82 = sphi 0, %s80
      %s83 = sphi 0, %s82
      %s97 = sphi 0, %s83
      %s101 = sphi 0, %s101
      %s103 = sphi 0, %s101
      %s104 = sphi 0, %s103
      %s118 = sphi 0, %s104
      %s122 = sphi 0, %s122
      %s124 = sphi 0, %s122
      %s125 = sphi 0, %s124
      %s139 = sphi 0, %s125
      %s143 = sphi 0, %s143
      %s145 = sphi 0, %s143
      %s146 = sphi 0, %s145
      %s160 = sphi 0, %s146
      %s164 = sphi 0, %s164
      %s166 = sphi 0, %s164
      %s167 = sphi 0, %s166
      %s181 = sphi 0, %s167
      %s185 = sphi 0, %s185
      %s187 = sphi 0, %s185
      %s188 = sphi 0, %s187
      %s202 = sphi 0, %s188
      %s206 = sphi 0, %s206
      %s208 = sphi 0, %s206
      %s209 = sphi 0, %s208
      %s223 = sphi 0, %s209
      %s227 = sphi 0, %s227
      %s229 = sphi 0, %s227
      %s230 = sphi 0, %s229
      %s244 = sphi 0, %s230
      %s248 = sphi 0, %s248
      %s250 = sphi 0, %s248
      %s251 = sphi 0, %s250
      %s265 = sphi 0, %s251
      %s271 = sphi 0, %s273
      %s274 = sphi 0, %s271
      %s275 = sphi 0, %s274
      %s291 = sphi 0, %s275
    $region4: #{tpu_custom_call.1} parent=1 // loop_header_branch
      %28 = sbr.rel (%p26) target = $region8
    $region5: #{tpu_custom_call.1} parent=1 // loop_body
      %s30 = ssub.s32 %s25, 1
      %s31 = ssub.s32 %s25, 2
      %s32 = sadd.s32 %s25, 1
      %s33 = ssub.s32 %s25, %s32
      %p34 = scmp.eq.s32.totalorder %s33, 0
      %s36 = sadd.s32 %s35, 1
      %s37 = scalar_select %p34, %s35, %s36
      %p40 = pneg %p34
      %p41 = scmp.eq.s32.totalorder %s25, 1
      %p42 = por %p40, %p41
      %p43 = scmp.ne.s32.totalorder %s35, %s38
      %p44 = scmp.eq.s32.totalorder %s25, 0
      %p45 = por %p43, %p44
      %p46 = scmp.ne.s32.totalorder %s35, %s38
      %p47 = scmp.eq.s32.totalorder %s30, 1
      %p48 = por %p46, %p47
      %p49 = scmp.ne.s32.totalorder %s38, %s39
      %p50 = scmp.eq.s32.totalorder %s30, 0
      %p51 = por %p49, %p50
      %p52 = scmp.ne.s32.totalorder %s38, %s39
      %p53 = scmp.eq.s32.totalorder %s31, 1
      %p54 = por %p52, %p53
      %p56 = scmp.ne.s32.totalorder %s39, %s55
      %p57 = scmp.eq.s32.totalorder %s31, 0
      %p58 = por %p56, %p57
      %s60 = sadd.s32 %s59, 1
      %p63 = scmp.eq.s32.totalorder %s25, 1
      %p64 = scmp.ne.s32.totalorder %s59, %s61
      %p65 = scmp.eq.s32.totalorder %s25, 0
      %p66 = por %p64, %p65
      %p67 = scmp.ne.s32.totalorder %s59, %s61
      %p68 = scmp.eq.s32.totalorder %s30, 1
      %p69 = por %p67, %p68
      %p70 = scmp.ne.s32.totalorder %s61, %s62
      %p71 = scmp.eq.s32.totalorder %s30, 0
      %p72 = por %p70, %p71
      %p73 = scmp.ne.s32.totalorder %s61, %s62
      %p74 = scmp.eq.s32.totalorder %s31, 1
      %p75 = por %p73, %p74
      %p77 = scmp.ne.s32.totalorder %s62, %s76
      %p78 = scmp.eq.s32.totalorder %s31, 0
      %p79 = por %p77, %p78
      %s81 = sadd.s32 %s80, 1
      %p84 = scmp.eq.s32.totalorder %s25, 1
      %p85 = scmp.ne.s32.totalorder %s80, %s82
      %p86 = scmp.eq.s32.totalorder %s25, 0
      %p87 = por %p85, %p86
      %p88 = scmp.ne.s32.totalorder %s80, %s82
      %p89 = scmp.eq.s32.totalorder %s30, 1
      %p90 = por %p88, %p89
      %p91 = scmp.ne.s32.totalorder %s82, %s83
      %p92 = scmp.eq.s32.totalorder %s30, 0
      %p93 = por %p91, %p92
      %p94 = scmp.ne.s32.totalorder %s82, %s83
      %p95 = scmp.eq.s32.totalorder %s31, 1
      %p96 = por %p94, %p95
      %p98 = scmp.ne.s32.totalorder %s83, %s97
      %p99 = scmp.eq.s32.totalorder %s31, 0
      %p100 = por %p98, %p99
      %s102 = sadd.s32 %s101, 1
      %p105 = scmp.eq.s32.totalorder %s25, 1
      %p106 = scmp.ne.s32.totalorder %s101, %s103
      %p107 = scmp.eq.s32.totalorder %s25, 0
      %p108 = por %p106, %p107
      %p109 = scmp.ne.s32.totalorder %s101, %s103
      %p110 = scmp.eq.s32.totalorder %s30, 1
      %p111 = por %p109, %p110
      %p112 = scmp.ne.s32.totalorder %s103, %s104
      %p113 = scmp.eq.s32.totalorder %s30, 0
      %p114 = por %p112, %p113
      %p115 = scmp.ne.s32.totalorder %s103, %s104
      %p116 = scmp.eq.s32.totalorder %s31, 1
      %p117 = por %p115, %p116
      %p119 = scmp.ne.s32.totalorder %s104, %s118
      %p120 = scmp.eq.s32.totalorder %s31, 0
      %p121 = por %p119, %p120
      %s123 = sadd.s32 %s122, 1
      %p126 = scmp.eq.s32.totalorder %s25, 1
      %p127 = scmp.ne.s32.totalorder %s122, %s124
      %p128 = scmp.eq.s32.totalorder %s25, 0
      %p129 = por %p127, %p128
      %p130 = scmp.ne.s32.totalorder %s122, %s124
      %p131 = scmp.eq.s32.totalorder %s30, 1
      %p132 = por %p130, %p131
      %p133 = scmp.ne.s32.totalorder %s124, %s125
      %p134 = scmp.eq.s32.totalorder %s30, 0
      %p135 = por %p133, %p134
      %p136 = scmp.ne.s32.totalorder %s124, %s125
      %p137 = scmp.eq.s32.totalorder %s31, 1
      %p138 = por %p136, %p137
      %p140 = scmp.ne.s32.totalorder %s125, %s139
      %p141 = scmp.eq.s32.totalorder %s31, 0
      %p142 = por %p140, %p141
      %s144 = sadd.s32 %s143, 1
      %p147 = scmp.eq.s32.totalorder %s25, 1
      %p148 = scmp.ne.s32.totalorder %s143, %s145
      %p149 = scmp.eq.s32.totalorder %s25, 0
      %p150 = por %p148, %p149
      %p151 = scmp.ne.s32.totalorder %s143, %s145
      %p152 = scmp.eq.s32.totalorder %s30, 1
      %p153 = por %p151, %p152
      %p154 = scmp.ne.s32.totalorder %s145, %s146
      %p155 = scmp.eq.s32.totalorder %s30, 0
      %p156 = por %p154, %p155
      %p157 = scmp.ne.s32.totalorder %s145, %s146
      %p158 = scmp.eq.s32.totalorder %s31, 1
      %p159 = por %p157, %p158
      %p161 = scmp.ne.s32.totalorder %s146, %s160
      %p162 = scmp.eq.s32.totalorder %s31, 0
      %p163 = por %p161, %p162
      %s165 = sadd.s32 %s164, 1
      %p168 = scmp.eq.s32.totalorder %s25, 1
      %p169 = scmp.ne.s32.totalorder %s164, %s166
      %p170 = scmp.eq.s32.totalorder %s25, 0
      %p171 = por %p169, %p170
      %p172 = scmp.ne.s32.totalorder %s164, %s166
      %p173 = scmp.eq.s32.totalorder %s30, 1
      %p174 = por %p172, %p173
      %p175 = scmp.ne.s32.totalorder %s166, %s167
      %p176 = scmp.eq.s32.totalorder %s30, 0
      %p177 = por %p175, %p176
      %p178 = scmp.ne.s32.totalorder %s166, %s167
      %p179 = scmp.eq.s32.totalorder %s31, 1
      %p180 = por %p178, %p179
      %p182 = scmp.ne.s32.totalorder %s167, %s181
      %p183 = scmp.eq.s32.totalorder %s31, 0
      %p184 = por %p182, %p183
      %s186 = sadd.s32 %s185, 1
      %p189 = scmp.eq.s32.totalorder %s25, 1
      %p190 = scmp.ne.s32.totalorder %s185, %s187
      %p191 = scmp.eq.s32.totalorder %s25, 0
      %p192 = por %p190, %p191
      %p193 = scmp.ne.s32.totalorder %s185, %s187
      %p194 = scmp.eq.s32.totalorder %s30, 1
      %p195 = por %p193, %p194
      %p196 = scmp.ne.s32.totalorder %s187, %s188
      %p197 = scmp.eq.s32.totalorder %s30, 0
      %p198 = por %p196, %p197
      %p199 = scmp.ne.s32.totalorder %s187, %s188
      %p200 = scmp.eq.s32.totalorder %s31, 1
      %p201 = por %p199, %p200
      %p203 = scmp.ne.s32.totalorder %s188, %s202
      %p204 = scmp.eq.s32.totalorder %s31, 0
      %p205 = por %p203, %p204
      %s207 = sadd.s32 %s206, 1
      %p210 = scmp.eq.s32.totalorder %s25, 1
      %p211 = scmp.ne.s32.totalorder %s206, %s208
      %p212 = scmp.eq.s32.totalorder %s25, 0
      %p213 = por %p211, %p212
      %p214 = scmp.ne.s32.totalorder %s206, %s208
      %p215 = scmp.eq.s32.totalorder %s30, 1
      %p216 = por %p214, %p215
      %p217 = scmp.ne.s32.totalorder %s208, %s209
      %p218 = scmp.eq.s32.totalorder %s30, 0
      %p219 = por %p217, %p218
      %p220 = scmp.ne.s32.totalorder %s208, %s209
      %p221 = scmp.eq.s32.totalorder %s31, 1
      %p222 = por %p220, %p221
      %p224 = scmp.ne.s32.totalorder %s209, %s223
      %p225 = scmp.eq.s32.totalorder %s31, 0
      %p226 = por %p224, %p225
      %s228 = sadd.s32 %s227, 1
      %p231 = scmp.eq.s32.totalorder %s25, 1
      %p232 = scmp.ne.s32.totalorder %s227, %s229
      %p233 = scmp.eq.s32.totalorder %s25, 0
      %p234 = por %p232, %p233
      %p235 = scmp.ne.s32.totalorder %s227, %s229
      %p236 = scmp.eq.s32.totalorder %s30, 1
      %p237 = por %p235, %p236
      %p238 = scmp.ne.s32.totalorder %s229, %s230
      %p239 = scmp.eq.s32.totalorder %s30, 0
      %p240 = por %p238, %p239
      %p241 = scmp.ne.s32.totalorder %s229, %s230
      %p242 = scmp.eq.s32.totalorder %s31, 1
      %p243 = por %p241, %p242
      %p245 = scmp.ne.s32.totalorder %s230, %s244
      %p246 = scmp.eq.s32.totalorder %s31, 0
      %p247 = por %p245, %p246
      %s249 = sadd.s32 %s248, 1
      %p252 = scmp.eq.s32.totalorder %s25, 1
      %p253 = scmp.ne.s32.totalorder %s248, %s250
      %p254 = scmp.eq.s32.totalorder %s25, 0
      %p255 = por %p253, %p254
      %p256 = scmp.ne.s32.totalorder %s248, %s250
      %p257 = scmp.eq.s32.totalorder %s30, 1
      %p258 = por %p256, %p257
      %p259 = scmp.ne.s32.totalorder %s250, %s251
      %p260 = scmp.eq.s32.totalorder %s30, 0
      %p261 = por %p259, %p260
      %p262 = scmp.ne.s32.totalorder %s250, %s251
      %p263 = scmp.eq.s32.totalorder %s31, 1
      %p264 = por %p262, %p263
      %p266 = scmp.ne.s32.totalorder %s251, %s265
      %p267 = scmp.eq.s32.totalorder %s31, 0
      %p268 = por %p266, %p267
      %s269 = ssub.s32 %s25, %s32
      %p270 = scmp.eq.s32.totalorder %s269, 0
      %s272 = sadd.s32 %s271, 1
      %s273 = scalar_select %p270, %s271, %s272
      %p276 = pneg %p270
      %p277 = scmp.eq.s32.totalorder %s25, 1
      %p278 = por %p276, %p277
      %p279 = scmp.ne.s32.totalorder %s271, %s274
      %p280 = scmp.eq.s32.totalorder %s25, 0
      %p281 = por %p279, %p280
      %p282 = scmp.ne.s32.totalorder %s271, %s274
      %p283 = scmp.eq.s32.totalorder %s30, 1
      %p284 = por %p282, %p283
      %p285 = scmp.ne.s32.totalorder %s274, %s275
      %p286 = scmp.eq.s32.totalorder %s30, 0
      %p287 = por %p285, %p286
      %p288 = scmp.ne.s32.totalorder %s274, %s275
      %p289 = scmp.eq.s32.totalorder %s31, 1
      %p290 = por %p288, %p289
      %p292 = scmp.ne.s32.totalorder %s275, %s291
      %p293 = scmp.eq.s32.totalorder %s31, 0
      %p294 = por %p292, %p293
      %p295 = scmp.le.s32.totalorder 1, %s25
      %p296 = scmp.lt.s32.totalorder %s25, 3
      %p297 = pnand %p295, %p296
      %p298 = pneg %p297
      // Predicated region
      $region9: #{tpu_custom_call.1} parent=5 // pred_check
        _
      $region10: #{tpu_custom_call.1} parent=5 // pred_check_branch
        %300 = sbr.rel (%p297) target = $region12
      $region11: #{tpu_custom_call.1} parent=5 // pred_region
        %s301 = ssub.s32 %s25, 1
        // Predicated region
        $region13: #{tpu_custom_call.1} parent=11 // pred_check
          %p302 = pneg %p72
        $region14: #{tpu_custom_call.1} parent=11 // pred_check_branch
          %304 = sbr.rel (%p302) target = $region16
        $region15: #{tpu_custom_call.1} parent=11 // pred_region
          _
        $region16: #{tpu_custom_call.1} parent=11 // pred_fallthru
          _
        // Predicated region
        $region17: #{tpu_custom_call.1} parent=11 // pred_check
          %p305 = pneg %p93
        $region18: #{tpu_custom_call.1} parent=11 // pred_check_branch
          %307 = sbr.rel (%p305) target = $region20
        $region19: #{tpu_custom_call.1} parent=11 // pred_region
          _
        $region20: #{tpu_custom_call.1} parent=11 // pred_fallthru
          _
        // Predicated region
        $region21: #{tpu_custom_call.1} parent=11 // pred_check
          %p308 = pneg %p114
        $region22: #{tpu_custom_call.1} parent=11 // pred_check_branch
          %310 = sbr.rel (%p308) target = $region24
        $region23: #{tpu_custom_call.1} parent=11 // pred_region
          %s312 = ssub.s32 18432, 18432
          %313 = vsyncadd [#allocation9], %s312
          %s314 = sshll.u32 [#allocation8], 4
          %s315 = int_to_ptr.vmem [resolvable:$true] %s314
          %320 = dma.hbm_to_vmem [thread:$0]  %s3, 18432, %s315, [#allocation9], 128, 128, 8
        $region24: #{tpu_custom_call.1} parent=11 // pred_fallthru
          _
        // Predicated region
        $region25: #{tpu_custom_call.1} parent=11 // pred_check
          %p321 = pneg %p135
        $region26: #{tpu_custom_call.1} parent=11 // pred_check_branch
          %323 = sbr.rel (%p321) target = $region28
        $region27: #{tpu_custom_call.1} parent=11 // pred_region
          _
        $region28: #{tpu_custom_call.1} parent=11 // pred_fallthru
          _
        // Predicated region
        $region29: #{tpu_custom_call.1} parent=11 // pred_check
          %p324 = pneg %p156
        $region30: #{tpu_custom_call.1} parent=11 // pred_check_branch
          %326 = sbr.rel (%p324) target = $region32
        $region31: #{tpu_custom_call.1} parent=11 // pred_region
          _
        $region32: #{tpu_custom_call.1} parent=11 // pred_fallthru
          _
        // Predicated region
        $region33: #{tpu_custom_call.1} parent=11 // pred_check
          %p327 = pneg %p177
        $region34: #{tpu_custom_call.1} parent=11 // pred_check_branch
          %329 = sbr.rel (%p327) target = $region36
        $region35: #{tpu_custom_call.1} parent=11 // pred_region
          _
        $region36: #{tpu_custom_call.1} parent=11 // pred_fallthru
          _
        // Predicated region
        $region37: #{tpu_custom_call.1} parent=11 // pred_check
          %p330 = pneg %p198
        $region38: #{tpu_custom_call.1} parent=11 // pred_check_branch
          %332 = sbr.rel (%p330) target = $region40
        $region39: #{tpu_custom_call.1} parent=11 // pred_region
          %s334 = ssub.s32 18432, 18432
          %335 = vsyncadd [#allocation9], %s334
          %s336 = sshll.u32 [#allocation10], 4
          %s337 = int_to_ptr.vmem [resolvable:$true] %s336
          %342 = dma.hbm_to_vmem [thread:$0]  %s7, 18432, %s337, [#allocation9], 128, 128, 8
        $region40: #{tpu_custom_call.1} parent=11 // pred_fallthru
          _
        // Predicated region
        $region41: #{tpu_custom_call.1} parent=11 // pred_check
          %p343 = pneg %p219
        $region42: #{tpu_custom_call.1} parent=11 // pred_check_branch
          %345 = sbr.rel (%p343) target = $region44
        $region43: #{tpu_custom_call.1} parent=11 // pred_region
          _
        $region44: #{tpu_custom_call.1} parent=11 // pred_fallthru
          _
        // Predicated region
        $region45: #{tpu_custom_call.1} parent=11 // pred_check
          %p346 = pneg %p240
        $region46: #{tpu_custom_call.1} parent=11 // pred_check_branch
          %348 = sbr.rel (%p346) target = $region48
        $region47: #{tpu_custom_call.1} parent=11 // pred_region
          %s350 = ssub.s32 2048, 2048
          %351 = vsyncadd [#allocation12], %s350
          %s352 = sshll.u32 [#allocation11], 4
          %s353 = int_to_ptr.vmem [resolvable:$true] %s352
          %358 = dma.hbm_to_vmem [thread:$0]  %s9, 2048, %s353, [#allocation12], 128, 128, 8
        $region48: #{tpu_custom_call.1} parent=11 // pred_fallthru
          _
        // Predicated region
        $region49: #{tpu_custom_call.1} parent=11 // pred_check
          %p359 = pneg %p261
        $region50: #{tpu_custom_call.1} parent=11 // pred_check_branch
          %361 = sbr.rel (%p359) target = $region52
        $region51: #{tpu_custom_call.1} parent=11 // pred_region
          _
        $region52: #{tpu_custom_call.1} parent=11 // pred_fallthru
          _
      $region12: #{tpu_custom_call.1} parent=5 // pred_fallthru
        _
      %p362 = scmp.lt.s32.totalorder %s25, 2
      // Predicated region
      $region53: #{tpu_custom_call.1} parent=5 // pred_check
        %p363 = pneg %p362
      $region54: #{tpu_custom_call.1} parent=5 // pred_check_branch
        %365 = sbr.rel (%p363) target = $region56
      $region55: #{tpu_custom_call.1} parent=5 // pred_region
        // Predicated region
        $region57: #{tpu_custom_call.1} parent=55 // pred_check
          %p366 = pneg %p45
        $region58: #{tpu_custom_call.1} parent=55 // pred_check_branch
          %368 = sbr.rel (%p366) target = $region60
        $region59: #{tpu_custom_call.1} parent=55 // pred_region
          %s369 = sand.u32 %s35, 1
          %s370 = scalar_lea.sflag [#allocation6], %s369
          %s371 = sand.u32 %s35, 1
          %s372 = smul.addr %s371, 256
          %s373 = scalar_lea.vmem [#allocation5], %s372
          %s375 = ssub.s32 4096, 4096
          %376 = vsyncadd %s370, %s375
          %s377 = smul.addr %s25, 32
          %s378 = smul.addr %s377, 128
          %s379 = scalar_lea.hbm %s0, %s378
          %s380 = sshll.u32 %s373, 4
          %s381 = int_to_ptr.vmem [resolvable:$true] %s380
          %386 = dma.hbm_to_vmem [thread:$0]  %s379, 4096, %s381, %s370, 128, 128, 8
        $region60: #{tpu_custom_call.1} parent=55 // pred_fallthru
          _
      $region56: #{tpu_custom_call.1} parent=5 // pred_fallthru
        _
      %p387 = scmp.le.s32.totalorder 1, %s25
      %p388 = scmp.lt.s32.totalorder %s25, 3
      %p389 = pnand %p387, %p388
      %p390 = pneg %p389
      // Predicated region
      $region61: #{tpu_custom_call.1} parent=5 // pred_check
        _
      $region62: #{tpu_custom_call.1} parent=5 // pred_check_branch
        %392 = sbr.rel (%p389) target = $region64
      $region63: #{tpu_custom_call.1} parent=5 // pred_region
        %s393 = ssub.s32 %s25, 1
        %s394 = sand.u32 %s38, 1
        %s395 = scalar_lea.sflag [#allocation6], %s394
        %s396 = sand.u32 %s38, 1
        %s397 = smul.addr %s396, 256
        %s398 = scalar_lea.vmem [#allocation5], %s397
        // Predicated region
        $region65: #{tpu_custom_call.1} parent=63 // pred_check
          %p399 = pneg %p51
        $region66: #{tpu_custom_call.1} parent=63 // pred_check_branch
          %401 = sbr.rel (%p399) target = $region68
        $region67: #{tpu_custom_call.1} parent=63 // pred_region
          %402 = dma.done %s395, 4096
        $region68: #{tpu_custom_call.1} parent=63 // pred_fallthru
          _
        // Predicated region
        $region69: #{tpu_custom_call.1} parent=63 // pred_check
          %p403 = pneg %p114
        $region70: #{tpu_custom_call.1} parent=63 // pred_check_branch
          %405 = sbr.rel (%p403) target = $region72
        $region71: #{tpu_custom_call.1} parent=63 // pred_region
          %406 = dma.done [#allocation9], 18432
        $region72: #{tpu_custom_call.1} parent=63 // pred_fallthru
          _
        // Predicated region
        $region73: #{tpu_custom_call.1} parent=63 // pred_check
          %p407 = pneg %p198
        $region74: #{tpu_custom_call.1} parent=63 // pred_check_branch
          %409 = sbr.rel (%p407) target = $region76
        $region75: #{tpu_custom_call.1} parent=63 // pred_region
          %410 = dma.done [#allocation9], 18432
        $region76: #{tpu_custom_call.1} parent=63 // pred_fallthru
          _
        // Predicated region
        $region77: #{tpu_custom_call.1} parent=63 // pred_check
          %p411 = pneg %p240
        $region78: #{tpu_custom_call.1} parent=63 // pred_check_branch
          %413 = sbr.rel (%p411) target = $region80
        $region79: #{tpu_custom_call.1} parent=63 // pred_region
          %414 = dma.done [#allocation12], 2048
        $region80: #{tpu_custom_call.1} parent=63 // pred_fallthru
          _
        %s415 = sand.u32 %s38, 1
        %s416 = scalar_lea.sflag [#allocation6], %s415
        %s417 = sand.u32 %s38, 1
        %s418 = smul.addr %s417, 256
        %s419 = scalar_lea.vmem [#allocation5], %s418
        %p420 = pneg %p51
        %p421 = pneg %p48
        %p422 = pneg %p72
        %p423 = pneg %p69
        %p424 = pneg %p93
        %p425 = pneg %p90
        %p426 = pneg %p114
        %p427 = pneg %p111
        %p428 = pneg %p135
        %p429 = pneg %p132
        %p430 = pneg %p156
        %p431 = pneg %p153
        %p432 = pneg %p177
        %p433 = pneg %p174
        %p434 = pneg %p198
        %p435 = pneg %p195
        %p436 = pneg %p219
        %p437 = pneg %p216
        %p438 = pneg %p240
        %p439 = pneg %p237
        %p440 = pneg %p261
        %p441 = pneg %p258
        %p442 = pneg %p287
        %p443 = pneg %p284
        %s444 = sand.u32 %s274, 1
        %s445 = scalar_lea.sflag [#allocation7], %s444
        %s446 = sand.u32 %s274, 1
        %s447 = smul.addr %s446, 256
        %s448 = scalar_lea.vmem [#allocation13], %s447
        %v449 = vld [vmem:[%s398] sm:$0xff]
        %v450 = vld [vmem:[%s398 + $0x8] sm:$0xff]
        %v451 = vld [vmem:[%s398 + $0x10] sm:$0xff]
        %v452 = vld [vmem:[%s398 + $0x18] sm:$0xff]
        %v453 = vld [vmem:[%s398 + $0x20] sm:$0xff]
        %v454 = vld [vmem:[%s398 + $0x28] sm:$0xff]
        %v455 = vld [vmem:[%s398 + $0x30] sm:$0xff]
        %v456 = vld [vmem:[%s398 + $0x38] sm:$0xff]
        %v457 = vld [vmem:[%s398 + $0x40] sm:$0xff]
        %v458 = vld [vmem:[%s398 + $0x48] sm:$0xff]
        %v459 = vld [vmem:[%s398 + $0x50] sm:$0xff]
        %v460 = vld [vmem:[%s398 + $0x58] sm:$0xff]
        %v461 = vld [vmem:[%s398 + $0x60] sm:$0xff]
        %v462 = vld [vmem:[%s398 + $0x68] sm:$0xff]
        %v463 = vld [vmem:[%s398 + $0x70] sm:$0xff]
        %v464 = vld [vmem:[%s398 + $0x78] sm:$0xff]
        %v465 = vld [vmem:[%s398 + $0x80] sm:$0xff]
        %v466 = vld [vmem:[%s398 + $0x88] sm:$0xff]
        %v467 = vld [vmem:[%s398 + $0x90] sm:$0xff]
        %v468 = vld [vmem:[%s398 + $0x98] sm:$0xff]
        %v469 = vld [vmem:[%s398 + $0xa0] sm:$0xff]
        %v470 = vld [vmem:[%s398 + $0xa8] sm:$0xff]
        %v471 = vld [vmem:[%s398 + $0xb0] sm:$0xff]
        %v472 = vld [vmem:[%s398 + $0xb8] sm:$0xff]
        %v473 = vld [vmem:[%s398 + $0xc0] sm:$0xff]
        %v474 = vld [vmem:[%s398 + $0xc8] sm:$0xff]
        %v475 = vld [vmem:[%s398 + $0xd0] sm:$0xff]
        %v476 = vld [vmem:[%s398 + $0xd8] sm:$0xff]
        %v477 = vld [vmem:[%s398 + $0xe0] sm:$0xff]
        %v478 = vld [vmem:[%s398 + $0xe8] sm:$0xff]
        %v479 = vld [vmem:[%s398 + $0xf0] sm:$0xff]
        %v480 = vld [vmem:[%s398 + $0xf8] sm:$0xff]
        %v481 = vld [vmem:[%s1] sm:$0x1]
        %v482 = vld [vmem:[%s2] sm:$0x1]
        %v483 = vadd.f32 %v449, %v450
        %v484 = vadd.f32 %v483, %v451
        %v485 = vadd.f32 %v484, %v452
        %v486 = vadd.f32 %v485, %v453
        %v487 = vadd.f32 %v486, %v454
        %v488 = vadd.f32 %v487, %v455
        %v489 = vadd.f32 %v488, %v456
        %v490 = vadd.f32 %v489, %v457
        %v491 = vadd.f32 %v490, %v458
        %v492 = vadd.f32 %v491, %v459
        %v493 = vadd.f32 %v492, %v460
        %v494 = vadd.f32 %v493, %v461
        %v495 = vadd.f32 %v494, %v462
        %v496 = vadd.f32 %v495, %v463
        %v497 = vadd.f32 %v496, %v464
        %v498 = vadd.f32 %v497, %v465
        %v499 = vadd.f32 %v498, %v466
        %v500 = vadd.f32 %v499, %v467
        %v501 = vadd.f32 %v500, %v468
        %v502 = vadd.f32 %v501, %v469
        %v503 = vadd.f32 %v502, %v470
        %v504 = vadd.f32 %v503, %v471
        %v505 = vadd.f32 %v504, %v472
        %v506 = vadd.f32 %v505, %v473
        %v507 = vadd.f32 %v506, %v474
        %v508 = vadd.f32 %v507, %v475
        %v509 = vadd.f32 %v508, %v476
        %v510 = vadd.f32 %v509, %v477
        %v511 = vadd.f32 %v510, %v478
        %v512 = vadd.f32 %v511, %v479
        %v513 = vadd.f32 %v512, %v480
        %514 = vadd.xlane.f32.xlu0 %v513
        %v515 = vpop.xlane.xlu0 %514
        %v516 = vrot.slane %v515, 4
        %v517 = vadd.f32 %v515, %v516
        %v518 = vrot.slane %v517, 2
        %v519 = vadd.f32 %v517, %v518
        %v520 = vrot.slane %v519, 1
        %v521 = vadd.f32 %v519, %v520
        %s522 = vtos %v521
        %v523 = vrcp.pop 1024.0
        %s524 = vtos %v523
        %s525 = smul.f32 %s522, %s524
        %v526 = vstv %s525
        %v527 = vsub.f32 %v449, %v526
        %v528 = vsub.f32 %v450, %v526
        %v529 = vsub.f32 %v451, %v526
        %v530 = vsub.f32 %v452, %v526
        %v531 = vsub.f32 %v453, %v526
        %v532 = vsub.f32 %v454, %v526
        %v533 = vsub.f32 %v455, %v526
        %v534 = vsub.f32 %v456, %v526
        %v535 = vsub.f32 %v457, %v526
        %v536 = vsub.f32 %v458, %v526
        %v537 = vsub.f32 %v459, %v526
        %v538 = vsub.f32 %v460, %v526
        %v539 = vsub.f32 %v461, %v526
        %v540 = vsub.f32 %v462, %v526
        %v541 = vsub.f32 %v463, %v526
        %v542 = vsub.f32 %v464, %v526
        %v543 = vsub.f32 %v465, %v526
        %v544 = vsub.f32 %v466, %v526
        %v545 = vsub.f32 %v467, %v526
        %v546 = vsub.f32 %v468, %v526
        %v547 = vsub.f32 %v469, %v526
        %v548 = vsub.f32 %v470, %v526
        %v549 = vsub.f32 %v471, %v526
        %v550 = vsub.f32 %v472, %v526
        %v551 = vsub.f32 %v473, %v526
        %v552 = vsub.f32 %v474, %v526
        %v553 = vsub.f32 %v475, %v526
        %v554 = vsub.f32 %v476, %v526
        %v555 = vsub.f32 %v477, %v526
        %v556 = vsub.f32 %v478, %v526
        %v557 = vsub.f32 %v479, %v526
        %v558 = vsub.f32 %v480, %v526
        %v559 = vmul.f32 %v527, %v527
        %v560 = vmul.f32 %v528, %v528
        %v561 = vmul.f32 %v529, %v529
        %v562 = vmul.f32 %v530, %v530
        %v563 = vmul.f32 %v531, %v531
        %v564 = vmul.f32 %v532, %v532
        %v565 = vmul.f32 %v533, %v533
        %v566 = vmul.f32 %v534, %v534
        %v567 = vmul.f32 %v535, %v535
        %v568 = vmul.f32 %v536, %v536
        %v569 = vmul.f32 %v537, %v537
        %v570 = vmul.f32 %v538, %v538
        %v571 = vmul.f32 %v539, %v539
        %v572 = vmul.f32 %v540, %v540
        %v573 = vmul.f32 %v541, %v541
        %v574 = vmul.f32 %v542, %v542
        %v575 = vmul.f32 %v543, %v543
        %v576 = vmul.f32 %v544, %v544
        %v577 = vmul.f32 %v545, %v545
        %v578 = vmul.f32 %v546, %v546
        %v579 = vmul.f32 %v547, %v547
        %v580 = vmul.f32 %v548, %v548
        %v581 = vmul.f32 %v549, %v549
        %v582 = vmul.f32 %v550, %v550
        %v583 = vmul.f32 %v551, %v551
        %v584 = vmul.f32 %v552, %v552
        %v585 = vmul.f32 %v553, %v553
        %v586 = vmul.f32 %v554, %v554
        %v587 = vmul.f32 %v555, %v555
        %v588 = vmul.f32 %v556, %v556
        %v589 = vmul.f32 %v557, %v557
        %v590 = vmul.f32 %v558, %v558
        %v591 = vadd.f32 %v559, %v560
        %v592 = vadd.f32 %v591, %v561
        %v593 = vadd.f32 %v592, %v562
        %v594 = vadd.f32 %v593, %v563
        %v595 = vadd.f32 %v594, %v564
        %v596 = vadd.f32 %v595, %v565
        %v597 = vadd.f32 %v596, %v566
        %v598 = vadd.f32 %v597, %v567
        %v599 = vadd.f32 %v598, %v568
        %v600 = vadd.f32 %v599, %v569
        %v601 = vadd.f32 %v600, %v570
        %v602 = vadd.f32 %v601, %v571
        %v603 = vadd.f32 %v602, %v572
        %v604 = vadd.f32 %v603, %v573
        %v605 = vadd.f32 %v604, %v574
        %v606 = vadd.f32 %v605, %v575
        %v607 = vadd.f32 %v606, %v576
        %v608 = vadd.f32 %v607, %v577
        %v609 = vadd.f32 %v608, %v578
        %v610 = vadd.f32 %v609, %v579
        %v611 = vadd.f32 %v610, %v580
        %v612 = vadd.f32 %v611, %v581
        %v613 = vadd.f32 %v612, %v582
        %v614 = vadd.f32 %v613, %v583
        %v615 = vadd.f32 %v614, %v584
        %v616 = vadd.f32 %v615, %v585
        %v617 = vadd.f32 %v616, %v586
        %v618 = vadd.f32 %v617, %v587
        %v619 = vadd.f32 %v618, %v588
        %v620 = vadd.f32 %v619, %v589
        %v621 = vadd.f32 %v620, %v590
        %622 = vadd.xlane.f32.xlu0 %v621
        %v623 = vpop.xlane.xlu0 %622
        %v624 = vrot.slane %v623, 4
        %v625 = vadd.f32 %v623, %v624
        %v626 = vrot.slane %v625, 2
        %v627 = vadd.f32 %v625, %v626
        %v628 = vrot.slane %v627, 1
        %v629 = vadd.f32 %v627, %v628
        %s630 = vtos %v629
        %s631 = smul.f32 %s525, 31744.0
        %s632 = smul.f32 %s631, %s525
        %s633 = ssub.f32 %s630, %s632
        %v634 = vrcp.pop 1024.0
        %s635 = vtos %v634
        %s636 = smul.f32 %s633, %s635
        %s637 = sadd.f32 %s636, 1e-05
        %v638 = vstv %s637
        %v639 = vrsqrt.pop %v638
        %s640 = vtos %v639
        %v641 = vstv %s640
        %v642 = vmul.f32 %v527, %v641
        %v643 = vmul.f32 %v528, %v641
        %v644 = vmul.f32 %v529, %v641
        %v645 = vmul.f32 %v530, %v641
        %v646 = vmul.f32 %v531, %v641
        %v647 = vmul.f32 %v532, %v641
        %v648 = vmul.f32 %v533, %v641
        %v649 = vmul.f32 %v534, %v641
        %v650 = vmul.f32 %v535, %v641
        %v651 = vmul.f32 %v536, %v641
        %v652 = vmul.f32 %v537, %v641
        %v653 = vmul.f32 %v538, %v641
        %v654 = vmul.f32 %v539, %v641
        %v655 = vmul.f32 %v540, %v641
        %v656 = vmul.f32 %v541, %v641
        %v657 = vmul.f32 %v542, %v641
        %v658 = vmul.f32 %v543, %v641
        %v659 = vmul.f32 %v544, %v641
        %v660 = vmul.f32 %v545, %v641
        %v661 = vmul.f32 %v546, %v641
        %v662 = vmul.f32 %v547, %v641
        %v663 = vmul.f32 %v548, %v641
        %v664 = vmul.f32 %v549, %v641
        %v665 = vmul.f32 %v550, %v641
        %v666 = vmul.f32 %v551, %v641
        %v667 = vmul.f32 %v552, %v641
        %v668 = vmul.f32 %v553, %v641
        %v669 = vmul.f32 %v554, %v641
        %v670 = vmul.f32 %v555, %v641
        %v671 = vmul.f32 %v556, %v641
        %v672 = vmul.f32 %v557, %v641
        %v673 = vmul.f32 %v558, %v641
        %v675 = vlaneseq
        %v676 = vshrl.u32 %v675, 7
        %v677 = vsub.s32 0, %v676
        %v678 = vrot.slane %v481, %v677
        %v680 = vmul.f32 %v642, %v678
        %v681 = vmul.f32 %v643, %v678
        %v682 = vmul.f32 %v644, %v678
        %v683 = vmul.f32 %v645, %v678
        %v684 = vmul.f32 %v646, %v678
        %v685 = vmul.f32 %v647, %v678
        %v686 = vmul.f32 %v648, %v678
        %v687 = vmul.f32 %v649, %v678
        %v688 = vmul.f32 %v650, %v678
        %v689 = vmul.f32 %v651, %v678
        %v690 = vmul.f32 %v652, %v678
        %v691 = vmul.f32 %v653, %v678
        %v692 = vmul.f32 %v654, %v678
        %v693 = vmul.f32 %v655, %v678
        %v694 = vmul.f32 %v656, %v678
        %v695 = vmul.f32 %v657, %v678
        %v696 = vmul.f32 %v658, %v678
        %v697 = vmul.f32 %v659, %v678
        %v698 = vmul.f32 %v660, %v678
        %v699 = vmul.f32 %v661, %v678
        %v700 = vmul.f32 %v662, %v678
        %v701 = vmul.f32 %v663, %v678
        %v702 = vmul.f32 %v664, %v678
        %v703 = vmul.f32 %v665, %v678
        %v704 = vmul.f32 %v666, %v678
        %v705 = vmul.f32 %v667, %v678
        %v706 = vmul.f32 %v668, %v678
        %v707 = vmul.f32 %v669, %v678
        %v708 = vmul.f32 %v670, %v678
        %v709 = vmul.f32 %v671, %v678
        %v710 = vmul.f32 %v672, %v678
        %v711 = vmul.f32 %v673, %v678
        %v713 = vlaneseq
        %v714 = vshrl.u32 %v713, 7
        %v715 = vsub.s32 0, %v714
        %v716 = vrot.slane %v482, %v715
        %v718 = vadd.f32 %v680, %v716
        %v719 = vadd.f32 %v681, %v716
        %v720 = vadd.f32 %v682, %v716
        %v721 = vadd.f32 %v683, %v716
        %v722 = vadd.f32 %v684, %v716
        %v723 = vadd.f32 %v685, %v716
        %v724 = vadd.f32 %v686, %v716
        %v725 = vadd.f32 %v687, %v716
        %v726 = vadd.f32 %v688, %v716
        %v727 = vadd.f32 %v689, %v716
        %v728 = vadd.f32 %v690, %v716
        %v729 = vadd.f32 %v691, %v716
        %v730 = vadd.f32 %v692, %v716
        %v731 = vadd.f32 %v693, %v716
        %v732 = vadd.f32 %v694, %v716
        %v733 = vadd.f32 %v695, %v716
        %v734 = vadd.f32 %v696, %v716
        %v735 = vadd.f32 %v697, %v716
        %v736 = vadd.f32 %v698, %v716
        %v737 = vadd.f32 %v699, %v716
        %v738 = vadd.f32 %v700, %v716
        %v739 = vadd.f32 %v701, %v716
        %v740 = vadd.f32 %v702, %v716
        %v741 = vadd.f32 %v703, %v716
        %v742 = vadd.f32 %v704, %v716
        %v743 = vadd.f32 %v705, %v716
        %v744 = vadd.f32 %v706, %v716
        %v745 = vadd.f32 %v707, %v716
        %v746 = vadd.f32 %v708, %v716
        %v747 = vadd.f32 %v709, %v716
        %v748 = vadd.f32 %v710, %v716
        %v749 = vadd.f32 %v711, %v716
        %750 = vst [vmem:[#allocation2] sm:$0xff] 0.0
        %751 = vst [vmem:[#allocation2 + $0x8] sm:$0xff] 0.0
        %752 = vst [vmem:[#allocation2 + $0x10] sm:$0x3] 0.0
        %s753 = scalar_lea.vmem [#allocation2], 408
        %754 = vst [vmem:[%s753] sm:$0xff] 0.0
        %755 = vst [vmem:[%s753 + $0x8] sm:$0xff] 0.0
        %756 = vst [vmem:[%s753 + $0x10] sm:$0x3] 0.0
        %757 = vst [vmem:[#allocation2] sm:$0x1] 0.0
        %758 = vst [vmem:[#allocation2 + $0x18] sm:$0x1] 0.0
        %759 = vst [vmem:[#allocation2 + $0x30] sm:$0x1] 0.0
        %760 = vst [vmem:[#allocation2 + $0x48] sm:$0x1] 0.0
        %761 = vst [vmem:[#allocation2 + $0x60] sm:$0x1] 0.0
        %762 = vst [vmem:[#allocation2 + $0x78] sm:$0x1] 0.0
        %763 = vst [vmem:[#allocation2 + $0x90] sm:$0x1] 0.0
        %764 = vst [vmem:[#allocation2 + $0xa8] sm:$0x1] 0.0
        %765 = vst [vmem:[#allocation2 + $0xc0] sm:$0x1] 0.0
        %766 = vst [vmem:[#allocation2 + $0xd8] sm:$0x1] 0.0
        %767 = vst [vmem:[#allocation2 + $0xf0] sm:$0x1] 0.0
        %768 = vst [vmem:[#allocation2 + $0x108] sm:$0x1] 0.0
        %769 = vst [vmem:[#allocation2 + $0x120] sm:$0x1] 0.0
        %770 = vst [vmem:[#allocation2 + $0x138] sm:$0x1] 0.0
        %771 = vst [vmem:[#allocation2 + $0x150] sm:$0x1] 0.0
        %772 = vst [vmem:[#allocation2 + $0x168] sm:$0x1] 0.0
        %773 = vst [vmem:[#allocation2 + $0x180] sm:$0x1] 0.0
        %774 = vst [vmem:[#allocation2 + $0x198] sm:$0x1] 0.0
        %775 = vst [vmem:[#allocation2 + $0x11] sm:$0x1] 0.0
        %776 = vst [vmem:[#allocation2 + $0x29] sm:$0x1] 0.0
        %777 = vst [vmem:[#allocation2 + $0x41] sm:$0x1] 0.0
        %778 = vst [vmem:[#allocation2 + $0x59] sm:$0x1] 0.0
        %779 = vst [vmem:[#allocation2 + $0x71] sm:$0x1] 0.0
        %780 = vst [vmem:[#allocation2 + $0x89] sm:$0x1] 0.0
        %781 = vst [vmem:[#allocation2 + $0xa1] sm:$0x1] 0.0
        %782 = vst [vmem:[#allocation2 + $0xb9] sm:$0x1] 0.0
        %783 = vst [vmem:[#allocation2 + $0xd1] sm:$0x1] 0.0
        %784 = vst [vmem:[#allocation2 + $0xe9] sm:$0x1] 0.0
        %785 = vst [vmem:[#allocation2 + $0x101] sm:$0x1] 0.0
        %786 = vst [vmem:[#allocation2 + $0x119] sm:$0x1] 0.0
        %787 = vst [vmem:[#allocation2 + $0x131] sm:$0x1] 0.0
        %788 = vst [vmem:[#allocation2 + $0x149] sm:$0x1] 0.0
        %789 = vst [vmem:[#allocation2 + $0x161] sm:$0x1] 0.0
        %790 = vst [vmem:[#allocation2 + $0x179] sm:$0x1] 0.0
        %791 = vst [vmem:[#allocation2 + $0x191] sm:$0x1] 0.0
        %792 = vst [vmem:[#allocation2 + $0x1a9] sm:$0x1] 0.0
        %793 = vst [vmem:[#allocation3] sm:$0xff] 0.0
        %794 = vst [vmem:[#allocation3 + $0x8] sm:$0xff] 0.0
        %795 = vst [vmem:[#allocation3 + $0x10] sm:$0x3] 0.0
        %s796 = scalar_lea.vmem [#allocation3], 408
        %797 = vst [vmem:[%s796] sm:$0xff] 0.0
        %798 = vst [vmem:[%s796 + $0x8] sm:$0xff] 0.0
        %799 = vst [vmem:[%s796 + $0x10] sm:$0x3] 0.0
        %800 = vst [vmem:[#allocation3] sm:$0x1] 0.0
        %801 = vst [vmem:[#allocation3 + $0x18] sm:$0x1] 0.0
        %802 = vst [vmem:[#allocation3 + $0x30] sm:$0x1] 0.0
        %803 = vst [vmem:[#allocation3 + $0x48] sm:$0x1] 0.0
        %804 = vst [vmem:[#allocation3 + $0x60] sm:$0x1] 0.0
        %805 = vst [vmem:[#allocation3 + $0x78] sm:$0x1] 0.0
        %806 = vst [vmem:[#allocation3 + $0x90] sm:$0x1] 0.0
        %807 = vst [vmem:[#allocation3 + $0xa8] sm:$0x1] 0.0
        %808 = vst [vmem:[#allocation3 + $0xc0] sm:$0x1] 0.0
        %809 = vst [vmem:[#allocation3 + $0xd8] sm:$0x1] 0.0
        %810 = vst [vmem:[#allocation3 + $0xf0] sm:$0x1] 0.0
        %811 = vst [vmem:[#allocation3 + $0x108] sm:$0x1] 0.0
        %812 = vst [vmem:[#allocation3 + $0x120] sm:$0x1] 0.0
        %813 = vst [vmem:[#allocation3 + $0x138] sm:$0x1] 0.0
        %814 = vst [vmem:[#allocation3 + $0x150] sm:$0x1] 0.0
        %815 = vst [vmem:[#allocation3 + $0x168] sm:$0x1] 0.0
        %816 = vst [vmem:[#allocation3 + $0x180] sm:$0x1] 0.0
        %817 = vst [vmem:[#allocation3 + $0x198] sm:$0x1] 0.0
        %818 = vst [vmem:[#allocation3 + $0x11] sm:$0x1] 0.0
        %819 = vst [vmem:[#allocation3 + $0x29] sm:$0x1] 0.0
        %820 = vst [vmem:[#allocation3 + $0x41] sm:$0x1] 0.0
        %821 = vst [vmem:[#allocation3 + $0x59] sm:$0x1] 0.0
        %822 = vst [vmem:[#allocation3 + $0x71] sm:$0x1] 0.0
        %823 = vst [vmem:[#allocation3 + $0x89] sm:$0x1] 0.0
        %824 = vst [vmem:[#allocation3 + $0xa1] sm:$0x1] 0.0
        %825 = vst [vmem:[#allocation3 + $0xb9] sm:$0x1] 0.0
        %826 = vst [vmem:[#allocation3 + $0xd1] sm:$0x1] 0.0
        %827 = vst [vmem:[#allocation3 + $0xe9] sm:$0x1] 0.0
        %828 = vst [vmem:[#allocation3 + $0x101] sm:$0x1] 0.0
        %829 = vst [vmem:[#allocation3 + $0x119] sm:$0x1] 0.0
        %830 = vst [vmem:[#allocation3 + $0x131] sm:$0x1] 0.0
        %831 = vst [vmem:[#allocation3 + $0x149] sm:$0x1] 0.0
        %832 = vst [vmem:[#allocation3 + $0x161] sm:$0x1] 0.0
        %833 = vst [vmem:[#allocation3 + $0x179] sm:$0x1] 0.0
        %834 = vst [vmem:[#allocation3 + $0x191] sm:$0x1] 0.0
        %835 = vst [vmem:[#allocation3 + $0x1a9] sm:$0x1] 0.0
        %s836 = scalar_lea.vmem [#allocation2], 24
        %837 = vst [vmem:[%s836 + $0x1] sm:$0xff] %v718
        %838 = vst [vmem:[%s836 + $0x9] sm:$0xff] %v719
        %839 = vst [vmem:[%s836 + $0x19] sm:$0xff] %v720
        %840 = vst [vmem:[%s836 + $0x21] sm:$0xff] %v721
        %841 = vst [vmem:[%s836 + $0x31] sm:$0xff] %v722
        %842 = vst [vmem:[%s836 + $0x39] sm:$0xff] %v723
        %843 = vst [vmem:[%s836 + $0x49] sm:$0xff] %v724
        %844 = vst [vmem:[%s836 + $0x51] sm:$0xff] %v725
        %845 = vst [vmem:[%s836 + $0x61] sm:$0xff] %v726
        %846 = vst [vmem:[%s836 + $0x69] sm:$0xff] %v727
        %847 = vst [vmem:[%s836 + $0x79] sm:$0xff] %v728
        %848 = vst [vmem:[%s836 + $0x81] sm:$0xff] %v729
        %849 = vst [vmem:[%s836 + $0x91] sm:$0xff] %v730
        %850 = vst [vmem:[%s836 + $0x99] sm:$0xff] %v731
        %851 = vst [vmem:[%s836 + $0xa9] sm:$0xff] %v732
        %852 = vst [vmem:[%s836 + $0xb1] sm:$0xff] %v733
        %853 = vst [vmem:[%s836 + $0xc1] sm:$0xff] %v734
        %854 = vst [vmem:[%s836 + $0xc9] sm:$0xff] %v735
        %855 = vst [vmem:[%s836 + $0xd9] sm:$0xff] %v736
        %856 = vst [vmem:[%s836 + $0xe1] sm:$0xff] %v737
        %857 = vst [vmem:[%s836 + $0xf1] sm:$0xff] %v738
        %858 = vst [vmem:[%s836 + $0xf9] sm:$0xff] %v739
        %859 = vst [vmem:[%s836 + $0x109] sm:$0xff] %v740
        %860 = vst [vmem:[%s836 + $0x111] sm:$0xff] %v741
        %861 = vst [vmem:[%s836 + $0x121] sm:$0xff] %v742
        %862 = vst [vmem:[%s836 + $0x129] sm:$0xff] %v743
        %863 = vst [vmem:[%s836 + $0x139] sm:$0xff] %v744
        %864 = vst [vmem:[%s836 + $0x141] sm:$0xff] %v745
        %865 = vst [vmem:[%s836 + $0x151] sm:$0xff] %v746
        %866 = vst [vmem:[%s836 + $0x159] sm:$0xff] %v747
        %867 = vst [vmem:[%s836 + $0x169] sm:$0xff] %v748
        %868 = vst [vmem:[%s836 + $0x171] sm:$0xff] %v749
        %v869 = vld [vmem:[%s4] sm:$0x1]
        %v871 = vlaneseq
        %v872 = vshrl.u32 %v871, 7
        %v873 = vsub.s32 0, %v872
        %v874 = vrot.slane %v869, %v873
        %876 = vst [vmem:[#allocation4] sm:$0xff] %v874
        %877 = vst [vmem:[#allocation4 + $0x8] sm:$0xff] %v874
        %878 = vst [vmem:[#allocation4 + $0x10] sm:$0xff] %v874
        %879 = vst [vmem:[#allocation4 + $0x18] sm:$0xff] %v874
        %880 = vst [vmem:[#allocation4 + $0x20] sm:$0xff] %v874
        %881 = vst [vmem:[#allocation4 + $0x28] sm:$0xff] %v874
        %882 = vst [vmem:[#allocation4 + $0x30] sm:$0xff] %v874
        %883 = vst [vmem:[#allocation4 + $0x38] sm:$0xff] %v874
        %884 = vst [vmem:[#allocation4 + $0x40] sm:$0xff] %v874
        %885 = vst [vmem:[#allocation4 + $0x48] sm:$0xff] %v874
        %886 = vst [vmem:[#allocation4 + $0x50] sm:$0xff] %v874
        %887 = vst [vmem:[#allocation4 + $0x58] sm:$0xff] %v874
        %888 = vst [vmem:[#allocation4 + $0x60] sm:$0xff] %v874
        %889 = vst [vmem:[#allocation4 + $0x68] sm:$0xff] %v874
        %890 = vst [vmem:[#allocation4 + $0x70] sm:$0xff] %v874
        %891 = vst [vmem:[#allocation4 + $0x78] sm:$0xff] %v874
        %892 = vst [vmem:[#allocation4 + $0x80] sm:$0xff] %v874
        %893 = vst [vmem:[#allocation4 + $0x88] sm:$0xff] %v874
        %894 = vst [vmem:[#allocation4 + $0x90] sm:$0xff] %v874
        %895 = vst [vmem:[#allocation4 + $0x98] sm:$0xff] %v874
        %896 = vst [vmem:[#allocation4 + $0xa0] sm:$0xff] %v874
        %897 = vst [vmem:[#allocation4 + $0xa8] sm:$0xff] %v874
        %898 = vst [vmem:[#allocation4 + $0xb0] sm:$0xff] %v874
        %899 = vst [vmem:[#allocation4 + $0xb8] sm:$0xff] %v874
        %900 = vst [vmem:[#allocation4 + $0xc0] sm:$0xff] %v874
        %901 = vst [vmem:[#allocation4 + $0xc8] sm:$0xff] %v874
        %902 = vst [vmem:[#allocation4 + $0xd0] sm:$0xff] %v874
        %903 = vst [vmem:[#allocation4 + $0xd8] sm:$0xff] %v874
        %904 = vst [vmem:[#allocation4 + $0xe0] sm:$0xff] %v874
        %905 = vst [vmem:[#allocation4 + $0xe8] sm:$0xff] %v874
        %906 = vst [vmem:[#allocation4 + $0xf0] sm:$0xff] %v874
        %907 = vst [vmem:[#allocation4 + $0xf8] sm:$0xff] %v874
        %v908 = vld [vmem:[#allocation2] sm:$0xff]
        %v909 = vld [vmem:[#allocation2 + $0x8] sm:$0xff]
        %v910 = vld [vmem:[#allocation2 + $0x18] sm:$0xff]
        %v911 = vld [vmem:[#allocation2 + $0x20] sm:$0xff]
        %v912 = vld [vmem:[#allocation2 + $0x30] sm:$0xff]
        %v913 = vld [vmem:[#allocation2 + $0x38] sm:$0xff]
        %v914 = vld [vmem:[#allocation2 + $0x48] sm:$0xff]
        %v915 = vld [vmem:[#allocation2 + $0x50] sm:$0xff]
        %v916 = vld [vmem:[#allocation2 + $0x60] sm:$0xff]
        %v917 = vld [vmem:[#allocation2 + $0x68] sm:$0xff]
        %v918 = vld [vmem:[#allocation2 + $0x78] sm:$0xff]
        %v919 = vld [vmem:[#allocation2 + $0x80] sm:$0xff]
        %v920 = vld [vmem:[#allocation2 + $0x90] sm:$0xff]
        %v921 = vld [vmem:[#allocation2 + $0x98] sm:$0xff]
        %v922 = vld [vmem:[#allocation2 + $0xa8] sm:$0xff]
        %v923 = vld [vmem:[#allocation2 + $0xb0] sm:$0xff]
        %v924 = vld [vmem:[#allocation2 + $0xc0] sm:$0xff]
        %v925 = vld [vmem:[#allocation2 + $0xc8] sm:$0xff]
        %v926 = vld [vmem:[#allocation2 + $0xd8] sm:$0xff]
        %v927 = vld [vmem:[#allocation2 + $0xe0] sm:$0xff]
        %v928 = vld [vmem:[#allocation2 + $0xf0] sm:$0xff]
        %v929 = vld [vmem:[#allocation2 + $0xf8] sm:$0xff]
        %v930 = vld [vmem:[#allocation2 + $0x108] sm:$0xff]
        %v931 = vld [vmem:[#allocation2 + $0x110] sm:$0xff]
        %v932 = vld [vmem:[#allocation2 + $0x120] sm:$0xff]
        %v933 = vld [vmem:[#allocation2 + $0x128] sm:$0xff]
        %v934 = vld [vmem:[#allocation2 + $0x138] sm:$0xff]
        %v935 = vld [vmem:[#allocation2 + $0x140] sm:$0xff]
        %v936 = vld [vmem:[#allocation2 + $0x150] sm:$0xff]
        %v937 = vld [vmem:[#allocation2 + $0x158] sm:$0xff]
        %v938 = vld [vmem:[#allocation2 + $0x168] sm:$0xff]
        %v939 = vld [vmem:[#allocation2 + $0x170] sm:$0xff]
        %v940 = vld [vmem:[#allocation2 + $0x180] sm:$0xff]
        %v941 = vld [vmem:[#allocation2 + $0x188] sm:$0xff]
        %v942 = vld [vmem:[#allocation2 + $0x198] sm:$0xff]
        %v943 = vld [vmem:[#allocation2 + $0x1a0] sm:$0xff]
        %v944 = vld [vmem:[#allocation4] sm:$0xff]
        %v945 = vld [vmem:[#allocation4 + $0x8] sm:$0xff]
        %v946 = vld [vmem:[#allocation4 + $0x10] sm:$0xff]
        %v947 = vld [vmem:[#allocation4 + $0x18] sm:$0xff]
        %v948 = vld [vmem:[#allocation4 + $0x20] sm:$0xff]
        %v949 = vld [vmem:[#allocation4 + $0x28] sm:$0xff]
        %v950 = vld [vmem:[#allocation4 + $0x30] sm:$0xff]
        %v951 = vld [vmem:[#allocation4 + $0x38] sm:$0xff]
        %v952 = vld [vmem:[#allocation4 + $0x40] sm:$0xff]
        %v953 = vld [vmem:[#allocation4 + $0x48] sm:$0xff]
        %v954 = vld [vmem:[#allocation4 + $0x50] sm:$0xff]
        %v955 = vld [vmem:[#allocation4 + $0x58] sm:$0xff]
        %v956 = vld [vmem:[#allocation4 + $0x60] sm:$0xff]
        %v957 = vld [vmem:[#allocation4 + $0x68] sm:$0xff]
        %v958 = vld [vmem:[#allocation4 + $0x70] sm:$0xff]
        %v959 = vld [vmem:[#allocation4 + $0x78] sm:$0xff]
        %v960 = vld [vmem:[#allocation4 + $0x80] sm:$0xff]
        %v961 = vld [vmem:[#allocation4 + $0x88] sm:$0xff]
        %v962 = vld [vmem:[#allocation4 + $0x90] sm:$0xff]
        %v963 = vld [vmem:[#allocation4 + $0x98] sm:$0xff]
        %v964 = vld [vmem:[#allocation4 + $0xa0] sm:$0xff]
        %v965 = vld [vmem:[#allocation4 + $0xa8] sm:$0xff]
        %v966 = vld [vmem:[#allocation4 + $0xb0] sm:$0xff]
        %v967 = vld [vmem:[#allocation4 + $0xb8] sm:$0xff]
        %v968 = vld [vmem:[#allocation4 + $0xc0] sm:$0xff]
        %v969 = vld [vmem:[#allocation4 + $0xc8] sm:$0xff]
        %v970 = vld [vmem:[#allocation4 + $0xd0] sm:$0xff]
        %v971 = vld [vmem:[#allocation4 + $0xd8] sm:$0xff]
        %v972 = vld [vmem:[#allocation4 + $0xe0] sm:$0xff]
        %v973 = vld [vmem:[#allocation4 + $0xe8] sm:$0xff]
        %v974 = vld [vmem:[#allocation4 + $0xf0] sm:$0xff]
        %v975 = vld [vmem:[#allocation4 + $0xf8] sm:$0xff]
        %v976 = vld [vmem:[#allocation8] sm:$0xff]
        %v977 = vld [vmem:[#allocation8 + $0x8] sm:$0xff]
        %v978 = vld [vmem:[#allocation8 + $0x10] sm:$0xff]
        %v979 = vld [vmem:[#allocation8 + $0x18] sm:$0xff]
        %v980 = vld [vmem:[#allocation8 + $0x20] sm:$0xff]
        %v981 = vld [vmem:[#allocation8 + $0x28] sm:$0xff]
        %v982 = vld [vmem:[#allocation8 + $0x30] sm:$0xff]
        %v983 = vld [vmem:[#allocation8 + $0x38] sm:$0xff]
        %v984 = vld [vmem:[#allocation8 + $0x40] sm:$0xff]
        %v985 = vld [vmem:[#allocation8 + $0x48] sm:$0xff]
        %v986 = vld [vmem:[#allocation8 + $0x50] sm:$0xff]
        %v987 = vld [vmem:[#allocation8 + $0x58] sm:$0xff]
        %v988 = vld [vmem:[#allocation8 + $0x60] sm:$0xff]
        %v989 = vld [vmem:[#allocation8 + $0x68] sm:$0xff]
        %v990 = vld [vmem:[#allocation8 + $0x70] sm:$0xff]
        %v991 = vld [vmem:[#allocation8 + $0x78] sm:$0xff]
        %992 = vmatprep.subr.mxu0 0.0
        %993 = vmatpush1.msra.mxu0 %v991
        %994 = vmatprep.subr.mxu0 0.0
        %995 = vmatpush1.msra.mxu0 %v990
        %996 = vmatprep.subr.mxu0 0.0
        %997 = vmatpush1.msra.mxu0 %v989
        %998 = vmatprep.subr.mxu0 0.0
        %999 = vmatpush1.msra.mxu0 %v988
        %1000 = vmatprep.subr.mxu0 0.0
        %1001 = vmatpush1.msra.mxu0 %v987
        %1002 = vmatprep.subr.mxu0 0.0
        %1003 = vmatpush1.msra.mxu0 %v986
        %1004 = vmatprep.subr.mxu0 0.0
        %1005 = vmatpush1.msra.mxu0 %v985
        %1006 = vmatprep.subr.mxu0 0.0
        %1007 = vmatpush1.msra.mxu0 %v984
        %1008 = vmatprep.subr.mxu0 0.0
        %1009 = vmatpush1.msra.mxu0 %v983
        %1010 = vmatprep.subr.mxu0 0.0
        %1011 = vmatpush1.msra.mxu0 %v982
        %1012 = vmatprep.subr.mxu0 0.0
        %1013 = vmatpush1.msra.mxu0 %v981
        %1014 = vmatprep.subr.mxu0 0.0
        %1015 = vmatpush1.msra.mxu0 %v980
        %1016 = vmatprep.subr.mxu0 0.0
        %1017 = vmatpush1.msra.mxu0 %v979
        %1018 = vmatprep.subr.mxu0 0.0
        %1019 = vmatpush1.msra.mxu0 %v978
        %1020 = vmatprep.subr.mxu0 0.0
        %1021 = vmatpush1.msra.mxu0 %v977
        %1022 = vmatprep.subr.mxu0 0.0
        %1023 = vmatpush1.msra.mxu0 %v976
        %1024 = vmatprep.subr.mxu0 0.0
        %1025 = vmatpush2.msra.mxu0 0.0
        %1026 = vmatprep.subr.mxu0 0.0
        %1027 = vmatpush2.msra.mxu0 0.0
        %1028 = vmatprep.subr.mxu0 0.0
        %1029 = vmatpush2.msra.mxu0 0.0
        %1030 = vmatprep.subr.mxu0 0.0
        %1031 = vmatpush2.msra.mxu0 0.0
        %1032 = vmatprep.subr.mxu0 0.0
        %1033 = vmatpush2.msra.mxu0 0.0
        %1034 = vmatprep.subr.mxu0 0.0
        %1035 = vmatpush2.msra.mxu0 0.0
        %1036 = vmatprep.subr.mxu0 0.0
        %1037 = vmatpush2.msra.mxu0 0.0
        %1038 = vmatprep.subr.mxu0 0.0
        %1039 = vmatpush2.msra.mxu0 0.0
        %1040 = vmatprep.subr.mxu0 0.0
        %1041 = vmatpush2.msra.mxu0 0.0
        %1042 = vmatprep.subr.mxu0 0.0
        %1043 = vmatpush2.msra.mxu0 0.0
        %1044 = vmatprep.subr.mxu0 0.0
        %1045 = vmatpush2.msra.mxu0 0.0
        %1046 = vmatprep.subr.mxu0 0.0
        %1047 = vmatpush2.msra.mxu0 0.0
        %1048 = vmatprep.subr.mxu0 0.0
        %1049 = vmatpush2.msra.mxu0 0.0
        %1050 = vmatprep.subr.mxu0 0.0
        %1051 = vmatpush2.msra.mxu0 0.0
        %1052 = vmatprep.subr.mxu0 0.0
        %1053 = vmatpush2.msra.mxu0 0.0
        %1054 = vmatprep.subr.mxu0 0.0
        %1055 = vmatpush2.msra.mxu0 0.0
        %1056 = vmatprep.mubr.f32.mxu0 0.0
        %1057 = vmatmul.mubr.f32.gmra.mxu0 %v908
        %v1058 = vpop.f32.mrf.mxu0
        %v1059 = vadd.f32 0.0, %v1058
        %v1060 = vpop.f32.mrf.mxu0
        %1061 = vmatprep.mubr.f32.mxu0 0.0
        %1062 = vmatmul.mubr.f32.gmra.mxu0 %v909
        %v1063 = vpop.f32.mrf.mxu0
        %v1064 = vadd.f32 0.0, %v1063
        %v1065 = vpop.f32.mrf.mxu0
        %1066 = vmatprep.mubr.f32.mxu0 0.0
        %1067 = vmatmul.mubr.f32.gmra.mxu0 %v910
        %v1068 = vpop.f32.mrf.mxu0
        %v1069 = vadd.f32 0.0, %v1068
        %v1070 = vpop.f32.mrf.mxu0
        %1071 = vmatprep.mubr.f32.mxu0 0.0
        %1072 = vmatmul.mubr.f32.gmra.mxu0 %v911
        %v1073 = vpop.f32.mrf.mxu0
        %v1074 = vadd.f32 0.0, %v1073
        %v1075 = vpop.f32.mrf.mxu0
        %1076 = vmatprep.mubr.f32.mxu0 0.0
        %1077 = vmatmul.mubr.f32.gmra.mxu0 %v912
        %v1078 = vpop.f32.mrf.mxu0
        %v1079 = vadd.f32 0.0, %v1078
        %v1080 = vpop.f32.mrf.mxu0
        %1081 = vmatprep.mubr.f32.mxu0 0.0
        %1082 = vmatmul.mubr.f32.gmra.mxu0 %v913
        %v1083 = vpop.f32.mrf.mxu0
        %v1084 = vadd.f32 0.0, %v1083
        %v1085 = vpop.f32.mrf.mxu0
        %1086 = vmatprep.mubr.f32.mxu0 0.0
        %1087 = vmatmul.mubr.f32.gmra.mxu0 %v914
        %v1088 = vpop.f32.mrf.mxu0
        %v1089 = vadd.f32 0.0, %v1088
        %v1090 = vpop.f32.mrf.mxu0
        %1091 = vmatprep.mubr.f32.mxu0 0.0
        %1092 = vmatmul.mubr.f32.gmra.mxu0 %v915
        %v1093 = vpop.f32.mrf.mxu0
        %v1094 = vadd.f32 0.0, %v1093
        %v1095 = vpop.f32.mrf.mxu0
        %1096 = vmatprep.mubr.f32.mxu0 0.0
        %1097 = vmatmul.mubr.f32.gmra.mxu0 %v916
        %v1098 = vpop.f32.mrf.mxu0
        %v1099 = vadd.f32 0.0, %v1098
        %v1100 = vpop.f32.mrf.mxu0
        %1101 = vmatprep.mubr.f32.mxu0 0.0
        %1102 = vmatmul.mubr.f32.gmra.mxu0 %v917
        %v1103 = vpop.f32.mrf.mxu0
        %v1104 = vadd.f32 0.0, %v1103
        %v1105 = vpop.f32.mrf.mxu0
        %1106 = vmatprep.mubr.f32.mxu0 0.0
        %1107 = vmatmul.mubr.f32.gmra.mxu0 %v918
        %v1108 = vpop.f32.mrf.mxu0
        %v1109 = vadd.f32 0.0, %v1108
        %v1110 = vpop.f32.mrf.mxu0
        %1111 = vmatprep.mubr.f32.mxu0 0.0
        %1112 = vmatmul.mubr.f32.gmra.mxu0 %v919
        %v1113 = vpop.f32.mrf.mxu0
        %v1114 = vadd.f32 0.0, %v1113
        %v1115 = vpop.f32.mrf.mxu0
        %1116 = vmatprep.mubr.f32.mxu0 0.0
        %1117 = vmatmul.mubr.f32.gmra.mxu0 %v920
        %v1118 = vpop.f32.mrf.mxu0
        %v1119 = vadd.f32 0.0, %v1118
        %v1120 = vpop.f32.mrf.mxu0
        %1121 = vmatprep.mubr.f32.mxu0 0.0
        %1122 = vmatmul.mubr.f32.gmra.mxu0 %v921
        %v1123 = vpop.f32.mrf.mxu0
        %v1124 = vadd.f32 0.0, %v1123
        %v1125 = vpop.f32.mrf.mxu0
        %1126 = vmatprep.mubr.f32.mxu0 0.0
        %1127 = vmatmul.mubr.f32.gmra.mxu0 %v922
        %v1128 = vpop.f32.mrf.mxu0
        %v1129 = vadd.f32 0.0, %v1128
        %v1130 = vpop.f32.mrf.mxu0
        %1131 = vmatprep.mubr.f32.mxu0 0.0
        %1132 = vmatmul.mubr.f32.gmra.mxu0 %v923
        %v1133 = vpop.f32.mrf.mxu0
        %v1134 = vadd.f32 0.0, %v1133
        %v1135 = vpop.f32.mrf.mxu0
        %1136 = vmatprep.mubr.f32.mxu0 0.0
        %1137 = vmatmul.mubr.f32.gmra.mxu0 %v924
        %v1138 = vpop.f32.mrf.mxu0
        %v1139 = vadd.f32 0.0, %v1138
        %v1140 = vpop.f32.mrf.mxu0
        %1141 = vmatprep.mubr.f32.mxu0 0.0
        %1142 = vmatmul.mubr.f32.gmra.mxu0 %v925
        %v1143 = vpop.f32.mrf.mxu0
        %v1144 = vadd.f32 0.0, %v1143
        %v1145 = vpop.f32.mrf.mxu0
        %1146 = vmatprep.mubr.f32.mxu0 0.0
        %1147 = vmatmul.mubr.f32.gmra.mxu0 %v926
        %v1148 = vpop.f32.mrf.mxu0
        %v1149 = vadd.f32 0.0, %v1148
        %v1150 = vpop.f32.mrf.mxu0
        %1151 = vmatprep.mubr.f32.mxu0 0.0
        %1152 = vmatmul.mubr.f32.gmra.mxu0 %v927
        %v1153 = vpop.f32.mrf.mxu0
        %v1154 = vadd.f32 0.0, %v1153
        %v1155 = vpop.f32.mrf.mxu0
        %1156 = vmatprep.mubr.f32.mxu0 0.0
        %1157 = vmatmul.mubr.f32.gmra.mxu0 %v928
        %v1158 = vpop.f32.mrf.mxu0
        %v1159 = vadd.f32 0.0, %v1158
        %v1160 = vpop.f32.mrf.mxu0
        %1161 = vmatprep.mubr.f32.mxu0 0.0
        %1162 = vmatmul.mubr.f32.gmra.mxu0 %v929
        %v1163 = vpop.f32.mrf.mxu0
        %v1164 = vadd.f32 0.0, %v1163
        %v1165 = vpop.f32.mrf.mxu0
        %1166 = vmatprep.mubr.f32.mxu0 0.0
        %1167 = vmatmul.mubr.f32.gmra.mxu0 %v930
        %v1168 = vpop.f32.mrf.mxu0
        %v1169 = vadd.f32 0.0, %v1168
        %v1170 = vpop.f32.mrf.mxu0
        %1171 = vmatprep.mubr.f32.mxu0 0.0
        %1172 = vmatmul.mubr.f32.gmra.mxu0 %v931
        %v1173 = vpop.f32.mrf.mxu0
        %v1174 = vadd.f32 0.0, %v1173
        %v1175 = vpop.f32.mrf.mxu0
        %1176 = vmatprep.mubr.f32.mxu0 0.0
        %1177 = vmatmul.mubr.f32.gmra.mxu0 %v932
        %v1178 = vpop.f32.mrf.mxu0
        %v1179 = vadd.f32 0.0, %v1178
        %v1180 = vpop.f32.mrf.mxu0
        %1181 = vmatprep.mubr.f32.mxu0 0.0
        %1182 = vmatmul.mubr.f32.gmra.mxu0 %v933
        %v1183 = vpop.f32.mrf.mxu0
        %v1184 = vadd.f32 0.0, %v1183
        %v1185 = vpop.f32.mrf.mxu0
        %1186 = vmatprep.mubr.f32.mxu0 0.0
        %1187 = vmatmul.mubr.f32.gmra.mxu0 %v934
        %v1188 = vpop.f32.mrf.mxu0
        %v1189 = vadd.f32 0.0, %v1188
        %v1190 = vpop.f32.mrf.mxu0
        %1191 = vmatprep.mubr.f32.mxu0 0.0
        %1192 = vmatmul.mubr.f32.gmra.mxu0 %v935
        %v1193 = vpop.f32.mrf.mxu0
        %v1194 = vadd.f32 0.0, %v1193
        %v1195 = vpop.f32.mrf.mxu0
        %1196 = vmatprep.mubr.f32.mxu0 0.0
        %1197 = vmatmul.mubr.f32.gmra.mxu0 %v936
        %v1198 = vpop.f32.mrf.mxu0
        %v1199 = vadd.f32 0.0, %v1198
        %v1200 = vpop.f32.mrf.mxu0
        %1201 = vmatprep.mubr.f32.mxu0 0.0
        %1202 = vmatmul.mubr.f32.gmra.mxu0 %v937
        %v1203 = vpop.f32.mrf.mxu0
        %v1204 = vadd.f32 0.0, %v1203
        %v1205 = vpop.f32.mrf.mxu0
        %1206 = vmatprep.mubr.f32.mxu0 0.0
        %1207 = vmatmul.mubr.f32.gmra.mxu0 %v938
        %v1208 = vpop.f32.mrf.mxu0
        %v1209 = vadd.f32 0.0, %v1208
        %v1210 = vpop.f32.mrf.mxu0
        %1211 = vmatprep.mubr.f32.mxu0 0.0
        %1212 = vmatmul.mubr.f32.gmra.mxu0 %v939
        %v1213 = vpop.f32.mrf.mxu0
        %v1214 = vadd.f32 0.0, %v1213
        %v1215 = vpop.f32.mrf.mxu0
        %1216 = vdwg.mxu0
        %v1217 = vadd.f32 %v944, %v1059
        %v1218 = vadd.f32 %v945, %v1064
        %v1219 = vadd.f32 %v946, %v1069
        %v1220 = vadd.f32 %v947, %v1074
        %v1221 = vadd.f32 %v948, %v1079
        %v1222 = vadd.f32 %v949, %v1084
        %v1223 = vadd.f32 %v950, %v1089
        %v1224 = vadd.f32 %v951, %v1094
        %v1225 = vadd.f32 %v952, %v1099
        %v1226 = vadd.f32 %v953, %v1104
        %v1227 = vadd.f32 %v954, %v1109
        %v1228 = vadd.f32 %v955, %v1114
        %v1229 = vadd.f32 %v956, %v1119
        %v1230 = vadd.f32 %v957, %v1124
        %v1231 = vadd.f32 %v958, %v1129
        %v1232 = vadd.f32 %v959, %v1134
        %v1233 = vadd.f32 %v960, %v1139
        %v1234 = vadd.f32 %v961, %v1144
        %v1235 = vadd.f32 %v962, %v1149
        %v1236 = vadd.f32 %v963, %v1154
        %v1237 = vadd.f32 %v964, %v1159
        %v1238 = vadd.f32 %v965, %v1164
        %v1239 = vadd.f32 %v966, %v1169
        %v1240 = vadd.f32 %v967, %v1174
        %v1241 = vadd.f32 %v968, %v1179
        %v1242 = vadd.f32 %v969, %v1184
        %v1243 = vadd.f32 %v970, %v1189
        %v1244 = vadd.f32 %v971, %v1194
        %v1245 = vadd.f32 %v972, %v1199
        %v1246 = vadd.f32 %v973, %v1204
        %v1247 = vadd.f32 %v974, %v1209
        %v1248 = vadd.f32 %v975, %v1214
        %1249 = vst [vmem:[#allocation4] sm:$0xff] %v1217
        %1250 = vst [vmem:[#allocation4 + $0x8] sm:$0xff] %v1218
        %1251 = vst [vmem:[#allocation4 + $0x10] sm:$0xff] %v1219
        %1252 = vst [vmem:[#allocation4 + $0x18] sm:$0xff] %v1220
        %1253 = vst [vmem:[#allocation4 + $0x20] sm:$0xff] %v1221
        %1254 = vst [vmem:[#allocation4 + $0x28] sm:$0xff] %v1222
        %1255 = vst [vmem:[#allocation4 + $0x30] sm:$0xff] %v1223
        %1256 = vst [vmem:[#allocation4 + $0x38] sm:$0xff] %v1224
        %1257 = vst [vmem:[#allocation4 + $0x40] sm:$0xff] %v1225
        %1258 = vst [vmem:[#allocation4 + $0x48] sm:$0xff] %v1226
        %1259 = vst [vmem:[#allocation4 + $0x50] sm:$0xff] %v1227
        %1260 = vst [vmem:[#allocation4 + $0x58] sm:$0xff] %v1228
        %1261 = vst [vmem:[#allocation4 + $0x60] sm:$0xff] %v1229
        %1262 = vst [vmem:[#allocation4 + $0x68] sm:$0xff] %v1230
        %1263 = vst [vmem:[#allocation4 + $0x70] sm:$0xff] %v1231
        %1264 = vst [vmem:[#allocation4 + $0x78] sm:$0xff] %v1232
        %1265 = vst [vmem:[#allocation4 + $0x80] sm:$0xff] %v1233
        %1266 = vst [vmem:[#allocation4 + $0x88] sm:$0xff] %v1234
        %1267 = vst [vmem:[#allocation4 + $0x90] sm:$0xff] %v1235
        %1268 = vst [vmem:[#allocation4 + $0x98] sm:$0xff] %v1236
        %1269 = vst [vmem:[#allocation4 + $0xa0] sm:$0xff] %v1237
        %1270 = vst [vmem:[#allocation4 + $0xa8] sm:$0xff] %v1238
        %1271 = vst [vmem:[#allocation4 + $0xb0] sm:$0xff] %v1239
        %1272 = vst [vmem:[#allocation4 + $0xb8] sm:$0xff] %v1240
        %1273 = vst [vmem:[#allocation4 + $0xc0] sm:$0xff] %v1241
        %1274 = vst [vmem:[#allocation4 + $0xc8] sm:$0xff] %v1242
        %1275 = vst [vmem:[#allocation4 + $0xd0] sm:$0xff] %v1243
        %1276 = vst [vmem:[#allocation4 + $0xd8] sm:$0xff] %v1244
        %1277 = vst [vmem:[#allocation4 + $0xe0] sm:$0xff] %v1245
        %1278 = vst [vmem:[#allocation4 + $0xe8] sm:$0xff] %v1246
        %1279 = vst [vmem:[#allocation4 + $0xf0] sm:$0xff] %v1247
        %1280 = vst [vmem:[#allocation4 + $0xf8] sm:$0xff] %v1248
        %v1281 = vld [vmem:[#allocation4] sm:$0xff]
        %v1282 = vld [vmem:[#allocation4 + $0x8] sm:$0xff]
        %v1283 = vld [vmem:[#allocation4 + $0x10] sm:$0xff]
        %v1284 = vld [vmem:[#allocation4 + $0x18] sm:$0xff]
        %v1285 = vld [vmem:[#allocation4 + $0x20] sm:$0xff]
        %v1286 = vld [vmem:[#allocation4 + $0x28] sm:$0xff]
        %v1287 = vld [vmem:[#allocation4 + $0x30] sm:$0xff]
        %v1288 = vld [vmem:[#allocation4 + $0x38] sm:$0xff]
        %v1289 = vld [vmem:[#allocation4 + $0x40] sm:$0xff]
        %v1290 = vld [vmem:[#allocation4 + $0x48] sm:$0xff]
        %v1291 = vld [vmem:[#allocation4 + $0x50] sm:$0xff]
        %v1292 = vld [vmem:[#allocation4 + $0x58] sm:$0xff]
        %v1293 = vld [vmem:[#allocation4 + $0x60] sm:$0xff]
        %v1294 = vld [vmem:[#allocation4 + $0x68] sm:$0xff]
        %v1295 = vld [vmem:[#allocation4 + $0x70] sm:$0xff]
        %v1296 = vld [vmem:[#allocation4 + $0x78] sm:$0xff]
        %v1297 = vld [vmem:[#allocation4 + $0x80] sm:$0xff]
        %v1298 = vld [vmem:[#allocation4 + $0x88] sm:$0xff]
        %v1299 = vld [vmem:[#allocation4 + $0x90] sm:$0xff]
        %v1300 = vld [vmem:[#allocation4 + $0x98] sm:$0xff]
        %v1301 = vld [vmem:[#allocation4 + $0xa0] sm:$0xff]
        %v1302 = vld [vmem:[#allocation4 + $0xa8] sm:$0xff]
        %v1303 = vld [vmem:[#allocation4 + $0xb0] sm:$0xff]
        %v1304 = vld [vmem:[#allocation4 + $0xb8] sm:$0xff]
        %v1305 = vld [vmem:[#allocation4 + $0xc0] sm:$0xff]
        %v1306 = vld [vmem:[#allocation4 + $0xc8] sm:$0xff]
        %v1307 = vld [vmem:[#allocation4 + $0xd0] sm:$0xff]
        %v1308 = vld [vmem:[#allocation4 + $0xd8] sm:$0xff]
        %v1309 = vld [vmem:[#allocation4 + $0xe0] sm:$0xff]
        %v1310 = vld [vmem:[#allocation4 + $0xe8] sm:$0xff]
        %v1311 = vld [vmem:[#allocation4 + $0xf0] sm:$0xff]
        %v1312 = vld [vmem:[#allocation4 + $0xf8] sm:$0xff]
        %s1313 = scalar_lea.vmem [#allocation8], 384
        %v1314 = vld [vmem:[%s1313] sm:$0xff]
        %v1315 = vld [vmem:[%s1313 + $0x8] sm:$0xff]
        %v1316 = vld [vmem:[%s1313 + $0x10] sm:$0xff]
        %v1317 = vld [vmem:[%s1313 + $0x18] sm:$0xff]
        %v1318 = vld [vmem:[%s1313 + $0x20] sm:$0xff]
        %v1319 = vld [vmem:[%s1313 + $0x28] sm:$0xff]
        %v1320 = vld [vmem:[%s1313 + $0x30] sm:$0xff]
        %v1321 = vld [vmem:[%s1313 + $0x38] sm:$0xff]
        %v1322 = vld [vmem:[%s1313 + $0x40] sm:$0xff]
        %v1323 = vld [vmem:[%s1313 + $0x48] sm:$0xff]
        %v1324 = vld [vmem:[%s1313 + $0x50] sm:$0xff]
        %v1325 = vld [vmem:[%s1313 + $0x58] sm:$0xff]
        %v1326 = vld [vmem:[%s1313 + $0x60] sm:$0xff]
        %v1327 = vld [vmem:[%s1313 + $0x68] sm:$0xff]
        %v1328 = vld [vmem:[%s1313 + $0x70] sm:$0xff]
        %v1329 = vld [vmem:[%s1313 + $0x78] sm:$0xff]
        %1330 = vmatprep.subr.mxu0 0.0
        %1331 = vmatpush1.msra.mxu0 %v1329
        %1332 = vmatprep.subr.mxu0 0.0
        %1333 = vmatpush1.msra.mxu0 %v1328
        %1334 = vmatprep.subr.mxu0 0.0
        %1335 = vmatpush1.msra.mxu0 %v1327
        %1336 = vmatprep.subr.mxu0 0.0
        %1337 = vmatpush1.msra.mxu0 %v1326
        %1338 = vmatprep.subr.mxu0 0.0
        %1339 = vmatpush1.msra.mxu0 %v1325
        %1340 = vmatprep.subr.mxu0 0.0
        %1341 = vmatpush1.msra.mxu0 %v1324
        %1342 = vmatprep.subr.mxu0 0.0
        %1343 = vmatpush1.msra.mxu0 %v1323
        %1344 = vmatprep.subr.mxu0 0.0
        %1345 = vmatpush1.msra.mxu0 %v1322
        %1346 = vmatprep.subr.mxu0 0.0
        %1347 = vmatpush1.msra.mxu0 %v1321
        %1348 = vmatprep.subr.mxu0 0.0
        %1349 = vmatpush1.msra.mxu0 %v1320
        %1350 = vmatprep.subr.mxu0 0.0
        %1351 = vmatpush1.msra.mxu0 %v1319
        %1352 = vmatprep.subr.mxu0 0.0
        %1353 = vmatpush1.msra.mxu0 %v1318
        %1354 = vmatprep.subr.mxu0 0.0
        %1355 = vmatpush1.msra.mxu0 %v1317
        %1356 = vmatprep.subr.mxu0 0.0
        %1357 = vmatpush1.msra.mxu0 %v1316
        %1358 = vmatprep.subr.mxu0 0.0
        %1359 = vmatpush1.msra.mxu0 %v1315
        %1360 = vmatprep.subr.mxu0 0.0
        %1361 = vmatpush1.msra.mxu0 %v1314
        %1362 = vmatprep.subr.mxu0 0.0
        %1363 = vmatpush2.msra.mxu0 0.0
        %1364 = vmatprep.subr.mxu0 0.0
        %1365 = vmatpush2.msra.mxu0 0.0
        %1366 = vmatprep.subr.mxu0 0.0
        %1367 = vmatpush2.msra.mxu0 0.0
        %1368 = vmatprep.subr.mxu0 0.0
        %1369 = vmatpush2.msra.mxu0 0.0
        %1370 = vmatprep.subr.mxu0 0.0
        %1371 = vmatpush2.msra.mxu0 0.0
        %1372 = vmatprep.subr.mxu0 0.0
        %1373 = vmatpush2.msra.mxu0 0.0
        %1374 = vmatprep.subr.mxu0 0.0
        %1375 = vmatpush2.msra.mxu0 0.0
        %1376 = vmatprep.subr.mxu0 0.0
        %1377 = vmatpush2.msra.mxu0 0.0
        %1378 = vmatprep.subr.mxu0 0.0
        %1379 = vmatpush2.msra.mxu0 0.0
        %1380 = vmatprep.subr.mxu0 0.0
        %1381 = vmatpush2.msra.mxu0 0.0
        %1382 = vmatprep.subr.mxu0 0.0
        %1383 = vmatpush2.msra.mxu0 0.0
        %1384 = vmatprep.subr.mxu0 0.0
        %1385 = vmatpush2.msra.mxu0 0.0
        %1386 = vmatprep.subr.mxu0 0.0
        %1387 = vmatpush2.msra.mxu0 0.0
        %1388 = vmatprep.subr.mxu0 0.0
        %1389 = vmatpush2.msra.mxu0 0.0
        %1390 = vmatprep.subr.mxu0 0.0
        %1391 = vmatpush2.msra.mxu0 0.0
        %1392 = vmatprep.subr.mxu0 0.0
        %1393 = vmatpush2.msra.mxu0 0.0
        %1394 = vmatprep.mubr.f32.mxu0 0.0
        %1395 = vmatmul.mubr.f32.gmra.mxu0 %v910
        %v1396 = vpop.f32.mrf.mxu0
        %v1397 = vadd.f32 0.0, %v1396
        %v1398 = vpop.f32.mrf.mxu0
        %1399 = vmatprep.mubr.f32.mxu0 0.0
        %1400 = vmatmul.mubr.f32.gmra.mxu0 %v911
        %v1401 = vpop.f32.mrf.mxu0
        %v1402 = vadd.f32 0.0, %v1401
        %v1403 = vpop.f32.mrf.mxu0
        %1404 = vmatprep.mubr.f32.mxu0 0.0
        %1405 = vmatmul.mubr.f32.gmra.mxu0 %v912
        %v1406 = vpop.f32.mrf.mxu0
        %v1407 = vadd.f32 0.0, %v1406
        %v1408 = vpop.f32.mrf.mxu0
        %1409 = vmatprep.mubr.f32.mxu0 0.0
        %1410 = vmatmul.mubr.f32.gmra.mxu0 %v913
        %v1411 = vpop.f32.mrf.mxu0
        %v1412 = vadd.f32 0.0, %v1411
        %v1413 = vpop.f32.mrf.mxu0
        %1414 = vmatprep.mubr.f32.mxu0 0.0
        %1415 = vmatmul.mubr.f32.gmra.mxu0 %v914
        %v1416 = vpop.f32.mrf.mxu0
        %v1417 = vadd.f32 0.0, %v1416
        %v1418 = vpop.f32.mrf.mxu0
        %1419 = vmatprep.mubr.f32.mxu0 0.0
        %1420 = vmatmul.mubr.f32.gmra.mxu0 %v915
        %v1421 = vpop.f32.mrf.mxu0
        %v1422 = vadd.f32 0.0, %v1421
        %v1423 = vpop.f32.mrf.mxu0
        %1424 = vmatprep.mubr.f32.mxu0 0.0
        %1425 = vmatmul.mubr.f32.gmra.mxu0 %v916
        %v1426 = vpop.f32.mrf.mxu0
        %v1427 = vadd.f32 0.0, %v1426
        %v1428 = vpop.f32.mrf.mxu0
        %1429 = vmatprep.mubr.f32.mxu0 0.0
        %1430 = vmatmul.mubr.f32.gmra.mxu0 %v917
        %v1431 = vpop.f32.mrf.mxu0
        %v1432 = vadd.f32 0.0, %v1431
        %v1433 = vpop.f32.mrf.mxu0
        %1434 = vmatprep.mubr.f32.mxu0 0.0
        %1435 = vmatmul.mubr.f32.gmra.mxu0 %v918
        %v1436 = vpop.f32.mrf.mxu0
        %v1437 = vadd.f32 0.0, %v1436
        %v1438 = vpop.f32.mrf.mxu0
        %1439 = vmatprep.mubr.f32.mxu0 0.0
        %1440 = vmatmul.mubr.f32.gmra.mxu0 %v919
        %v1441 = vpop.f32.mrf.mxu0
        %v1442 = vadd.f32 0.0, %v1441
        %v1443 = vpop.f32.mrf.mxu0
        %1444 = vmatprep.mubr.f32.mxu0 0.0
        %1445 = vmatmul.mubr.f32.gmra.mxu0 %v920
        %v1446 = vpop.f32.mrf.mxu0
        %v1447 = vadd.f32 0.0, %v1446
        %v1448 = vpop.f32.mrf.mxu0
        %1449 = vmatprep.mubr.f32.mxu0 0.0
        %1450 = vmatmul.mubr.f32.gmra.mxu0 %v921
        %v1451 = vpop.f32.mrf.mxu0
        %v1452 = vadd.f32 0.0, %v1451
        %v1453 = vpop.f32.mrf.mxu0
        %1454 = vmatprep.mubr.f32.mxu0 0.0
        %1455 = vmatmul.mubr.f32.gmra.mxu0 %v922
        %v1456 = vpop.f32.mrf.mxu0
        %v1457 = vadd.f32 0.0, %v1456
        %v1458 = vpop.f32.mrf.mxu0
        %1459 = vmatprep.mubr.f32.mxu0 0.0
        %1460 = vmatmul.mubr.f32.gmra.mxu0 %v923
        %v1461 = vpop.f32.mrf.mxu0
        %v1462 = vadd.f32 0.0, %v1461
        %v1463 = vpop.f32.mrf.mxu0
        %1464 = vmatprep.mubr.f32.mxu0 0.0
        %1465 = vmatmul.mubr.f32.gmra.mxu0 %v924
        %v1466 = vpop.f32.mrf.mxu0
        %v1467 = vadd.f32 0.0, %v1466
        %v1468 = vpop.f32.mrf.mxu0
        %1469 = vmatprep.mubr.f32.mxu0 0.0
        %1470 = vmatmul.mubr.f32.gmra.mxu0 %v925
        %v1471 = vpop.f32.mrf.mxu0
        %v1472 = vadd.f32 0.0, %v1471
        %v1473 = vpop.f32.mrf.mxu0
        %1474 = vmatprep.mubr.f32.mxu0 0.0
        %1475 = vmatmul.mubr.f32.gmra.mxu0 %v926
        %v1476 = vpop.f32.mrf.mxu0
        %v1477 = vadd.f32 0.0, %v1476
        %v1478 = vpop.f32.mrf.mxu0
        %1479 = vmatprep.mubr.f32.mxu0 0.0
        %1480 = vmatmul.mubr.f32.gmra.mxu0 %v927
        %v1481 = vpop.f32.mrf.mxu0
        %v1482 = vadd.f32 0.0, %v1481
        %v1483 = vpop.f32.mrf.mxu0
        %1484 = vmatprep.mubr.f32.mxu0 0.0
        %1485 = vmatmul.mubr.f32.gmra.mxu0 %v928
        %v1486 = vpop.f32.mrf.mxu0
        %v1487 = vadd.f32 0.0, %v1486
        %v1488 = vpop.f32.mrf.mxu0
        %1489 = vmatprep.mubr.f32.mxu0 0.0
        %1490 = vmatmul.mubr.f32.gmra.mxu0 %v929
        %v1491 = vpop.f32.mrf.mxu0
        %v1492 = vadd.f32 0.0, %v1491
        %v1493 = vpop.f32.mrf.mxu0
        %1494 = vmatprep.mubr.f32.mxu0 0.0
        %1495 = vmatmul.mubr.f32.gmra.mxu0 %v930
        %v1496 = vpop.f32.mrf.mxu0
        %v1497 = vadd.f32 0.0, %v1496
        %v1498 = vpop.f32.mrf.mxu0
        %1499 = vmatprep.mubr.f32.mxu0 0.0
        %1500 = vmatmul.mubr.f32.gmra.mxu0 %v931
        %v1501 = vpop.f32.mrf.mxu0
        %v1502 = vadd.f32 0.0, %v1501
        %v1503 = vpop.f32.mrf.mxu0
        %1504 = vmatprep.mubr.f32.mxu0 0.0
        %1505 = vmatmul.mubr.f32.gmra.mxu0 %v932
        %v1506 = vpop.f32.mrf.mxu0
        %v1507 = vadd.f32 0.0, %v1506
        %v1508 = vpop.f32.mrf.mxu0
        %1509 = vmatprep.mubr.f32.mxu0 0.0
        %1510 = vmatmul.mubr.f32.gmra.mxu0 %v933
        %v1511 = vpop.f32.mrf.mxu0
        %v1512 = vadd.f32 0.0, %v1511
        %v1513 = vpop.f32.mrf.mxu0
        %1514 = vmatprep.mubr.f32.mxu0 0.0
        %1515 = vmatmul.mubr.f32.gmra.mxu0 %v934
        %v1516 = vpop.f32.mrf.mxu0
        %v1517 = vadd.f32 0.0, %v1516
        %v1518 = vpop.f32.mrf.mxu0
        %1519 = vmatprep.mubr.f32.mxu0 0.0
        %1520 = vmatmul.mubr.f32.gmra.mxu0 %v935
        %v1521 = vpop.f32.mrf.mxu0
        %v1522 = vadd.f32 0.0, %v1521
        %v1523 = vpop.f32.mrf.mxu0
        %1524 = vmatprep.mubr.f32.mxu0 0.0
        %1525 = vmatmul.mubr.f32.gmra.mxu0 %v936
        %v1526 = vpop.f32.mrf.mxu0
        %v1527 = vadd.f32 0.0, %v1526
        %v1528 = vpop.f32.mrf.mxu0
        %1529 = vmatprep.mubr.f32.mxu0 0.0
        %1530 = vmatmul.mubr.f32.gmra.mxu0 %v937
        %v1531 = vpop.f32.mrf.mxu0
        %v1532 = vadd.f32 0.0, %v1531
        %v1533 = vpop.f32.mrf.mxu0
        %1534 = vmatprep.mubr.f32.mxu0 0.0
        %1535 = vmatmul.mubr.f32.gmra.mxu0 %v938
        %v1536 = vpop.f32.mrf.mxu0
        %v1537 = vadd.f32 0.0, %v1536
        %v1538 = vpop.f32.mrf.mxu0
        %1539 = vmatprep.mubr.f32.mxu0 0.0
        %1540 = vmatmul.mubr.f32.gmra.mxu0 %v939
        %v1541 = vpop.f32.mrf.mxu0
        %v1542 = vadd.f32 0.0, %v1541
        %v1543 = vpop.f32.mrf.mxu0
        %1544 = vmatprep.mubr.f32.mxu0 0.0
        %1545 = vmatmul.mubr.f32.gmra.mxu0 %v940
        %v1546 = vpop.f32.mrf.mxu0
        %v1547 = vadd.f32 0.0, %v1546
        %v1548 = vpop.f32.mrf.mxu0
        %1549 = vmatprep.mubr.f32.mxu0 0.0
        %1550 = vmatmul.mubr.f32.gmra.mxu0 %v941
        %v1551 = vpop.f32.mrf.mxu0
        %v1552 = vadd.f32 0.0, %v1551
        %v1553 = vpop.f32.mrf.mxu0
        %1554 = vdwg.mxu0
        %v1555 = vadd.f32 %v1281, %v1397
        %v1556 = vadd.f32 %v1282, %v1402
        %v1557 = vadd.f32 %v1283, %v1407
        %v1558 = vadd.f32 %v1284, %v1412
        %v1559 = vadd.f32 %v1285, %v1417
        %v1560 = vadd.f32 %v1286, %v1422
        %v1561 = vadd.f32 %v1287, %v1427
        %v1562 = vadd.f32 %v1288, %v1432
        %v1563 = vadd.f32 %v1289, %v1437
        %v1564 = vadd.f32 %v1290, %v1442
        %v1565 = vadd.f32 %v1291, %v1447
        %v1566 = vadd.f32 %v1292, %v1452
        %v1567 = vadd.f32 %v1293, %v1457
        %v1568 = vadd.f32 %v1294, %v1462
        %v1569 = vadd.f32 %v1295, %v1467
        %v1570 = vadd.f32 %v1296, %v1472
        %v1571 = vadd.f32 %v1297, %v1477
        %v1572 = vadd.f32 %v1298, %v1482
        %v1573 = vadd.f32 %v1299, %v1487
        %v1574 = vadd.f32 %v1300, %v1492
        %v1575 = vadd.f32 %v1301, %v1497
        %v1576 = vadd.f32 %v1302, %v1502
        %v1577 = vadd.f32 %v1303, %v1507
        %v1578 = vadd.f32 %v1304, %v1512
        %v1579 = vadd.f32 %v1305, %v1517
        %v1580 = vadd.f32 %v1306, %v1522
        %v1581 = vadd.f32 %v1307, %v1527
        %v1582 = vadd.f32 %v1308, %v1532
        %v1583 = vadd.f32 %v1309, %v1537
        %v1584 = vadd.f32 %v1310, %v1542
        %v1585 = vadd.f32 %v1311, %v1547
        %v1586 = vadd.f32 %v1312, %v1552
        %1587 = vst [vmem:[#allocation4] sm:$0xff] %v1555
        %1588 = vst [vmem:[#allocation4 + $0x8] sm:$0xff] %v1556
        %1589 = vst [vmem:[#allocation4 + $0x10] sm:$0xff] %v1557
        %1590 = vst [vmem:[#allocation4 + $0x18] sm:$0xff] %v1558
        %1591 = vst [vmem:[#allocation4 + $0x20] sm:$0xff] %v1559
        %1592 = vst [vmem:[#allocation4 + $0x28] sm:$0xff] %v1560
        %1593 = vst [vmem:[#allocation4 + $0x30] sm:$0xff] %v1561
        %1594 = vst [vmem:[#allocation4 + $0x38] sm:$0xff] %v1562
        %1595 = vst [vmem:[#allocation4 + $0x40] sm:$0xff] %v1563
        %1596 = vst [vmem:[#allocation4 + $0x48] sm:$0xff] %v1564
        %1597 = vst [vmem:[#allocation4 + $0x50] sm:$0xff] %v1565
        %1598 = vst [vmem:[#allocation4 + $0x58] sm:$0xff] %v1566
        %1599 = vst [vmem:[#allocation4 + $0x60] sm:$0xff] %v1567
        %1600 = vst [vmem:[#allocation4 + $0x68] sm:$0xff] %v1568
        %1601 = vst [vmem:[#allocation4 + $0x70] sm:$0xff] %v1569
        %1602 = vst [vmem:[#allocation4 + $0x78] sm:$0xff] %v1570
        %1603 = vst [vmem:[#allocation4 + $0x80] sm:$0xff] %v1571
        %1604 = vst [vmem:[#allocation4 + $0x88] sm:$0xff] %v1572
        %1605 = vst [vmem:[#allocation4 + $0x90] sm:$0xff] %v1573
        %1606 = vst [vmem:[#allocation4 + $0x98] sm:$0xff] %v1574
        %1607 = vst [vmem:[#allocation4 + $0xa0] sm:$0xff] %v1575
        %1608 = vst [vmem:[#allocation4 + $0xa8] sm:$0xff] %v1576
        %1609 = vst [vmem:[#allocation4 + $0xb0] sm:$0xff] %v1577
        %1610 = vst [vmem:[#allocation4 + $0xb8] sm:$0xff] %v1578
        %1611 = vst [vmem:[#allocation4 + $0xc0] sm:$0xff] %v1579
        %1612 = vst [vmem:[#allocation4 + $0xc8] sm:$0xff] %v1580
        %1613 = vst [vmem:[#allocation4 + $0xd0] sm:$0xff] %v1581
        %1614 = vst [vmem:[#allocation4 + $0xd8] sm:$0xff] %v1582
        %1615 = vst [vmem:[#allocation4 + $0xe0] sm:$0xff] %v1583
        %1616 = vst [vmem:[#allocation4 + $0xe8] sm:$0xff] %v1584
        %1617 = vst [vmem:[#allocation4 + $0xf0] sm:$0xff] %v1585
        %1618 = vst [vmem:[#allocation4 + $0xf8] sm:$0xff] %v1586
        %v1619 = vld [vmem:[#allocation4] sm:$0xff]
        %v1620 = vld [vmem:[#allocation4 + $0x8] sm:$0xff]
        %v1621 = vld [vmem:[#allocation4 + $0x10] sm:$0xff]
        %v1622 = vld [vmem:[#allocation4 + $0x18] sm:$0xff]
        %v1623 = vld [vmem:[#allocation4 + $0x20] sm:$0xff]
        %v1624 = vld [vmem:[#allocation4 + $0x28] sm:$0xff]
        %v1625 = vld [vmem:[#allocation4 + $0x30] sm:$0xff]
        %v1626 = vld [vmem:[#allocation4 + $0x38] sm:$0xff]
        %v1627 = vld [vmem:[#allocation4 + $0x40] sm:$0xff]
        %v1628 = vld [vmem:[#allocation4 + $0x48] sm:$0xff]
        %v1629 = vld [vmem:[#allocation4 + $0x50] sm:$0xff]
        %v1630 = vld [vmem:[#allocation4 + $0x58] sm:$0xff]
        %v1631 = vld [vmem:[#allocation4 + $0x60] sm:$0xff]
        %v1632 = vld [vmem:[#allocation4 + $0x68] sm:$0xff]
        %v1633 = vld [vmem:[#allocation4 + $0x70] sm:$0xff]
        %v1634 = vld [vmem:[#allocation4 + $0x78] sm:$0xff]
        %v1635 = vld [vmem:[#allocation4 + $0x80] sm:$0xff]
        %v1636 = vld [vmem:[#allocation4 + $0x88] sm:$0xff]
        %v1637 = vld [vmem:[#allocation4 + $0x90] sm:$0xff]
        %v1638 = vld [vmem:[#allocation4 + $0x98] sm:$0xff]
        %v1639 = vld [vmem:[#allocation4 + $0xa0] sm:$0xff]
        %v1640 = vld [vmem:[#allocation4 + $0xa8] sm:$0xff]
        %v1641 = vld [vmem:[#allocation4 + $0xb0] sm:$0xff]
        %v1642 = vld [vmem:[#allocation4 + $0xb8] sm:$0xff]
        %v1643 = vld [vmem:[#allocation4 + $0xc0] sm:$0xff]
        %v1644 = vld [vmem:[#allocation4 + $0xc8] sm:$0xff]
        %v1645 = vld [vmem:[#allocation4 + $0xd0] sm:$0xff]
        %v1646 = vld [vmem:[#allocation4 + $0xd8] sm:$0xff]
        %v1647 = vld [vmem:[#allocation4 + $0xe0] sm:$0xff]
        %v1648 = vld [vmem:[#allocation4 + $0xe8] sm:$0xff]
        %v1649 = vld [vmem:[#allocation4 + $0xf0] sm:$0xff]
        %v1650 = vld [vmem:[#allocation4 + $0xf8] sm:$0xff]
        %s1651 = scalar_lea.vmem [#allocation8], 768
        %v1652 = vld [vmem:[%s1651] sm:$0xff]
        %v1653 = vld [vmem:[%s1651 + $0x8] sm:$0xff]
        %v1654 = vld [vmem:[%s1651 + $0x10] sm:$0xff]
        %v1655 = vld [vmem:[%s1651 + $0x18] sm:$0xff]
        %v1656 = vld [vmem:[%s1651 + $0x20] sm:$0xff]
        %v1657 = vld [vmem:[%s1651 + $0x28] sm:$0xff]
        %v1658 = vld [vmem:[%s1651 + $0x30] sm:$0xff]
        %v1659 = vld [vmem:[%s1651 + $0x38] sm:$0xff]
        %v1660 = vld [vmem:[%s1651 + $0x40] sm:$0xff]
        %v1661 = vld [vmem:[%s1651 + $0x48] sm:$0xff]
        %v1662 = vld [vmem:[%s1651 + $0x50] sm:$0xff]
        %v1663 = vld [vmem:[%s1651 + $0x58] sm:$0xff]
        %v1664 = vld [vmem:[%s1651 + $0x60] sm:$0xff]
        %v1665 = vld [vmem:[%s1651 + $0x68] sm:$0xff]
        %v1666 = vld [vmem:[%s1651 + $0x70] sm:$0xff]
        %v1667 = vld [vmem:[%s1651 + $0x78] sm:$0xff]
        %1668 = vmatprep.subr.mxu0 0.0
        %1669 = vmatpush1.msra.mxu0 %v1667
        %1670 = vmatprep.subr.mxu0 0.0
        %1671 = vmatpush1.msra.mxu0 %v1666
        %1672 = vmatprep.subr.mxu0 0.0
        %1673 = vmatpush1.msra.mxu0 %v1665
        %1674 = vmatprep.subr.mxu0 0.0
        %1675 = vmatpush1.msra.mxu0 %v1664
        %1676 = vmatprep.subr.mxu0 0.0
        %1677 = vmatpush1.msra.mxu0 %v1663
        %1678 = vmatprep.subr.mxu0 0.0
        %1679 = vmatpush1.msra.mxu0 %v1662
        %1680 = vmatprep.subr.mxu0 0.0
        %1681 = vmatpush1.msra.mxu0 %v1661
        %1682 = vmatprep.subr.mxu0 0.0
        %1683 = vmatpush1.msra.mxu0 %v1660
        %1684 = vmatprep.subr.mxu0 0.0
        %1685 = vmatpush1.msra.mxu0 %v1659
        %1686 = vmatprep.subr.mxu0 0.0
        %1687 = vmatpush1.msra.mxu0 %v1658
        %1688 = vmatprep.subr.mxu0 0.0
        %1689 = vmatpush1.msra.mxu0 %v1657
        %1690 = vmatprep.subr.mxu0 0.0
        %1691 = vmatpush1.msra.mxu0 %v1656
        %1692 = vmatprep.subr.mxu0 0.0
        %1693 = vmatpush1.msra.mxu0 %v1655
        %1694 = vmatprep.subr.mxu0 0.0
        %1695 = vmatpush1.msra.mxu0 %v1654
        %1696 = vmatprep.subr.mxu0 0.0
        %1697 = vmatpush1.msra.mxu0 %v1653
        %1698 = vmatprep.subr.mxu0 0.0
        %1699 = vmatpush1.msra.mxu0 %v1652
        %1700 = vmatprep.subr.mxu0 0.0
        %1701 = vmatpush2.msra.mxu0 0.0
        %1702 = vmatprep.subr.mxu0 0.0
        %1703 = vmatpush2.msra.mxu0 0.0
        %1704 = vmatprep.subr.mxu0 0.0
        %1705 = vmatpush2.msra.mxu0 0.0
        %1706 = vmatprep.subr.mxu0 0.0
        %1707 = vmatpush2.msra.mxu0 0.0
        %1708 = vmatprep.subr.mxu0 0.0
        %1709 = vmatpush2.msra.mxu0 0.0
        %1710 = vmatprep.subr.mxu0 0.0
        %1711 = vmatpush2.msra.mxu0 0.0
        %1712 = vmatprep.subr.mxu0 0.0
        %1713 = vmatpush2.msra.mxu0 0.0
        %1714 = vmatprep.subr.mxu0 0.0
        %1715 = vmatpush2.msra.mxu0 0.0
        %1716 = vmatprep.subr.mxu0 0.0
        %1717 = vmatpush2.msra.mxu0 0.0
        %1718 = vmatprep.subr.mxu0 0.0
        %1719 = vmatpush2.msra.mxu0 0.0
        %1720 = vmatprep.subr.mxu0 0.0
        %1721 = vmatpush2.msra.mxu0 0.0
        %1722 = vmatprep.subr.mxu0 0.0
        %1723 = vmatpush2.msra.mxu0 0.0
        %1724 = vmatprep.subr.mxu0 0.0
        %1725 = vmatpush2.msra.mxu0 0.0
        %1726 = vmatprep.subr.mxu0 0.0
        %1727 = vmatpush2.msra.mxu0 0.0
        %1728 = vmatprep.subr.mxu0 0.0
        %1729 = vmatpush2.msra.mxu0 0.0
        %1730 = vmatprep.subr.mxu0 0.0
        %1731 = vmatpush2.msra.mxu0 0.0
        %1732 = vmatprep.mubr.f32.mxu0 0.0
        %1733 = vmatmul.mubr.f32.gmra.mxu0 %v912
        %v1734 = vpop.f32.mrf.mxu0
        %v1735 = vadd.f32 0.0, %v1734
        %v1736 = vpop.f32.mrf.mxu0
        %1737 = vmatprep.mubr.f32.mxu0 0.0
        %1738 = vmatmul.mubr.f32.gmra.mxu0 %v913
        %v1739 = vpop.f32.mrf.mxu0
        %v1740 = vadd.f32 0.0, %v1739
        %v1741 = vpop.f32.mrf.mxu0
        %1742 = vmatprep.mubr.f32.mxu0 0.0
        %1743 = vmatmul.mubr.f32.gmra.mxu0 %v914
        %v1744 = vpop.f32.mrf.mxu0
        %v1745 = vadd.f32 0.0, %v1744
        %v1746 = vpop.f32.mrf.mxu0
        %1747 = vmatprep.mubr.f32.mxu0 0.0
        %1748 = vmatmul.mubr.f32.gmra.mxu0 %v915
        %v1749 = vpop.f32.mrf.mxu0
        %v1750 = vadd.f32 0.0, %v1749
        %v1751 = vpop.f32.mrf.mxu0
        %1752 = vmatprep.mubr.f32.mxu0 0.0
        %1753 = vmatmul.mubr.f32.gmra.mxu0 %v916
        %v1754 = vpop.f32.mrf.mxu0
        %v1755 = vadd.f32 0.0, %v1754
        %v1756 = vpop.f32.mrf.mxu0
        %1757 = vmatprep.mubr.f32.mxu0 0.0
        %1758 = vmatmul.mubr.f32.gmra.mxu0 %v917
        %v1759 = vpop.f32.mrf.mxu0
        %v1760 = vadd.f32 0.0, %v1759
        %v1761 = vpop.f32.mrf.mxu0
        %1762 = vmatprep.mubr.f32.mxu0 0.0
        %1763 = vmatmul.mubr.f32.gmra.mxu0 %v918
        %v1764 = vpop.f32.mrf.mxu0
        %v1765 = vadd.f32 0.0, %v1764
        %v1766 = vpop.f32.mrf.mxu0
        %1767 = vmatprep.mubr.f32.mxu0 0.0
        %1768 = vmatmul.mubr.f32.gmra.mxu0 %v919
        %v1769 = vpop.f32.mrf.mxu0
        %v1770 = vadd.f32 0.0, %v1769
        %v1771 = vpop.f32.mrf.mxu0
        %1772 = vmatprep.mubr.f32.mxu0 0.0
        %1773 = vmatmul.mubr.f32.gmra.mxu0 %v920
        %v1774 = vpop.f32.mrf.mxu0
        %v1775 = vadd.f32 0.0, %v1774
        %v1776 = vpop.f32.mrf.mxu0
        %1777 = vmatprep.mubr.f32.mxu0 0.0
        %1778 = vmatmul.mubr.f32.gmra.mxu0 %v921
        %v1779 = vpop.f32.mrf.mxu0
        %v1780 = vadd.f32 0.0, %v1779
        %v1781 = vpop.f32.mrf.mxu0
        %1782 = vmatprep.mubr.f32.mxu0 0.0
        %1783 = vmatmul.mubr.f32.gmra.mxu0 %v922
        %v1784 = vpop.f32.mrf.mxu0
        %v1785 = vadd.f32 0.0, %v1784
        %v1786 = vpop.f32.mrf.mxu0
        %1787 = vmatprep.mubr.f32.mxu0 0.0
        %1788 = vmatmul.mubr.f32.gmra.mxu0 %v923
        %v1789 = vpop.f32.mrf.mxu0
        %v1790 = vadd.f32 0.0, %v1789
        %v1791 = vpop.f32.mrf.mxu0
        %1792 = vmatprep.mubr.f32.mxu0 0.0
        %1793 = vmatmul.mubr.f32.gmra.mxu0 %v924
        %v1794 = vpop.f32.mrf.mxu0
        %v1795 = vadd.f32 0.0, %v1794
        %v1796 = vpop.f32.mrf.mxu0
        %1797 = vmatprep.mubr.f32.mxu0 0.0
        %1798 = vmatmul.mubr.f32.gmra.mxu0 %v925
        %v1799 = vpop.f32.mrf.mxu0
        %v1800 = vadd.f32 0.0, %v1799
        %v1801 = vpop.f32.mrf.mxu0
        %1802 = vmatprep.mubr.f32.mxu0 0.0
        %1803 = vmatmul.mubr.f32.gmra.mxu0 %v926
        %v1804 = vpop.f32.mrf.mxu0
        %v1805 = vadd.f32 0.0, %v1804
        %v1806 = vpop.f32.mrf.mxu0
        %1807 = vmatprep.mubr.f32.mxu0 0.0
        %1808 = vmatmul.mubr.f32.gmra.mxu0 %v927
        %v1809 = vpop.f32.mrf.mxu0
        %v1810 = vadd.f32 0.0, %v1809
        %v1811 = vpop.f32.mrf.mxu0
        %1812 = vmatprep.mubr.f32.mxu0 0.0
        %1813 = vmatmul.mubr.f32.gmra.mxu0 %v928
        %v1814 = vpop.f32.mrf.mxu0
        %v1815 = vadd.f32 0.0, %v1814
        %v1816 = vpop.f32.mrf.mxu0
        %1817 = vmatprep.mubr.f32.mxu0 0.0
        %1818 = vmatmul.mubr.f32.gmra.mxu0 %v929
        %v1819 = vpop.f32.mrf.mxu0
        %v1820 = vadd.f32 0.0, %v1819
        %v1821 = vpop.f32.mrf.mxu0
        %1822 = vmatprep.mubr.f32.mxu0 0.0
        %1823 = vmatmul.mubr.f32.gmra.mxu0 %v930
        %v1824 = vpop.f32.mrf.mxu0
        %v1825 = vadd.f32 0.0, %v1824
        %v1826 = vpop.f32.mrf.mxu0
        %1827 = vmatprep.mubr.f32.mxu0 0.0
        %1828 = vmatmul.mubr.f32.gmra.mxu0 %v931
        %v1829 = vpop.f32.mrf.mxu0
        %v1830 = vadd.f32 0.0, %v1829
        %v1831 = vpop.f32.mrf.mxu0
        %1832 = vmatprep.mubr.f32.mxu0 0.0
        %1833 = vmatmul.mubr.f32.gmra.mxu0 %v932
        %v1834 = vpop.f32.mrf.mxu0
        %v1835 = vadd.f32 0.0, %v1834
        %v1836 = vpop.f32.mrf.mxu0
        %1837 = vmatprep.mubr.f32.mxu0 0.0
        %1838 = vmatmul.mubr.f32.gmra.mxu0 %v933
        %v1839 = vpop.f32.mrf.mxu0
        %v1840 = vadd.f32 0.0, %v1839
        %v1841 = vpop.f32.mrf.mxu0
        %1842 = vmatprep.mubr.f32.mxu0 0.0
        %1843 = vmatmul.mubr.f32.gmra.mxu0 %v934
        %v1844 = vpop.f32.mrf.mxu0
        %v1845 = vadd.f32 0.0, %v1844
        %v1846 = vpop.f32.mrf.mxu0
        %1847 = vmatprep.mubr.f32.mxu0 0.0
        %1848 = vmatmul.mubr.f32.gmra.mxu0 %v935
        %v1849 = vpop.f32.mrf.mxu0
        %v1850 = vadd.f32 0.0, %v1849
        %v1851 = vpop.f32.mrf.mxu0
        %1852 = vmatprep.mubr.f32.mxu0 0.0
        %1853 = vmatmul.mubr.f32.gmra.mxu0 %v936
        %v1854 = vpop.f32.mrf.mxu0
        %v1855 = vadd.f32 0.0, %v1854
        %v1856 = vpop.f32.mrf.mxu0
        %1857 = vmatprep.mubr.f32.mxu0 0.0
        %1858 = vmatmul.mubr.f32.gmra.mxu0 %v937
        %v1859 = vpop.f32.mrf.mxu0
        %v1860 = vadd.f32 0.0, %v1859
        %v1861 = vpop.f32.mrf.mxu0
        %1862 = vmatprep.mubr.f32.mxu0 0.0
        %1863 = vmatmul.mubr.f32.gmra.mxu0 %v938
        %v1864 = vpop.f32.mrf.mxu0
        %v1865 = vadd.f32 0.0, %v1864
        %v1866 = vpop.f32.mrf.mxu0
        %1867 = vmatprep.mubr.f32.mxu0 0.0
        %1868 = vmatmul.mubr.f32.gmra.mxu0 %v939
        %v1869 = vpop.f32.mrf.mxu0
        %v1870 = vadd.f32 0.0, %v1869
        %v1871 = vpop.f32.mrf.mxu0
        %1872 = vmatprep.mubr.f32.mxu0 0.0
        %1873 = vmatmul.mubr.f32.gmra.mxu0 %v940
        %v1874 = vpop.f32.mrf.mxu0
        %v1875 = vadd.f32 0.0, %v1874
        %v1876 = vpop.f32.mrf.mxu0
        %1877 = vmatprep.mubr.f32.mxu0 0.0
        %1878 = vmatmul.mubr.f32.gmra.mxu0 %v941
        %v1879 = vpop.f32.mrf.mxu0
        %v1880 = vadd.f32 0.0, %v1879
        %v1881 = vpop.f32.mrf.mxu0
        %1882 = vmatprep.mubr.f32.mxu0 0.0
        %1883 = vmatmul.mubr.f32.gmra.mxu0 %v942
        %v1884 = vpop.f32.mrf.mxu0
        %v1885 = vadd.f32 0.0, %v1884
        %v1886 = vpop.f32.mrf.mxu0
        %1887 = vmatprep.mubr.f32.mxu0 0.0
        %1888 = vmatmul.mubr.f32.gmra.mxu0 %v943
        %v1889 = vpop.f32.mrf.mxu0
        %v1890 = vadd.f32 0.0, %v1889
        %v1891 = vpop.f32.mrf.mxu0
        %1892 = vdwg.mxu0
        %v1893 = vadd.f32 %v1619, %v1735
        %v1894 = vadd.f32 %v1620, %v1740
        %v1895 = vadd.f32 %v1621, %v1745
        %v1896 = vadd.f32 %v1622, %v1750
        %v1897 = vadd.f32 %v1623, %v1755
        %v1898 = vadd.f32 %v1624, %v1760
        %v1899 = vadd.f32 %v1625, %v1765
        %v1900 = vadd.f32 %v1626, %v1770
        %v1901 = vadd.f32 %v1627, %v1775
        %v1902 = vadd.f32 %v1628, %v1780
        %v1903 = vadd.f32 %v1629, %v1785
        %v1904 = vadd.f32 %v1630, %v1790
        %v1905 = vadd.f32 %v1631, %v1795
        %v1906 = vadd.f32 %v1632, %v1800
        %v1907 = vadd.f32 %v1633, %v1805
        %v1908 = vadd.f32 %v1634, %v1810
        %v1909 = vadd.f32 %v1635, %v1815
        %v1910 = vadd.f32 %v1636, %v1820
        %v1911 = vadd.f32 %v1637, %v1825
        %v1912 = vadd.f32 %v1638, %v1830
        %v1913 = vadd.f32 %v1639, %v1835
        %v1914 = vadd.f32 %v1640, %v1840
        %v1915 = vadd.f32 %v1641, %v1845
        %v1916 = vadd.f32 %v1642, %v1850
        %v1917 = vadd.f32 %v1643, %v1855
        %v1918 = vadd.f32 %v1644, %v1860
        %v1919 = vadd.f32 %v1645, %v1865
        %v1920 = vadd.f32 %v1646, %v1870
        %v1921 = vadd.f32 %v1647, %v1875
        %v1922 = vadd.f32 %v1648, %v1880
        %v1923 = vadd.f32 %v1649, %v1885
        %v1924 = vadd.f32 %v1650, %v1890
        %1925 = vst [vmem:[#allocation4] sm:$0xff] %v1893
        %1926 = vst [vmem:[#allocation4 + $0x8] sm:$0xff] %v1894
        %1927 = vst [vmem:[#allocation4 + $0x10] sm:$0xff] %v1895
        %1928 = vst [vmem:[#allocation4 + $0x18] sm:$0xff] %v1896
        %1929 = vst [vmem:[#allocation4 + $0x20] sm:$0xff] %v1897
        %1930 = vst [vmem:[#allocation4 + $0x28] sm:$0xff] %v1898
        %1931 = vst [vmem:[#allocation4 + $0x30] sm:$0xff] %v1899
        %1932 = vst [vmem:[#allocation4 + $0x38] sm:$0xff] %v1900
        %1933 = vst [vmem:[#allocation4 + $0x40] sm:$0xff] %v1901
        %1934 = vst [vmem:[#allocation4 + $0x48] sm:$0xff] %v1902
        %1935 = vst [vmem:[#allocation4 + $0x50] sm:$0xff] %v1903
        %1936 = vst [vmem:[#allocation4 + $0x58] sm:$0xff] %v1904
        %1937 = vst [vmem:[#allocation4 + $0x60] sm:$0xff] %v1905
        %1938 = vst [vmem:[#allocation4 + $0x68] sm:$0xff] %v1906
        %1939 = vst [vmem:[#allocation4 + $0x70] sm:$0xff] %v1907
        %1940 = vst [vmem:[#allocation4 + $0x78] sm:$0xff] %v1908
        %1941 = vst [vmem:[#allocation4 + $0x80] sm:$0xff] %v1909
        %1942 = vst [vmem:[#allocation4 + $0x88] sm:$0xff] %v1910
        %1943 = vst [vmem:[#allocation4 + $0x90] sm:$0xff] %v1911
        %1944 = vst [vmem:[#allocation4 + $0x98] sm:$0xff] %v1912
        %1945 = vst [vmem:[#allocation4 + $0xa0] sm:$0xff] %v1913
        %1946 = vst [vmem:[#allocation4 + $0xa8] sm:$0xff] %v1914
        %1947 = vst [vmem:[#allocation4 + $0xb0] sm:$0xff] %v1915
        %1948 = vst [vmem:[#allocation4 + $0xb8] sm:$0xff] %v1916
        %1949 = vst [vmem:[#allocation4 + $0xc0] sm:$0xff] %v1917
        %1950 = vst [vmem:[#allocation4 + $0xc8] sm:$0xff] %v1918
        %1951 = vst [vmem:[#allocation4 + $0xd0] sm:$0xff] %v1919
        %1952 = vst [vmem:[#allocation4 + $0xd8] sm:$0xff] %v1920
        %1953 = vst [vmem:[#allocation4 + $0xe0] sm:$0xff] %v1921
        %1954 = vst [vmem:[#allocation4 + $0xe8] sm:$0xff] %v1922
        %1955 = vst [vmem:[#allocation4 + $0xf0] sm:$0xff] %v1923
        %1956 = vst [vmem:[#allocation4 + $0xf8] sm:$0xff] %v1924
        %v1957 = vld [vmem:[#allocation2 + $0x1] sm:$0xff]
        %v1958 = vld [vmem:[#allocation2 + $0x9] sm:$0xff]
        %v1959 = vld [vmem:[#allocation2 + $0x19] sm:$0xff]
        %v1960 = vld [vmem:[#allocation2 + $0x21] sm:$0xff]
        %v1961 = vld [vmem:[#allocation2 + $0x31] sm:$0xff]
        %v1962 = vld [vmem:[#allocation2 + $0x39] sm:$0xff]
        %v1963 = vld [vmem:[#allocation2 + $0x49] sm:$0xff]
        %v1964 = vld [vmem:[#allocation2 + $0x51] sm:$0xff]
        %v1965 = vld [vmem:[#allocation2 + $0x61] sm:$0xff]
        %v1966 = vld [vmem:[#allocation2 + $0x69] sm:$0xff]
        %v1967 = vld [vmem:[#allocation2 + $0x79] sm:$0xff]
        %v1968 = vld [vmem:[#allocation2 + $0x81] sm:$0xff]
        %v1969 = vld [vmem:[#allocation2 + $0x91] sm:$0xff]
        %v1970 = vld [vmem:[#allocation2 + $0x99] sm:$0xff]
        %v1971 = vld [vmem:[#allocation2 + $0xa9] sm:$0xff]
        %v1972 = vld [vmem:[#allocation2 + $0xb1] sm:$0xff]
        %v1973 = vld [vmem:[#allocation2 + $0xc1] sm:$0xff]
        %v1974 = vld [vmem:[#allocation2 + $0xc9] sm:$0xff]
        %v1975 = vld [vmem:[#allocation2 + $0xd9] sm:$0xff]
        %v1976 = vld [vmem:[#allocation2 + $0xe1] sm:$0xff]
        %v1977 = vld [vmem:[#allocation2 + $0xf1] sm:$0xff]
        %v1978 = vld [vmem:[#allocation2 + $0xf9] sm:$0xff]
        %v1979 = vld [vmem:[#allocation2 + $0x109] sm:$0xff]
        %v1980 = vld [vmem:[#allocation2 + $0x111] sm:$0xff]
        %v1981 = vld [vmem:[#allocation2 + $0x121] sm:$0xff]
        %v1982 = vld [vmem:[#allocation2 + $0x129] sm:$0xff]
        %v1983 = vld [vmem:[#allocation2 + $0x139] sm:$0xff]
        %v1984 = vld [vmem:[#allocation2 + $0x141] sm:$0xff]
        %v1985 = vld [vmem:[#allocation2 + $0x151] sm:$0xff]
        %v1986 = vld [vmem:[#allocation2 + $0x159] sm:$0xff]
        %v1987 = vld [vmem:[#allocation2 + $0x169] sm:$0xff]
        %v1988 = vld [vmem:[#allocation2 + $0x171] sm:$0xff]
        %v1989 = vld [vmem:[#allocation2 + $0x181] sm:$0xff]
        %v1990 = vld [vmem:[#allocation2 + $0x189] sm:$0xff]
        %v1991 = vld [vmem:[#allocation2 + $0x199] sm:$0xff]
        %v1992 = vld [vmem:[#allocation2 + $0x1a1] sm:$0xff]
        %v1993 = vld [vmem:[#allocation4] sm:$0xff]
        %v1994 = vld [vmem:[#allocation4 + $0x8] sm:$0xff]
        %v1995 = vld [vmem:[#allocation4 + $0x10] sm:$0xff]
        %v1996 = vld [vmem:[#allocation4 + $0x18] sm:$0xff]
        %v1997 = vld [vmem:[#allocation4 + $0x20] sm:$0xff]
        %v1998 = vld [vmem:[#allocation4 + $0x28] sm:$0xff]
        %v1999 = vld [vmem:[#allocation4 + $0x30] sm:$0xff]
        %v2000 = vld [vmem:[#allocation4 + $0x38] sm:$0xff]
        %v2001 = vld [vmem:[#allocation4 + $0x40] sm:$0xff]
        %v2002 = vld [vmem:[#allocation4 + $0x48] sm:$0xff]
        %v2003 = vld [vmem:[#allocation4 + $0x50] sm:$0xff]
        %v2004 = vld [vmem:[#allocation4 + $0x58] sm:$0xff]
        %v2005 = vld [vmem:[#allocation4 + $0x60] sm:$0xff]
        %v2006 = vld [vmem:[#allocation4 + $0x68] sm:$0xff]
        %v2007 = vld [vmem:[#allocation4 + $0x70] sm:$0xff]
        %v2008 = vld [vmem:[#allocation4 + $0x78] sm:$0xff]
        %v2009 = vld [vmem:[#allocation4 + $0x80] sm:$0xff]
        %v2010 = vld [vmem:[#allocation4 + $0x88] sm:$0xff]
        %v2011 = vld [vmem:[#allocation4 + $0x90] sm:$0xff]
        %v2012 = vld [vmem:[#allocation4 + $0x98] sm:$0xff]
        %v2013 = vld [vmem:[#allocation4 + $0xa0] sm:$0xff]
        %v2014 = vld [vmem:[#allocation4 + $0xa8] sm:$0xff]
        %v2015 = vld [vmem:[#allocation4 + $0xb0] sm:$0xff]
        %v2016 = vld [vmem:[#allocation4 + $0xb8] sm:$0xff]
        %v2017 = vld [vmem:[#allocation4 + $0xc0] sm:$0xff]
        %v2018 = vld [vmem:[#allocation4 + $0xc8] sm:$0xff]
        %v2019 = vld [vmem:[#allocation4 + $0xd0] sm:$0xff]
        %v2020 = vld [vmem:[#allocation4 + $0xd8] sm:$0xff]
        %v2021 = vld [vmem:[#allocation4 + $0xe0] sm:$0xff]
        %v2022 = vld [vmem:[#allocation4 + $0xe8] sm:$0xff]
        %v2023 = vld [vmem:[#allocation4 + $0xf0] sm:$0xff]
        %v2024 = vld [vmem:[#allocation4 + $0xf8] sm:$0xff]
        %s2025 = scalar_lea.vmem [#allocation8], 128
        %v2026 = vld [vmem:[%s2025] sm:$0xff]
        %v2027 = vld [vmem:[%s2025 + $0x8] sm:$0xff]
        %v2028 = vld [vmem:[%s2025 + $0x10] sm:$0xff]
        %v2029 = vld [vmem:[%s2025 + $0x18] sm:$0xff]
        %v2030 = vld [vmem:[%s2025 + $0x20] sm:$0xff]
        %v2031 = vld [vmem:[%s2025 + $0x28] sm:$0xff]
        %v2032 = vld [vmem:[%s2025 + $0x30] sm:$0xff]
        %v2033 = vld [vmem:[%s2025 + $0x38] sm:$0xff]
        %v2034 = vld [vmem:[%s2025 + $0x40] sm:$0xff]
        %v2035 = vld [vmem:[%s2025 + $0x48] sm:$0xff]
        %v2036 = vld [vmem:[%s2025 + $0x50] sm:$0xff]
        %v2037 = vld [vmem:[%s2025 + $0x58] sm:$0xff]
        %v2038 = vld [vmem:[%s2025 + $0x60] sm:$0xff]
        %v2039 = vld [vmem:[%s2025 + $0x68] sm:$0xff]
        %v2040 = vld [vmem:[%s2025 + $0x70] sm:$0xff]
        %v2041 = vld [vmem:[%s2025 + $0x78] sm:$0xff]
        %2042 = vmatprep.subr.mxu0 0.0
        %2043 = vmatpush1.msra.mxu0 %v2041
        %2044 = vmatprep.subr.mxu0 0.0
        %2045 = vmatpush1.msra.mxu0 %v2040
        %2046 = vmatprep.subr.mxu0 0.0
        %2047 = vmatpush1.msra.mxu0 %v2039
        %2048 = vmatprep.subr.mxu0 0.0
        %2049 = vmatpush1.msra.mxu0 %v2038
        %2050 = vmatprep.subr.mxu0 0.0
        %2051 = vmatpush1.msra.mxu0 %v2037
        %2052 = vmatprep.subr.mxu0 0.0
        %2053 = vmatpush1.msra.mxu0 %v2036
        %2054 = vmatprep.subr.mxu0 0.0
        %2055 = vmatpush1.msra.mxu0 %v2035
        %2056 = vmatprep.subr.mxu0 0.0
        %2057 = vmatpush1.msra.mxu0 %v2034
        %2058 = vmatprep.subr.mxu0 0.0
        %2059 = vmatpush1.msra.mxu0 %v2033
        %2060 = vmatprep.subr.mxu0 0.0
        %2061 = vmatpush1.msra.mxu0 %v2032
        %2062 = vmatprep.subr.mxu0 0.0
        %2063 = vmatpush1.msra.mxu0 %v2031
        %2064 = vmatprep.subr.mxu0 0.0
        %2065 = vmatpush1.msra.mxu0 %v2030
        %2066 = vmatprep.subr.mxu0 0.0
        %2067 = vmatpush1.msra.mxu0 %v2029
        %2068 = vmatprep.subr.mxu0 0.0
        %2069 = vmatpush1.msra.mxu0 %v2028
        %2070 = vmatprep.subr.mxu0 0.0
        %2071 = vmatpush1.msra.mxu0 %v2027
        %2072 = vmatprep.subr.mxu0 0.0
        %2073 = vmatpush1.msra.mxu0 %v2026
        %2074 = vmatprep.subr.mxu0 0.0
        %2075 = vmatpush2.msra.mxu0 0.0
        %2076 = vmatprep.subr.mxu0 0.0
        %2077 = vmatpush2.msra.mxu0 0.0
        %2078 = vmatprep.subr.mxu0 0.0
        %2079 = vmatpush2.msra.mxu0 0.0
        %2080 = vmatprep.subr.mxu0 0.0
        %2081 = vmatpush2.msra.mxu0 0.0
        %2082 = vmatprep.subr.mxu0 0.0
        %2083 = vmatpush2.msra.mxu0 0.0
        %2084 = vmatprep.subr.mxu0 0.0
        %2085 = vmatpush2.msra.mxu0 0.0
        %2086 = vmatprep.subr.mxu0 0.0
        %2087 = vmatpush2.msra.mxu0 0.0
        %2088 = vmatprep.subr.mxu0 0.0
        %2089 = vmatpush2.msra.mxu0 0.0
        %2090 = vmatprep.subr.mxu0 0.0
        %2091 = vmatpush2.msra.mxu0 0.0
        %2092 = vmatprep.subr.mxu0 0.0
        %2093 = vmatpush2.msra.mxu0 0.0
        %2094 = vmatprep.subr.mxu0 0.0
        %2095 = vmatpush2.msra.mxu0 0.0
        %2096 = vmatprep.subr.mxu0 0.0
        %2097 = vmatpush2.msra.mxu0 0.0
        %2098 = vmatprep.subr.mxu0 0.0
        %2099 = vmatpush2.msra.mxu0 0.0
        %2100 = vmatprep.subr.mxu0 0.0
        %2101 = vmatpush2.msra.mxu0 0.0
        %2102 = vmatprep.subr.mxu0 0.0
        %2103 = vmatpush2.msra.mxu0 0.0
        %2104 = vmatprep.subr.mxu0 0.0
        %2105 = vmatpush2.msra.mxu0 0.0
        %2106 = vmatprep.mubr.f32.mxu0 0.0
        %2107 = vmatmul.mubr.f32.gmra.mxu0 %v1957
        %v2108 = vpop.f32.mrf.mxu0
        %v2109 = vadd.f32 0.0, %v2108
        %v2110 = vpop.f32.mrf.mxu0
        %2111 = vmatprep.mubr.f32.mxu0 0.0
        %2112 = vmatmul.mubr.f32.gmra.mxu0 %v1958
        %v2113 = vpop.f32.mrf.mxu0
        %v2114 = vadd.f32 0.0, %v2113
        %v2115 = vpop.f32.mrf.mxu0
        %2116 = vmatprep.mubr.f32.mxu0 0.0
        %2117 = vmatmul.mubr.f32.gmra.mxu0 %v1959
        %v2118 = vpop.f32.mrf.mxu0
        %v2119 = vadd.f32 0.0, %v2118
        %v2120 = vpop.f32.mrf.mxu0
        %2121 = vmatprep.mubr.f32.mxu0 0.0
        %2122 = vmatmul.mubr.f32.gmra.mxu0 %v1960
        %v2123 = vpop.f32.mrf.mxu0
        %v2124 = vadd.f32 0.0, %v2123
        %v2125 = vpop.f32.mrf.mxu0
        %2126 = vmatprep.mubr.f32.mxu0 0.0
        %2127 = vmatmul.mubr.f32.gmra.mxu0 %v1961
        %v2128 = vpop.f32.mrf.mxu0
        %v2129 = vadd.f32 0.0, %v2128
        %v2130 = vpop.f32.mrf.mxu0
        %2131 = vmatprep.mubr.f32.mxu0 0.0
        %2132 = vmatmul.mubr.f32.gmra.mxu0 %v1962
        %v2133 = vpop.f32.mrf.mxu0
        %v2134 = vadd.f32 0.0, %v2133
        %v2135 = vpop.f32.mrf.mxu0
        %2136 = vmatprep.mubr.f32.mxu0 0.0
        %2137 = vmatmul.mubr.f32.gmra.mxu0 %v1963
        %v2138 = vpop.f32.mrf.mxu0
        %v2139 = vadd.f32 0.0, %v2138
        %v2140 = vpop.f32.mrf.mxu0
        %2141 = vmatprep.mubr.f32.mxu0 0.0
        %2142 = vmatmul.mubr.f32.gmra.mxu0 %v1964
        %v2143 = vpop.f32.mrf.mxu0
        %v2144 = vadd.f32 0.0, %v2143
        %v2145 = vpop.f32.mrf.mxu0
        %2146 = vmatprep.mubr.f32.mxu0 0.0
        %2147 = vmatmul.mubr.f32.gmra.mxu0 %v1965
        %v2148 = vpop.f32.mrf.mxu0
        %v2149 = vadd.f32 0.0, %v2148
        %v2150 = vpop.f32.mrf.mxu0
        %2151 = vmatprep.mubr.f32.mxu0 0.0
        %2152 = vmatmul.mubr.f32.gmra.mxu0 %v1966
        %v2153 = vpop.f32.mrf.mxu0
        %v2154 = vadd.f32 0.0, %v2153
        %v2155 = vpop.f32.mrf.mxu0
        %2156 = vmatprep.mubr.f32.mxu0 0.0
        %2157 = vmatmul.mubr.f32.gmra.mxu0 %v1967
        %v2158 = vpop.f32.mrf.mxu0
        %v2159 = vadd.f32 0.0, %v2158
        %v2160 = vpop.f32.mrf.mxu0
        %2161 = vmatprep.mubr.f32.mxu0 0.0
        %2162 = vmatmul.mubr.f32.gmra.mxu0 %v1968
        %v2163 = vpop.f32.mrf.mxu0
        %v2164 = vadd.f32 0.0, %v2163
        %v2165 = vpop.f32.mrf.mxu0
        %2166 = vmatprep.mubr.f32.mxu0 0.0
        %2167 = vmatmul.mubr.f32.gmra.mxu0 %v1969
        %v2168 = vpop.f32.mrf.mxu0
        %v2169 = vadd.f32 0.0, %v2168
        %v2170 = vpop.f32.mrf.mxu0
        %2171 = vmatprep.mubr.f32.mxu0 0.0
        %2172 = vmatmul.mubr.f32.gmra.mxu0 %v1970
        %v2173 = vpop.f32.mrf.mxu0
        %v2174 = vadd.f32 0.0, %v2173
        %v2175 = vpop.f32.mrf.mxu0
        %2176 = vmatprep.mubr.f32.mxu0 0.0
        %2177 = vmatmul.mubr.f32.gmra.mxu0 %v1971
        %v2178 = vpop.f32.mrf.mxu0
        %v2179 = vadd.f32 0.0, %v2178
        %v2180 = vpop.f32.mrf.mxu0
        %2181 = vmatprep.mubr.f32.mxu0 0.0
        %2182 = vmatmul.mubr.f32.gmra.mxu0 %v1972
        %v2183 = vpop.f32.mrf.mxu0
        %v2184 = vadd.f32 0.0, %v2183
        %v2185 = vpop.f32.mrf.mxu0
        %2186 = vmatprep.mubr.f32.mxu0 0.0
        %2187 = vmatmul.mubr.f32.gmra.mxu0 %v1973
        %v2188 = vpop.f32.mrf.mxu0
        %v2189 = vadd.f32 0.0, %v2188
        %v2190 = vpop.f32.mrf.mxu0
        %2191 = vmatprep.mubr.f32.mxu0 0.0
        %2192 = vmatmul.mubr.f32.gmra.mxu0 %v1974
        %v2193 = vpop.f32.mrf.mxu0
        %v2194 = vadd.f32 0.0, %v2193
        %v2195 = vpop.f32.mrf.mxu0
        %2196 = vmatprep.mubr.f32.mxu0 0.0
        %2197 = vmatmul.mubr.f32.gmra.mxu0 %v1975
        %v2198 = vpop.f32.mrf.mxu0
        %v2199 = vadd.f32 0.0, %v2198
        %v2200 = vpop.f32.mrf.mxu0
        %2201 = vmatprep.mubr.f32.mxu0 0.0
        %2202 = vmatmul.mubr.f32.gmra.mxu0 %v1976
        %v2203 = vpop.f32.mrf.mxu0
        %v2204 = vadd.f32 0.0, %v2203
        %v2205 = vpop.f32.mrf.mxu0
        %2206 = vmatprep.mubr.f32.mxu0 0.0
        %2207 = vmatmul.mubr.f32.gmra.mxu0 %v1977
        %v2208 = vpop.f32.mrf.mxu0
        %v2209 = vadd.f32 0.0, %v2208
        %v2210 = vpop.f32.mrf.mxu0
        %2211 = vmatprep.mubr.f32.mxu0 0.0
        %2212 = vmatmul.mubr.f32.gmra.mxu0 %v1978
        %v2213 = vpop.f32.mrf.mxu0
        %v2214 = vadd.f32 0.0, %v2213
        %v2215 = vpop.f32.mrf.mxu0
        %2216 = vmatprep.mubr.f32.mxu0 0.0
        %2217 = vmatmul.mubr.f32.gmra.mxu0 %v1979
        %v2218 = vpop.f32.mrf.mxu0
        %v2219 = vadd.f32 0.0, %v2218
        %v2220 = vpop.f32.mrf.mxu0
        %2221 = vmatprep.mubr.f32.mxu0 0.0
        %2222 = vmatmul.mubr.f32.gmra.mxu0 %v1980
        %v2223 = vpop.f32.mrf.mxu0
        %v2224 = vadd.f32 0.0, %v2223
        %v2225 = vpop.f32.mrf.mxu0
        %2226 = vmatprep.mubr.f32.mxu0 0.0
        %2227 = vmatmul.mubr.f32.gmra.mxu0 %v1981
        %v2228 = vpop.f32.mrf.mxu0
        %v2229 = vadd.f32 0.0, %v2228
        %v2230 = vpop.f32.mrf.mxu0
        %2231 = vmatprep.mubr.f32.mxu0 0.0
        %2232 = vmatmul.mubr.f32.gmra.mxu0 %v1982
        %v2233 = vpop.f32.mrf.mxu0
        %v2234 = vadd.f32 0.0, %v2233
        %v2235 = vpop.f32.mrf.mxu0
        %2236 = vmatprep.mubr.f32.mxu0 0.0
        %2237 = vmatmul.mubr.f32.gmra.mxu0 %v1983
        %v2238 = vpop.f32.mrf.mxu0
        %v2239 = vadd.f32 0.0, %v2238
        %v2240 = vpop.f32.mrf.mxu0
        %2241 = vmatprep.mubr.f32.mxu0 0.0
        %2242 = vmatmul.mubr.f32.gmra.mxu0 %v1984
        %v2243 = vpop.f32.mrf.mxu0
        %v2244 = vadd.f32 0.0, %v2243
        %v2245 = vpop.f32.mrf.mxu0
        %2246 = vmatprep.mubr.f32.mxu0 0.0
        %2247 = vmatmul.mubr.f32.gmra.mxu0 %v1985
        %v2248 = vpop.f32.mrf.mxu0
        %v2249 = vadd.f32 0.0, %v2248
        %v2250 = vpop.f32.mrf.mxu0
        %2251 = vmatprep.mubr.f32.mxu0 0.0
        %2252 = vmatmul.mubr.f32.gmra.mxu0 %v1986
        %v2253 = vpop.f32.mrf.mxu0
        %v2254 = vadd.f32 0.0, %v2253
        %v2255 = vpop.f32.mrf.mxu0
        %2256 = vmatprep.mubr.f32.mxu0 0.0
        %2257 = vmatmul.mubr.f32.gmra.mxu0 %v1987
        %v2258 = vpop.f32.mrf.mxu0
        %v2259 = vadd.f32 0.0, %v2258
        %v2260 = vpop.f32.mrf.mxu0
        %2261 = vmatprep.mubr.f32.mxu0 0.0
        %2262 = vmatmul.mubr.f32.gmra.mxu0 %v1988
        %v2263 = vpop.f32.mrf.mxu0
        %v2264 = vadd.f32 0.0, %v2263
        %v2265 = vpop.f32.mrf.mxu0
        %2266 = vdwg.mxu0
        %v2267 = vadd.f32 %v1993, %v2109
        %v2268 = vadd.f32 %v1994, %v2114
        %v2269 = vadd.f32 %v1995, %v2119
        %v2270 = vadd.f32 %v1996, %v2124
        %v2271 = vadd.f32 %v1997, %v2129
        %v2272 = vadd.f32 %v1998, %v2134
        %v2273 = vadd.f32 %v1999, %v2139
        %v2274 = vadd.f32 %v2000, %v2144
        %v2275 = vadd.f32 %v2001, %v2149
        %v2276 = vadd.f32 %v2002, %v2154
        %v2277 = vadd.f32 %v2003, %v2159
        %v2278 = vadd.f32 %v2004, %v2164
        %v2279 = vadd.f32 %v2005, %v2169
        %v2280 = vadd.f32 %v2006, %v2174
        %v2281 = vadd.f32 %v2007, %v2179
        %v2282 = vadd.f32 %v2008, %v2184
        %v2283 = vadd.f32 %v2009, %v2189
        %v2284 = vadd.f32 %v2010, %v2194
        %v2285 = vadd.f32 %v2011, %v2199
        %v2286 = vadd.f32 %v2012, %v2204
        %v2287 = vadd.f32 %v2013, %v2209
        %v2288 = vadd.f32 %v2014, %v2214
        %v2289 = vadd.f32 %v2015, %v2219
        %v2290 = vadd.f32 %v2016, %v2224
        %v2291 = vadd.f32 %v2017, %v2229
        %v2292 = vadd.f32 %v2018, %v2234
        %v2293 = vadd.f32 %v2019, %v2239
        %v2294 = vadd.f32 %v2020, %v2244
        %v2295 = vadd.f32 %v2021, %v2249
        %v2296 = vadd.f32 %v2022, %v2254
        %v2297 = vadd.f32 %v2023, %v2259
        %v2298 = vadd.f32 %v2024, %v2264
        %2299 = vst [vmem:[#allocation4] sm:$0xff] %v2267
        %2300 = vst [vmem:[#allocation4 + $0x8] sm:$0xff] %v2268
        %2301 = vst [vmem:[#allocation4 + $0x10] sm:$0xff] %v2269
        %2302 = vst [vmem:[#allocation4 + $0x18] sm:$0xff] %v2270
        %2303 = vst [vmem:[#allocation4 + $0x20] sm:$0xff] %v2271
        %2304 = vst [vmem:[#allocation4 + $0x28] sm:$0xff] %v2272
        %2305 = vst [vmem:[#allocation4 + $0x30] sm:$0xff] %v2273
        %2306 = vst [vmem:[#allocation4 + $0x38] sm:$0xff] %v2274
        %2307 = vst [vmem:[#allocation4 + $0x40] sm:$0xff] %v2275
        %2308 = vst [vmem:[#allocation4 + $0x48] sm:$0xff] %v2276
        %2309 = vst [vmem:[#allocation4 + $0x50] sm:$0xff] %v2277
        %2310 = vst [vmem:[#allocation4 + $0x58] sm:$0xff] %v2278
        %2311 = vst [vmem:[#allocation4 + $0x60] sm:$0xff] %v2279
        %2312 = vst [vmem:[#allocation4 + $0x68] sm:$0xff] %v2280
        %2313 = vst [vmem:[#allocation4 + $0x70] sm:$0xff] %v2281
        %2314 = vst [vmem:[#allocation4 + $0x78] sm:$0xff] %v2282
        %2315 = vst [vmem:[#allocation4 + $0x80] sm:$0xff] %v2283
        %2316 = vst [vmem:[#allocation4 + $0x88] sm:$0xff] %v2284
        %2317 = vst [vmem:[#allocation4 + $0x90] sm:$0xff] %v2285
        %2318 = vst [vmem:[#allocation4 + $0x98] sm:$0xff] %v2286
        %2319 = vst [vmem:[#allocation4 + $0xa0] sm:$0xff] %v2287
        %2320 = vst [vmem:[#allocation4 + $0xa8] sm:$0xff] %v2288
        %2321 = vst [vmem:[#allocation4 + $0xb0] sm:$0xff] %v2289
        %2322 = vst [vmem:[#allocation4 + $0xb8] sm:$0xff] %v2290
        %2323 = vst [vmem:[#allocation4 + $0xc0] sm:$0xff] %v2291
        %2324 = vst [vmem:[#allocation4 + $0xc8] sm:$0xff] %v2292
        %2325 = vst [vmem:[#allocation4 + $0xd0] sm:$0xff] %v2293
        %2326 = vst [vmem:[#allocation4 + $0xd8] sm:$0xff] %v2294
        %2327 = vst [vmem:[#allocation4 + $0xe0] sm:$0xff] %v2295
        %2328 = vst [vmem:[#allocation4 + $0xe8] sm:$0xff] %v2296
        %2329 = vst [vmem:[#allocation4 + $0xf0] sm:$0xff] %v2297
        %2330 = vst [vmem:[#allocation4 + $0xf8] sm:$0xff] %v2298
        %v2331 = vld [vmem:[#allocation4] sm:$0xff]
        %v2332 = vld [vmem:[#allocation4 + $0x8] sm:$0xff]
        %v2333 = vld [vmem:[#allocation4 + $0x10] sm:$0xff]
        %v2334 = vld [vmem:[#allocation4 + $0x18] sm:$0xff]
        %v2335 = vld [vmem:[#allocation4 + $0x20] sm:$0xff]
        %v2336 = vld [vmem:[#allocation4 + $0x28] sm:$0xff]
        %v2337 = vld [vmem:[#allocation4 + $0x30] sm:$0xff]
        %v2338 = vld [vmem:[#allocation4 + $0x38] sm:$0xff]
        %v2339 = vld [vmem:[#allocation4 + $0x40] sm:$0xff]
        %v2340 = vld [vmem:[#allocation4 + $0x48] sm:$0xff]
        %v2341 = vld [vmem:[#allocation4 + $0x50] sm:$0xff]
        %v2342 = vld [vmem:[#allocation4 + $0x58] sm:$0xff]
        %v2343 = vld [vmem:[#allocation4 + $0x60] sm:$0xff]
        %v2344 = vld [vmem:[#allocation4 + $0x68] sm:$0xff]
        %v2345 = vld [vmem:[#allocation4 + $0x70] sm:$0xff]
        %v2346 = vld [vmem:[#allocation4 + $0x78] sm:$0xff]
        %v2347 = vld [vmem:[#allocation4 + $0x80] sm:$0xff]
        %v2348 = vld [vmem:[#allocation4 + $0x88] sm:$0xff]
        %v2349 = vld [vmem:[#allocation4 + $0x90] sm:$0xff]
        %v2350 = vld [vmem:[#allocation4 + $0x98] sm:$0xff]
        %v2351 = vld [vmem:[#allocation4 + $0xa0] sm:$0xff]
        %v2352 = vld [vmem:[#allocation4 + $0xa8] sm:$0xff]
        %v2353 = vld [vmem:[#allocation4 + $0xb0] sm:$0xff]
        %v2354 = vld [vmem:[#allocation4 + $0xb8] sm:$0xff]
        %v2355 = vld [vmem:[#allocation4 + $0xc0] sm:$0xff]
        %v2356 = vld [vmem:[#allocation4 + $0xc8] sm:$0xff]
        %v2357 = vld [vmem:[#allocation4 + $0xd0] sm:$0xff]
        %v2358 = vld [vmem:[#allocation4 + $0xd8] sm:$0xff]
        %v2359 = vld [vmem:[#allocation4 + $0xe0] sm:$0xff]
        %v2360 = vld [vmem:[#allocation4 + $0xe8] sm:$0xff]
        %v2361 = vld [vmem:[#allocation4 + $0xf0] sm:$0xff]
        %v2362 = vld [vmem:[#allocation4 + $0xf8] sm:$0xff]
        %s2363 = scalar_lea.vmem [#allocation8], 512
        %v2364 = vld [vmem:[%s2363] sm:$0xff]
        %v2365 = vld [vmem:[%s2363 + $0x8] sm:$0xff]
        %v2366 = vld [vmem:[%s2363 + $0x10] sm:$0xff]
        %v2367 = vld [vmem:[%s2363 + $0x18] sm:$0xff]
        %v2368 = vld [vmem:[%s2363 + $0x20] sm:$0xff]
        %v2369 = vld [vmem:[%s2363 + $0x28] sm:$0xff]
        %v2370 = vld [vmem:[%s2363 + $0x30] sm:$0xff]
        %v2371 = vld [vmem:[%s2363 + $0x38] sm:$0xff]
        %v2372 = vld [vmem:[%s2363 + $0x40] sm:$0xff]
        %v2373 = vld [vmem:[%s2363 + $0x48] sm:$0xff]
        %v2374 = vld [vmem:[%s2363 + $0x50] sm:$0xff]
        %v2375 = vld [vmem:[%s2363 + $0x58] sm:$0xff]
        %v2376 = vld [vmem:[%s2363 + $0x60] sm:$0xff]
        %v2377 = vld [vmem:[%s2363 + $0x68] sm:$0xff]
        %v2378 = vld [vmem:[%s2363 + $0x70] sm:$0xff]
        %v2379 = vld [vmem:[%s2363 + $0x78] sm:$0xff]
        %2380 = vmatprep.subr.mxu0 0.0
        %2381 = vmatpush1.msra.mxu0 %v2379
        %2382 = vmatprep.subr.mxu0 0.0
        %2383 = vmatpush1.msra.mxu0 %v2378
        %2384 = vmatprep.subr.mxu0 0.0
        %2385 = vmatpush1.msra.mxu0 %v2377
        %2386 = vmatprep.subr.mxu0 0.0
        %2387 = vmatpush1.msra.mxu0 %v2376
        %2388 = vmatprep.subr.mxu0 0.0
        %2389 = vmatpush1.msra.mxu0 %v2375
        %2390 = vmatprep.subr.mxu0 0.0
        %2391 = vmatpush1.msra.mxu0 %v2374
        %2392 = vmatprep.subr.mxu0 0.0
        %2393 = vmatpush1.msra.mxu0 %v2373
        %2394 = vmatprep.subr.mxu0 0.0
        %2395 = vmatpush1.msra.mxu0 %v2372
        %2396 = vmatprep.subr.mxu0 0.0
        %2397 = vmatpush1.msra.mxu0 %v2371
        %2398 = vmatprep.subr.mxu0 0.0
        %2399 = vmatpush1.msra.mxu0 %v2370
        %2400 = vmatprep.subr.mxu0 0.0
        %2401 = vmatpush1.msra.mxu0 %v2369
        %2402 = vmatprep.subr.mxu0 0.0
        %2403 = vmatpush1.msra.mxu0 %v2368
        %2404 = vmatprep.subr.mxu0 0.0
        %2405 = vmatpush1.msra.mxu0 %v2367
        %2406 = vmatprep.subr.mxu0 0.0
        %2407 = vmatpush1.msra.mxu0 %v2366
        %2408 = vmatprep.subr.mxu0 0.0
        %2409 = vmatpush1.msra.mxu0 %v2365
        %2410 = vmatprep.subr.mxu0 0.0
        %2411 = vmatpush1.msra.mxu0 %v2364
        %2412 = vmatprep.subr.mxu0 0.0
        %2413 = vmatpush2.msra.mxu0 0.0
        %2414 = vmatprep.subr.mxu0 0.0
        %2415 = vmatpush2.msra.mxu0 0.0
        %2416 = vmatprep.subr.mxu0 0.0
        %2417 = vmatpush2.msra.mxu0 0.0
        %2418 = vmatprep.subr.mxu0 0.0
        %2419 = vmatpush2.msra.mxu0 0.0
        %2420 = vmatprep.subr.mxu0 0.0
        %2421 = vmatpush2.msra.mxu0 0.0
        %2422 = vmatprep.subr.mxu0 0.0
        %2423 = vmatpush2.msra.mxu0 0.0
        %2424 = vmatprep.subr.mxu0 0.0
        %2425 = vmatpush2.msra.mxu0 0.0
        %2426 = vmatprep.subr.mxu0 0.0
        %2427 = vmatpush2.msra.mxu0 0.0
        %2428 = vmatprep.subr.mxu0 0.0
        %2429 = vmatpush2.msra.mxu0 0.0
        %2430 = vmatprep.subr.mxu0 0.0
        %2431 = vmatpush2.msra.mxu0 0.0
        %2432 = vmatprep.subr.mxu0 0.0
        %2433 = vmatpush2.msra.mxu0 0.0
        %2434 = vmatprep.subr.mxu0 0.0
        %2435 = vmatpush2.msra.mxu0 0.0
        %2436 = vmatprep.subr.mxu0 0.0
        %2437 = vmatpush2.msra.mxu0 0.0
        %2438 = vmatprep.subr.mxu0 0.0
        %2439 = vmatpush2.msra.mxu0 0.0
        %2440 = vmatprep.subr.mxu0 0.0
        %2441 = vmatpush2.msra.mxu0 0.0
        %2442 = vmatprep.subr.mxu0 0.0
        %2443 = vmatpush2.msra.mxu0 0.0
        %2444 = vmatprep.mubr.f32.mxu0 0.0
        %2445 = vmatmul.mubr.f32.gmra.mxu0 %v1959
        %v2446 = vpop.f32.mrf.mxu0
        %v2447 = vadd.f32 0.0, %v2446
        %v2448 = vpop.f32.mrf.mxu0
        %2449 = vmatprep.mubr.f32.mxu0 0.0
        %2450 = vmatmul.mubr.f32.gmra.mxu0 %v1960
        %v2451 = vpop.f32.mrf.mxu0
        %v2452 = vadd.f32 0.0, %v2451
        %v2453 = vpop.f32.mrf.mxu0
        %2454 = vmatprep.mubr.f32.mxu0 0.0
        %2455 = vmatmul.mubr.f32.gmra.mxu0 %v1961
        %v2456 = vpop.f32.mrf.mxu0
        %v2457 = vadd.f32 0.0, %v2456
        %v2458 = vpop.f32.mrf.mxu0
        %2459 = vmatprep.mubr.f32.mxu0 0.0
        %2460 = vmatmul.mubr.f32.gmra.mxu0 %v1962
        %v2461 = vpop.f32.mrf.mxu0
        %v2462 = vadd.f32 0.0, %v2461
        %v2463 = vpop.f32.mrf.mxu0
        %2464 = vmatprep.mubr.f32.mxu0 0.0
        %2465 = vmatmul.mubr.f32.gmra.mxu0 %v1963
        %v2466 = vpop.f32.mrf.mxu0
        %v2467 = vadd.f32 0.0, %v2466
        %v2468 = vpop.f32.mrf.mxu0
        %2469 = vmatprep.mubr.f32.mxu0 0.0
        %2470 = vmatmul.mubr.f32.gmra.mxu0 %v1964
        %v2471 = vpop.f32.mrf.mxu0
        %v2472 = vadd.f32 0.0, %v2471
        %v2473 = vpop.f32.mrf.mxu0
        %2474 = vmatprep.mubr.f32.mxu0 0.0
        %2475 = vmatmul.mubr.f32.gmra.mxu0 %v1965
        %v2476 = vpop.f32.mrf.mxu0
        %v2477 = vadd.f32 0.0, %v2476
        %v2478 = vpop.f32.mrf.mxu0
        %2479 = vmatprep.mubr.f32.mxu0 0.0
        %2480 = vmatmul.mubr.f32.gmra.mxu0 %v1966
        %v2481 = vpop.f32.mrf.mxu0
        %v2482 = vadd.f32 0.0, %v2481
        %v2483 = vpop.f32.mrf.mxu0
        %2484 = vmatprep.mubr.f32.mxu0 0.0
        %2485 = vmatmul.mubr.f32.gmra.mxu0 %v1967
        %v2486 = vpop.f32.mrf.mxu0
        %v2487 = vadd.f32 0.0, %v2486
        %v2488 = vpop.f32.mrf.mxu0
        %2489 = vmatprep.mubr.f32.mxu0 0.0
        %2490 = vmatmul.mubr.f32.gmra.mxu0 %v1968
        %v2491 = vpop.f32.mrf.mxu0
        %v2492 = vadd.f32 0.0, %v2491
        %v2493 = vpop.f32.mrf.mxu0
        %2494 = vmatprep.mubr.f32.mxu0 0.0
        %2495 = vmatmul.mubr.f32.gmra.mxu0 %v1969
        %v2496 = vpop.f32.mrf.mxu0
        %v2497 = vadd.f32 0.0, %v2496
        %v2498 = vpop.f32.mrf.mxu0
        %2499 = vmatprep.mubr.f32.mxu0 0.0
        %2500 = vmatmul.mubr.f32.gmra.mxu0 %v1970
        %v2501 = vpop.f32.mrf.mxu0
        %v2502 = vadd.f32 0.0, %v2501
        %v2503 = vpop.f32.mrf.mxu0
        %2504 = vmatprep.mubr.f32.mxu0 0.0
        %2505 = vmatmul.mubr.f32.gmra.mxu0 %v1971
        %v2506 = vpop.f32.mrf.mxu0
        %v2507 = vadd.f32 0.0, %v2506
        %v2508 = vpop.f32.mrf.mxu0
        %2509 = vmatprep.mubr.f32.mxu0 0.0
        %2510 = vmatmul.mubr.f32.gmra.mxu0 %v1972
        %v2511 = vpop.f32.mrf.mxu0
        %v2512 = vadd.f32 0.0, %v2511
        %v2513 = vpop.f32.mrf.mxu0
        %2514 = vmatprep.mubr.f32.mxu0 0.0
        %2515 = vmatmul.mubr.f32.gmra.mxu0 %v1973
        %v2516 = vpop.f32.mrf.mxu0
        %v2517 = vadd.f32 0.0, %v2516
        %v2518 = vpop.f32.mrf.mxu0
        %2519 = vmatprep.mubr.f32.mxu0 0.0
        %2520 = vmatmul.mubr.f32.gmra.mxu0 %v1974
        %v2521 = vpop.f32.mrf.mxu0
        %v2522 = vadd.f32 0.0, %v2521
        %v2523 = vpop.f32.mrf.mxu0
        %2524 = vmatprep.mubr.f32.mxu0 0.0
        %2525 = vmatmul.mubr.f32.gmra.mxu0 %v1975
        %v2526 = vpop.f32.mrf.mxu0
        %v2527 = vadd.f32 0.0, %v2526
        %v2528 = vpop.f32.mrf.mxu0
        %2529 = vmatprep.mubr.f32.mxu0 0.0
        %2530 = vmatmul.mubr.f32.gmra.mxu0 %v1976
        %v2531 = vpop.f32.mrf.mxu0
        %v2532 = vadd.f32 0.0, %v2531
        %v2533 = vpop.f32.mrf.mxu0
        %2534 = vmatprep.mubr.f32.mxu0 0.0
        %2535 = vmatmul.mubr.f32.gmra.mxu0 %v1977
        %v2536 = vpop.f32.mrf.mxu0
        %v2537 = vadd.f32 0.0, %v2536
        %v2538 = vpop.f32.mrf.mxu0
        %2539 = vmatprep.mubr.f32.mxu0 0.0
        %2540 = vmatmul.mubr.f32.gmra.mxu0 %v1978
        %v2541 = vpop.f32.mrf.mxu0
        %v2542 = vadd.f32 0.0, %v2541
        %v2543 = vpop.f32.mrf.mxu0
        %2544 = vmatprep.mubr.f32.mxu0 0.0
        %2545 = vmatmul.mubr.f32.gmra.mxu0 %v1979
        %v2546 = vpop.f32.mrf.mxu0
        %v2547 = vadd.f32 0.0, %v2546
        %v2548 = vpop.f32.mrf.mxu0
        %2549 = vmatprep.mubr.f32.mxu0 0.0
        %2550 = vmatmul.mubr.f32.gmra.mxu0 %v1980
        %v2551 = vpop.f32.mrf.mxu0
        %v2552 = vadd.f32 0.0, %v2551
        %v2553 = vpop.f32.mrf.mxu0
        %2554 = vmatprep.mubr.f32.mxu0 0.0
        %2555 = vmatmul.mubr.f32.gmra.mxu0 %v1981
        %v2556 = vpop.f32.mrf.mxu0
        %v2557 = vadd.f32 0.0, %v2556
        %v2558 = vpop.f32.mrf.mxu0
        %2559 = vmatprep.mubr.f32.mxu0 0.0
        %2560 = vmatmul.mubr.f32.gmra.mxu0 %v1982
        %v2561 = vpop.f32.mrf.mxu0
        %v2562 = vadd.f32 0.0, %v2561
        %v2563 = vpop.f32.mrf.mxu0
        %2564 = vmatprep.mubr.f32.mxu0 0.0
        %2565 = vmatmul.mubr.f32.gmra.mxu0 %v1983
        %v2566 = vpop.f32.mrf.mxu0
        %v2567 = vadd.f32 0.0, %v2566
        %v2568 = vpop.f32.mrf.mxu0
        %2569 = vmatprep.mubr.f32.mxu0 0.0
        %2570 = vmatmul.mubr.f32.gmra.mxu0 %v1984
        %v2571 = vpop.f32.mrf.mxu0
        %v2572 = vadd.f32 0.0, %v2571
        %v2573 = vpop.f32.mrf.mxu0
        %2574 = vmatprep.mubr.f32.mxu0 0.0
        %2575 = vmatmul.mubr.f32.gmra.mxu0 %v1985
        %v2576 = vpop.f32.mrf.mxu0
        %v2577 = vadd.f32 0.0, %v2576
        %v2578 = vpop.f32.mrf.mxu0
        %2579 = vmatprep.mubr.f32.mxu0 0.0
        %2580 = vmatmul.mubr.f32.gmra.mxu0 %v1986
        %v2581 = vpop.f32.mrf.mxu0
        %v2582 = vadd.f32 0.0, %v2581
        %v2583 = vpop.f32.mrf.mxu0
        %2584 = vmatprep.mubr.f32.mxu0 0.0
        %2585 = vmatmul.mubr.f32.gmra.mxu0 %v1987
        %v2586 = vpop.f32.mrf.mxu0
        %v2587 = vadd.f32 0.0, %v2586
        %v2588 = vpop.f32.mrf.mxu0
        %2589 = vmatprep.mubr.f32.mxu0 0.0
        %2590 = vmatmul.mubr.f32.gmra.mxu0 %v1988
        %v2591 = vpop.f32.mrf.mxu0
        %v2592 = vadd.f32 0.0, %v2591
        %v2593 = vpop.f32.mrf.mxu0
        %2594 = vmatprep.mubr.f32.mxu0 0.0
        %2595 = vmatmul.mubr.f32.gmra.mxu0 %v1989
        %v2596 = vpop.f32.mrf.mxu0
        %v2597 = vadd.f32 0.0, %v2596
        %v2598 = vpop.f32.mrf.mxu0
        %2599 = vmatprep.mubr.f32.mxu0 0.0
        %2600 = vmatmul.mubr.f32.gmra.mxu0 %v1990
        %v2601 = vpop.f32.mrf.mxu0
        %v2602 = vadd.f32 0.0, %v2601
        %v2603 = vpop.f32.mrf.mxu0
        %2604 = vdwg.mxu0
        %v2605 = vadd.f32 %v2331, %v2447
        %v2606 = vadd.f32 %v2332, %v2452
        %v2607 = vadd.f32 %v2333, %v2457
        %v2608 = vadd.f32 %v2334, %v2462
        %v2609 = vadd.f32 %v2335, %v2467
        %v2610 = vadd.f32 %v2336, %v2472
        %v2611 = vadd.f32 %v2337, %v2477
        %v2612 = vadd.f32 %v2338, %v2482
        %v2613 = vadd.f32 %v2339, %v2487
        %v2614 = vadd.f32 %v2340, %v2492
        %v2615 = vadd.f32 %v2341, %v2497
        %v2616 = vadd.f32 %v2342, %v2502
        %v2617 = vadd.f32 %v2343, %v2507
        %v2618 = vadd.f32 %v2344, %v2512
        %v2619 = vadd.f32 %v2345, %v2517
        %v2620 = vadd.f32 %v2346, %v2522
        %v2621 = vadd.f32 %v2347, %v2527
        %v2622 = vadd.f32 %v2348, %v2532
        %v2623 = vadd.f32 %v2349, %v2537
        %v2624 = vadd.f32 %v2350, %v2542
        %v2625 = vadd.f32 %v2351, %v2547
        %v2626 = vadd.f32 %v2352, %v2552
        %v2627 = vadd.f32 %v2353, %v2557
        %v2628 = vadd.f32 %v2354, %v2562
        %v2629 = vadd.f32 %v2355, %v2567
        %v2630 = vadd.f32 %v2356, %v2572
        %v2631 = vadd.f32 %v2357, %v2577
        %v2632 = vadd.f32 %v2358, %v2582
        %v2633 = vadd.f32 %v2359, %v2587
        %v2634 = vadd.f32 %v2360, %v2592
        %v2635 = vadd.f32 %v2361, %v2597
        %v2636 = vadd.f32 %v2362, %v2602
        %2637 = vst [vmem:[#allocation4] sm:$0xff] %v2605
        %2638 = vst [vmem:[#allocation4 + $0x8] sm:$0xff] %v2606
        %2639 = vst [vmem:[#allocation4 + $0x10] sm:$0xff] %v2607
        %2640 = vst [vmem:[#allocation4 + $0x18] sm:$0xff] %v2608
        %2641 = vst [vmem:[#allocation4 + $0x20] sm:$0xff] %v2609
        %2642 = vst [vmem:[#allocation4 + $0x28] sm:$0xff] %v2610
        %2643 = vst [vmem:[#allocation4 + $0x30] sm:$0xff] %v2611
        %2644 = vst [vmem:[#allocation4 + $0x38] sm:$0xff] %v2612
        %2645 = vst [vmem:[#allocation4 + $0x40] sm:$0xff] %v2613
        %2646 = vst [vmem:[#allocation4 + $0x48] sm:$0xff] %v2614
        %2647 = vst [vmem:[#allocation4 + $0x50] sm:$0xff] %v2615
        %2648 = vst [vmem:[#allocation4 + $0x58] sm:$0xff] %v2616
        %2649 = vst [vmem:[#allocation4 + $0x60] sm:$0xff] %v2617
        %2650 = vst [vmem:[#allocation4 + $0x68] sm:$0xff] %v2618
        %2651 = vst [vmem:[#allocation4 + $0x70] sm:$0xff] %v2619
        %2652 = vst [vmem:[#allocation4 + $0x78] sm:$0xff] %v2620
        %2653 = vst [vmem:[#allocation4 + $0x80] sm:$0xff] %v2621
        %2654 = vst [vmem:[#allocation4 + $0x88] sm:$0xff] %v2622
        %2655 = vst [vmem:[#allocation4 + $0x90] sm:$0xff] %v2623
        %2656 = vst [vmem:[#allocation4 + $0x98] sm:$0xff] %v2624
        %2657 = vst [vmem:[#allocation4 + $0xa0] sm:$0xff] %v2625
        %2658 = vst [vmem:[#allocation4 + $0xa8] sm:$0xff] %v2626
        %2659 = vst [vmem:[#allocation4 + $0xb0] sm:$0xff] %v2627
        %2660 = vst [vmem:[#allocation4 + $0xb8] sm:$0xff] %v2628
        %2661 = vst [vmem:[#allocation4 + $0xc0] sm:$0xff] %v2629
        %2662 = vst [vmem:[#allocation4 + $0xc8] sm:$0xff] %v2630
        %2663 = vst [vmem:[#allocation4 + $0xd0] sm:$0xff] %v2631
        %2664 = vst [vmem:[#allocation4 + $0xd8] sm:$0xff] %v2632
        %2665 = vst [vmem:[#allocation4 + $0xe0] sm:$0xff] %v2633
        %2666 = vst [vmem:[#allocation4 + $0xe8] sm:$0xff] %v2634
        %2667 = vst [vmem:[#allocation4 + $0xf0] sm:$0xff] %v2635
        %2668 = vst [vmem:[#allocation4 + $0xf8] sm:$0xff] %v2636
        %v2669 = vld [vmem:[#allocation4] sm:$0xff]
        %v2670 = vld [vmem:[#allocation4 + $0x8] sm:$0xff]
        %v2671 = vld [vmem:[#allocation4 + $0x10] sm:$0xff]
        %v2672 = vld [vmem:[#allocation4 + $0x18] sm:$0xff]
        %v2673 = vld [vmem:[#allocation4 + $0x20] sm:$0xff]
        %v2674 = vld [vmem:[#allocation4 + $0x28] sm:$0xff]
        %v2675 = vld [vmem:[#allocation4 + $0x30] sm:$0xff]
        %v2676 = vld [vmem:[#allocation4 + $0x38] sm:$0xff]
        %v2677 = vld [vmem:[#allocation4 + $0x40] sm:$0xff]
        %v2678 = vld [vmem:[#allocation4 + $0x48] sm:$0xff]
        %v2679 = vld [vmem:[#allocation4 + $0x50] sm:$0xff]
        %v2680 = vld [vmem:[#allocation4 + $0x58] sm:$0xff]
        %v2681 = vld [vmem:[#allocation4 + $0x60] sm:$0xff]
        %v2682 = vld [vmem:[#allocation4 + $0x68] sm:$0xff]
        %v2683 = vld [vmem:[#allocation4 + $0x70] sm:$0xff]
        %v2684 = vld [vmem:[#allocation4 + $0x78] sm:$0xff]
        %v2685 = vld [vmem:[#allocation4 + $0x80] sm:$0xff]
        %v2686 = vld [vmem:[#allocation4 + $0x88] sm:$0xff]
        %v2687 = vld [vmem:[#allocation4 + $0x90] sm:$0xff]
        %v2688 = vld [vmem:[#allocation4 + $0x98] sm:$0xff]
        %v2689 = vld [vmem:[#allocation4 + $0xa0] sm:$0xff]
        %v2690 = vld [vmem:[#allocation4 + $0xa8] sm:$0xff]
        %v2691 = vld [vmem:[#allocation4 + $0xb0] sm:$0xff]
        %v2692 = vld [vmem:[#allocation4 + $0xb8] sm:$0xff]
        %v2693 = vld [vmem:[#allocation4 + $0xc0] sm:$0xff]
        %v2694 = vld [vmem:[#allocation4 + $0xc8] sm:$0xff]
        %v2695 = vld [vmem:[#allocation4 + $0xd0] sm:$0xff]
        %v2696 = vld [vmem:[#allocation4 + $0xd8] sm:$0xff]
        %v2697 = vld [vmem:[#allocation4 + $0xe0] sm:$0xff]
        %v2698 = vld [vmem:[#allocation4 + $0xe8] sm:$0xff]
        %v2699 = vld [vmem:[#allocation4 + $0xf0] sm:$0xff]
        %v2700 = vld [vmem:[#allocation4 + $0xf8] sm:$0xff]
        %s2701 = scalar_lea.vmem [#allocation8], 896
        %v2702 = vld [vmem:[%s2701] sm:$0xff]
        %v2703 = vld [vmem:[%s2701 + $0x8] sm:$0xff]
        %v2704 = vld [vmem:[%s2701 + $0x10] sm:$0xff]
        %v2705 = vld [vmem:[%s2701 + $0x18] sm:$0xff]
        %v2706 = vld [vmem:[%s2701 + $0x20] sm:$0xff]
        %v2707 = vld [vmem:[%s2701 + $0x28] sm:$0xff]
        %v2708 = vld [vmem:[%s2701 + $0x30] sm:$0xff]
        %v2709 = vld [vmem:[%s2701 + $0x38] sm:$0xff]
        %v2710 = vld [vmem:[%s2701 + $0x40] sm:$0xff]
        %v2711 = vld [vmem:[%s2701 + $0x48] sm:$0xff]
        %v2712 = vld [vmem:[%s2701 + $0x50] sm:$0xff]
        %v2713 = vld [vmem:[%s2701 + $0x58] sm:$0xff]
        %v2714 = vld [vmem:[%s2701 + $0x60] sm:$0xff]
        %v2715 = vld [vmem:[%s2701 + $0x68] sm:$0xff]
        %v2716 = vld [vmem:[%s2701 + $0x70] sm:$0xff]
        %v2717 = vld [vmem:[%s2701 + $0x78] sm:$0xff]
        %2718 = vmatprep.subr.mxu0 0.0
        %2719 = vmatpush1.msra.mxu0 %v2717
        %2720 = vmatprep.subr.mxu0 0.0
        %2721 = vmatpush1.msra.mxu0 %v2716
        %2722 = vmatprep.subr.mxu0 0.0
        %2723 = vmatpush1.msra.mxu0 %v2715
        %2724 = vmatprep.subr.mxu0 0.0
        %2725 = vmatpush1.msra.mxu0 %v2714
        %2726 = vmatprep.subr.mxu0 0.0
        %2727 = vmatpush1.msra.mxu0 %v2713
        %2728 = vmatprep.subr.mxu0 0.0
        %2729 = vmatpush1.msra.mxu0 %v2712
        %2730 = vmatprep.subr.mxu0 0.0
        %2731 = vmatpush1.msra.mxu0 %v2711
        %2732 = vmatprep.subr.mxu0 0.0
        %2733 = vmatpush1.msra.mxu0 %v2710
        %2734 = vmatprep.subr.mxu0 0.0
        %2735 = vmatpush1.msra.mxu0 %v2709
        %2736 = vmatprep.subr.mxu0 0.0
        %2737 = vmatpush1.msra.mxu0 %v2708
        %2738 = vmatprep.subr.mxu0 0.0
        %2739 = vmatpush1.msra.mxu0 %v2707
        %2740 = vmatprep.subr.mxu0 0.0
        %2741 = vmatpush1.msra.mxu0 %v2706
        %2742 = vmatprep.subr.mxu0 0.0
        %2743 = vmatpush1.msra.mxu0 %v2705
        %2744 = vmatprep.subr.mxu0 0.0
        %2745 = vmatpush1.msra.mxu0 %v2704
        %2746 = vmatprep.subr.mxu0 0.0
        %2747 = vmatpush1.msra.mxu0 %v2703
        %2748 = vmatprep.subr.mxu0 0.0
        %2749 = vmatpush1.msra.mxu0 %v2702
        %2750 = vmatprep.subr.mxu0 0.0
        %2751 = vmatpush2.msra.mxu0 0.0
        %2752 = vmatprep.subr.mxu0 0.0
        %2753 = vmatpush2.msra.mxu0 0.0
        %2754 = vmatprep.subr.mxu0 0.0
        %2755 = vmatpush2.msra.mxu0 0.0
        %2756 = vmatprep.subr.mxu0 0.0
        %2757 = vmatpush2.msra.mxu0 0.0
        %2758 = vmatprep.subr.mxu0 0.0
        %2759 = vmatpush2.msra.mxu0 0.0
        %2760 = vmatprep.subr.mxu0 0.0
        %2761 = vmatpush2.msra.mxu0 0.0
        %2762 = vmatprep.subr.mxu0 0.0
        %2763 = vmatpush2.msra.mxu0 0.0
        %2764 = vmatprep.subr.mxu0 0.0
        %2765 = vmatpush2.msra.mxu0 0.0
        %2766 = vmatprep.subr.mxu0 0.0
        %2767 = vmatpush2.msra.mxu0 0.0
        %2768 = vmatprep.subr.mxu0 0.0
        %2769 = vmatpush2.msra.mxu0 0.0
        %2770 = vmatprep.subr.mxu0 0.0
        %2771 = vmatpush2.msra.mxu0 0.0
        %2772 = vmatprep.subr.mxu0 0.0
        %2773 = vmatpush2.msra.mxu0 0.0
        %2774 = vmatprep.subr.mxu0 0.0
        %2775 = vmatpush2.msra.mxu0 0.0
        %2776 = vmatprep.subr.mxu0 0.0
        %2777 = vmatpush2.msra.mxu0 0.0
        %2778 = vmatprep.subr.mxu0 0.0
        %2779 = vmatpush2.msra.mxu0 0.0
        %2780 = vmatprep.subr.mxu0 0.0
        %2781 = vmatpush2.msra.mxu0 0.0
        %2782 = vmatprep.mubr.f32.mxu0 0.0
        %2783 = vmatmul.mubr.f32.gmra.mxu0 %v1961
        %v2784 = vpop.f32.mrf.mxu0
        %v2785 = vadd.f32 0.0, %v2784
        %v2786 = vpop.f32.mrf.mxu0
        %2787 = vmatprep.mubr.f32.mxu0 0.0
        %2788 = vmatmul.mubr.f32.gmra.mxu0 %v1962
        %v2789 = vpop.f32.mrf.mxu0
        %v2790 = vadd.f32 0.0, %v2789
        %v2791 = vpop.f32.mrf.mxu0
        %2792 = vmatprep.mubr.f32.mxu0 0.0
        %2793 = vmatmul.mubr.f32.gmra.mxu0 %v1963
        %v2794 = vpop.f32.mrf.mxu0
        %v2795 = vadd.f32 0.0, %v2794
        %v2796 = vpop.f32.mrf.mxu0
        %2797 = vmatprep.mubr.f32.mxu0 0.0
        %2798 = vmatmul.mubr.f32.gmra.mxu0 %v1964
        %v2799 = vpop.f32.mrf.mxu0
        %v2800 = vadd.f32 0.0, %v2799
        %v2801 = vpop.f32.mrf.mxu0
        %2802 = vmatprep.mubr.f32.mxu0 0.0
        %2803 = vmatmul.mubr.f32.gmra.mxu0 %v1965
        %v2804 = vpop.f32.mrf.mxu0
        %v2805 = vadd.f32 0.0, %v2804
        %v2806 = vpop.f32.mrf.mxu0
        %2807 = vmatprep.mubr.f32.mxu0 0.0
        %2808 = vmatmul.mubr.f32.gmra.mxu0 %v1966
        %v2809 = vpop.f32.mrf.mxu0
        %v2810 = vadd.f32 0.0, %v2809
        %v2811 = vpop.f32.mrf.mxu0
        %2812 = vmatprep.mubr.f32.mxu0 0.0
        %2813 = vmatmul.mubr.f32.gmra.mxu0 %v1967
        %v2814 = vpop.f32.mrf.mxu0
        %v2815 = vadd.f32 0.0, %v2814
        %v2816 = vpop.f32.mrf.mxu0
        %2817 = vmatprep.mubr.f32.mxu0 0.0
        %2818 = vmatmul.mubr.f32.gmra.mxu0 %v1968
        %v2819 = vpop.f32.mrf.mxu0
        %v2820 = vadd.f32 0.0, %v2819
        %v2821 = vpop.f32.mrf.mxu0
        %2822 = vmatprep.mubr.f32.mxu0 0.0
        %2823 = vmatmul.mubr.f32.gmra.mxu0 %v1969
        %v2824 = vpop.f32.mrf.mxu0
        %v2825 = vadd.f32 0.0, %v2824
        %v2826 = vpop.f32.mrf.mxu0
        %2827 = vmatprep.mubr.f32.mxu0 0.0
        %2828 = vmatmul.mubr.f32.gmra.mxu0 %v1970
        %v2829 = vpop.f32.mrf.mxu0
        %v2830 = vadd.f32 0.0, %v2829
        %v2831 = vpop.f32.mrf.mxu0
        %2832 = vmatprep.mubr.f32.mxu0 0.0
        %2833 = vmatmul.mubr.f32.gmra.mxu0 %v1971
        %v2834 = vpop.f32.mrf.mxu0
        %v2835 = vadd.f32 0.0, %v2834
        %v2836 = vpop.f32.mrf.mxu0
        %2837 = vmatprep.mubr.f32.mxu0 0.0
        %2838 = vmatmul.mubr.f32.gmra.mxu0 %v1972
        %v2839 = vpop.f32.mrf.mxu0
        %v2840 = vadd.f32 0.0, %v2839
        %v2841 = vpop.f32.mrf.mxu0
        %2842 = vmatprep.mubr.f32.mxu0 0.0
        %2843 = vmatmul.mubr.f32.gmra.mxu0 %v1973
        %v2844 = vpop.f32.mrf.mxu0
        %v2845 = vadd.f32 0.0, %v2844
        %v2846 = vpop.f32.mrf.mxu0
        %2847 = vmatprep.mubr.f32.mxu0 0.0
        %2848 = vmatmul.mubr.f32.gmra.mxu0 %v1974
        %v2849 = vpop.f32.mrf.mxu0
        %v2850 = vadd.f32 0.0, %v2849
        %v2851 = vpop.f32.mrf.mxu0
        %2852 = vmatprep.mubr.f32.mxu0 0.0
        %2853 = vmatmul.mubr.f32.gmra.mxu0 %v1975
        %v2854 = vpop.f32.mrf.mxu0
        %v2855 = vadd.f32 0.0, %v2854
        %v2856 = vpop.f32.mrf.mxu0
        %2857 = vmatprep.mubr.f32.mxu0 0.0
        %2858 = vmatmul.mubr.f32.gmra.mxu0 %v1976
        %v2859 = vpop.f32.mrf.mxu0
        %v2860 = vadd.f32 0.0, %v2859
        %v2861 = vpop.f32.mrf.mxu0
        %2862 = vmatprep.mubr.f32.mxu0 0.0
        %2863 = vmatmul.mubr.f32.gmra.mxu0 %v1977
        %v2864 = vpop.f32.mrf.mxu0
        %v2865 = vadd.f32 0.0, %v2864
        %v2866 = vpop.f32.mrf.mxu0
        %2867 = vmatprep.mubr.f32.mxu0 0.0
        %2868 = vmatmul.mubr.f32.gmra.mxu0 %v1978
        %v2869 = vpop.f32.mrf.mxu0
        %v2870 = vadd.f32 0.0, %v2869
        %v2871 = vpop.f32.mrf.mxu0
        %2872 = vmatprep.mubr.f32.mxu0 0.0
        %2873 = vmatmul.mubr.f32.gmra.mxu0 %v1979
        %v2874 = vpop.f32.mrf.mxu0
        %v2875 = vadd.f32 0.0, %v2874
        %v2876 = vpop.f32.mrf.mxu0
        %2877 = vmatprep.mubr.f32.mxu0 0.0
        %2878 = vmatmul.mubr.f32.gmra.mxu0 %v1980
        %v2879 = vpop.f32.mrf.mxu0
        %v2880 = vadd.f32 0.0, %v2879
        %v2881 = vpop.f32.mrf.mxu0
        %2882 = vmatprep.mubr.f32.mxu0 0.0
        %2883 = vmatmul.mubr.f32.gmra.mxu0 %v1981
        %v2884 = vpop.f32.mrf.mxu0
        %v2885 = vadd.f32 0.0, %v2884
        %v2886 = vpop.f32.mrf.mxu0
        %2887 = vmatprep.mubr.f32.mxu0 0.0
        %2888 = vmatmul.mubr.f32.gmra.mxu0 %v1982
        %v2889 = vpop.f32.mrf.mxu0
        %v2890 = vadd.f32 0.0, %v2889
        %v2891 = vpop.f32.mrf.mxu0
        %2892 = vmatprep.mubr.f32.mxu0 0.0
        %2893 = vmatmul.mubr.f32.gmra.mxu0 %v1983
        %v2894 = vpop.f32.mrf.mxu0
        %v2895 = vadd.f32 0.0, %v2894
        %v2896 = vpop.f32.mrf.mxu0
        %2897 = vmatprep.mubr.f32.mxu0 0.0
        %2898 = vmatmul.mubr.f32.gmra.mxu0 %v1984
        %v2899 = vpop.f32.mrf.mxu0
        %v2900 = vadd.f32 0.0, %v2899
        %v2901 = vpop.f32.mrf.mxu0
        %2902 = vmatprep.mubr.f32.mxu0 0.0
        %2903 = vmatmul.mubr.f32.gmra.mxu0 %v1985
        %v2904 = vpop.f32.mrf.mxu0
        %v2905 = vadd.f32 0.0, %v2904
        %v2906 = vpop.f32.mrf.mxu0
        %2907 = vmatprep.mubr.f32.mxu0 0.0
        %2908 = vmatmul.mubr.f32.gmra.mxu0 %v1986
        %v2909 = vpop.f32.mrf.mxu0
        %v2910 = vadd.f32 0.0, %v2909
        %v2911 = vpop.f32.mrf.mxu0
        %2912 = vmatprep.mubr.f32.mxu0 0.0
        %2913 = vmatmul.mubr.f32.gmra.mxu0 %v1987
        %v2914 = vpop.f32.mrf.mxu0
        %v2915 = vadd.f32 0.0, %v2914
        %v2916 = vpop.f32.mrf.mxu0
        %2917 = vmatprep.mubr.f32.mxu0 0.0
        %2918 = vmatmul.mubr.f32.gmra.mxu0 %v1988
        %v2919 = vpop.f32.mrf.mxu0
        %v2920 = vadd.f32 0.0, %v2919
        %v2921 = vpop.f32.mrf.mxu0
        %2922 = vmatprep.mubr.f32.mxu0 0.0
        %2923 = vmatmul.mubr.f32.gmra.mxu0 %v1989
        %v2924 = vpop.f32.mrf.mxu0
        %v2925 = vadd.f32 0.0, %v2924
        %v2926 = vpop.f32.mrf.mxu0
        %2927 = vmatprep.mubr.f32.mxu0 0.0
        %2928 = vmatmul.mubr.f32.gmra.mxu0 %v1990
        %v2929 = vpop.f32.mrf.mxu0
        %v2930 = vadd.f32 0.0, %v2929
        %v2931 = vpop.f32.mrf.mxu0
        %2932 = vmatprep.mubr.f32.mxu0 0.0
        %2933 = vmatmul.mubr.f32.gmra.mxu0 %v1991
        %v2934 = vpop.f32.mrf.mxu0
        %v2935 = vadd.f32 0.0, %v2934
        %v2936 = vpop.f32.mrf.mxu0
        %2937 = vmatprep.mubr.f32.mxu0 0.0
        %2938 = vmatmul.mubr.f32.gmra.mxu0 %v1992
        %v2939 = vpop.f32.mrf.mxu0
        %v2940 = vadd.f32 0.0, %v2939
        %v2941 = vpop.f32.mrf.mxu0
        %2942 = vdwg.mxu0
        %v2943 = vadd.f32 %v2669, %v2785
        %v2944 = vadd.f32 %v2670, %v2790
        %v2945 = vadd.f32 %v2671, %v2795
        %v2946 = vadd.f32 %v2672, %v2800
        %v2947 = vadd.f32 %v2673, %v2805
        %v2948 = vadd.f32 %v2674, %v2810
        %v2949 = vadd.f32 %v2675, %v2815
        %v2950 = vadd.f32 %v2676, %v2820
        %v2951 = vadd.f32 %v2677, %v2825
        %v2952 = vadd.f32 %v2678, %v2830
        %v2953 = vadd.f32 %v2679, %v2835
        %v2954 = vadd.f32 %v2680, %v2840
        %v2955 = vadd.f32 %v2681, %v2845
        %v2956 = vadd.f32 %v2682, %v2850
        %v2957 = vadd.f32 %v2683, %v2855
        %v2958 = vadd.f32 %v2684, %v2860
        %v2959 = vadd.f32 %v2685, %v2865
        %v2960 = vadd.f32 %v2686, %v2870
        %v2961 = vadd.f32 %v2687, %v2875
        %v2962 = vadd.f32 %v2688, %v2880
        %v2963 = vadd.f32 %v2689, %v2885
        %v2964 = vadd.f32 %v2690, %v2890
        %v2965 = vadd.f32 %v2691, %v2895
        %v2966 = vadd.f32 %v2692, %v2900
        %v2967 = vadd.f32 %v2693, %v2905
        %v2968 = vadd.f32 %v2694, %v2910
        %v2969 = vadd.f32 %v2695, %v2915
        %v2970 = vadd.f32 %v2696, %v2920
        %v2971 = vadd.f32 %v2697, %v2925
        %v2972 = vadd.f32 %v2698, %v2930
        %v2973 = vadd.f32 %v2699, %v2935
        %v2974 = vadd.f32 %v2700, %v2940
        %2975 = vst [vmem:[#allocation4] sm:$0xff] %v2943
        %2976 = vst [vmem:[#allocation4 + $0x8] sm:$0xff] %v2944
        %2977 = vst [vmem:[#allocation4 + $0x10] sm:$0xff] %v2945
        %2978 = vst [vmem:[#allocation4 + $0x18] sm:$0xff] %v2946
        %2979 = vst [vmem:[#allocation4 + $0x20] sm:$0xff] %v2947
        %2980 = vst [vmem:[#allocation4 + $0x28] sm:$0xff] %v2948
        %2981 = vst [vmem:[#allocation4 + $0x30] sm:$0xff] %v2949
        %2982 = vst [vmem:[#allocation4 + $0x38] sm:$0xff] %v2950
        %2983 = vst [vmem:[#allocation4 + $0x40] sm:$0xff] %v2951
        %2984 = vst [vmem:[#allocation4 + $0x48] sm:$0xff] %v2952
        %2985 = vst [vmem:[#allocation4 + $0x50] sm:$0xff] %v2953
        %2986 = vst [vmem:[#allocation4 + $0x58] sm:$0xff] %v2954
        %2987 = vst [vmem:[#allocation4 + $0x60] sm:$0xff] %v2955
        %2988 = vst [vmem:[#allocation4 + $0x68] sm:$0xff] %v2956
        %2989 = vst [vmem:[#allocation4 + $0x70] sm:$0xff] %v2957
        %2990 = vst [vmem:[#allocation4 + $0x78] sm:$0xff] %v2958
        %2991 = vst [vmem:[#allocation4 + $0x80] sm:$0xff] %v2959
        %2992 = vst [vmem:[#allocation4 + $0x88] sm:$0xff] %v2960
        %2993 = vst [vmem:[#allocation4 + $0x90] sm:$0xff] %v2961
        %2994 = vst [vmem:[#allocation4 + $0x98] sm:$0xff] %v2962
        %2995 = vst [vmem:[#allocation4 + $0xa0] sm:$0xff] %v2963
        %2996 = vst [vmem:[#allocation4 + $0xa8] sm:$0xff] %v2964
        %2997 = vst [vmem:[#allocation4 + $0xb0] sm:$0xff] %v2965
        %2998 = vst [vmem:[#allocation4 + $0xb8] sm:$0xff] %v2966
        %2999 = vst [vmem:[#allocation4 + $0xc0] sm:$0xff] %v2967
        %3000 = vst [vmem:[#allocation4 + $0xc8] sm:$0xff] %v2968
        %3001 = vst [vmem:[#allocation4 + $0xd0] sm:$0xff] %v2969
        %3002 = vst [vmem:[#allocation4 + $0xd8] sm:$0xff] %v2970
        %3003 = vst [vmem:[#allocation4 + $0xe0] sm:$0xff] %v2971
        %3004 = vst [vmem:[#allocation4 + $0xe8] sm:$0xff] %v2972
        %3005 = vst [vmem:[#allocation4 + $0xf0] sm:$0xff] %v2973
        %3006 = vst [vmem:[#allocation4 + $0xf8] sm:$0xff] %v2974
        %v3007 = vld [vmem:[#allocation2 + $0x2] sm:$0xff]
        %v3008 = vld [vmem:[#allocation2 + $0xa] sm:$0xff]
        %v3009 = vld [vmem:[#allocation2 + $0x1a] sm:$0xff]
        %v3010 = vld [vmem:[#allocation2 + $0x22] sm:$0xff]
        %v3011 = vld [vmem:[#allocation2 + $0x32] sm:$0xff]
        %v3012 = vld [vmem:[#allocation2 + $0x3a] sm:$0xff]
        %v3013 = vld [vmem:[#allocation2 + $0x4a] sm:$0xff]
        %v3014 = vld [vmem:[#allocation2 + $0x52] sm:$0xff]
        %v3015 = vld [vmem:[#allocation2 + $0x62] sm:$0xff]
        %v3016 = vld [vmem:[#allocation2 + $0x6a] sm:$0xff]
        %v3017 = vld [vmem:[#allocation2 + $0x7a] sm:$0xff]
        %v3018 = vld [vmem:[#allocation2 + $0x82] sm:$0xff]
        %v3019 = vld [vmem:[#allocation2 + $0x92] sm:$0xff]
        %v3020 = vld [vmem:[#allocation2 + $0x9a] sm:$0xff]
        %v3021 = vld [vmem:[#allocation2 + $0xaa] sm:$0xff]
        %v3022 = vld [vmem:[#allocation2 + $0xb2] sm:$0xff]
        %v3023 = vld [vmem:[#allocation2 + $0xc2] sm:$0xff]
        %v3024 = vld [vmem:[#allocation2 + $0xca] sm:$0xff]
        %v3025 = vld [vmem:[#allocation2 + $0xda] sm:$0xff]
        %v3026 = vld [vmem:[#allocation2 + $0xe2] sm:$0xff]
        %v3027 = vld [vmem:[#allocation2 + $0xf2] sm:$0xff]
        %v3028 = vld [vmem:[#allocation2 + $0xfa] sm:$0xff]
        %v3029 = vld [vmem:[#allocation2 + $0x10a] sm:$0xff]
        %v3030 = vld [vmem:[#allocation2 + $0x112] sm:$0xff]
        %v3031 = vld [vmem:[#allocation2 + $0x122] sm:$0xff]
        %v3032 = vld [vmem:[#allocation2 + $0x12a] sm:$0xff]
        %v3033 = vld [vmem:[#allocation2 + $0x13a] sm:$0xff]
        %v3034 = vld [vmem:[#allocation2 + $0x142] sm:$0xff]
        %v3035 = vld [vmem:[#allocation2 + $0x152] sm:$0xff]
        %v3036 = vld [vmem:[#allocation2 + $0x15a] sm:$0xff]
        %v3037 = vld [vmem:[#allocation2 + $0x16a] sm:$0xff]
        %v3038 = vld [vmem:[#allocation2 + $0x172] sm:$0xff]
        %v3039 = vld [vmem:[#allocation2 + $0x182] sm:$0xff]
        %v3040 = vld [vmem:[#allocation2 + $0x18a] sm:$0xff]
        %v3041 = vld [vmem:[#allocation2 + $0x19a] sm:$0xff]
        %v3042 = vld [vmem:[#allocation2 + $0x1a2] sm:$0xff]
        %v3043 = vld [vmem:[#allocation4] sm:$0xff]
        %v3044 = vld [vmem:[#allocation4 + $0x8] sm:$0xff]
        %v3045 = vld [vmem:[#allocation4 + $0x10] sm:$0xff]
        %v3046 = vld [vmem:[#allocation4 + $0x18] sm:$0xff]
        %v3047 = vld [vmem:[#allocation4 + $0x20] sm:$0xff]
        %v3048 = vld [vmem:[#allocation4 + $0x28] sm:$0xff]
        %v3049 = vld [vmem:[#allocation4 + $0x30] sm:$0xff]
        %v3050 = vld [vmem:[#allocation4 + $0x38] sm:$0xff]
        %v3051 = vld [vmem:[#allocation4 + $0x40] sm:$0xff]
        %v3052 = vld [vmem:[#allocation4 + $0x48] sm:$0xff]
        %v3053 = vld [vmem:[#allocation4 + $0x50] sm:$0xff]
        %v3054 = vld [vmem:[#allocation4 + $0x58] sm:$0xff]
        %v3055 = vld [vmem:[#allocation4 + $0x60] sm:$0xff]
        %v3056 = vld [vmem:[#allocation4 + $0x68] sm:$0xff]
        %v3057 = vld [vmem:[#allocation4 + $0x70] sm:$0xff]
        %v3058 = vld [vmem:[#allocation4 + $0x78] sm:$0xff]
        %v3059 = vld [vmem:[#allocation4 + $0x80] sm:$0xff]
        %v3060 = vld [vmem:[#allocation4 + $0x88] sm:$0xff]
        %v3061 = vld [vmem:[#allocation4 + $0x90] sm:$0xff]
        %v3062 = vld [vmem:[#allocation4 + $0x98] sm:$0xff]
        %v3063 = vld [vmem:[#allocation4 + $0xa0] sm:$0xff]
        %v3064 = vld [vmem:[#allocation4 + $0xa8] sm:$0xff]
        %v3065 = vld [vmem:[#allocation4 + $0xb0] sm:$0xff]
        %v3066 = vld [vmem:[#allocation4 + $0xb8] sm:$0xff]
        %v3067 = vld [vmem:[#allocation4 + $0xc0] sm:$0xff]
        %v3068 = vld [vmem:[#allocation4 + $0xc8] sm:$0xff]
        %v3069 = vld [vmem:[#allocation4 + $0xd0] sm:$0xff]
        %v3070 = vld [vmem:[#allocation4 + $0xd8] sm:$0xff]
        %v3071 = vld [vmem:[#allocation4 + $0xe0] sm:$0xff]
        %v3072 = vld [vmem:[#allocation4 + $0xe8] sm:$0xff]
        %v3073 = vld [vmem:[#allocation4 + $0xf0] sm:$0xff]
        %v3074 = vld [vmem:[#allocation4 + $0xf8] sm:$0xff]
        %s3075 = scalar_lea.vmem [#allocation8], 256
        %v3076 = vld [vmem:[%s3075] sm:$0xff]
        %v3077 = vld [vmem:[%s3075 + $0x8] sm:$0xff]
        %v3078 = vld [vmem:[%s3075 + $0x10] sm:$0xff]
        %v3079 = vld [vmem:[%s3075 + $0x18] sm:$0xff]
        %v3080 = vld [vmem:[%s3075 + $0x20] sm:$0xff]
        %v3081 = vld [vmem:[%s3075 + $0x28] sm:$0xff]
        %v3082 = vld [vmem:[%s3075 + $0x30] sm:$0xff]
        %v3083 = vld [vmem:[%s3075 + $0x38] sm:$0xff]
        %v3084 = vld [vmem:[%s3075 + $0x40] sm:$0xff]
        %v3085 = vld [vmem:[%s3075 + $0x48] sm:$0xff]
        %v3086 = vld [vmem:[%s3075 + $0x50] sm:$0xff]
        %v3087 = vld [vmem:[%s3075 + $0x58] sm:$0xff]
        %v3088 = vld [vmem:[%s3075 + $0x60] sm:$0xff]
        %v3089 = vld [vmem:[%s3075 + $0x68] sm:$0xff]
        %v3090 = vld [vmem:[%s3075 + $0x70] sm:$0xff]
        %v3091 = vld [vmem:[%s3075 + $0x78] sm:$0xff]
        %3092 = vmatprep.subr.mxu0 0.0
        %3093 = vmatpush1.msra.mxu0 %v3091
        %3094 = vmatprep.subr.mxu0 0.0
        %3095 = vmatpush1.msra.mxu0 %v3090
        %3096 = vmatprep.subr.mxu0 0.0
        %3097 = vmatpush1.msra.mxu0 %v3089
        %3098 = vmatprep.subr.mxu0 0.0
        %3099 = vmatpush1.msra.mxu0 %v3088
        %3100 = vmatprep.subr.mxu0 0.0
        %3101 = vmatpush1.msra.mxu0 %v3087
        %3102 = vmatprep.subr.mxu0 0.0
        %3103 = vmatpush1.msra.mxu0 %v3086
        %3104 = vmatprep.subr.mxu0 0.0
        %3105 = vmatpush1.msra.mxu0 %v3085
        %3106 = vmatprep.subr.mxu0 0.0
        %3107 = vmatpush1.msra.mxu0 %v3084
        %3108 = vmatprep.subr.mxu0 0.0
        %3109 = vmatpush1.msra.mxu0 %v3083
        %3110 = vmatprep.subr.mxu0 0.0
        %3111 = vmatpush1.msra.mxu0 %v3082
        %3112 = vmatprep.subr.mxu0 0.0
        %3113 = vmatpush1.msra.mxu0 %v3081
        %3114 = vmatprep.subr.mxu0 0.0
        %3115 = vmatpush1.msra.mxu0 %v3080
        %3116 = vmatprep.subr.mxu0 0.0
        %3117 = vmatpush1.msra.mxu0 %v3079
        %3118 = vmatprep.subr.mxu0 0.0
        %3119 = vmatpush1.msra.mxu0 %v3078
        %3120 = vmatprep.subr.mxu0 0.0
        %3121 = vmatpush1.msra.mxu0 %v3077
        %3122 = vmatprep.subr.mxu0 0.0
        %3123 = vmatpush1.msra.mxu0 %v3076
        %3124 = vmatprep.subr.mxu0 0.0
        %3125 = vmatpush2.msra.mxu0 0.0
        %3126 = vmatprep.subr.mxu0 0.0
        %3127 = vmatpush2.msra.mxu0 0.0
        %3128 = vmatprep.subr.mxu0 0.0
        %3129 = vmatpush2.msra.mxu0 0.0
        %3130 = vmatprep.subr.mxu0 0.0
        %3131 = vmatpush2.msra.mxu0 0.0
        %3132 = vmatprep.subr.mxu0 0.0
        %3133 = vmatpush2.msra.mxu0 0.0
        %3134 = vmatprep.subr.mxu0 0.0
        %3135 = vmatpush2.msra.mxu0 0.0
        %3136 = vmatprep.subr.mxu0 0.0
        %3137 = vmatpush2.msra.mxu0 0.0
        %3138 = vmatprep.subr.mxu0 0.0
        %3139 = vmatpush2.msra.mxu0 0.0
        %3140 = vmatprep.subr.mxu0 0.0
        %3141 = vmatpush2.msra.mxu0 0.0
        %3142 = vmatprep.subr.mxu0 0.0
        %3143 = vmatpush2.msra.mxu0 0.0
        %3144 = vmatprep.subr.mxu0 0.0
        %3145 = vmatpush2.msra.mxu0 0.0
        %3146 = vmatprep.subr.mxu0 0.0
        %3147 = vmatpush2.msra.mxu0 0.0
        %3148 = vmatprep.subr.mxu0 0.0
        %3149 = vmatpush2.msra.mxu0 0.0
        %3150 = vmatprep.subr.mxu0 0.0
        %3151 = vmatpush2.msra.mxu0 0.0
        %3152 = vmatprep.subr.mxu0 0.0
        %3153 = vmatpush2.msra.mxu0 0.0
        %3154 = vmatprep.subr.mxu0 0.0
        %3155 = vmatpush2.msra.mxu0 0.0
        %3156 = vmatprep.mubr.f32.mxu0 0.0
        %3157 = vmatmul.mubr.f32.gmra.mxu0 %v3007
        %v3158 = vpop.f32.mrf.mxu0
        %v3159 = vadd.f32 0.0, %v3158
        %v3160 = vpop.f32.mrf.mxu0
        %3161 = vmatprep.mubr.f32.mxu0 0.0
        %3162 = vmatmul.mubr.f32.gmra.mxu0 %v3008
        %v3163 = vpop.f32.mrf.mxu0
        %v3164 = vadd.f32 0.0, %v3163
        %v3165 = vpop.f32.mrf.mxu0
        %3166 = vmatprep.mubr.f32.mxu0 0.0
        %3167 = vmatmul.mubr.f32.gmra.mxu0 %v3009
        %v3168 = vpop.f32.mrf.mxu0
        %v3169 = vadd.f32 0.0, %v3168
        %v3170 = vpop.f32.mrf.mxu0
        %3171 = vmatprep.mubr.f32.mxu0 0.0
        %3172 = vmatmul.mubr.f32.gmra.mxu0 %v3010
        %v3173 = vpop.f32.mrf.mxu0
        %v3174 = vadd.f32 0.0, %v3173
        %v3175 = vpop.f32.mrf.mxu0
        %3176 = vmatprep.mubr.f32.mxu0 0.0
        %3177 = vmatmul.mubr.f32.gmra.mxu0 %v3011
        %v3178 = vpop.f32.mrf.mxu0
        %v3179 = vadd.f32 0.0, %v3178
        %v3180 = vpop.f32.mrf.mxu0
        %3181 = vmatprep.mubr.f32.mxu0 0.0
        %3182 = vmatmul.mubr.f32.gmra.mxu0 %v3012
        %v3183 = vpop.f32.mrf.mxu0
        %v3184 = vadd.f32 0.0, %v3183
        %v3185 = vpop.f32.mrf.mxu0
        %3186 = vmatprep.mubr.f32.mxu0 0.0
        %3187 = vmatmul.mubr.f32.gmra.mxu0 %v3013
        %v3188 = vpop.f32.mrf.mxu0
        %v3189 = vadd.f32 0.0, %v3188
        %v3190 = vpop.f32.mrf.mxu0
        %3191 = vmatprep.mubr.f32.mxu0 0.0
        %3192 = vmatmul.mubr.f32.gmra.mxu0 %v3014
        %v3193 = vpop.f32.mrf.mxu0
        %v3194 = vadd.f32 0.0, %v3193
        %v3195 = vpop.f32.mrf.mxu0
        %3196 = vmatprep.mubr.f32.mxu0 0.0
        %3197 = vmatmul.mubr.f32.gmra.mxu0 %v3015
        %v3198 = vpop.f32.mrf.mxu0
        %v3199 = vadd.f32 0.0, %v3198
        %v3200 = vpop.f32.mrf.mxu0
        %3201 = vmatprep.mubr.f32.mxu0 0.0
        %3202 = vmatmul.mubr.f32.gmra.mxu0 %v3016
        %v3203 = vpop.f32.mrf.mxu0
        %v3204 = vadd.f32 0.0, %v3203
        %v3205 = vpop.f32.mrf.mxu0
        %3206 = vmatprep.mubr.f32.mxu0 0.0
        %3207 = vmatmul.mubr.f32.gmra.mxu0 %v3017
        %v3208 = vpop.f32.mrf.mxu0
        %v3209 = vadd.f32 0.0, %v3208
        %v3210 = vpop.f32.mrf.mxu0
        %3211 = vmatprep.mubr.f32.mxu0 0.0
        %3212 = vmatmul.mubr.f32.gmra.mxu0 %v3018
        %v3213 = vpop.f32.mrf.mxu0
        %v3214 = vadd.f32 0.0, %v3213
        %v3215 = vpop.f32.mrf.mxu0
        %3216 = vmatprep.mubr.f32.mxu0 0.0
        %3217 = vmatmul.mubr.f32.gmra.mxu0 %v3019
        %v3218 = vpop.f32.mrf.mxu0
        %v3219 = vadd.f32 0.0, %v3218
        %v3220 = vpop.f32.mrf.mxu0
        %3221 = vmatprep.mubr.f32.mxu0 0.0
        %3222 = vmatmul.mubr.f32.gmra.mxu0 %v3020
        %v3223 = vpop.f32.mrf.mxu0
        %v3224 = vadd.f32 0.0, %v3223
        %v3225 = vpop.f32.mrf.mxu0
        %3226 = vmatprep.mubr.f32.mxu0 0.0
        %3227 = vmatmul.mubr.f32.gmra.mxu0 %v3021
        %v3228 = vpop.f32.mrf.mxu0
        %v3229 = vadd.f32 0.0, %v3228
        %v3230 = vpop.f32.mrf.mxu0
        %3231 = vmatprep.mubr.f32.mxu0 0.0
        %3232 = vmatmul.mubr.f32.gmra.mxu0 %v3022
        %v3233 = vpop.f32.mrf.mxu0
        %v3234 = vadd.f32 0.0, %v3233
        %v3235 = vpop.f32.mrf.mxu0
        %3236 = vmatprep.mubr.f32.mxu0 0.0
        %3237 = vmatmul.mubr.f32.gmra.mxu0 %v3023
        %v3238 = vpop.f32.mrf.mxu0
        %v3239 = vadd.f32 0.0, %v3238
        %v3240 = vpop.f32.mrf.mxu0
        %3241 = vmatprep.mubr.f32.mxu0 0.0
        %3242 = vmatmul.mubr.f32.gmra.mxu0 %v3024
        %v3243 = vpop.f32.mrf.mxu0
        %v3244 = vadd.f32 0.0, %v3243
        %v3245 = vpop.f32.mrf.mxu0
        %3246 = vmatprep.mubr.f32.mxu0 0.0
        %3247 = vmatmul.mubr.f32.gmra.mxu0 %v3025
        %v3248 = vpop.f32.mrf.mxu0
        %v3249 = vadd.f32 0.0, %v3248
        %v3250 = vpop.f32.mrf.mxu0
        %3251 = vmatprep.mubr.f32.mxu0 0.0
        %3252 = vmatmul.mubr.f32.gmra.mxu0 %v3026
        %v3253 = vpop.f32.mrf.mxu0
        %v3254 = vadd.f32 0.0, %v3253
        %v3255 = vpop.f32.mrf.mxu0
        %3256 = vmatprep.mubr.f32.mxu0 0.0
        %3257 = vmatmul.mubr.f32.gmra.mxu0 %v3027
        %v3258 = vpop.f32.mrf.mxu0
        %v3259 = vadd.f32 0.0, %v3258
        %v3260 = vpop.f32.mrf.mxu0
        %3261 = vmatprep.mubr.f32.mxu0 0.0
        %3262 = vmatmul.mubr.f32.gmra.mxu0 %v3028
        %v3263 = vpop.f32.mrf.mxu0
        %v3264 = vadd.f32 0.0, %v3263
        %v3265 = vpop.f32.mrf.mxu0
        %3266 = vmatprep.mubr.f32.mxu0 0.0
        %3267 = vmatmul.mubr.f32.gmra.mxu0 %v3029
        %v3268 = vpop.f32.mrf.mxu0
        %v3269 = vadd.f32 0.0, %v3268
        %v3270 = vpop.f32.mrf.mxu0
        %3271 = vmatprep.mubr.f32.mxu0 0.0
        %3272 = vmatmul.mubr.f32.gmra.mxu0 %v3030
        %v3273 = vpop.f32.mrf.mxu0
        %v3274 = vadd.f32 0.0, %v3273
        %v3275 = vpop.f32.mrf.mxu0
        %3276 = vmatprep.mubr.f32.mxu0 0.0
        %3277 = vmatmul.mubr.f32.gmra.mxu0 %v3031
        %v3278 = vpop.f32.mrf.mxu0
        %v3279 = vadd.f32 0.0, %v3278
        %v3280 = vpop.f32.mrf.mxu0
        %3281 = vmatprep.mubr.f32.mxu0 0.0
        %3282 = vmatmul.mubr.f32.gmra.mxu0 %v3032
        %v3283 = vpop.f32.mrf.mxu0
        %v3284 = vadd.f32 0.0, %v3283
        %v3285 = vpop.f32.mrf.mxu0
        %3286 = vmatprep.mubr.f32.mxu0 0.0
        %3287 = vmatmul.mubr.f32.gmra.mxu0 %v3033
        %v3288 = vpop.f32.mrf.mxu0
        %v3289 = vadd.f32 0.0, %v3288
        %v3290 = vpop.f32.mrf.mxu0
        %3291 = vmatprep.mubr.f32.mxu0 0.0
        %3292 = vmatmul.mubr.f32.gmra.mxu0 %v3034
        %v3293 = vpop.f32.mrf.mxu0
        %v3294 = vadd.f32 0.0, %v3293
        %v3295 = vpop.f32.mrf.mxu0
        %3296 = vmatprep.mubr.f32.mxu0 0.0
        %3297 = vmatmul.mubr.f32.gmra.mxu0 %v3035
        %v3298 = vpop.f32.mrf.mxu0
        %v3299 = vadd.f32 0.0, %v3298
        %v3300 = vpop.f32.mrf.mxu0
        %3301 = vmatprep.mubr.f32.mxu0 0.0
        %3302 = vmatmul.mubr.f32.gmra.mxu0 %v3036
        %v3303 = vpop.f32.mrf.mxu0
        %v3304 = vadd.f32 0.0, %v3303
        %v3305 = vpop.f32.mrf.mxu0
        %3306 = vmatprep.mubr.f32.mxu0 0.0
        %3307 = vmatmul.mubr.f32.gmra.mxu0 %v3037
        %v3308 = vpop.f32.mrf.mxu0
        %v3309 = vadd.f32 0.0, %v3308
        %v3310 = vpop.f32.mrf.mxu0
        %3311 = vmatprep.mubr.f32.mxu0 0.0
        %3312 = vmatmul.mubr.f32.gmra.mxu0 %v3038
        %v3313 = vpop.f32.mrf.mxu0
        %v3314 = vadd.f32 0.0, %v3313
        %v3315 = vpop.f32.mrf.mxu0
        %3316 = vdwg.mxu0
        %v3317 = vadd.f32 %v3043, %v3159
        %v3318 = vadd.f32 %v3044, %v3164
        %v3319 = vadd.f32 %v3045, %v3169
        %v3320 = vadd.f32 %v3046, %v3174
        %v3321 = vadd.f32 %v3047, %v3179
        %v3322 = vadd.f32 %v3048, %v3184
        %v3323 = vadd.f32 %v3049, %v3189
        %v3324 = vadd.f32 %v3050, %v3194
        %v3325 = vadd.f32 %v3051, %v3199
        %v3326 = vadd.f32 %v3052, %v3204
        %v3327 = vadd.f32 %v3053, %v3209
        %v3328 = vadd.f32 %v3054, %v3214
        %v3329 = vadd.f32 %v3055, %v3219
        %v3330 = vadd.f32 %v3056, %v3224
        %v3331 = vadd.f32 %v3057, %v3229
        %v3332 = vadd.f32 %v3058, %v3234
        %v3333 = vadd.f32 %v3059, %v3239
        %v3334 = vadd.f32 %v3060, %v3244
        %v3335 = vadd.f32 %v3061, %v3249
        %v3336 = vadd.f32 %v3062, %v3254
        %v3337 = vadd.f32 %v3063, %v3259
        %v3338 = vadd.f32 %v3064, %v3264
        %v3339 = vadd.f32 %v3065, %v3269
        %v3340 = vadd.f32 %v3066, %v3274
        %v3341 = vadd.f32 %v3067, %v3279
        %v3342 = vadd.f32 %v3068, %v3284
        %v3343 = vadd.f32 %v3069, %v3289
        %v3344 = vadd.f32 %v3070, %v3294
        %v3345 = vadd.f32 %v3071, %v3299
        %v3346 = vadd.f32 %v3072, %v3304
        %v3347 = vadd.f32 %v3073, %v3309
        %v3348 = vadd.f32 %v3074, %v3314
        %3349 = vst [vmem:[#allocation4] sm:$0xff] %v3317
        %3350 = vst [vmem:[#allocation4 + $0x8] sm:$0xff] %v3318
        %3351 = vst [vmem:[#allocation4 + $0x10] sm:$0xff] %v3319
        %3352 = vst [vmem:[#allocation4 + $0x18] sm:$0xff] %v3320
        %3353 = vst [vmem:[#allocation4 + $0x20] sm:$0xff] %v3321
        %3354 = vst [vmem:[#allocation4 + $0x28] sm:$0xff] %v3322
        %3355 = vst [vmem:[#allocation4 + $0x30] sm:$0xff] %v3323
        %3356 = vst [vmem:[#allocation4 + $0x38] sm:$0xff] %v3324
        %3357 = vst [vmem:[#allocation4 + $0x40] sm:$0xff] %v3325
        %3358 = vst [vmem:[#allocation4 + $0x48] sm:$0xff] %v3326
        %3359 = vst [vmem:[#allocation4 + $0x50] sm:$0xff] %v3327
        %3360 = vst [vmem:[#allocation4 + $0x58] sm:$0xff] %v3328
        %3361 = vst [vmem:[#allocation4 + $0x60] sm:$0xff] %v3329
        %3362 = vst [vmem:[#allocation4 + $0x68] sm:$0xff] %v3330
        %3363 = vst [vmem:[#allocation4 + $0x70] sm:$0xff] %v3331
        %3364 = vst [vmem:[#allocation4 + $0x78] sm:$0xff] %v3332
        %3365 = vst [vmem:[#allocation4 + $0x80] sm:$0xff] %v3333
        %3366 = vst [vmem:[#allocation4 + $0x88] sm:$0xff] %v3334
        %3367 = vst [vmem:[#allocation4 + $0x90] sm:$0xff] %v3335
        %3368 = vst [vmem:[#allocation4 + $0x98] sm:$0xff] %v3336
        %3369 = vst [vmem:[#allocation4 + $0xa0] sm:$0xff] %v3337
        %3370 = vst [vmem:[#allocation4 + $0xa8] sm:$0xff] %v3338
        %3371 = vst [vmem:[#allocation4 + $0xb0] sm:$0xff] %v3339
        %3372 = vst [vmem:[#allocation4 + $0xb8] sm:$0xff] %v3340
        %3373 = vst [vmem:[#allocation4 + $0xc0] sm:$0xff] %v3341
        %3374 = vst [vmem:[#allocation4 + $0xc8] sm:$0xff] %v3342
        %3375 = vst [vmem:[#allocation4 + $0xd0] sm:$0xff] %v3343
        %3376 = vst [vmem:[#allocation4 + $0xd8] sm:$0xff] %v3344
        %3377 = vst [vmem:[#allocation4 + $0xe0] sm:$0xff] %v3345
        %3378 = vst [vmem:[#allocation4 + $0xe8] sm:$0xff] %v3346
        %3379 = vst [vmem:[#allocation4 + $0xf0] sm:$0xff] %v3347
        %3380 = vst [vmem:[#allocation4 + $0xf8] sm:$0xff] %v3348
        %v3381 = vld [vmem:[#allocation4] sm:$0xff]
        %v3382 = vld [vmem:[#allocation4 + $0x8] sm:$0xff]
        %v3383 = vld [vmem:[#allocation4 + $0x10] sm:$0xff]
        %v3384 = vld [vmem:[#allocation4 + $0x18] sm:$0xff]
        %v3385 = vld [vmem:[#allocation4 + $0x20] sm:$0xff]
        %v3386 = vld [vmem:[#allocation4 + $0x28] sm:$0xff]
        %v3387 = vld [vmem:[#allocation4 + $0x30] sm:$0xff]
        %v3388 = vld [vmem:[#allocation4 + $0x38] sm:$0xff]
        %v3389 = vld [vmem:[#allocation4 + $0x40] sm:$0xff]
        %v3390 = vld [vmem:[#allocation4 + $0x48] sm:$0xff]
        %v3391 = vld [vmem:[#allocation4 + $0x50] sm:$0xff]
        %v3392 = vld [vmem:[#allocation4 + $0x58] sm:$0xff]
        %v3393 = vld [vmem:[#allocation4 + $0x60] sm:$0xff]
        %v3394 = vld [vmem:[#allocation4 + $0x68] sm:$0xff]
        %v3395 = vld [vmem:[#allocation4 + $0x70] sm:$0xff]
        %v3396 = vld [vmem:[#allocation4 + $0x78] sm:$0xff]
        %v3397 = vld [vmem:[#allocation4 + $0x80] sm:$0xff]
        %v3398 = vld [vmem:[#allocation4 + $0x88] sm:$0xff]
        %v3399 = vld [vmem:[#allocation4 + $0x90] sm:$0xff]
        %v3400 = vld [vmem:[#allocation4 + $0x98] sm:$0xff]
        %v3401 = vld [vmem:[#allocation4 + $0xa0] sm:$0xff]
        %v3402 = vld [vmem:[#allocation4 + $0xa8] sm:$0xff]
        %v3403 = vld [vmem:[#allocation4 + $0xb0] sm:$0xff]
        %v3404 = vld [vmem:[#allocation4 + $0xb8] sm:$0xff]
        %v3405 = vld [vmem:[#allocation4 + $0xc0] sm:$0xff]
        %v3406 = vld [vmem:[#allocation4 + $0xc8] sm:$0xff]
        %v3407 = vld [vmem:[#allocation4 + $0xd0] sm:$0xff]
        %v3408 = vld [vmem:[#allocation4 + $0xd8] sm:$0xff]
        %v3409 = vld [vmem:[#allocation4 + $0xe0] sm:$0xff]
        %v3410 = vld [vmem:[#allocation4 + $0xe8] sm:$0xff]
        %v3411 = vld [vmem:[#allocation4 + $0xf0] sm:$0xff]
        %v3412 = vld [vmem:[#allocation4 + $0xf8] sm:$0xff]
        %s3413 = scalar_lea.vmem [#allocation8], 640
        %v3414 = vld [vmem:[%s3413] sm:$0xff]
        %v3415 = vld [vmem:[%s3413 + $0x8] sm:$0xff]
        %v3416 = vld [vmem:[%s3413 + $0x10] sm:$0xff]
        %v3417 = vld [vmem:[%s3413 + $0x18] sm:$0xff]
        %v3418 = vld [vmem:[%s3413 + $0x20] sm:$0xff]
        %v3419 = vld [vmem:[%s3413 + $0x28] sm:$0xff]
        %v3420 = vld [vmem:[%s3413 + $0x30] sm:$0xff]
        %v3421 = vld [vmem:[%s3413 + $0x38] sm:$0xff]
        %v3422 = vld [vmem:[%s3413 + $0x40] sm:$0xff]
        %v3423 = vld [vmem:[%s3413 + $0x48] sm:$0xff]
        %v3424 = vld [vmem:[%s3413 + $0x50] sm:$0xff]
        %v3425 = vld [vmem:[%s3413 + $0x58] sm:$0xff]
        %v3426 = vld [vmem:[%s3413 + $0x60] sm:$0xff]
        %v3427 = vld [vmem:[%s3413 + $0x68] sm:$0xff]
        %v3428 = vld [vmem:[%s3413 + $0x70] sm:$0xff]
        %v3429 = vld [vmem:[%s3413 + $0x78] sm:$0xff]
        %3430 = vmatprep.subr.mxu0 0.0
        %3431 = vmatpush1.msra.mxu0 %v3429
        %3432 = vmatprep.subr.mxu0 0.0
        %3433 = vmatpush1.msra.mxu0 %v3428
        %3434 = vmatprep.subr.mxu0 0.0
        %3435 = vmatpush1.msra.mxu0 %v3427
        %3436 = vmatprep.subr.mxu0 0.0
        %3437 = vmatpush1.msra.mxu0 %v3426
        %3438 = vmatprep.subr.mxu0 0.0
        %3439 = vmatpush1.msra.mxu0 %v3425
        %3440 = vmatprep.subr.mxu0 0.0
        %3441 = vmatpush1.msra.mxu0 %v3424
        %3442 = vmatprep.subr.mxu0 0.0
        %3443 = vmatpush1.msra.mxu0 %v3423
        %3444 = vmatprep.subr.mxu0 0.0
        %3445 = vmatpush1.msra.mxu0 %v3422
        %3446 = vmatprep.subr.mxu0 0.0
        %3447 = vmatpush1.msra.mxu0 %v3421
        %3448 = vmatprep.subr.mxu0 0.0
        %3449 = vmatpush1.msra.mxu0 %v3420
        %3450 = vmatprep.subr.mxu0 0.0
        %3451 = vmatpush1.msra.mxu0 %v3419
        %3452 = vmatprep.subr.mxu0 0.0
        %3453 = vmatpush1.msra.mxu0 %v3418
        %3454 = vmatprep.subr.mxu0 0.0
        %3455 = vmatpush1.msra.mxu0 %v3417
        %3456 = vmatprep.subr.mxu0 0.0
        %3457 = vmatpush1.msra.mxu0 %v3416
        %3458 = vmatprep.subr.mxu0 0.0
        %3459 = vmatpush1.msra.mxu0 %v3415
        %3460 = vmatprep.subr.mxu0 0.0
        %3461 = vmatpush1.msra.mxu0 %v3414
        %3462 = vmatprep.subr.mxu0 0.0
        %3463 = vmatpush2.msra.mxu0 0.0
        %3464 = vmatprep.subr.mxu0 0.0
        %3465 = vmatpush2.msra.mxu0 0.0
        %3466 = vmatprep.subr.mxu0 0.0
        %3467 = vmatpush2.msra.mxu0 0.0
        %3468 = vmatprep.subr.mxu0 0.0
        %3469 = vmatpush2.msra.mxu0 0.0
        %3470 = vmatprep.subr.mxu0 0.0
        %3471 = vmatpush2.msra.mxu0 0.0
        %3472 = vmatprep.subr.mxu0 0.0
        %3473 = vmatpush2.msra.mxu0 0.0
        %3474 = vmatprep.subr.mxu0 0.0
        %3475 = vmatpush2.msra.mxu0 0.0
        %3476 = vmatprep.subr.mxu0 0.0
        %3477 = vmatpush2.msra.mxu0 0.0
        %3478 = vmatprep.subr.mxu0 0.0
        %3479 = vmatpush2.msra.mxu0 0.0
        %3480 = vmatprep.subr.mxu0 0.0
        %3481 = vmatpush2.msra.mxu0 0.0
        %3482 = vmatprep.subr.mxu0 0.0
        %3483 = vmatpush2.msra.mxu0 0.0
        %3484 = vmatprep.subr.mxu0 0.0
        %3485 = vmatpush2.msra.mxu0 0.0
        %3486 = vmatprep.subr.mxu0 0.0
        %3487 = vmatpush2.msra.mxu0 0.0
        %3488 = vmatprep.subr.mxu0 0.0
        %3489 = vmatpush2.msra.mxu0 0.0
        %3490 = vmatprep.subr.mxu0 0.0
        %3491 = vmatpush2.msra.mxu0 0.0
        %3492 = vmatprep.subr.mxu0 0.0
        %3493 = vmatpush2.msra.mxu0 0.0
        %3494 = vmatprep.mubr.f32.mxu0 0.0
        %3495 = vmatmul.mubr.f32.gmra.mxu0 %v3009
        %v3496 = vpop.f32.mrf.mxu0
        %v3497 = vadd.f32 0.0, %v3496
        %v3498 = vpop.f32.mrf.mxu0
        %3499 = vmatprep.mubr.f32.mxu0 0.0
        %3500 = vmatmul.mubr.f32.gmra.mxu0 %v3010
        %v3501 = vpop.f32.mrf.mxu0
        %v3502 = vadd.f32 0.0, %v3501
        %v3503 = vpop.f32.mrf.mxu0
        %3504 = vmatprep.mubr.f32.mxu0 0.0
        %3505 = vmatmul.mubr.f32.gmra.mxu0 %v3011
        %v3506 = vpop.f32.mrf.mxu0
        %v3507 = vadd.f32 0.0, %v3506
        %v3508 = vpop.f32.mrf.mxu0
        %3509 = vmatprep.mubr.f32.mxu0 0.0
        %3510 = vmatmul.mubr.f32.gmra.mxu0 %v3012
        %v3511 = vpop.f32.mrf.mxu0
        %v3512 = vadd.f32 0.0, %v3511
        %v3513 = vpop.f32.mrf.mxu0
        %3514 = vmatprep.mubr.f32.mxu0 0.0
        %3515 = vmatmul.mubr.f32.gmra.mxu0 %v3013
        %v3516 = vpop.f32.mrf.mxu0
        %v3517 = vadd.f32 0.0, %v3516
        %v3518 = vpop.f32.mrf.mxu0
        %3519 = vmatprep.mubr.f32.mxu0 0.0
        %3520 = vmatmul.mubr.f32.gmra.mxu0 %v3014
        %v3521 = vpop.f32.mrf.mxu0
        %v3522 = vadd.f32 0.0, %v3521
        %v3523 = vpop.f32.mrf.mxu0
        %3524 = vmatprep.mubr.f32.mxu0 0.0
        %3525 = vmatmul.mubr.f32.gmra.mxu0 %v3015
        %v3526 = vpop.f32.mrf.mxu0
        %v3527 = vadd.f32 0.0, %v3526
        %v3528 = vpop.f32.mrf.mxu0
        %3529 = vmatprep.mubr.f32.mxu0 0.0
        %3530 = vmatmul.mubr.f32.gmra.mxu0 %v3016
        %v3531 = vpop.f32.mrf.mxu0
        %v3532 = vadd.f32 0.0, %v3531
        %v3533 = vpop.f32.mrf.mxu0
        %3534 = vmatprep.mubr.f32.mxu0 0.0
        %3535 = vmatmul.mubr.f32.gmra.mxu0 %v3017
        %v3536 = vpop.f32.mrf.mxu0
        %v3537 = vadd.f32 0.0, %v3536
        %v3538 = vpop.f32.mrf.mxu0
        %3539 = vmatprep.mubr.f32.mxu0 0.0
        %3540 = vmatmul.mubr.f32.gmra.mxu0 %v3018
        %v3541 = vpop.f32.mrf.mxu0
        %v3542 = vadd.f32 0.0, %v3541
        %v3543 = vpop.f32.mrf.mxu0
        %3544 = vmatprep.mubr.f32.mxu0 0.0
        %3545 = vmatmul.mubr.f32.gmra.mxu0 %v3019
        %v3546 = vpop.f32.mrf.mxu0
        %v3547 = vadd.f32 0.0, %v3546
        %v3548 = vpop.f32.mrf.mxu0
        %3549 = vmatprep.mubr.f32.mxu0 0.0
        %3550 = vmatmul.mubr.f32.gmra.mxu0 %v3020
        %v3551 = vpop.f32.mrf.mxu0
        %v3552 = vadd.f32 0.0, %v3551
        %v3553 = vpop.f32.mrf.mxu0
        %3554 = vmatprep.mubr.f32.mxu0 0.0
        %3555 = vmatmul.mubr.f32.gmra.mxu0 %v3021
        %v3556 = vpop.f32.mrf.mxu0
        %v3557 = vadd.f32 0.0, %v3556
        %v3558 = vpop.f32.mrf.mxu0
        %3559 = vmatprep.mubr.f32.mxu0 0.0
        %3560 = vmatmul.mubr.f32.gmra.mxu0 %v3022
        %v3561 = vpop.f32.mrf.mxu0
        %v3562 = vadd.f32 0.0, %v3561
        %v3563 = vpop.f32.mrf.mxu0
        %3564 = vmatprep.mubr.f32.mxu0 0.0
        %3565 = vmatmul.mubr.f32.gmra.mxu0 %v3023
        %v3566 = vpop.f32.mrf.mxu0
        %v3567 = vadd.f32 0.0, %v3566
        %v3568 = vpop.f32.mrf.mxu0
        %3569 = vmatprep.mubr.f32.mxu0 0.0
        %3570 = vmatmul.mubr.f32.gmra.mxu0 %v3024
        %v3571 = vpop.f32.mrf.mxu0
        %v3572 = vadd.f32 0.0, %v3571
        %v3573 = vpop.f32.mrf.mxu0
        %3574 = vmatprep.mubr.f32.mxu0 0.0
        %3575 = vmatmul.mubr.f32.gmra.mxu0 %v3025
        %v3576 = vpop.f32.mrf.mxu0
        %v3577 = vadd.f32 0.0, %v3576
        %v3578 = vpop.f32.mrf.mxu0
        %3579 = vmatprep.mubr.f32.mxu0 0.0
        %3580 = vmatmul.mubr.f32.gmra.mxu0 %v3026
        %v3581 = vpop.f32.mrf.mxu0
        %v3582 = vadd.f32 0.0, %v3581
        %v3583 = vpop.f32.mrf.mxu0
        %3584 = vmatprep.mubr.f32.mxu0 0.0
        %3585 = vmatmul.mubr.f32.gmra.mxu0 %v3027
        %v3586 = vpop.f32.mrf.mxu0
        %v3587 = vadd.f32 0.0, %v3586
        %v3588 = vpop.f32.mrf.mxu0
        %3589 = vmatprep.mubr.f32.mxu0 0.0
        %3590 = vmatmul.mubr.f32.gmra.mxu0 %v3028
        %v3591 = vpop.f32.mrf.mxu0
        %v3592 = vadd.f32 0.0, %v3591
        %v3593 = vpop.f32.mrf.mxu0
        %3594 = vmatprep.mubr.f32.mxu0 0.0
        %3595 = vmatmul.mubr.f32.gmra.mxu0 %v3029
        %v3596 = vpop.f32.mrf.mxu0
        %v3597 = vadd.f32 0.0, %v3596
        %v3598 = vpop.f32.mrf.mxu0
        %3599 = vmatprep.mubr.f32.mxu0 0.0
        %3600 = vmatmul.mubr.f32.gmra.mxu0 %v3030
        %v3601 = vpop.f32.mrf.mxu0
        %v3602 = vadd.f32 0.0, %v3601
        %v3603 = vpop.f32.mrf.mxu0
        %3604 = vmatprep.mubr.f32.mxu0 0.0
        %3605 = vmatmul.mubr.f32.gmra.mxu0 %v3031
        %v3606 = vpop.f32.mrf.mxu0
        %v3607 = vadd.f32 0.0, %v3606
        %v3608 = vpop.f32.mrf.mxu0
        %3609 = vmatprep.mubr.f32.mxu0 0.0
        %3610 = vmatmul.mubr.f32.gmra.mxu0 %v3032
        %v3611 = vpop.f32.mrf.mxu0
        %v3612 = vadd.f32 0.0, %v3611
        %v3613 = vpop.f32.mrf.mxu0
        %3614 = vmatprep.mubr.f32.mxu0 0.0
        %3615 = vmatmul.mubr.f32.gmra.mxu0 %v3033
        %v3616 = vpop.f32.mrf.mxu0
        %v3617 = vadd.f32 0.0, %v3616
        %v3618 = vpop.f32.mrf.mxu0
        %3619 = vmatprep.mubr.f32.mxu0 0.0
        %3620 = vmatmul.mubr.f32.gmra.mxu0 %v3034
        %v3621 = vpop.f32.mrf.mxu0
        %v3622 = vadd.f32 0.0, %v3621
        %v3623 = vpop.f32.mrf.mxu0
        %3624 = vmatprep.mubr.f32.mxu0 0.0
        %3625 = vmatmul.mubr.f32.gmra.mxu0 %v3035
        %v3626 = vpop.f32.mrf.mxu0
        %v3627 = vadd.f32 0.0, %v3626
        %v3628 = vpop.f32.mrf.mxu0
        %3629 = vmatprep.mubr.f32.mxu0 0.0
        %3630 = vmatmul.mubr.f32.gmra.mxu0 %v3036
        %v3631 = vpop.f32.mrf.mxu0
        %v3632 = vadd.f32 0.0, %v3631
        %v3633 = vpop.f32.mrf.mxu0
        %3634 = vmatprep.mubr.f32.mxu0 0.0
        %3635 = vmatmul.mubr.f32.gmra.mxu0 %v3037
        %v3636 = vpop.f32.mrf.mxu0
        %v3637 = vadd.f32 0.0, %v3636
        %v3638 = vpop.f32.mrf.mxu0
        %3639 = vmatprep.mubr.f32.mxu0 0.0
        %3640 = vmatmul.mubr.f32.gmra.mxu0 %v3038
        %v3641 = vpop.f32.mrf.mxu0
        %v3642 = vadd.f32 0.0, %v3641
        %v3643 = vpop.f32.mrf.mxu0
        %3644 = vmatprep.mubr.f32.mxu0 0.0
        %3645 = vmatmul.mubr.f32.gmra.mxu0 %v3039
        %v3646 = vpop.f32.mrf.mxu0
        %v3647 = vadd.f32 0.0, %v3646
        %v3648 = vpop.f32.mrf.mxu0
        %3649 = vmatprep.mubr.f32.mxu0 0.0
        %3650 = vmatmul.mubr.f32.gmra.mxu0 %v3040
        %v3651 = vpop.f32.mrf.mxu0
        %v3652 = vadd.f32 0.0, %v3651
        %v3653 = vpop.f32.mrf.mxu0
        %3654 = vdwg.mxu0
        %v3655 = vadd.f32 %v3381, %v3497
        %v3656 = vadd.f32 %v3382, %v3502
        %v3657 = vadd.f32 %v3383, %v3507
        %v3658 = vadd.f32 %v3384, %v3512
        %v3659 = vadd.f32 %v3385, %v3517
        %v3660 = vadd.f32 %v3386, %v3522
        %v3661 = vadd.f32 %v3387, %v3527
        %v3662 = vadd.f32 %v3388, %v3532
        %v3663 = vadd.f32 %v3389, %v3537
        %v3664 = vadd.f32 %v3390, %v3542
        %v3665 = vadd.f32 %v3391, %v3547
        %v3666 = vadd.f32 %v3392, %v3552
        %v3667 = vadd.f32 %v3393, %v3557
        %v3668 = vadd.f32 %v3394, %v3562
        %v3669 = vadd.f32 %v3395, %v3567
        %v3670 = vadd.f32 %v3396, %v3572
        %v3671 = vadd.f32 %v3397, %v3577
        %v3672 = vadd.f32 %v3398, %v3582
        %v3673 = vadd.f32 %v3399, %v3587
        %v3674 = vadd.f32 %v3400, %v3592
        %v3675 = vadd.f32 %v3401, %v3597
        %v3676 = vadd.f32 %v3402, %v3602
        %v3677 = vadd.f32 %v3403, %v3607
        %v3678 = vadd.f32 %v3404, %v3612
        %v3679 = vadd.f32 %v3405, %v3617
        %v3680 = vadd.f32 %v3406, %v3622
        %v3681 = vadd.f32 %v3407, %v3627
        %v3682 = vadd.f32 %v3408, %v3632
        %v3683 = vadd.f32 %v3409, %v3637
        %v3684 = vadd.f32 %v3410, %v3642
        %v3685 = vadd.f32 %v3411, %v3647
        %v3686 = vadd.f32 %v3412, %v3652
        %3687 = vst [vmem:[#allocation4] sm:$0xff] %v3655
        %3688 = vst [vmem:[#allocation4 + $0x8] sm:$0xff] %v3656
        %3689 = vst [vmem:[#allocation4 + $0x10] sm:$0xff] %v3657
        %3690 = vst [vmem:[#allocation4 + $0x18] sm:$0xff] %v3658
        %3691 = vst [vmem:[#allocation4 + $0x20] sm:$0xff] %v3659
        %3692 = vst [vmem:[#allocation4 + $0x28] sm:$0xff] %v3660
        %3693 = vst [vmem:[#allocation4 + $0x30] sm:$0xff] %v3661
        %3694 = vst [vmem:[#allocation4 + $0x38] sm:$0xff] %v3662
        %3695 = vst [vmem:[#allocation4 + $0x40] sm:$0xff] %v3663
        %3696 = vst [vmem:[#allocation4 + $0x48] sm:$0xff] %v3664
        %3697 = vst [vmem:[#allocation4 + $0x50] sm:$0xff] %v3665
        %3698 = vst [vmem:[#allocation4 + $0x58] sm:$0xff] %v3666
        %3699 = vst [vmem:[#allocation4 + $0x60] sm:$0xff] %v3667
        %3700 = vst [vmem:[#allocation4 + $0x68] sm:$0xff] %v3668
        %3701 = vst [vmem:[#allocation4 + $0x70] sm:$0xff] %v3669
        %3702 = vst [vmem:[#allocation4 + $0x78] sm:$0xff] %v3670
        %3703 = vst [vmem:[#allocation4 + $0x80] sm:$0xff] %v3671
        %3704 = vst [vmem:[#allocation4 + $0x88] sm:$0xff] %v3672
        %3705 = vst [vmem:[#allocation4 + $0x90] sm:$0xff] %v3673
        %3706 = vst [vmem:[#allocation4 + $0x98] sm:$0xff] %v3674
        %3707 = vst [vmem:[#allocation4 + $0xa0] sm:$0xff] %v3675
        %3708 = vst [vmem:[#allocation4 + $0xa8] sm:$0xff] %v3676
        %3709 = vst [vmem:[#allocation4 + $0xb0] sm:$0xff] %v3677
        %3710 = vst [vmem:[#allocation4 + $0xb8] sm:$0xff] %v3678
        %3711 = vst [vmem:[#allocation4 + $0xc0] sm:$0xff] %v3679
        %3712 = vst [vmem:[#allocation4 + $0xc8] sm:$0xff] %v3680
        %3713 = vst [vmem:[#allocation4 + $0xd0] sm:$0xff] %v3681
        %3714 = vst [vmem:[#allocation4 + $0xd8] sm:$0xff] %v3682
        %3715 = vst [vmem:[#allocation4 + $0xe0] sm:$0xff] %v3683
        %3716 = vst [vmem:[#allocation4 + $0xe8] sm:$0xff] %v3684
        %3717 = vst [vmem:[#allocation4 + $0xf0] sm:$0xff] %v3685
        %3718 = vst [vmem:[#allocation4 + $0xf8] sm:$0xff] %v3686
        %v3719 = vld [vmem:[#allocation4] sm:$0xff]
        %v3720 = vld [vmem:[#allocation4 + $0x8] sm:$0xff]
        %v3721 = vld [vmem:[#allocation4 + $0x10] sm:$0xff]
        %v3722 = vld [vmem:[#allocation4 + $0x18] sm:$0xff]
        %v3723 = vld [vmem:[#allocation4 + $0x20] sm:$0xff]
        %v3724 = vld [vmem:[#allocation4 + $0x28] sm:$0xff]
        %v3725 = vld [vmem:[#allocation4 + $0x30] sm:$0xff]
        %v3726 = vld [vmem:[#allocation4 + $0x38] sm:$0xff]
        %v3727 = vld [vmem:[#allocation4 + $0x40] sm:$0xff]
        %v3728 = vld [vmem:[#allocation4 + $0x48] sm:$0xff]
        %v3729 = vld [vmem:[#allocation4 + $0x50] sm:$0xff]
        %v3730 = vld [vmem:[#allocation4 + $0x58] sm:$0xff]
        %v3731 = vld [vmem:[#allocation4 + $0x60] sm:$0xff]
        %v3732 = vld [vmem:[#allocation4 + $0x68] sm:$0xff]
        %v3733 = vld [vmem:[#allocation4 + $0x70] sm:$0xff]
        %v3734 = vld [vmem:[#allocation4 + $0x78] sm:$0xff]
        %v3735 = vld [vmem:[#allocation4 + $0x80] sm:$0xff]
        %v3736 = vld [vmem:[#allocation4 + $0x88] sm:$0xff]
        %v3737 = vld [vmem:[#allocation4 + $0x90] sm:$0xff]
        %v3738 = vld [vmem:[#allocation4 + $0x98] sm:$0xff]
        %v3739 = vld [vmem:[#allocation4 + $0xa0] sm:$0xff]
        %v3740 = vld [vmem:[#allocation4 + $0xa8] sm:$0xff]
        %v3741 = vld [vmem:[#allocation4 + $0xb0] sm:$0xff]
        %v3742 = vld [vmem:[#allocation4 + $0xb8] sm:$0xff]
        %v3743 = vld [vmem:[#allocation4 + $0xc0] sm:$0xff]
        %v3744 = vld [vmem:[#allocation4 + $0xc8] sm:$0xff]
        %v3745 = vld [vmem:[#allocation4 + $0xd0] sm:$0xff]
        %v3746 = vld [vmem:[#allocation4 + $0xd8] sm:$0xff]
        %v3747 = vld [vmem:[#allocation4 + $0xe0] sm:$0xff]
        %v3748 = vld [vmem:[#allocation4 + $0xe8] sm:$0xff]
        %v3749 = vld [vmem:[#allocation4 + $0xf0] sm:$0xff]
        %v3750 = vld [vmem:[#allocation4 + $0xf8] sm:$0xff]
        %s3751 = scalar_lea.vmem [#allocation8], 1024
        %v3752 = vld [vmem:[%s3751] sm:$0xff]
        %v3753 = vld [vmem:[%s3751 + $0x8] sm:$0xff]
        %v3754 = vld [vmem:[%s3751 + $0x10] sm:$0xff]
        %v3755 = vld [vmem:[%s3751 + $0x18] sm:$0xff]
        %v3756 = vld [vmem:[%s3751 + $0x20] sm:$0xff]
        %v3757 = vld [vmem:[%s3751 + $0x28] sm:$0xff]
        %v3758 = vld [vmem:[%s3751 + $0x30] sm:$0xff]
        %v3759 = vld [vmem:[%s3751 + $0x38] sm:$0xff]
        %v3760 = vld [vmem:[%s3751 + $0x40] sm:$0xff]
        %v3761 = vld [vmem:[%s3751 + $0x48] sm:$0xff]
        %v3762 = vld [vmem:[%s3751 + $0x50] sm:$0xff]
        %v3763 = vld [vmem:[%s3751 + $0x58] sm:$0xff]
        %v3764 = vld [vmem:[%s3751 + $0x60] sm:$0xff]
        %v3765 = vld [vmem:[%s3751 + $0x68] sm:$0xff]
        %v3766 = vld [vmem:[%s3751 + $0x70] sm:$0xff]
        %v3767 = vld [vmem:[%s3751 + $0x78] sm:$0xff]
        %3768 = vmatprep.subr.mxu0 0.0
        %3769 = vmatpush1.msra.mxu0 %v3767
        %3770 = vmatprep.subr.mxu0 0.0
        %3771 = vmatpush1.msra.mxu0 %v3766
        %3772 = vmatprep.subr.mxu0 0.0
        %3773 = vmatpush1.msra.mxu0 %v3765
        %3774 = vmatprep.subr.mxu0 0.0
        %3775 = vmatpush1.msra.mxu0 %v3764
        %3776 = vmatprep.subr.mxu0 0.0
        %3777 = vmatpush1.msra.mxu0 %v3763
        %3778 = vmatprep.subr.mxu0 0.0
        %3779 = vmatpush1.msra.mxu0 %v3762
        %3780 = vmatprep.subr.mxu0 0.0
        %3781 = vmatpush1.msra.mxu0 %v3761
        %3782 = vmatprep.subr.mxu0 0.0
        %3783 = vmatpush1.msra.mxu0 %v3760
        %3784 = vmatprep.subr.mxu0 0.0
        %3785 = vmatpush1.msra.mxu0 %v3759
        %3786 = vmatprep.subr.mxu0 0.0
        %3787 = vmatpush1.msra.mxu0 %v3758
        %3788 = vmatprep.subr.mxu0 0.0
        %3789 = vmatpush1.msra.mxu0 %v3757
        %3790 = vmatprep.subr.mxu0 0.0
        %3791 = vmatpush1.msra.mxu0 %v3756
        %3792 = vmatprep.subr.mxu0 0.0
        %3793 = vmatpush1.msra.mxu0 %v3755
        %3794 = vmatprep.subr.mxu0 0.0
        %3795 = vmatpush1.msra.mxu0 %v3754
        %3796 = vmatprep.subr.mxu0 0.0
        %3797 = vmatpush1.msra.mxu0 %v3753
        %3798 = vmatprep.subr.mxu0 0.0
        %3799 = vmatpush1.msra.mxu0 %v3752
        %3800 = vmatprep.subr.mxu0 0.0
        %3801 = vmatpush2.msra.mxu0 0.0
        %3802 = vmatprep.subr.mxu0 0.0
        %3803 = vmatpush2.msra.mxu0 0.0
        %3804 = vmatprep.subr.mxu0 0.0
        %3805 = vmatpush2.msra.mxu0 0.0
        %3806 = vmatprep.subr.mxu0 0.0
        %3807 = vmatpush2.msra.mxu0 0.0
        %3808 = vmatprep.subr.mxu0 0.0
        %3809 = vmatpush2.msra.mxu0 0.0
        %3810 = vmatprep.subr.mxu0 0.0
        %3811 = vmatpush2.msra.mxu0 0.0
        %3812 = vmatprep.subr.mxu0 0.0
        %3813 = vmatpush2.msra.mxu0 0.0
        %3814 = vmatprep.subr.mxu0 0.0
        %3815 = vmatpush2.msra.mxu0 0.0
        %3816 = vmatprep.subr.mxu0 0.0
        %3817 = vmatpush2.msra.mxu0 0.0
        %3818 = vmatprep.subr.mxu0 0.0
        %3819 = vmatpush2.msra.mxu0 0.0
        %3820 = vmatprep.subr.mxu0 0.0
        %3821 = vmatpush2.msra.mxu0 0.0
        %3822 = vmatprep.subr.mxu0 0.0
        %3823 = vmatpush2.msra.mxu0 0.0
        %3824 = vmatprep.subr.mxu0 0.0
        %3825 = vmatpush2.msra.mxu0 0.0
        %3826 = vmatprep.subr.mxu0 0.0
        %3827 = vmatpush2.msra.mxu0 0.0
        %3828 = vmatprep.subr.mxu0 0.0
        %3829 = vmatpush2.msra.mxu0 0.0
        %3830 = vmatprep.subr.mxu0 0.0
        %3831 = vmatpush2.msra.mxu0 0.0
        %3832 = vmatprep.mubr.f32.mxu0 0.0
        %3833 = vmatmul.mubr.f32.gmra.mxu0 %v3011
        %v3834 = vpop.f32.mrf.mxu0
        %v3835 = vadd.f32 0.0, %v3834
        %v3836 = vpop.f32.mrf.mxu0
        %3837 = vmatprep.mubr.f32.mxu0 0.0
        %3838 = vmatmul.mubr.f32.gmra.mxu0 %v3012
        %v3839 = vpop.f32.mrf.mxu0
        %v3840 = vadd.f32 0.0, %v3839
        %v3841 = vpop.f32.mrf.mxu0
        %3842 = vmatprep.mubr.f32.mxu0 0.0
        %3843 = vmatmul.mubr.f32.gmra.mxu0 %v3013
        %v3844 = vpop.f32.mrf.mxu0
        %v3845 = vadd.f32 0.0, %v3844
        %v3846 = vpop.f32.mrf.mxu0
        %3847 = vmatprep.mubr.f32.mxu0 0.0
        %3848 = vmatmul.mubr.f32.gmra.mxu0 %v3014
        %v3849 = vpop.f32.mrf.mxu0
        %v3850 = vadd.f32 0.0, %v3849
        %v3851 = vpop.f32.mrf.mxu0
        %3852 = vmatprep.mubr.f32.mxu0 0.0
        %3853 = vmatmul.mubr.f32.gmra.mxu0 %v3015
        %v3854 = vpop.f32.mrf.mxu0
        %v3855 = vadd.f32 0.0, %v3854
        %v3856 = vpop.f32.mrf.mxu0
        %3857 = vmatprep.mubr.f32.mxu0 0.0
        %3858 = vmatmul.mubr.f32.gmra.mxu0 %v3016
        %v3859 = vpop.f32.mrf.mxu0
        %v3860 = vadd.f32 0.0, %v3859
        %v3861 = vpop.f32.mrf.mxu0
        %3862 = vmatprep.mubr.f32.mxu0 0.0
        %3863 = vmatmul.mubr.f32.gmra.mxu0 %v3017
        %v3864 = vpop.f32.mrf.mxu0
        %v3865 = vadd.f32 0.0, %v3864
        %v3866 = vpop.f32.mrf.mxu0
        %3867 = vmatprep.mubr.f32.mxu0 0.0
        %3868 = vmatmul.mubr.f32.gmra.mxu0 %v3018
        %v3869 = vpop.f32.mrf.mxu0
        %v3870 = vadd.f32 0.0, %v3869
        %v3871 = vpop.f32.mrf.mxu0
        %3872 = vmatprep.mubr.f32.mxu0 0.0
        %3873 = vmatmul.mubr.f32.gmra.mxu0 %v3019
        %v3874 = vpop.f32.mrf.mxu0
        %v3875 = vadd.f32 0.0, %v3874
        %v3876 = vpop.f32.mrf.mxu0
        %3877 = vmatprep.mubr.f32.mxu0 0.0
        %3878 = vmatmul.mubr.f32.gmra.mxu0 %v3020
        %v3879 = vpop.f32.mrf.mxu0
        %v3880 = vadd.f32 0.0, %v3879
        %v3881 = vpop.f32.mrf.mxu0
        %3882 = vmatprep.mubr.f32.mxu0 0.0
        %3883 = vmatmul.mubr.f32.gmra.mxu0 %v3021
        %v3884 = vpop.f32.mrf.mxu0
        %v3885 = vadd.f32 0.0, %v3884
        %v3886 = vpop.f32.mrf.mxu0
        %3887 = vmatprep.mubr.f32.mxu0 0.0
        %3888 = vmatmul.mubr.f32.gmra.mxu0 %v3022
        %v3889 = vpop.f32.mrf.mxu0
        %v3890 = vadd.f32 0.0, %v3889
        %v3891 = vpop.f32.mrf.mxu0
        %3892 = vmatprep.mubr.f32.mxu0 0.0
        %3893 = vmatmul.mubr.f32.gmra.mxu0 %v3023
        %v3894 = vpop.f32.mrf.mxu0
        %v3895 = vadd.f32 0.0, %v3894
        %v3896 = vpop.f32.mrf.mxu0
        %3897 = vmatprep.mubr.f32.mxu0 0.0
        %3898 = vmatmul.mubr.f32.gmra.mxu0 %v3024
        %v3899 = vpop.f32.mrf.mxu0
        %v3900 = vadd.f32 0.0, %v3899
        %v3901 = vpop.f32.mrf.mxu0
        %3902 = vmatprep.mubr.f32.mxu0 0.0
        %3903 = vmatmul.mubr.f32.gmra.mxu0 %v3025
        %v3904 = vpop.f32.mrf.mxu0
        %v3905 = vadd.f32 0.0, %v3904
        %v3906 = vpop.f32.mrf.mxu0
        %3907 = vmatprep.mubr.f32.mxu0 0.0
        %3908 = vmatmul.mubr.f32.gmra.mxu0 %v3026
        %v3909 = vpop.f32.mrf.mxu0
        %v3910 = vadd.f32 0.0, %v3909
        %v3911 = vpop.f32.mrf.mxu0
        %3912 = vmatprep.mubr.f32.mxu0 0.0
        %3913 = vmatmul.mubr.f32.gmra.mxu0 %v3027
        %v3914 = vpop.f32.mrf.mxu0
        %v3915 = vadd.f32 0.0, %v3914
        %v3916 = vpop.f32.mrf.mxu0
        %3917 = vmatprep.mubr.f32.mxu0 0.0
        %3918 = vmatmul.mubr.f32.gmra.mxu0 %v3028
        %v3919 = vpop.f32.mrf.mxu0
        %v3920 = vadd.f32 0.0, %v3919
        %v3921 = vpop.f32.mrf.mxu0
        %3922 = vmatprep.mubr.f32.mxu0 0.0
        %3923 = vmatmul.mubr.f32.gmra.mxu0 %v3029
        %v3924 = vpop.f32.mrf.mxu0
        %v3925 = vadd.f32 0.0, %v3924
        %v3926 = vpop.f32.mrf.mxu0
        %3927 = vmatprep.mubr.f32.mxu0 0.0
        %3928 = vmatmul.mubr.f32.gmra.mxu0 %v3030
        %v3929 = vpop.f32.mrf.mxu0
        %v3930 = vadd.f32 0.0, %v3929
        %v3931 = vpop.f32.mrf.mxu0
        %3932 = vmatprep.mubr.f32.mxu0 0.0
        %3933 = vmatmul.mubr.f32.gmra.mxu0 %v3031
        %v3934 = vpop.f32.mrf.mxu0
        %v3935 = vadd.f32 0.0, %v3934
        %v3936 = vpop.f32.mrf.mxu0
        %3937 = vmatprep.mubr.f32.mxu0 0.0
        %3938 = vmatmul.mubr.f32.gmra.mxu0 %v3032
        %v3939 = vpop.f32.mrf.mxu0
        %v3940 = vadd.f32 0.0, %v3939
        %v3941 = vpop.f32.mrf.mxu0
        %3942 = vmatprep.mubr.f32.mxu0 0.0
        %3943 = vmatmul.mubr.f32.gmra.mxu0 %v3033
        %v3944 = vpop.f32.mrf.mxu0
        %v3945 = vadd.f32 0.0, %v3944
        %v3946 = vpop.f32.mrf.mxu0
        %3947 = vmatprep.mubr.f32.mxu0 0.0
        %3948 = vmatmul.mubr.f32.gmra.mxu0 %v3034
        %v3949 = vpop.f32.mrf.mxu0
        %v3950 = vadd.f32 0.0, %v3949
        %v3951 = vpop.f32.mrf.mxu0
        %3952 = vmatprep.mubr.f32.mxu0 0.0
        %3953 = vmatmul.mubr.f32.gmra.mxu0 %v3035
        %v3954 = vpop.f32.mrf.mxu0
        %v3955 = vadd.f32 0.0, %v3954
        %v3956 = vpop.f32.mrf.mxu0
        %3957 = vmatprep.mubr.f32.mxu0 0.0
        %3958 = vmatmul.mubr.f32.gmra.mxu0 %v3036
        %v3959 = vpop.f32.mrf.mxu0
        %v3960 = vadd.f32 0.0, %v3959
        %v3961 = vpop.f32.mrf.mxu0
        %3962 = vmatprep.mubr.f32.mxu0 0.0
        %3963 = vmatmul.mubr.f32.gmra.mxu0 %v3037
        %v3964 = vpop.f32.mrf.mxu0
        %v3965 = vadd.f32 0.0, %v3964
        %v3966 = vpop.f32.mrf.mxu0
        %3967 = vmatprep.mubr.f32.mxu0 0.0
        %3968 = vmatmul.mubr.f32.gmra.mxu0 %v3038
        %v3969 = vpop.f32.mrf.mxu0
        %v3970 = vadd.f32 0.0, %v3969
        %v3971 = vpop.f32.mrf.mxu0
        %3972 = vmatprep.mubr.f32.mxu0 0.0
        %3973 = vmatmul.mubr.f32.gmra.mxu0 %v3039
        %v3974 = vpop.f32.mrf.mxu0
        %v3975 = vadd.f32 0.0, %v3974
        %v3976 = vpop.f32.mrf.mxu0
        %3977 = vmatprep.mubr.f32.mxu0 0.0
        %3978 = vmatmul.mubr.f32.gmra.mxu0 %v3040
        %v3979 = vpop.f32.mrf.mxu0
        %v3980 = vadd.f32 0.0, %v3979
        %v3981 = vpop.f32.mrf.mxu0
        %3982 = vmatprep.mubr.f32.mxu0 0.0
        %3983 = vmatmul.mubr.f32.gmra.mxu0 %v3041
        %v3984 = vpop.f32.mrf.mxu0
        %v3985 = vadd.f32 0.0, %v3984
        %v3986 = vpop.f32.mrf.mxu0
        %3987 = vmatprep.mubr.f32.mxu0 0.0
        %3988 = vmatmul.mubr.f32.gmra.mxu0 %v3042
        %v3989 = vpop.f32.mrf.mxu0
        %v3990 = vadd.f32 0.0, %v3989
        %v3991 = vpop.f32.mrf.mxu0
        %3992 = vdwg.mxu0
        %v3993 = vadd.f32 %v3719, %v3835
        %v3994 = vadd.f32 %v3720, %v3840
        %v3995 = vadd.f32 %v3721, %v3845
        %v3996 = vadd.f32 %v3722, %v3850
        %v3997 = vadd.f32 %v3723, %v3855
        %v3998 = vadd.f32 %v3724, %v3860
        %v3999 = vadd.f32 %v3725, %v3865
        %v4000 = vadd.f32 %v3726, %v3870
        %v4001 = vadd.f32 %v3727, %v3875
        %v4002 = vadd.f32 %v3728, %v3880
        %v4003 = vadd.f32 %v3729, %v3885
        %v4004 = vadd.f32 %v3730, %v3890
        %v4005 = vadd.f32 %v3731, %v3895
        %v4006 = vadd.f32 %v3732, %v3900
        %v4007 = vadd.f32 %v3733, %v3905
        %v4008 = vadd.f32 %v3734, %v3910
        %v4009 = vadd.f32 %v3735, %v3915
        %v4010 = vadd.f32 %v3736, %v3920
        %v4011 = vadd.f32 %v3737, %v3925
        %v4012 = vadd.f32 %v3738, %v3930
        %v4013 = vadd.f32 %v3739, %v3935
        %v4014 = vadd.f32 %v3740, %v3940
        %v4015 = vadd.f32 %v3741, %v3945
        %v4016 = vadd.f32 %v3742, %v3950
        %v4017 = vadd.f32 %v3743, %v3955
        %v4018 = vadd.f32 %v3744, %v3960
        %v4019 = vadd.f32 %v3745, %v3965
        %v4020 = vadd.f32 %v3746, %v3970
        %v4021 = vadd.f32 %v3747, %v3975
        %v4022 = vadd.f32 %v3748, %v3980
        %v4023 = vadd.f32 %v3749, %v3985
        %v4024 = vadd.f32 %v3750, %v3990
        %4025 = vst [vmem:[#allocation4] sm:$0xff] %v3993
        %4026 = vst [vmem:[#allocation4 + $0x8] sm:$0xff] %v3994
        %4027 = vst [vmem:[#allocation4 + $0x10] sm:$0xff] %v3995
        %4028 = vst [vmem:[#allocation4 + $0x18] sm:$0xff] %v3996
        %4029 = vst [vmem:[#allocation4 + $0x20] sm:$0xff] %v3997
        %4030 = vst [vmem:[#allocation4 + $0x28] sm:$0xff] %v3998
        %4031 = vst [vmem:[#allocation4 + $0x30] sm:$0xff] %v3999
        %4032 = vst [vmem:[#allocation4 + $0x38] sm:$0xff] %v4000
        %4033 = vst [vmem:[#allocation4 + $0x40] sm:$0xff] %v4001
        %4034 = vst [vmem:[#allocation4 + $0x48] sm:$0xff] %v4002
        %4035 = vst [vmem:[#allocation4 + $0x50] sm:$0xff] %v4003
        %4036 = vst [vmem:[#allocation4 + $0x58] sm:$0xff] %v4004
        %4037 = vst [vmem:[#allocation4 + $0x60] sm:$0xff] %v4005
        %4038 = vst [vmem:[#allocation4 + $0x68] sm:$0xff] %v4006
        %4039 = vst [vmem:[#allocation4 + $0x70] sm:$0xff] %v4007
        %4040 = vst [vmem:[#allocation4 + $0x78] sm:$0xff] %v4008
        %4041 = vst [vmem:[#allocation4 + $0x80] sm:$0xff] %v4009
        %4042 = vst [vmem:[#allocation4 + $0x88] sm:$0xff] %v4010
        %4043 = vst [vmem:[#allocation4 + $0x90] sm:$0xff] %v4011
        %4044 = vst [vmem:[#allocation4 + $0x98] sm:$0xff] %v4012
        %4045 = vst [vmem:[#allocation4 + $0xa0] sm:$0xff] %v4013
        %4046 = vst [vmem:[#allocation4 + $0xa8] sm:$0xff] %v4014
        %4047 = vst [vmem:[#allocation4 + $0xb0] sm:$0xff] %v4015
        %4048 = vst [vmem:[#allocation4 + $0xb8] sm:$0xff] %v4016
        %4049 = vst [vmem:[#allocation4 + $0xc0] sm:$0xff] %v4017
        %4050 = vst [vmem:[#allocation4 + $0xc8] sm:$0xff] %v4018
        %4051 = vst [vmem:[#allocation4 + $0xd0] sm:$0xff] %v4019
        %4052 = vst [vmem:[#allocation4 + $0xd8] sm:$0xff] %v4020
        %4053 = vst [vmem:[#allocation4 + $0xe0] sm:$0xff] %v4021
        %4054 = vst [vmem:[#allocation4 + $0xe8] sm:$0xff] %v4022
        %4055 = vst [vmem:[#allocation4 + $0xf0] sm:$0xff] %v4023
        %4056 = vst [vmem:[#allocation4 + $0xf8] sm:$0xff] %v4024
        %v4057 = vld [vmem:[#allocation4] sm:$0xff]
        %v4058 = vld [vmem:[#allocation4 + $0x8] sm:$0xff]
        %v4059 = vld [vmem:[#allocation4 + $0x10] sm:$0xff]
        %v4060 = vld [vmem:[#allocation4 + $0x18] sm:$0xff]
        %v4061 = vld [vmem:[#allocation4 + $0x20] sm:$0xff]
        %v4062 = vld [vmem:[#allocation4 + $0x28] sm:$0xff]
        %v4063 = vld [vmem:[#allocation4 + $0x30] sm:$0xff]
        %v4064 = vld [vmem:[#allocation4 + $0x38] sm:$0xff]
        %v4065 = vld [vmem:[#allocation4 + $0x40] sm:$0xff]
        %v4066 = vld [vmem:[#allocation4 + $0x48] sm:$0xff]
        %v4067 = vld [vmem:[#allocation4 + $0x50] sm:$0xff]
        %v4068 = vld [vmem:[#allocation4 + $0x58] sm:$0xff]
        %v4069 = vld [vmem:[#allocation4 + $0x60] sm:$0xff]
        %v4070 = vld [vmem:[#allocation4 + $0x68] sm:$0xff]
        %v4071 = vld [vmem:[#allocation4 + $0x70] sm:$0xff]
        %v4072 = vld [vmem:[#allocation4 + $0x78] sm:$0xff]
        %v4073 = vld [vmem:[#allocation4 + $0x80] sm:$0xff]
        %v4074 = vld [vmem:[#allocation4 + $0x88] sm:$0xff]
        %v4075 = vld [vmem:[#allocation4 + $0x90] sm:$0xff]
        %v4076 = vld [vmem:[#allocation4 + $0x98] sm:$0xff]
        %v4077 = vld [vmem:[#allocation4 + $0xa0] sm:$0xff]
        %v4078 = vld [vmem:[#allocation4 + $0xa8] sm:$0xff]
        %v4079 = vld [vmem:[#allocation4 + $0xb0] sm:$0xff]
        %v4080 = vld [vmem:[#allocation4 + $0xb8] sm:$0xff]
        %v4081 = vld [vmem:[#allocation4 + $0xc0] sm:$0xff]
        %v4082 = vld [vmem:[#allocation4 + $0xc8] sm:$0xff]
        %v4083 = vld [vmem:[#allocation4 + $0xd0] sm:$0xff]
        %v4084 = vld [vmem:[#allocation4 + $0xd8] sm:$0xff]
        %v4085 = vld [vmem:[#allocation4 + $0xe0] sm:$0xff]
        %v4086 = vld [vmem:[#allocation4 + $0xe8] sm:$0xff]
        %v4087 = vld [vmem:[#allocation4 + $0xf0] sm:$0xff]
        %v4088 = vld [vmem:[#allocation4 + $0xf8] sm:$0xff]
        %v4089 = vmax.f32 %v4057, 0.0
        %v4090 = vmax.f32 %v4058, 0.0
        %v4091 = vmax.f32 %v4059, 0.0
        %v4092 = vmax.f32 %v4060, 0.0
        %v4093 = vmax.f32 %v4061, 0.0
        %v4094 = vmax.f32 %v4062, 0.0
        %v4095 = vmax.f32 %v4063, 0.0
        %v4096 = vmax.f32 %v4064, 0.0
        %v4097 = vmax.f32 %v4065, 0.0
        %v4098 = vmax.f32 %v4066, 0.0
        %v4099 = vmax.f32 %v4067, 0.0
        %v4100 = vmax.f32 %v4068, 0.0
        %v4101 = vmax.f32 %v4069, 0.0
        %v4102 = vmax.f32 %v4070, 0.0
        %v4103 = vmax.f32 %v4071, 0.0
        %v4104 = vmax.f32 %v4072, 0.0
        %v4105 = vmax.f32 %v4073, 0.0
        %v4106 = vmax.f32 %v4074, 0.0
        %v4107 = vmax.f32 %v4075, 0.0
        %v4108 = vmax.f32 %v4076, 0.0
        %v4109 = vmax.f32 %v4077, 0.0
        %v4110 = vmax.f32 %v4078, 0.0
        %v4111 = vmax.f32 %v4079, 0.0
        %v4112 = vmax.f32 %v4080, 0.0
        %v4113 = vmax.f32 %v4081, 0.0
        %v4114 = vmax.f32 %v4082, 0.0
        %v4115 = vmax.f32 %v4083, 0.0
        %v4116 = vmax.f32 %v4084, 0.0
        %v4117 = vmax.f32 %v4085, 0.0
        %v4118 = vmax.f32 %v4086, 0.0
        %v4119 = vmax.f32 %v4087, 0.0
        %v4120 = vmax.f32 %v4088, 0.0
        %v4121 = vld [vmem:[%s5] sm:$0x1]
        %v4122 = vld [vmem:[%s6] sm:$0x1]
        %v4123 = vadd.f32 %v4089, %v4090
        %v4124 = vadd.f32 %v4123, %v4091
        %v4125 = vadd.f32 %v4124, %v4092
        %v4126 = vadd.f32 %v4125, %v4093
        %v4127 = vadd.f32 %v4126, %v4094
        %v4128 = vadd.f32 %v4127, %v4095
        %v4129 = vadd.f32 %v4128, %v4096
        %v4130 = vadd.f32 %v4129, %v4097
        %v4131 = vadd.f32 %v4130, %v4098
        %v4132 = vadd.f32 %v4131, %v4099
        %v4133 = vadd.f32 %v4132, %v4100
        %v4134 = vadd.f32 %v4133, %v4101
        %v4135 = vadd.f32 %v4134, %v4102
        %v4136 = vadd.f32 %v4135, %v4103
        %v4137 = vadd.f32 %v4136, %v4104
        %v4138 = vadd.f32 %v4137, %v4105
        %v4139 = vadd.f32 %v4138, %v4106
        %v4140 = vadd.f32 %v4139, %v4107
        %v4141 = vadd.f32 %v4140, %v4108
        %v4142 = vadd.f32 %v4141, %v4109
        %v4143 = vadd.f32 %v4142, %v4110
        %v4144 = vadd.f32 %v4143, %v4111
        %v4145 = vadd.f32 %v4144, %v4112
        %v4146 = vadd.f32 %v4145, %v4113
        %v4147 = vadd.f32 %v4146, %v4114
        %v4148 = vadd.f32 %v4147, %v4115
        %v4149 = vadd.f32 %v4148, %v4116
        %v4150 = vadd.f32 %v4149, %v4117
        %v4151 = vadd.f32 %v4150, %v4118
        %v4152 = vadd.f32 %v4151, %v4119
        %v4153 = vadd.f32 %v4152, %v4120
        %4154 = vadd.xlane.f32.xlu0 %v4153
        %v4155 = vpop.xlane.xlu0 %4154
        %v4156 = vrot.slane %v4155, 4
        %v4157 = vadd.f32 %v4155, %v4156
        %v4158 = vrot.slane %v4157, 2
        %v4159 = vadd.f32 %v4157, %v4158
        %v4160 = vrot.slane %v4159, 1
        %v4161 = vadd.f32 %v4159, %v4160
        %s4162 = vtos %v4161
        %v4163 = vrcp.pop 2048.0
        %s4164 = vtos %v4163
        %s4165 = smul.f32 %s4162, %s4164
        %v4166 = vstv %s4165
        %v4167 = vsub.f32 %v4089, %v4166
        %v4168 = vsub.f32 %v4090, %v4166
        %v4169 = vsub.f32 %v4091, %v4166
        %v4170 = vsub.f32 %v4092, %v4166
        %v4171 = vsub.f32 %v4093, %v4166
        %v4172 = vsub.f32 %v4094, %v4166
        %v4173 = vsub.f32 %v4095, %v4166
        %v4174 = vsub.f32 %v4096, %v4166
        %v4175 = vsub.f32 %v4097, %v4166
        %v4176 = vsub.f32 %v4098, %v4166
        %v4177 = vsub.f32 %v4099, %v4166
        %v4178 = vsub.f32 %v4100, %v4166
        %v4179 = vsub.f32 %v4101, %v4166
        %v4180 = vsub.f32 %v4102, %v4166
        %v4181 = vsub.f32 %v4103, %v4166
        %v4182 = vsub.f32 %v4104, %v4166
        %v4183 = vsub.f32 %v4105, %v4166
        %v4184 = vsub.f32 %v4106, %v4166
        %v4185 = vsub.f32 %v4107, %v4166
        %v4186 = vsub.f32 %v4108, %v4166
        %v4187 = vsub.f32 %v4109, %v4166
        %v4188 = vsub.f32 %v4110, %v4166
        %v4189 = vsub.f32 %v4111, %v4166
        %v4190 = vsub.f32 %v4112, %v4166
        %v4191 = vsub.f32 %v4113, %v4166
        %v4192 = vsub.f32 %v4114, %v4166
        %v4193 = vsub.f32 %v4115, %v4166
        %v4194 = vsub.f32 %v4116, %v4166
        %v4195 = vsub.f32 %v4117, %v4166
        %v4196 = vsub.f32 %v4118, %v4166
        %v4197 = vsub.f32 %v4119, %v4166
        %v4198 = vsub.f32 %v4120, %v4166
        %v4199 = vmul.f32 %v4167, %v4167
        %v4200 = vmul.f32 %v4168, %v4168
        %v4201 = vmul.f32 %v4169, %v4169
        %v4202 = vmul.f32 %v4170, %v4170
        %v4203 = vmul.f32 %v4171, %v4171
        %v4204 = vmul.f32 %v4172, %v4172
        %v4205 = vmul.f32 %v4173, %v4173
        %v4206 = vmul.f32 %v4174, %v4174
        %v4207 = vmul.f32 %v4175, %v4175
        %v4208 = vmul.f32 %v4176, %v4176
        %v4209 = vmul.f32 %v4177, %v4177
        %v4210 = vmul.f32 %v4178, %v4178
        %v4211 = vmul.f32 %v4179, %v4179
        %v4212 = vmul.f32 %v4180, %v4180
        %v4213 = vmul.f32 %v4181, %v4181
        %v4214 = vmul.f32 %v4182, %v4182
        %v4215 = vmul.f32 %v4183, %v4183
        %v4216 = vmul.f32 %v4184, %v4184
        %v4217 = vmul.f32 %v4185, %v4185
        %v4218 = vmul.f32 %v4186, %v4186
        %v4219 = vmul.f32 %v4187, %v4187
        %v4220 = vmul.f32 %v4188, %v4188
        %v4221 = vmul.f32 %v4189, %v4189
        %v4222 = vmul.f32 %v4190, %v4190
        %v4223 = vmul.f32 %v4191, %v4191
        %v4224 = vmul.f32 %v4192, %v4192
        %v4225 = vmul.f32 %v4193, %v4193
        %v4226 = vmul.f32 %v4194, %v4194
        %v4227 = vmul.f32 %v4195, %v4195
        %v4228 = vmul.f32 %v4196, %v4196
        %v4229 = vmul.f32 %v4197, %v4197
        %v4230 = vmul.f32 %v4198, %v4198
        %v4231 = vadd.f32 %v4199, %v4200
        %v4232 = vadd.f32 %v4231, %v4201
        %v4233 = vadd.f32 %v4232, %v4202
        %v4234 = vadd.f32 %v4233, %v4203
        %v4235 = vadd.f32 %v4234, %v4204
        %v4236 = vadd.f32 %v4235, %v4205
        %v4237 = vadd.f32 %v4236, %v4206
        %v4238 = vadd.f32 %v4237, %v4207
        %v4239 = vadd.f32 %v4238, %v4208
        %v4240 = vadd.f32 %v4239, %v4209
        %v4241 = vadd.f32 %v4240, %v4210
        %v4242 = vadd.f32 %v4241, %v4211
        %v4243 = vadd.f32 %v4242, %v4212
        %v4244 = vadd.f32 %v4243, %v4213
        %v4245 = vadd.f32 %v4244, %v4214
        %v4246 = vadd.f32 %v4245, %v4215
        %v4247 = vadd.f32 %v4246, %v4216
        %v4248 = vadd.f32 %v4247, %v4217
        %v4249 = vadd.f32 %v4248, %v4218
        %v4250 = vadd.f32 %v4249, %v4219
        %v4251 = vadd.f32 %v4250, %v4220
        %v4252 = vadd.f32 %v4251, %v4221
        %v4253 = vadd.f32 %v4252, %v4222
        %v4254 = vadd.f32 %v4253, %v4223
        %v4255 = vadd.f32 %v4254, %v4224
        %v4256 = vadd.f32 %v4255, %v4225
        %v4257 = vadd.f32 %v4256, %v4226
        %v4258 = vadd.f32 %v4257, %v4227
        %v4259 = vadd.f32 %v4258, %v4228
        %v4260 = vadd.f32 %v4259, %v4229
        %v4261 = vadd.f32 %v4260, %v4230
        %4262 = vadd.xlane.f32.xlu0 %v4261
        %v4263 = vpop.xlane.xlu0 %4262
        %v4264 = vrot.slane %v4263, 4
        %v4265 = vadd.f32 %v4263, %v4264
        %v4266 = vrot.slane %v4265, 2
        %v4267 = vadd.f32 %v4265, %v4266
        %v4268 = vrot.slane %v4267, 1
        %v4269 = vadd.f32 %v4267, %v4268
        %s4270 = vtos %v4269
        %s4271 = smul.f32 %s4165, 30720.0
        %s4272 = smul.f32 %s4271, %s4165
        %s4273 = ssub.f32 %s4270, %s4272
        %v4274 = vrcp.pop 2048.0
        %s4275 = vtos %v4274
        %s4276 = smul.f32 %s4273, %s4275
        %s4277 = sadd.f32 %s4276, 1e-05
        %v4278 = vstv %s4277
        %v4279 = vrsqrt.pop %v4278
        %s4280 = vtos %v4279
        %v4281 = vstv %s4280
        %v4282 = vmul.f32 %v4167, %v4281
        %v4283 = vmul.f32 %v4168, %v4281
        %v4284 = vmul.f32 %v4169, %v4281
        %v4285 = vmul.f32 %v4170, %v4281
        %v4286 = vmul.f32 %v4171, %v4281
        %v4287 = vmul.f32 %v4172, %v4281
        %v4288 = vmul.f32 %v4173, %v4281
        %v4289 = vmul.f32 %v4174, %v4281
        %v4290 = vmul.f32 %v4175, %v4281
        %v4291 = vmul.f32 %v4176, %v4281
        %v4292 = vmul.f32 %v4177, %v4281
        %v4293 = vmul.f32 %v4178, %v4281
        %v4294 = vmul.f32 %v4179, %v4281
        %v4295 = vmul.f32 %v4180, %v4281
        %v4296 = vmul.f32 %v4181, %v4281
        %v4297 = vmul.f32 %v4182, %v4281
        %v4298 = vmul.f32 %v4183, %v4281
        %v4299 = vmul.f32 %v4184, %v4281
        %v4300 = vmul.f32 %v4185, %v4281
        %v4301 = vmul.f32 %v4186, %v4281
        %v4302 = vmul.f32 %v4187, %v4281
        %v4303 = vmul.f32 %v4188, %v4281
        %v4304 = vmul.f32 %v4189, %v4281
        %v4305 = vmul.f32 %v4190, %v4281
        %v4306 = vmul.f32 %v4191, %v4281
        %v4307 = vmul.f32 %v4192, %v4281
        %v4308 = vmul.f32 %v4193, %v4281
        %v4309 = vmul.f32 %v4194, %v4281
        %v4310 = vmul.f32 %v4195, %v4281
        %v4311 = vmul.f32 %v4196, %v4281
        %v4312 = vmul.f32 %v4197, %v4281
        %v4313 = vmul.f32 %v4198, %v4281
        %v4315 = vlaneseq
        %v4316 = vshrl.u32 %v4315, 7
        %v4317 = vsub.s32 0, %v4316
        %v4318 = vrot.slane %v4121, %v4317
        %v4320 = vmul.f32 %v4282, %v4318
        %v4321 = vmul.f32 %v4283, %v4318
        %v4322 = vmul.f32 %v4284, %v4318
        %v4323 = vmul.f32 %v4285, %v4318
        %v4324 = vmul.f32 %v4286, %v4318
        %v4325 = vmul.f32 %v4287, %v4318
        %v4326 = vmul.f32 %v4288, %v4318
        %v4327 = vmul.f32 %v4289, %v4318
        %v4328 = vmul.f32 %v4290, %v4318
        %v4329 = vmul.f32 %v4291, %v4318
        %v4330 = vmul.f32 %v4292, %v4318
        %v4331 = vmul.f32 %v4293, %v4318
        %v4332 = vmul.f32 %v4294, %v4318
        %v4333 = vmul.f32 %v4295, %v4318
        %v4334 = vmul.f32 %v4296, %v4318
        %v4335 = vmul.f32 %v4297, %v4318
        %v4336 = vmul.f32 %v4298, %v4318
        %v4337 = vmul.f32 %v4299, %v4318
        %v4338 = vmul.f32 %v4300, %v4318
        %v4339 = vmul.f32 %v4301, %v4318
        %v4340 = vmul.f32 %v4302, %v4318
        %v4341 = vmul.f32 %v4303, %v4318
        %v4342 = vmul.f32 %v4304, %v4318
        %v4343 = vmul.f32 %v4305, %v4318
        %v4344 = vmul.f32 %v4306, %v4318
        %v4345 = vmul.f32 %v4307, %v4318
        %v4346 = vmul.f32 %v4308, %v4318
        %v4347 = vmul.f32 %v4309, %v4318
        %v4348 = vmul.f32 %v4310, %v4318
        %v4349 = vmul.f32 %v4311, %v4318
        %v4350 = vmul.f32 %v4312, %v4318
        %v4351 = vmul.f32 %v4313, %v4318
        %v4353 = vlaneseq
        %v4354 = vshrl.u32 %v4353, 7
        %v4355 = vsub.s32 0, %v4354
        %v4356 = vrot.slane %v4122, %v4355
        %v4358 = vadd.f32 %v4320, %v4356
        %v4359 = vadd.f32 %v4321, %v4356
        %v4360 = vadd.f32 %v4322, %v4356
        %v4361 = vadd.f32 %v4323, %v4356
        %v4362 = vadd.f32 %v4324, %v4356
        %v4363 = vadd.f32 %v4325, %v4356
        %v4364 = vadd.f32 %v4326, %v4356
        %v4365 = vadd.f32 %v4327, %v4356
        %v4366 = vadd.f32 %v4328, %v4356
        %v4367 = vadd.f32 %v4329, %v4356
        %v4368 = vadd.f32 %v4330, %v4356
        %v4369 = vadd.f32 %v4331, %v4356
        %v4370 = vadd.f32 %v4332, %v4356
        %v4371 = vadd.f32 %v4333, %v4356
        %v4372 = vadd.f32 %v4334, %v4356
        %v4373 = vadd.f32 %v4335, %v4356
        %v4374 = vadd.f32 %v4336, %v4356
        %v4375 = vadd.f32 %v4337, %v4356
        %v4376 = vadd.f32 %v4338, %v4356
        %v4377 = vadd.f32 %v4339, %v4356
        %v4378 = vadd.f32 %v4340, %v4356
        %v4379 = vadd.f32 %v4341, %v4356
        %v4380 = vadd.f32 %v4342, %v4356
        %v4381 = vadd.f32 %v4343, %v4356
        %v4382 = vadd.f32 %v4344, %v4356
        %v4383 = vadd.f32 %v4345, %v4356
        %v4384 = vadd.f32 %v4346, %v4356
        %v4385 = vadd.f32 %v4347, %v4356
        %v4386 = vadd.f32 %v4348, %v4356
        %v4387 = vadd.f32 %v4349, %v4356
        %v4388 = vadd.f32 %v4350, %v4356
        %v4389 = vadd.f32 %v4351, %v4356
        %s4390 = scalar_lea.vmem [#allocation3], 24
        %4391 = vst [vmem:[%s4390 + $0x1] sm:$0xff] %v4358
        %4392 = vst [vmem:[%s4390 + $0x9] sm:$0xff] %v4359
        %4393 = vst [vmem:[%s4390 + $0x19] sm:$0xff] %v4360
        %4394 = vst [vmem:[%s4390 + $0x21] sm:$0xff] %v4361
        %4395 = vst [vmem:[%s4390 + $0x31] sm:$0xff] %v4362
        %4396 = vst [vmem:[%s4390 + $0x39] sm:$0xff] %v4363
        %4397 = vst [vmem:[%s4390 + $0x49] sm:$0xff] %v4364
        %4398 = vst [vmem:[%s4390 + $0x51] sm:$0xff] %v4365
        %4399 = vst [vmem:[%s4390 + $0x61] sm:$0xff] %v4366
        %4400 = vst [vmem:[%s4390 + $0x69] sm:$0xff] %v4367
        %4401 = vst [vmem:[%s4390 + $0x79] sm:$0xff] %v4368
        %4402 = vst [vmem:[%s4390 + $0x81] sm:$0xff] %v4369
        %4403 = vst [vmem:[%s4390 + $0x91] sm:$0xff] %v4370
        %4404 = vst [vmem:[%s4390 + $0x99] sm:$0xff] %v4371
        %4405 = vst [vmem:[%s4390 + $0xa9] sm:$0xff] %v4372
        %4406 = vst [vmem:[%s4390 + $0xb1] sm:$0xff] %v4373
        %4407 = vst [vmem:[%s4390 + $0xc1] sm:$0xff] %v4374
        %4408 = vst [vmem:[%s4390 + $0xc9] sm:$0xff] %v4375
        %4409 = vst [vmem:[%s4390 + $0xd9] sm:$0xff] %v4376
        %4410 = vst [vmem:[%s4390 + $0xe1] sm:$0xff] %v4377
        %4411 = vst [vmem:[%s4390 + $0xf1] sm:$0xff] %v4378
        %4412 = vst [vmem:[%s4390 + $0xf9] sm:$0xff] %v4379
        %4413 = vst [vmem:[%s4390 + $0x109] sm:$0xff] %v4380
        %4414 = vst [vmem:[%s4390 + $0x111] sm:$0xff] %v4381
        %4415 = vst [vmem:[%s4390 + $0x121] sm:$0xff] %v4382
        %4416 = vst [vmem:[%s4390 + $0x129] sm:$0xff] %v4383
        %4417 = vst [vmem:[%s4390 + $0x139] sm:$0xff] %v4384
        %4418 = vst [vmem:[%s4390 + $0x141] sm:$0xff] %v4385
        %4419 = vst [vmem:[%s4390 + $0x151] sm:$0xff] %v4386
        %4420 = vst [vmem:[%s4390 + $0x159] sm:$0xff] %v4387
        %4421 = vst [vmem:[%s4390 + $0x169] sm:$0xff] %v4388
        %4422 = vst [vmem:[%s4390 + $0x171] sm:$0xff] %v4389
        %v4423 = vld [vmem:[%s8] sm:$0x1]
        %v4425 = vlaneseq
        %v4426 = vshrl.u32 %v4425, 7
        %v4427 = vsub.s32 0, %v4426
        %v4428 = vrot.slane %v4423, %v4427
        %4430 = vst [vmem:[#allocation4] sm:$0xff] %v4428
        %4431 = vst [vmem:[#allocation4 + $0x8] sm:$0xff] %v4428
        %4432 = vst [vmem:[#allocation4 + $0x10] sm:$0xff] %v4428
        %4433 = vst [vmem:[#allocation4 + $0x18] sm:$0xff] %v4428
        %4434 = vst [vmem:[#allocation4 + $0x20] sm:$0xff] %v4428
        %4435 = vst [vmem:[#allocation4 + $0x28] sm:$0xff] %v4428
        %4436 = vst [vmem:[#allocation4 + $0x30] sm:$0xff] %v4428
        %4437 = vst [vmem:[#allocation4 + $0x38] sm:$0xff] %v4428
        %4438 = vst [vmem:[#allocation4 + $0x40] sm:$0xff] %v4428
        %4439 = vst [vmem:[#allocation4 + $0x48] sm:$0xff] %v4428
        %4440 = vst [vmem:[#allocation4 + $0x50] sm:$0xff] %v4428
        %4441 = vst [vmem:[#allocation4 + $0x58] sm:$0xff] %v4428
        %4442 = vst [vmem:[#allocation4 + $0x60] sm:$0xff] %v4428
        %4443 = vst [vmem:[#allocation4 + $0x68] sm:$0xff] %v4428
        %4444 = vst [vmem:[#allocation4 + $0x70] sm:$0xff] %v4428
        %4445 = vst [vmem:[#allocation4 + $0x78] sm:$0xff] %v4428
        %4446 = vst [vmem:[#allocation4 + $0x80] sm:$0xff] %v4428
        %4447 = vst [vmem:[#allocation4 + $0x88] sm:$0xff] %v4428
        %4448 = vst [vmem:[#allocation4 + $0x90] sm:$0xff] %v4428
        %4449 = vst [vmem:[#allocation4 + $0x98] sm:$0xff] %v4428
        %4450 = vst [vmem:[#allocation4 + $0xa0] sm:$0xff] %v4428
        %4451 = vst [vmem:[#allocation4 + $0xa8] sm:$0xff] %v4428
        %4452 = vst [vmem:[#allocation4 + $0xb0] sm:$0xff] %v4428
        %4453 = vst [vmem:[#allocation4 + $0xb8] sm:$0xff] %v4428
        %4454 = vst [vmem:[#allocation4 + $0xc0] sm:$0xff] %v4428
        %4455 = vst [vmem:[#allocation4 + $0xc8] sm:$0xff] %v4428
        %4456 = vst [vmem:[#allocation4 + $0xd0] sm:$0xff] %v4428
        %4457 = vst [vmem:[#allocation4 + $0xd8] sm:$0xff] %v4428
        %4458 = vst [vmem:[#allocation4 + $0xe0] sm:$0xff] %v4428
        %4459 = vst [vmem:[#allocation4 + $0xe8] sm:$0xff] %v4428
        %4460 = vst [vmem:[#allocation4 + $0xf0] sm:$0xff] %v4428
        %4461 = vst [vmem:[#allocation4 + $0xf8] sm:$0xff] %v4428
        %v4462 = vld [vmem:[#allocation3] sm:$0xff]
        %v4463 = vld [vmem:[#allocation3 + $0x8] sm:$0xff]
        %v4464 = vld [vmem:[#allocation3 + $0x18] sm:$0xff]
        %v4465 = vld [vmem:[#allocation3 + $0x20] sm:$0xff]
        %v4466 = vld [vmem:[#allocation3 + $0x30] sm:$0xff]
        %v4467 = vld [vmem:[#allocation3 + $0x38] sm:$0xff]
        %v4468 = vld [vmem:[#allocation3 + $0x48] sm:$0xff]
        %v4469 = vld [vmem:[#allocation3 + $0x50] sm:$0xff]
        %v4470 = vld [vmem:[#allocation3 + $0x60] sm:$0xff]
        %v4471 = vld [vmem:[#allocation3 + $0x68] sm:$0xff]
        %v4472 = vld [vmem:[#allocation3 + $0x78] sm:$0xff]
        %v4473 = vld [vmem:[#allocation3 + $0x80] sm:$0xff]
        %v4474 = vld [vmem:[#allocation3 + $0x90] sm:$0xff]
        %v4475 = vld [vmem:[#allocation3 + $0x98] sm:$0xff]
        %v4476 = vld [vmem:[#allocation3 + $0xa8] sm:$0xff]
        %v4477 = vld [vmem:[#allocation3 + $0xb0] sm:$0xff]
        %v4478 = vld [vmem:[#allocation3 + $0xc0] sm:$0xff]
        %v4479 = vld [vmem:[#allocation3 + $0xc8] sm:$0xff]
        %v4480 = vld [vmem:[#allocation3 + $0xd8] sm:$0xff]
        %v4481 = vld [vmem:[#allocation3 + $0xe0] sm:$0xff]
        %v4482 = vld [vmem:[#allocation3 + $0xf0] sm:$0xff]
        %v4483 = vld [vmem:[#allocation3 + $0xf8] sm:$0xff]
        %v4484 = vld [vmem:[#allocation3 + $0x108] sm:$0xff]
        %v4485 = vld [vmem:[#allocation3 + $0x110] sm:$0xff]
        %v4486 = vld [vmem:[#allocation3 + $0x120] sm:$0xff]
        %v4487 = vld [vmem:[#allocation3 + $0x128] sm:$0xff]
        %v4488 = vld [vmem:[#allocation3 + $0x138] sm:$0xff]
        %v4489 = vld [vmem:[#allocation3 + $0x140] sm:$0xff]
        %v4490 = vld [vmem:[#allocation3 + $0x150] sm:$0xff]
        %v4491 = vld [vmem:[#allocation3 + $0x158] sm:$0xff]
        %v4492 = vld [vmem:[#allocation3 + $0x168] sm:$0xff]
        %v4493 = vld [vmem:[#allocation3 + $0x170] sm:$0xff]
        %v4494 = vld [vmem:[#allocation3 + $0x180] sm:$0xff]
        %v4495 = vld [vmem:[#allocation3 + $0x188] sm:$0xff]
        %v4496 = vld [vmem:[#allocation3 + $0x198] sm:$0xff]
        %v4497 = vld [vmem:[#allocation3 + $0x1a0] sm:$0xff]
        %v4498 = vld [vmem:[#allocation4] sm:$0xff]
        %v4499 = vld [vmem:[#allocation4 + $0x8] sm:$0xff]
        %v4500 = vld [vmem:[#allocation4 + $0x10] sm:$0xff]
        %v4501 = vld [vmem:[#allocation4 + $0x18] sm:$0xff]
        %v4502 = vld [vmem:[#allocation4 + $0x20] sm:$0xff]
        %v4503 = vld [vmem:[#allocation4 + $0x28] sm:$0xff]
        %v4504 = vld [vmem:[#allocation4 + $0x30] sm:$0xff]
        %v4505 = vld [vmem:[#allocation4 + $0x38] sm:$0xff]
        %v4506 = vld [vmem:[#allocation4 + $0x40] sm:$0xff]
        %v4507 = vld [vmem:[#allocation4 + $0x48] sm:$0xff]
        %v4508 = vld [vmem:[#allocation4 + $0x50] sm:$0xff]
        %v4509 = vld [vmem:[#allocation4 + $0x58] sm:$0xff]
        %v4510 = vld [vmem:[#allocation4 + $0x60] sm:$0xff]
        %v4511 = vld [vmem:[#allocation4 + $0x68] sm:$0xff]
        %v4512 = vld [vmem:[#allocation4 + $0x70] sm:$0xff]
        %v4513 = vld [vmem:[#allocation4 + $0x78] sm:$0xff]
        %v4514 = vld [vmem:[#allocation4 + $0x80] sm:$0xff]
        %v4515 = vld [vmem:[#allocation4 + $0x88] sm:$0xff]
        %v4516 = vld [vmem:[#allocation4 + $0x90] sm:$0xff]
        %v4517 = vld [vmem:[#allocation4 + $0x98] sm:$0xff]
        %v4518 = vld [vmem:[#allocation4 + $0xa0] sm:$0xff]
        %v4519 = vld [vmem:[#allocation4 + $0xa8] sm:$0xff]
        %v4520 = vld [vmem:[#allocation4 + $0xb0] sm:$0xff]
        %v4521 = vld [vmem:[#allocation4 + $0xb8] sm:$0xff]
        %v4522 = vld [vmem:[#allocation4 + $0xc0] sm:$0xff]
        %v4523 = vld [vmem:[#allocation4 + $0xc8] sm:$0xff]
        %v4524 = vld [vmem:[#allocation4 + $0xd0] sm:$0xff]
        %v4525 = vld [vmem:[#allocation4 + $0xd8] sm:$0xff]
        %v4526 = vld [vmem:[#allocation4 + $0xe0] sm:$0xff]
        %v4527 = vld [vmem:[#allocation4 + $0xe8] sm:$0xff]
        %v4528 = vld [vmem:[#allocation4 + $0xf0] sm:$0xff]
        %v4529 = vld [vmem:[#allocation4 + $0xf8] sm:$0xff]
        %v4530 = vld [vmem:[#allocation10] sm:$0xff]
        %v4531 = vld [vmem:[#allocation10 + $0x8] sm:$0xff]
        %v4532 = vld [vmem:[#allocation10 + $0x10] sm:$0xff]
        %v4533 = vld [vmem:[#allocation10 + $0x18] sm:$0xff]
        %v4534 = vld [vmem:[#allocation10 + $0x20] sm:$0xff]
        %v4535 = vld [vmem:[#allocation10 + $0x28] sm:$0xff]
        %v4536 = vld [vmem:[#allocation10 + $0x30] sm:$0xff]
        %v4537 = vld [vmem:[#allocation10 + $0x38] sm:$0xff]
        %v4538 = vld [vmem:[#allocation10 + $0x40] sm:$0xff]
        %v4539 = vld [vmem:[#allocation10 + $0x48] sm:$0xff]
        %v4540 = vld [vmem:[#allocation10 + $0x50] sm:$0xff]
        %v4541 = vld [vmem:[#allocation10 + $0x58] sm:$0xff]
        %v4542 = vld [vmem:[#allocation10 + $0x60] sm:$0xff]
        %v4543 = vld [vmem:[#allocation10 + $0x68] sm:$0xff]
        %v4544 = vld [vmem:[#allocation10 + $0x70] sm:$0xff]
        %v4545 = vld [vmem:[#allocation10 + $0x78] sm:$0xff]
        %4546 = vmatprep.subr.mxu0 0.0
        %4547 = vmatpush1.msra.mxu0 %v4545
        %4548 = vmatprep.subr.mxu0 0.0
        %4549 = vmatpush1.msra.mxu0 %v4544
        %4550 = vmatprep.subr.mxu0 0.0
        %4551 = vmatpush1.msra.mxu0 %v4543
        %4552 = vmatprep.subr.mxu0 0.0
        %4553 = vmatpush1.msra.mxu0 %v4542
        %4554 = vmatprep.subr.mxu0 0.0
        %4555 = vmatpush1.msra.mxu0 %v4541
        %4556 = vmatprep.subr.mxu0 0.0
        %4557 = vmatpush1.msra.mxu0 %v4540
        %4558 = vmatprep.subr.mxu0 0.0
        %4559 = vmatpush1.msra.mxu0 %v4539
        %4560 = vmatprep.subr.mxu0 0.0
        %4561 = vmatpush1.msra.mxu0 %v4538
        %4562 = vmatprep.subr.mxu0 0.0
        %4563 = vmatpush1.msra.mxu0 %v4537
        %4564 = vmatprep.subr.mxu0 0.0
        %4565 = vmatpush1.msra.mxu0 %v4536
        %4566 = vmatprep.subr.mxu0 0.0
        %4567 = vmatpush1.msra.mxu0 %v4535
        %4568 = vmatprep.subr.mxu0 0.0
        %4569 = vmatpush1.msra.mxu0 %v4534
        %4570 = vmatprep.subr.mxu0 0.0
        %4571 = vmatpush1.msra.mxu0 %v4533
        %4572 = vmatprep.subr.mxu0 0.0
        %4573 = vmatpush1.msra.mxu0 %v4532
        %4574 = vmatprep.subr.mxu0 0.0
        %4575 = vmatpush1.msra.mxu0 %v4531
        %4576 = vmatprep.subr.mxu0 0.0
        %4577 = vmatpush1.msra.mxu0 %v4530
        %4578 = vmatprep.subr.mxu0 0.0
        %4579 = vmatpush2.msra.mxu0 0.0
        %4580 = vmatprep.subr.mxu0 0.0
        %4581 = vmatpush2.msra.mxu0 0.0
        %4582 = vmatprep.subr.mxu0 0.0
        %4583 = vmatpush2.msra.mxu0 0.0
        %4584 = vmatprep.subr.mxu0 0.0
        %4585 = vmatpush2.msra.mxu0 0.0
        %4586 = vmatprep.subr.mxu0 0.0
        %4587 = vmatpush2.msra.mxu0 0.0
        %4588 = vmatprep.subr.mxu0 0.0
        %4589 = vmatpush2.msra.mxu0 0.0
        %4590 = vmatprep.subr.mxu0 0.0
        %4591 = vmatpush2.msra.mxu0 0.0
        %4592 = vmatprep.subr.mxu0 0.0
        %4593 = vmatpush2.msra.mxu0 0.0
        %4594 = vmatprep.subr.mxu0 0.0
        %4595 = vmatpush2.msra.mxu0 0.0
        %4596 = vmatprep.subr.mxu0 0.0
        %4597 = vmatpush2.msra.mxu0 0.0
        %4598 = vmatprep.subr.mxu0 0.0
        %4599 = vmatpush2.msra.mxu0 0.0
        %4600 = vmatprep.subr.mxu0 0.0
        %4601 = vmatpush2.msra.mxu0 0.0
        %4602 = vmatprep.subr.mxu0 0.0
        %4603 = vmatpush2.msra.mxu0 0.0
        %4604 = vmatprep.subr.mxu0 0.0
        %4605 = vmatpush2.msra.mxu0 0.0
        %4606 = vmatprep.subr.mxu0 0.0
        %4607 = vmatpush2.msra.mxu0 0.0
        %4608 = vmatprep.subr.mxu0 0.0
        %4609 = vmatpush2.msra.mxu0 0.0
        %4610 = vmatprep.mubr.f32.mxu0 0.0
        %4611 = vmatmul.mubr.f32.gmra.mxu0 %v4462
        %v4612 = vpop.f32.mrf.mxu0
        %v4613 = vadd.f32 0.0, %v4612
        %v4614 = vpop.f32.mrf.mxu0
        %4615 = vmatprep.mubr.f32.mxu0 0.0
        %4616 = vmatmul.mubr.f32.gmra.mxu0 %v4463
        %v4617 = vpop.f32.mrf.mxu0
        %v4618 = vadd.f32 0.0, %v4617
        %v4619 = vpop.f32.mrf.mxu0
        %4620 = vmatprep.mubr.f32.mxu0 0.0
        %4621 = vmatmul.mubr.f32.gmra.mxu0 %v4464
        %v4622 = vpop.f32.mrf.mxu0
        %v4623 = vadd.f32 0.0, %v4622
        %v4624 = vpop.f32.mrf.mxu0
        %4625 = vmatprep.mubr.f32.mxu0 0.0
        %4626 = vmatmul.mubr.f32.gmra.mxu0 %v4465
        %v4627 = vpop.f32.mrf.mxu0
        %v4628 = vadd.f32 0.0, %v4627
        %v4629 = vpop.f32.mrf.mxu0
        %4630 = vmatprep.mubr.f32.mxu0 0.0
        %4631 = vmatmul.mubr.f32.gmra.mxu0 %v4466
        %v4632 = vpop.f32.mrf.mxu0
        %v4633 = vadd.f32 0.0, %v4632
        %v4634 = vpop.f32.mrf.mxu0
        %4635 = vmatprep.mubr.f32.mxu0 0.0
        %4636 = vmatmul.mubr.f32.gmra.mxu0 %v4467
        %v4637 = vpop.f32.mrf.mxu0
        %v4638 = vadd.f32 0.0, %v4637
        %v4639 = vpop.f32.mrf.mxu0
        %4640 = vmatprep.mubr.f32.mxu0 0.0
        %4641 = vmatmul.mubr.f32.gmra.mxu0 %v4468
        %v4642 = vpop.f32.mrf.mxu0
        %v4643 = vadd.f32 0.0, %v4642
        %v4644 = vpop.f32.mrf.mxu0
        %4645 = vmatprep.mubr.f32.mxu0 0.0
        %4646 = vmatmul.mubr.f32.gmra.mxu0 %v4469
        %v4647 = vpop.f32.mrf.mxu0
        %v4648 = vadd.f32 0.0, %v4647
        %v4649 = vpop.f32.mrf.mxu0
        %4650 = vmatprep.mubr.f32.mxu0 0.0
        %4651 = vmatmul.mubr.f32.gmra.mxu0 %v4470
        %v4652 = vpop.f32.mrf.mxu0
        %v4653 = vadd.f32 0.0, %v4652
        %v4654 = vpop.f32.mrf.mxu0
        %4655 = vmatprep.mubr.f32.mxu0 0.0
        %4656 = vmatmul.mubr.f32.gmra.mxu0 %v4471
        %v4657 = vpop.f32.mrf.mxu0
        %v4658 = vadd.f32 0.0, %v4657
        %v4659 = vpop.f32.mrf.mxu0
        %4660 = vmatprep.mubr.f32.mxu0 0.0
        %4661 = vmatmul.mubr.f32.gmra.mxu0 %v4472
        %v4662 = vpop.f32.mrf.mxu0
        %v4663 = vadd.f32 0.0, %v4662
        %v4664 = vpop.f32.mrf.mxu0
        %4665 = vmatprep.mubr.f32.mxu0 0.0
        %4666 = vmatmul.mubr.f32.gmra.mxu0 %v4473
        %v4667 = vpop.f32.mrf.mxu0
        %v4668 = vadd.f32 0.0, %v4667
        %v4669 = vpop.f32.mrf.mxu0
        %4670 = vmatprep.mubr.f32.mxu0 0.0
        %4671 = vmatmul.mubr.f32.gmra.mxu0 %v4474
        %v4672 = vpop.f32.mrf.mxu0
        %v4673 = vadd.f32 0.0, %v4672
        %v4674 = vpop.f32.mrf.mxu0
        %4675 = vmatprep.mubr.f32.mxu0 0.0
        %4676 = vmatmul.mubr.f32.gmra.mxu0 %v4475
        %v4677 = vpop.f32.mrf.mxu0
        %v4678 = vadd.f32 0.0, %v4677
        %v4679 = vpop.f32.mrf.mxu0
        %4680 = vmatprep.mubr.f32.mxu0 0.0
        %4681 = vmatmul.mubr.f32.gmra.mxu0 %v4476
        %v4682 = vpop.f32.mrf.mxu0
        %v4683 = vadd.f32 0.0, %v4682
        %v4684 = vpop.f32.mrf.mxu0
        %4685 = vmatprep.mubr.f32.mxu0 0.0
        %4686 = vmatmul.mubr.f32.gmra.mxu0 %v4477
        %v4687 = vpop.f32.mrf.mxu0
        %v4688 = vadd.f32 0.0, %v4687
        %v4689 = vpop.f32.mrf.mxu0
        %4690 = vmatprep.mubr.f32.mxu0 0.0
        %4691 = vmatmul.mubr.f32.gmra.mxu0 %v4478
        %v4692 = vpop.f32.mrf.mxu0
        %v4693 = vadd.f32 0.0, %v4692
        %v4694 = vpop.f32.mrf.mxu0
        %4695 = vmatprep.mubr.f32.mxu0 0.0
        %4696 = vmatmul.mubr.f32.gmra.mxu0 %v4479
        %v4697 = vpop.f32.mrf.mxu0
        %v4698 = vadd.f32 0.0, %v4697
        %v4699 = vpop.f32.mrf.mxu0
        %4700 = vmatprep.mubr.f32.mxu0 0.0
        %4701 = vmatmul.mubr.f32.gmra.mxu0 %v4480
        %v4702 = vpop.f32.mrf.mxu0
        %v4703 = vadd.f32 0.0, %v4702
        %v4704 = vpop.f32.mrf.mxu0
        %4705 = vmatprep.mubr.f32.mxu0 0.0
        %4706 = vmatmul.mubr.f32.gmra.mxu0 %v4481
        %v4707 = vpop.f32.mrf.mxu0
        %v4708 = vadd.f32 0.0, %v4707
        %v4709 = vpop.f32.mrf.mxu0
        %4710 = vmatprep.mubr.f32.mxu0 0.0
        %4711 = vmatmul.mubr.f32.gmra.mxu0 %v4482
        %v4712 = vpop.f32.mrf.mxu0
        %v4713 = vadd.f32 0.0, %v4712
        %v4714 = vpop.f32.mrf.mxu0
        %4715 = vmatprep.mubr.f32.mxu0 0.0
        %4716 = vmatmul.mubr.f32.gmra.mxu0 %v4483
        %v4717 = vpop.f32.mrf.mxu0
        %v4718 = vadd.f32 0.0, %v4717
        %v4719 = vpop.f32.mrf.mxu0
        %4720 = vmatprep.mubr.f32.mxu0 0.0
        %4721 = vmatmul.mubr.f32.gmra.mxu0 %v4484
        %v4722 = vpop.f32.mrf.mxu0
        %v4723 = vadd.f32 0.0, %v4722
        %v4724 = vpop.f32.mrf.mxu0
        %4725 = vmatprep.mubr.f32.mxu0 0.0
        %4726 = vmatmul.mubr.f32.gmra.mxu0 %v4485
        %v4727 = vpop.f32.mrf.mxu0
        %v4728 = vadd.f32 0.0, %v4727
        %v4729 = vpop.f32.mrf.mxu0
        %4730 = vmatprep.mubr.f32.mxu0 0.0
        %4731 = vmatmul.mubr.f32.gmra.mxu0 %v4486
        %v4732 = vpop.f32.mrf.mxu0
        %v4733 = vadd.f32 0.0, %v4732
        %v4734 = vpop.f32.mrf.mxu0
        %4735 = vmatprep.mubr.f32.mxu0 0.0
        %4736 = vmatmul.mubr.f32.gmra.mxu0 %v4487
        %v4737 = vpop.f32.mrf.mxu0
        %v4738 = vadd.f32 0.0, %v4737
        %v4739 = vpop.f32.mrf.mxu0
        %4740 = vmatprep.mubr.f32.mxu0 0.0
        %4741 = vmatmul.mubr.f32.gmra.mxu0 %v4488
        %v4742 = vpop.f32.mrf.mxu0
        %v4743 = vadd.f32 0.0, %v4742
        %v4744 = vpop.f32.mrf.mxu0
        %4745 = vmatprep.mubr.f32.mxu0 0.0
        %4746 = vmatmul.mubr.f32.gmra.mxu0 %v4489
        %v4747 = vpop.f32.mrf.mxu0
        %v4748 = vadd.f32 0.0, %v4747
        %v4749 = vpop.f32.mrf.mxu0
        %4750 = vmatprep.mubr.f32.mxu0 0.0
        %4751 = vmatmul.mubr.f32.gmra.mxu0 %v4490
        %v4752 = vpop.f32.mrf.mxu0
        %v4753 = vadd.f32 0.0, %v4752
        %v4754 = vpop.f32.mrf.mxu0
        %4755 = vmatprep.mubr.f32.mxu0 0.0
        %4756 = vmatmul.mubr.f32.gmra.mxu0 %v4491
        %v4757 = vpop.f32.mrf.mxu0
        %v4758 = vadd.f32 0.0, %v4757
        %v4759 = vpop.f32.mrf.mxu0
        %4760 = vmatprep.mubr.f32.mxu0 0.0
        %4761 = vmatmul.mubr.f32.gmra.mxu0 %v4492
        %v4762 = vpop.f32.mrf.mxu0
        %v4763 = vadd.f32 0.0, %v4762
        %v4764 = vpop.f32.mrf.mxu0
        %4765 = vmatprep.mubr.f32.mxu0 0.0
        %4766 = vmatmul.mubr.f32.gmra.mxu0 %v4493
        %v4767 = vpop.f32.mrf.mxu0
        %v4768 = vadd.f32 0.0, %v4767
        %v4769 = vpop.f32.mrf.mxu0
        %4770 = vdwg.mxu0
        %v4771 = vadd.f32 %v4498, %v4613
        %v4772 = vadd.f32 %v4499, %v4618
        %v4773 = vadd.f32 %v4500, %v4623
        %v4774 = vadd.f32 %v4501, %v4628
        %v4775 = vadd.f32 %v4502, %v4633
        %v4776 = vadd.f32 %v4503, %v4638
        %v4777 = vadd.f32 %v4504, %v4643
        %v4778 = vadd.f32 %v4505, %v4648
        %v4779 = vadd.f32 %v4506, %v4653
        %v4780 = vadd.f32 %v4507, %v4658
        %v4781 = vadd.f32 %v4508, %v4663
        %v4782 = vadd.f32 %v4509, %v4668
        %v4783 = vadd.f32 %v4510, %v4673
        %v4784 = vadd.f32 %v4511, %v4678
        %v4785 = vadd.f32 %v4512, %v4683
        %v4786 = vadd.f32 %v4513, %v4688
        %v4787 = vadd.f32 %v4514, %v4693
        %v4788 = vadd.f32 %v4515, %v4698
        %v4789 = vadd.f32 %v4516, %v4703
        %v4790 = vadd.f32 %v4517, %v4708
        %v4791 = vadd.f32 %v4518, %v4713
        %v4792 = vadd.f32 %v4519, %v4718
        %v4793 = vadd.f32 %v4520, %v4723
        %v4794 = vadd.f32 %v4521, %v4728
        %v4795 = vadd.f32 %v4522, %v4733
        %v4796 = vadd.f32 %v4523, %v4738
        %v4797 = vadd.f32 %v4524, %v4743
        %v4798 = vadd.f32 %v4525, %v4748
        %v4799 = vadd.f32 %v4526, %v4753
        %v4800 = vadd.f32 %v4527, %v4758
        %v4801 = vadd.f32 %v4528, %v4763
        %v4802 = vadd.f32 %v4529, %v4768
        %4803 = vst [vmem:[#allocation4] sm:$0xff] %v4771
        %4804 = vst [vmem:[#allocation4 + $0x8] sm:$0xff] %v4772
        %4805 = vst [vmem:[#allocation4 + $0x10] sm:$0xff] %v4773
        %4806 = vst [vmem:[#allocation4 + $0x18] sm:$0xff] %v4774
        %4807 = vst [vmem:[#allocation4 + $0x20] sm:$0xff] %v4775
        %4808 = vst [vmem:[#allocation4 + $0x28] sm:$0xff] %v4776
        %4809 = vst [vmem:[#allocation4 + $0x30] sm:$0xff] %v4777
        %4810 = vst [vmem:[#allocation4 + $0x38] sm:$0xff] %v4778
        %4811 = vst [vmem:[#allocation4 + $0x40] sm:$0xff] %v4779
        %4812 = vst [vmem:[#allocation4 + $0x48] sm:$0xff] %v4780
        %4813 = vst [vmem:[#allocation4 + $0x50] sm:$0xff] %v4781
        %4814 = vst [vmem:[#allocation4 + $0x58] sm:$0xff] %v4782
        %4815 = vst [vmem:[#allocation4 + $0x60] sm:$0xff] %v4783
        %4816 = vst [vmem:[#allocation4 + $0x68] sm:$0xff] %v4784
        %4817 = vst [vmem:[#allocation4 + $0x70] sm:$0xff] %v4785
        %4818 = vst [vmem:[#allocation4 + $0x78] sm:$0xff] %v4786
        %4819 = vst [vmem:[#allocation4 + $0x80] sm:$0xff] %v4787
        %4820 = vst [vmem:[#allocation4 + $0x88] sm:$0xff] %v4788
        %4821 = vst [vmem:[#allocation4 + $0x90] sm:$0xff] %v4789
        %4822 = vst [vmem:[#allocation4 + $0x98] sm:$0xff] %v4790
        %4823 = vst [vmem:[#allocation4 + $0xa0] sm:$0xff] %v4791
        %4824 = vst [vmem:[#allocation4 + $0xa8] sm:$0xff] %v4792
        %4825 = vst [vmem:[#allocation4 + $0xb0] sm:$0xff] %v4793
        %4826 = vst [vmem:[#allocation4 + $0xb8] sm:$0xff] %v4794
        %4827 = vst [vmem:[#allocation4 + $0xc0] sm:$0xff] %v4795
        %4828 = vst [vmem:[#allocation4 + $0xc8] sm:$0xff] %v4796
        %4829 = vst [vmem:[#allocation4 + $0xd0] sm:$0xff] %v4797
        %4830 = vst [vmem:[#allocation4 + $0xd8] sm:$0xff] %v4798
        %4831 = vst [vmem:[#allocation4 + $0xe0] sm:$0xff] %v4799
        %4832 = vst [vmem:[#allocation4 + $0xe8] sm:$0xff] %v4800
        %4833 = vst [vmem:[#allocation4 + $0xf0] sm:$0xff] %v4801
        %4834 = vst [vmem:[#allocation4 + $0xf8] sm:$0xff] %v4802
        %v4835 = vld [vmem:[#allocation4] sm:$0xff]
        %v4836 = vld [vmem:[#allocation4 + $0x8] sm:$0xff]
        %v4837 = vld [vmem:[#allocation4 + $0x10] sm:$0xff]
        %v4838 = vld [vmem:[#allocation4 + $0x18] sm:$0xff]
        %v4839 = vld [vmem:[#allocation4 + $0x20] sm:$0xff]
        %v4840 = vld [vmem:[#allocation4 + $0x28] sm:$0xff]
        %v4841 = vld [vmem:[#allocation4 + $0x30] sm:$0xff]
        %v4842 = vld [vmem:[#allocation4 + $0x38] sm:$0xff]
        %v4843 = vld [vmem:[#allocation4 + $0x40] sm:$0xff]
        %v4844 = vld [vmem:[#allocation4 + $0x48] sm:$0xff]
        %v4845 = vld [vmem:[#allocation4 + $0x50] sm:$0xff]
        %v4846 = vld [vmem:[#allocation4 + $0x58] sm:$0xff]
        %v4847 = vld [vmem:[#allocation4 + $0x60] sm:$0xff]
        %v4848 = vld [vmem:[#allocation4 + $0x68] sm:$0xff]
        %v4849 = vld [vmem:[#allocation4 + $0x70] sm:$0xff]
        %v4850 = vld [vmem:[#allocation4 + $0x78] sm:$0xff]
        %v4851 = vld [vmem:[#allocation4 + $0x80] sm:$0xff]
        %v4852 = vld [vmem:[#allocation4 + $0x88] sm:$0xff]
        %v4853 = vld [vmem:[#allocation4 + $0x90] sm:$0xff]
        %v4854 = vld [vmem:[#allocation4 + $0x98] sm:$0xff]
        %v4855 = vld [vmem:[#allocation4 + $0xa0] sm:$0xff]
        %v4856 = vld [vmem:[#allocation4 + $0xa8] sm:$0xff]
        %v4857 = vld [vmem:[#allocation4 + $0xb0] sm:$0xff]
        %v4858 = vld [vmem:[#allocation4 + $0xb8] sm:$0xff]
        %v4859 = vld [vmem:[#allocation4 + $0xc0] sm:$0xff]
        %v4860 = vld [vmem:[#allocation4 + $0xc8] sm:$0xff]
        %v4861 = vld [vmem:[#allocation4 + $0xd0] sm:$0xff]
        %v4862 = vld [vmem:[#allocation4 + $0xd8] sm:$0xff]
        %v4863 = vld [vmem:[#allocation4 + $0xe0] sm:$0xff]
        %v4864 = vld [vmem:[#allocation4 + $0xe8] sm:$0xff]
        %v4865 = vld [vmem:[#allocation4 + $0xf0] sm:$0xff]
        %v4866 = vld [vmem:[#allocation4 + $0xf8] sm:$0xff]
        %s4867 = scalar_lea.vmem [#allocation10], 384
        %v4868 = vld [vmem:[%s4867] sm:$0xff]
        %v4869 = vld [vmem:[%s4867 + $0x8] sm:$0xff]
        %v4870 = vld [vmem:[%s4867 + $0x10] sm:$0xff]
        %v4871 = vld [vmem:[%s4867 + $0x18] sm:$0xff]
        %v4872 = vld [vmem:[%s4867 + $0x20] sm:$0xff]
        %v4873 = vld [vmem:[%s4867 + $0x28] sm:$0xff]
        %v4874 = vld [vmem:[%s4867 + $0x30] sm:$0xff]
        %v4875 = vld [vmem:[%s4867 + $0x38] sm:$0xff]
        %v4876 = vld [vmem:[%s4867 + $0x40] sm:$0xff]
        %v4877 = vld [vmem:[%s4867 + $0x48] sm:$0xff]
        %v4878 = vld [vmem:[%s4867 + $0x50] sm:$0xff]
        %v4879 = vld [vmem:[%s4867 + $0x58] sm:$0xff]
        %v4880 = vld [vmem:[%s4867 + $0x60] sm:$0xff]
        %v4881 = vld [vmem:[%s4867 + $0x68] sm:$0xff]
        %v4882 = vld [vmem:[%s4867 + $0x70] sm:$0xff]
        %v4883 = vld [vmem:[%s4867 + $0x78] sm:$0xff]
        %4884 = vmatprep.subr.mxu0 0.0
        %4885 = vmatpush1.msra.mxu0 %v4883
        %4886 = vmatprep.subr.mxu0 0.0
        %4887 = vmatpush1.msra.mxu0 %v4882
        %4888 = vmatprep.subr.mxu0 0.0
        %4889 = vmatpush1.msra.mxu0 %v4881
        %4890 = vmatprep.subr.mxu0 0.0
        %4891 = vmatpush1.msra.mxu0 %v4880
        %4892 = vmatprep.subr.mxu0 0.0
        %4893 = vmatpush1.msra.mxu0 %v4879
        %4894 = vmatprep.subr.mxu0 0.0
        %4895 = vmatpush1.msra.mxu0 %v4878
        %4896 = vmatprep.subr.mxu0 0.0
        %4897 = vmatpush1.msra.mxu0 %v4877
        %4898 = vmatprep.subr.mxu0 0.0
        %4899 = vmatpush1.msra.mxu0 %v4876
        %4900 = vmatprep.subr.mxu0 0.0
        %4901 = vmatpush1.msra.mxu0 %v4875
        %4902 = vmatprep.subr.mxu0 0.0
        %4903 = vmatpush1.msra.mxu0 %v4874
        %4904 = vmatprep.subr.mxu0 0.0
        %4905 = vmatpush1.msra.mxu0 %v4873
        %4906 = vmatprep.subr.mxu0 0.0
        %4907 = vmatpush1.msra.mxu0 %v4872
        %4908 = vmatprep.subr.mxu0 0.0
        %4909 = vmatpush1.msra.mxu0 %v4871
        %4910 = vmatprep.subr.mxu0 0.0
        %4911 = vmatpush1.msra.mxu0 %v4870
        %4912 = vmatprep.subr.mxu0 0.0
        %4913 = vmatpush1.msra.mxu0 %v4869
        %4914 = vmatprep.subr.mxu0 0.0
        %4915 = vmatpush1.msra.mxu0 %v4868
        %4916 = vmatprep.subr.mxu0 0.0
        %4917 = vmatpush2.msra.mxu0 0.0
        %4918 = vmatprep.subr.mxu0 0.0
        %4919 = vmatpush2.msra.mxu0 0.0
        %4920 = vmatprep.subr.mxu0 0.0
        %4921 = vmatpush2.msra.mxu0 0.0
        %4922 = vmatprep.subr.mxu0 0.0
        %4923 = vmatpush2.msra.mxu0 0.0
        %4924 = vmatprep.subr.mxu0 0.0
        %4925 = vmatpush2.msra.mxu0 0.0
        %4926 = vmatprep.subr.mxu0 0.0
        %4927 = vmatpush2.msra.mxu0 0.0
        %4928 = vmatprep.subr.mxu0 0.0
        %4929 = vmatpush2.msra.mxu0 0.0
        %4930 = vmatprep.subr.mxu0 0.0
        %4931 = vmatpush2.msra.mxu0 0.0
        %4932 = vmatprep.subr.mxu0 0.0
        %4933 = vmatpush2.msra.mxu0 0.0
        %4934 = vmatprep.subr.mxu0 0.0
        %4935 = vmatpush2.msra.mxu0 0.0
        %4936 = vmatprep.subr.mxu0 0.0
        %4937 = vmatpush2.msra.mxu0 0.0
        %4938 = vmatprep.subr.mxu0 0.0
        %4939 = vmatpush2.msra.mxu0 0.0
        %4940 = vmatprep.subr.mxu0 0.0
        %4941 = vmatpush2.msra.mxu0 0.0
        %4942 = vmatprep.subr.mxu0 0.0
        %4943 = vmatpush2.msra.mxu0 0.0
        %4944 = vmatprep.subr.mxu0 0.0
        %4945 = vmatpush2.msra.mxu0 0.0
        %4946 = vmatprep.subr.mxu0 0.0
        %4947 = vmatpush2.msra.mxu0 0.0
        %4948 = vmatprep.mubr.f32.mxu0 0.0
        %4949 = vmatmul.mubr.f32.gmra.mxu0 %v4464
        %v4950 = vpop.f32.mrf.mxu0
        %v4951 = vadd.f32 0.0, %v4950
        %v4952 = vpop.f32.mrf.mxu0
        %4953 = vmatprep.mubr.f32.mxu0 0.0
        %4954 = vmatmul.mubr.f32.gmra.mxu0 %v4465
        %v4955 = vpop.f32.mrf.mxu0
        %v4956 = vadd.f32 0.0, %v4955
        %v4957 = vpop.f32.mrf.mxu0
        %4958 = vmatprep.mubr.f32.mxu0 0.0
        %4959 = vmatmul.mubr.f32.gmra.mxu0 %v4466
        %v4960 = vpop.f32.mrf.mxu0
        %v4961 = vadd.f32 0.0, %v4960
        %v4962 = vpop.f32.mrf.mxu0
        %4963 = vmatprep.mubr.f32.mxu0 0.0
        %4964 = vmatmul.mubr.f32.gmra.mxu0 %v4467
        %v4965 = vpop.f32.mrf.mxu0
        %v4966 = vadd.f32 0.0, %v4965
        %v4967 = vpop.f32.mrf.mxu0
        %4968 = vmatprep.mubr.f32.mxu0 0.0
        %4969 = vmatmul.mubr.f32.gmra.mxu0 %v4468
        %v4970 = vpop.f32.mrf.mxu0
        %v4971 = vadd.f32 0.0, %v4970
        %v4972 = vpop.f32.mrf.mxu0
        %4973 = vmatprep.mubr.f32.mxu0 0.0
        %4974 = vmatmul.mubr.f32.gmra.mxu0 %v4469
        %v4975 = vpop.f32.mrf.mxu0
        %v4976 = vadd.f32 0.0, %v4975
        %v4977 = vpop.f32.mrf.mxu0
        %4978 = vmatprep.mubr.f32.mxu0 0.0
        %4979 = vmatmul.mubr.f32.gmra.mxu0 %v4470
        %v4980 = vpop.f32.mrf.mxu0
        %v4981 = vadd.f32 0.0, %v4980
        %v4982 = vpop.f32.mrf.mxu0
        %4983 = vmatprep.mubr.f32.mxu0 0.0
        %4984 = vmatmul.mubr.f32.gmra.mxu0 %v4471
        %v4985 = vpop.f32.mrf.mxu0
        %v4986 = vadd.f32 0.0, %v4985
        %v4987 = vpop.f32.mrf.mxu0
        %4988 = vmatprep.mubr.f32.mxu0 0.0
        %4989 = vmatmul.mubr.f32.gmra.mxu0 %v4472
        %v4990 = vpop.f32.mrf.mxu0
        %v4991 = vadd.f32 0.0, %v4990
        %v4992 = vpop.f32.mrf.mxu0
        %4993 = vmatprep.mubr.f32.mxu0 0.0
        %4994 = vmatmul.mubr.f32.gmra.mxu0 %v4473
        %v4995 = vpop.f32.mrf.mxu0
        %v4996 = vadd.f32 0.0, %v4995
        %v4997 = vpop.f32.mrf.mxu0
        %4998 = vmatprep.mubr.f32.mxu0 0.0
        %4999 = vmatmul.mubr.f32.gmra.mxu0 %v4474
        %v5000 = vpop.f32.mrf.mxu0
        %v5001 = vadd.f32 0.0, %v5000
        %v5002 = vpop.f32.mrf.mxu0
        %5003 = vmatprep.mubr.f32.mxu0 0.0
        %5004 = vmatmul.mubr.f32.gmra.mxu0 %v4475
        %v5005 = vpop.f32.mrf.mxu0
        %v5006 = vadd.f32 0.0, %v5005
        %v5007 = vpop.f32.mrf.mxu0
        %5008 = vmatprep.mubr.f32.mxu0 0.0
        %5009 = vmatmul.mubr.f32.gmra.mxu0 %v4476
        %v5010 = vpop.f32.mrf.mxu0
        %v5011 = vadd.f32 0.0, %v5010
        %v5012 = vpop.f32.mrf.mxu0
        %5013 = vmatprep.mubr.f32.mxu0 0.0
        %5014 = vmatmul.mubr.f32.gmra.mxu0 %v4477
        %v5015 = vpop.f32.mrf.mxu0
        %v5016 = vadd.f32 0.0, %v5015
        %v5017 = vpop.f32.mrf.mxu0
        %5018 = vmatprep.mubr.f32.mxu0 0.0
        %5019 = vmatmul.mubr.f32.gmra.mxu0 %v4478
        %v5020 = vpop.f32.mrf.mxu0
        %v5021 = vadd.f32 0.0, %v5020
        %v5022 = vpop.f32.mrf.mxu0
        %5023 = vmatprep.mubr.f32.mxu0 0.0
        %5024 = vmatmul.mubr.f32.gmra.mxu0 %v4479
        %v5025 = vpop.f32.mrf.mxu0
        %v5026 = vadd.f32 0.0, %v5025
        %v5027 = vpop.f32.mrf.mxu0
        %5028 = vmatprep.mubr.f32.mxu0 0.0
        %5029 = vmatmul.mubr.f32.gmra.mxu0 %v4480
        %v5030 = vpop.f32.mrf.mxu0
        %v5031 = vadd.f32 0.0, %v5030
        %v5032 = vpop.f32.mrf.mxu0
        %5033 = vmatprep.mubr.f32.mxu0 0.0
        %5034 = vmatmul.mubr.f32.gmra.mxu0 %v4481
        %v5035 = vpop.f32.mrf.mxu0
        %v5036 = vadd.f32 0.0, %v5035
        %v5037 = vpop.f32.mrf.mxu0
        %5038 = vmatprep.mubr.f32.mxu0 0.0
        %5039 = vmatmul.mubr.f32.gmra.mxu0 %v4482
        %v5040 = vpop.f32.mrf.mxu0
        %v5041 = vadd.f32 0.0, %v5040
        %v5042 = vpop.f32.mrf.mxu0
        %5043 = vmatprep.mubr.f32.mxu0 0.0
        %5044 = vmatmul.mubr.f32.gmra.mxu0 %v4483
        %v5045 = vpop.f32.mrf.mxu0
        %v5046 = vadd.f32 0.0, %v5045
        %v5047 = vpop.f32.mrf.mxu0
        %5048 = vmatprep.mubr.f32.mxu0 0.0
        %5049 = vmatmul.mubr.f32.gmra.mxu0 %v4484
        %v5050 = vpop.f32.mrf.mxu0
        %v5051 = vadd.f32 0.0, %v5050
        %v5052 = vpop.f32.mrf.mxu0
        %5053 = vmatprep.mubr.f32.mxu0 0.0
        %5054 = vmatmul.mubr.f32.gmra.mxu0 %v4485
        %v5055 = vpop.f32.mrf.mxu0
        %v5056 = vadd.f32 0.0, %v5055
        %v5057 = vpop.f32.mrf.mxu0
        %5058 = vmatprep.mubr.f32.mxu0 0.0
        %5059 = vmatmul.mubr.f32.gmra.mxu0 %v4486
        %v5060 = vpop.f32.mrf.mxu0
        %v5061 = vadd.f32 0.0, %v5060
        %v5062 = vpop.f32.mrf.mxu0
        %5063 = vmatprep.mubr.f32.mxu0 0.0
        %5064 = vmatmul.mubr.f32.gmra.mxu0 %v4487
        %v5065 = vpop.f32.mrf.mxu0
        %v5066 = vadd.f32 0.0, %v5065
        %v5067 = vpop.f32.mrf.mxu0
        %5068 = vmatprep.mubr.f32.mxu0 0.0
        %5069 = vmatmul.mubr.f32.gmra.mxu0 %v4488
        %v5070 = vpop.f32.mrf.mxu0
        %v5071 = vadd.f32 0.0, %v5070
        %v5072 = vpop.f32.mrf.mxu0
        %5073 = vmatprep.mubr.f32.mxu0 0.0
        %5074 = vmatmul.mubr.f32.gmra.mxu0 %v4489
        %v5075 = vpop.f32.mrf.mxu0
        %v5076 = vadd.f32 0.0, %v5075
        %v5077 = vpop.f32.mrf.mxu0
        %5078 = vmatprep.mubr.f32.mxu0 0.0
        %5079 = vmatmul.mubr.f32.gmra.mxu0 %v4490
        %v5080 = vpop.f32.mrf.mxu0
        %v5081 = vadd.f32 0.0, %v5080
        %v5082 = vpop.f32.mrf.mxu0
        %5083 = vmatprep.mubr.f32.mxu0 0.0
        %5084 = vmatmul.mubr.f32.gmra.mxu0 %v4491
        %v5085 = vpop.f32.mrf.mxu0
        %v5086 = vadd.f32 0.0, %v5085
        %v5087 = vpop.f32.mrf.mxu0
        %5088 = vmatprep.mubr.f32.mxu0 0.0
        %5089 = vmatmul.mubr.f32.gmra.mxu0 %v4492
        %v5090 = vpop.f32.mrf.mxu0
        %v5091 = vadd.f32 0.0, %v5090
        %v5092 = vpop.f32.mrf.mxu0
        %5093 = vmatprep.mubr.f32.mxu0 0.0
        %5094 = vmatmul.mubr.f32.gmra.mxu0 %v4493
        %v5095 = vpop.f32.mrf.mxu0
        %v5096 = vadd.f32 0.0, %v5095
        %v5097 = vpop.f32.mrf.mxu0
        %5098 = vmatprep.mubr.f32.mxu0 0.0
        %5099 = vmatmul.mubr.f32.gmra.mxu0 %v4494
        %v5100 = vpop.f32.mrf.mxu0
        %v5101 = vadd.f32 0.0, %v5100
        %v5102 = vpop.f32.mrf.mxu0
        %5103 = vmatprep.mubr.f32.mxu0 0.0
        %5104 = vmatmul.mubr.f32.gmra.mxu0 %v4495
        %v5105 = vpop.f32.mrf.mxu0
        %v5106 = vadd.f32 0.0, %v5105
        %v5107 = vpop.f32.mrf.mxu0
        %5108 = vdwg.mxu0
        %v5109 = vadd.f32 %v4835, %v4951
        %v5110 = vadd.f32 %v4836, %v4956
        %v5111 = vadd.f32 %v4837, %v4961
        %v5112 = vadd.f32 %v4838, %v4966
        %v5113 = vadd.f32 %v4839, %v4971
        %v5114 = vadd.f32 %v4840, %v4976
        %v5115 = vadd.f32 %v4841, %v4981
        %v5116 = vadd.f32 %v4842, %v4986
        %v5117 = vadd.f32 %v4843, %v4991
        %v5118 = vadd.f32 %v4844, %v4996
        %v5119 = vadd.f32 %v4845, %v5001
        %v5120 = vadd.f32 %v4846, %v5006
        %v5121 = vadd.f32 %v4847, %v5011
        %v5122 = vadd.f32 %v4848, %v5016
        %v5123 = vadd.f32 %v4849, %v5021
        %v5124 = vadd.f32 %v4850, %v5026
        %v5125 = vadd.f32 %v4851, %v5031
        %v5126 = vadd.f32 %v4852, %v5036
        %v5127 = vadd.f32 %v4853, %v5041
        %v5128 = vadd.f32 %v4854, %v5046
        %v5129 = vadd.f32 %v4855, %v5051
        %v5130 = vadd.f32 %v4856, %v5056
        %v5131 = vadd.f32 %v4857, %v5061
        %v5132 = vadd.f32 %v4858, %v5066
        %v5133 = vadd.f32 %v4859, %v5071
        %v5134 = vadd.f32 %v4860, %v5076
        %v5135 = vadd.f32 %v4861, %v5081
        %v5136 = vadd.f32 %v4862, %v5086
        %v5137 = vadd.f32 %v4863, %v5091
        %v5138 = vadd.f32 %v4864, %v5096
        %v5139 = vadd.f32 %v4865, %v5101
        %v5140 = vadd.f32 %v4866, %v5106
        %5141 = vst [vmem:[#allocation4] sm:$0xff] %v5109
        %5142 = vst [vmem:[#allocation4 + $0x8] sm:$0xff] %v5110
        %5143 = vst [vmem:[#allocation4 + $0x10] sm:$0xff] %v5111
        %5144 = vst [vmem:[#allocation4 + $0x18] sm:$0xff] %v5112
        %5145 = vst [vmem:[#allocation4 + $0x20] sm:$0xff] %v5113
        %5146 = vst [vmem:[#allocation4 + $0x28] sm:$0xff] %v5114
        %5147 = vst [vmem:[#allocation4 + $0x30] sm:$0xff] %v5115
        %5148 = vst [vmem:[#allocation4 + $0x38] sm:$0xff] %v5116
        %5149 = vst [vmem:[#allocation4 + $0x40] sm:$0xff] %v5117
        %5150 = vst [vmem:[#allocation4 + $0x48] sm:$0xff] %v5118
        %5151 = vst [vmem:[#allocation4 + $0x50] sm:$0xff] %v5119
        %5152 = vst [vmem:[#allocation4 + $0x58] sm:$0xff] %v5120
        %5153 = vst [vmem:[#allocation4 + $0x60] sm:$0xff] %v5121
        %5154 = vst [vmem:[#allocation4 + $0x68] sm:$0xff] %v5122
        %5155 = vst [vmem:[#allocation4 + $0x70] sm:$0xff] %v5123
        %5156 = vst [vmem:[#allocation4 + $0x78] sm:$0xff] %v5124
        %5157 = vst [vmem:[#allocation4 + $0x80] sm:$0xff] %v5125
        %5158 = vst [vmem:[#allocation4 + $0x88] sm:$0xff] %v5126
        %5159 = vst [vmem:[#allocation4 + $0x90] sm:$0xff] %v5127
        %5160 = vst [vmem:[#allocation4 + $0x98] sm:$0xff] %v5128
        %5161 = vst [vmem:[#allocation4 + $0xa0] sm:$0xff] %v5129
        %5162 = vst [vmem:[#allocation4 + $0xa8] sm:$0xff] %v5130
        %5163 = vst [vmem:[#allocation4 + $0xb0] sm:$0xff] %v5131
        %5164 = vst [vmem:[#allocation4 + $0xb8] sm:$0xff] %v5132
        %5165 = vst [vmem:[#allocation4 + $0xc0] sm:$0xff] %v5133
        %5166 = vst [vmem:[#allocation4 + $0xc8] sm:$0xff] %v5134
        %5167 = vst [vmem:[#allocation4 + $0xd0] sm:$0xff] %v5135
        %5168 = vst [vmem:[#allocation4 + $0xd8] sm:$0xff] %v5136
        %5169 = vst [vmem:[#allocation4 + $0xe0] sm:$0xff] %v5137
        %5170 = vst [vmem:[#allocation4 + $0xe8] sm:$0xff] %v5138
        %5171 = vst [vmem:[#allocation4 + $0xf0] sm:$0xff] %v5139
        %5172 = vst [vmem:[#allocation4 + $0xf8] sm:$0xff] %v5140
        %v5173 = vld [vmem:[#allocation4] sm:$0xff]
        %v5174 = vld [vmem:[#allocation4 + $0x8] sm:$0xff]
        %v5175 = vld [vmem:[#allocation4 + $0x10] sm:$0xff]
        %v5176 = vld [vmem:[#allocation4 + $0x18] sm:$0xff]
        %v5177 = vld [vmem:[#allocation4 + $0x20] sm:$0xff]
        %v5178 = vld [vmem:[#allocation4 + $0x28] sm:$0xff]
        %v5179 = vld [vmem:[#allocation4 + $0x30] sm:$0xff]
        %v5180 = vld [vmem:[#allocation4 + $0x38] sm:$0xff]
        %v5181 = vld [vmem:[#allocation4 + $0x40] sm:$0xff]
        %v5182 = vld [vmem:[#allocation4 + $0x48] sm:$0xff]
        %v5183 = vld [vmem:[#allocation4 + $0x50] sm:$0xff]
        %v5184 = vld [vmem:[#allocation4 + $0x58] sm:$0xff]
        %v5185 = vld [vmem:[#allocation4 + $0x60] sm:$0xff]
        %v5186 = vld [vmem:[#allocation4 + $0x68] sm:$0xff]
        %v5187 = vld [vmem:[#allocation4 + $0x70] sm:$0xff]
        %v5188 = vld [vmem:[#allocation4 + $0x78] sm:$0xff]
        %v5189 = vld [vmem:[#allocation4 + $0x80] sm:$0xff]
        %v5190 = vld [vmem:[#allocation4 + $0x88] sm:$0xff]
        %v5191 = vld [vmem:[#allocation4 + $0x90] sm:$0xff]
        %v5192 = vld [vmem:[#allocation4 + $0x98] sm:$0xff]
        %v5193 = vld [vmem:[#allocation4 + $0xa0] sm:$0xff]
        %v5194 = vld [vmem:[#allocation4 + $0xa8] sm:$0xff]
        %v5195 = vld [vmem:[#allocation4 + $0xb0] sm:$0xff]
        %v5196 = vld [vmem:[#allocation4 + $0xb8] sm:$0xff]
        %v5197 = vld [vmem:[#allocation4 + $0xc0] sm:$0xff]
        %v5198 = vld [vmem:[#allocation4 + $0xc8] sm:$0xff]
        %v5199 = vld [vmem:[#allocation4 + $0xd0] sm:$0xff]
        %v5200 = vld [vmem:[#allocation4 + $0xd8] sm:$0xff]
        %v5201 = vld [vmem:[#allocation4 + $0xe0] sm:$0xff]
        %v5202 = vld [vmem:[#allocation4 + $0xe8] sm:$0xff]
        %v5203 = vld [vmem:[#allocation4 + $0xf0] sm:$0xff]
        %v5204 = vld [vmem:[#allocation4 + $0xf8] sm:$0xff]
        %s5205 = scalar_lea.vmem [#allocation10], 768
        %v5206 = vld [vmem:[%s5205] sm:$0xff]
        %v5207 = vld [vmem:[%s5205 + $0x8] sm:$0xff]
        %v5208 = vld [vmem:[%s5205 + $0x10] sm:$0xff]
        %v5209 = vld [vmem:[%s5205 + $0x18] sm:$0xff]
        %v5210 = vld [vmem:[%s5205 + $0x20] sm:$0xff]
        %v5211 = vld [vmem:[%s5205 + $0x28] sm:$0xff]
        %v5212 = vld [vmem:[%s5205 + $0x30] sm:$0xff]
        %v5213 = vld [vmem:[%s5205 + $0x38] sm:$0xff]
        %v5214 = vld [vmem:[%s5205 + $0x40] sm:$0xff]
        %v5215 = vld [vmem:[%s5205 + $0x48] sm:$0xff]
        %v5216 = vld [vmem:[%s5205 + $0x50] sm:$0xff]
        %v5217 = vld [vmem:[%s5205 + $0x58] sm:$0xff]
        %v5218 = vld [vmem:[%s5205 + $0x60] sm:$0xff]
        %v5219 = vld [vmem:[%s5205 + $0x68] sm:$0xff]
        %v5220 = vld [vmem:[%s5205 + $0x70] sm:$0xff]
        %v5221 = vld [vmem:[%s5205 + $0x78] sm:$0xff]
        %5222 = vmatprep.subr.mxu0 0.0
        %5223 = vmatpush1.msra.mxu0 %v5221
        %5224 = vmatprep.subr.mxu0 0.0
        %5225 = vmatpush1.msra.mxu0 %v5220
        %5226 = vmatprep.subr.mxu0 0.0
        %5227 = vmatpush1.msra.mxu0 %v5219
        %5228 = vmatprep.subr.mxu0 0.0
        %5229 = vmatpush1.msra.mxu0 %v5218
        %5230 = vmatprep.subr.mxu0 0.0
        %5231 = vmatpush1.msra.mxu0 %v5217
        %5232 = vmatprep.subr.mxu0 0.0
        %5233 = vmatpush1.msra.mxu0 %v5216
        %5234 = vmatprep.subr.mxu0 0.0
        %5235 = vmatpush1.msra.mxu0 %v5215
        %5236 = vmatprep.subr.mxu0 0.0
        %5237 = vmatpush1.msra.mxu0 %v5214
        %5238 = vmatprep.subr.mxu0 0.0
        %5239 = vmatpush1.msra.mxu0 %v5213
        %5240 = vmatprep.subr.mxu0 0.0
        %5241 = vmatpush1.msra.mxu0 %v5212
        %5242 = vmatprep.subr.mxu0 0.0
        %5243 = vmatpush1.msra.mxu0 %v5211
        %5244 = vmatprep.subr.mxu0 0.0
        %5245 = vmatpush1.msra.mxu0 %v5210
        %5246 = vmatprep.subr.mxu0 0.0
        %5247 = vmatpush1.msra.mxu0 %v5209
        %5248 = vmatprep.subr.mxu0 0.0
        %5249 = vmatpush1.msra.mxu0 %v5208
        %5250 = vmatprep.subr.mxu0 0.0
        %5251 = vmatpush1.msra.mxu0 %v5207
        %5252 = vmatprep.subr.mxu0 0.0
        %5253 = vmatpush1.msra.mxu0 %v5206
        %5254 = vmatprep.subr.mxu0 0.0
        %5255 = vmatpush2.msra.mxu0 0.0
        %5256 = vmatprep.subr.mxu0 0.0
        %5257 = vmatpush2.msra.mxu0 0.0
        %5258 = vmatprep.subr.mxu0 0.0
        %5259 = vmatpush2.msra.mxu0 0.0
        %5260 = vmatprep.subr.mxu0 0.0
        %5261 = vmatpush2.msra.mxu0 0.0
        %5262 = vmatprep.subr.mxu0 0.0
        %5263 = vmatpush2.msra.mxu0 0.0
        %5264 = vmatprep.subr.mxu0 0.0
        %5265 = vmatpush2.msra.mxu0 0.0
        %5266 = vmatprep.subr.mxu0 0.0
        %5267 = vmatpush2.msra.mxu0 0.0
        %5268 = vmatprep.subr.mxu0 0.0
        %5269 = vmatpush2.msra.mxu0 0.0
        %5270 = vmatprep.subr.mxu0 0.0
        %5271 = vmatpush2.msra.mxu0 0.0
        %5272 = vmatprep.subr.mxu0 0.0
        %5273 = vmatpush2.msra.mxu0 0.0
        %5274 = vmatprep.subr.mxu0 0.0
        %5275 = vmatpush2.msra.mxu0 0.0
        %5276 = vmatprep.subr.mxu0 0.0
        %5277 = vmatpush2.msra.mxu0 0.0
        %5278 = vmatprep.subr.mxu0 0.0
        %5279 = vmatpush2.msra.mxu0 0.0
        %5280 = vmatprep.subr.mxu0 0.0
        %5281 = vmatpush2.msra.mxu0 0.0
        %5282 = vmatprep.subr.mxu0 0.0
        %5283 = vmatpush2.msra.mxu0 0.0
        %5284 = vmatprep.subr.mxu0 0.0
        %5285 = vmatpush2.msra.mxu0 0.0
        %5286 = vmatprep.mubr.f32.mxu0 0.0
        %5287 = vmatmul.mubr.f32.gmra.mxu0 %v4466
        %v5288 = vpop.f32.mrf.mxu0
        %v5289 = vadd.f32 0.0, %v5288
        %v5290 = vpop.f32.mrf.mxu0
        %5291 = vmatprep.mubr.f32.mxu0 0.0
        %5292 = vmatmul.mubr.f32.gmra.mxu0 %v4467
        %v5293 = vpop.f32.mrf.mxu0
        %v5294 = vadd.f32 0.0, %v5293
        %v5295 = vpop.f32.mrf.mxu0
        %5296 = vmatprep.mubr.f32.mxu0 0.0
        %5297 = vmatmul.mubr.f32.gmra.mxu0 %v4468
        %v5298 = vpop.f32.mrf.mxu0
        %v5299 = vadd.f32 0.0, %v5298
        %v5300 = vpop.f32.mrf.mxu0
        %5301 = vmatprep.mubr.f32.mxu0 0.0
        %5302 = vmatmul.mubr.f32.gmra.mxu0 %v4469
        %v5303 = vpop.f32.mrf.mxu0
        %v5304 = vadd.f32 0.0, %v5303
        %v5305 = vpop.f32.mrf.mxu0
        %5306 = vmatprep.mubr.f32.mxu0 0.0
        %5307 = vmatmul.mubr.f32.gmra.mxu0 %v4470
        %v5308 = vpop.f32.mrf.mxu0
        %v5309 = vadd.f32 0.0, %v5308
        %v5310 = vpop.f32.mrf.mxu0
        %5311 = vmatprep.mubr.f32.mxu0 0.0
        %5312 = vmatmul.mubr.f32.gmra.mxu0 %v4471
        %v5313 = vpop.f32.mrf.mxu0
        %v5314 = vadd.f32 0.0, %v5313
        %v5315 = vpop.f32.mrf.mxu0
        %5316 = vmatprep.mubr.f32.mxu0 0.0
        %5317 = vmatmul.mubr.f32.gmra.mxu0 %v4472
        %v5318 = vpop.f32.mrf.mxu0
        %v5319 = vadd.f32 0.0, %v5318
        %v5320 = vpop.f32.mrf.mxu0
        %5321 = vmatprep.mubr.f32.mxu0 0.0
        %5322 = vmatmul.mubr.f32.gmra.mxu0 %v4473
        %v5323 = vpop.f32.mrf.mxu0
        %v5324 = vadd.f32 0.0, %v5323
        %v5325 = vpop.f32.mrf.mxu0
        %5326 = vmatprep.mubr.f32.mxu0 0.0
        %5327 = vmatmul.mubr.f32.gmra.mxu0 %v4474
        %v5328 = vpop.f32.mrf.mxu0
        %v5329 = vadd.f32 0.0, %v5328
        %v5330 = vpop.f32.mrf.mxu0
        %5331 = vmatprep.mubr.f32.mxu0 0.0
        %5332 = vmatmul.mubr.f32.gmra.mxu0 %v4475
        %v5333 = vpop.f32.mrf.mxu0
        %v5334 = vadd.f32 0.0, %v5333
        %v5335 = vpop.f32.mrf.mxu0
        %5336 = vmatprep.mubr.f32.mxu0 0.0
        %5337 = vmatmul.mubr.f32.gmra.mxu0 %v4476
        %v5338 = vpop.f32.mrf.mxu0
        %v5339 = vadd.f32 0.0, %v5338
        %v5340 = vpop.f32.mrf.mxu0
        %5341 = vmatprep.mubr.f32.mxu0 0.0
        %5342 = vmatmul.mubr.f32.gmra.mxu0 %v4477
        %v5343 = vpop.f32.mrf.mxu0
        %v5344 = vadd.f32 0.0, %v5343
        %v5345 = vpop.f32.mrf.mxu0
        %5346 = vmatprep.mubr.f32.mxu0 0.0
        %5347 = vmatmul.mubr.f32.gmra.mxu0 %v4478
        %v5348 = vpop.f32.mrf.mxu0
        %v5349 = vadd.f32 0.0, %v5348
        %v5350 = vpop.f32.mrf.mxu0
        %5351 = vmatprep.mubr.f32.mxu0 0.0
        %5352 = vmatmul.mubr.f32.gmra.mxu0 %v4479
        %v5353 = vpop.f32.mrf.mxu0
        %v5354 = vadd.f32 0.0, %v5353
        %v5355 = vpop.f32.mrf.mxu0
        %5356 = vmatprep.mubr.f32.mxu0 0.0
        %5357 = vmatmul.mubr.f32.gmra.mxu0 %v4480
        %v5358 = vpop.f32.mrf.mxu0
        %v5359 = vadd.f32 0.0, %v5358
        %v5360 = vpop.f32.mrf.mxu0
        %5361 = vmatprep.mubr.f32.mxu0 0.0
        %5362 = vmatmul.mubr.f32.gmra.mxu0 %v4481
        %v5363 = vpop.f32.mrf.mxu0
        %v5364 = vadd.f32 0.0, %v5363
        %v5365 = vpop.f32.mrf.mxu0
        %5366 = vmatprep.mubr.f32.mxu0 0.0
        %5367 = vmatmul.mubr.f32.gmra.mxu0 %v4482
        %v5368 = vpop.f32.mrf.mxu0
        %v5369 = vadd.f32 0.0, %v5368
        %v5370 = vpop.f32.mrf.mxu0
        %5371 = vmatprep.mubr.f32.mxu0 0.0
        %5372 = vmatmul.mubr.f32.gmra.mxu0 %v4483
        %v5373 = vpop.f32.mrf.mxu0
        %v5374 = vadd.f32 0.0, %v5373
        %v5375 = vpop.f32.mrf.mxu0
        %5376 = vmatprep.mubr.f32.mxu0 0.0
        %5377 = vmatmul.mubr.f32.gmra.mxu0 %v4484
        %v5378 = vpop.f32.mrf.mxu0
        %v5379 = vadd.f32 0.0, %v5378
        %v5380 = vpop.f32.mrf.mxu0
        %5381 = vmatprep.mubr.f32.mxu0 0.0
        %5382 = vmatmul.mubr.f32.gmra.mxu0 %v4485
        %v5383 = vpop.f32.mrf.mxu0
        %v5384 = vadd.f32 0.0, %v5383
        %v5385 = vpop.f32.mrf.mxu0
        %5386 = vmatprep.mubr.f32.mxu0 0.0
        %5387 = vmatmul.mubr.f32.gmra.mxu0 %v4486
        %v5388 = vpop.f32.mrf.mxu0
        %v5389 = vadd.f32 0.0, %v5388
        %v5390 = vpop.f32.mrf.mxu0
        %5391 = vmatprep.mubr.f32.mxu0 0.0
        %5392 = vmatmul.mubr.f32.gmra.mxu0 %v4487
        %v5393 = vpop.f32.mrf.mxu0
        %v5394 = vadd.f32 0.0, %v5393
        %v5395 = vpop.f32.mrf.mxu0
        %5396 = vmatprep.mubr.f32.mxu0 0.0
        %5397 = vmatmul.mubr.f32.gmra.mxu0 %v4488
        %v5398 = vpop.f32.mrf.mxu0
        %v5399 = vadd.f32 0.0, %v5398
        %v5400 = vpop.f32.mrf.mxu0
        %5401 = vmatprep.mubr.f32.mxu0 0.0
        %5402 = vmatmul.mubr.f32.gmra.mxu0 %v4489
        %v5403 = vpop.f32.mrf.mxu0
        %v5404 = vadd.f32 0.0, %v5403
        %v5405 = vpop.f32.mrf.mxu0
        %5406 = vmatprep.mubr.f32.mxu0 0.0
        %5407 = vmatmul.mubr.f32.gmra.mxu0 %v4490
        %v5408 = vpop.f32.mrf.mxu0
        %v5409 = vadd.f32 0.0, %v5408
        %v5410 = vpop.f32.mrf.mxu0
        %5411 = vmatprep.mubr.f32.mxu0 0.0
        %5412 = vmatmul.mubr.f32.gmra.mxu0 %v4491
        %v5413 = vpop.f32.mrf.mxu0
        %v5414 = vadd.f32 0.0, %v5413
        %v5415 = vpop.f32.mrf.mxu0
        %5416 = vmatprep.mubr.f32.mxu0 0.0
        %5417 = vmatmul.mubr.f32.gmra.mxu0 %v4492
        %v5418 = vpop.f32.mrf.mxu0
        %v5419 = vadd.f32 0.0, %v5418
        %v5420 = vpop.f32.mrf.mxu0
        %5421 = vmatprep.mubr.f32.mxu0 0.0
        %5422 = vmatmul.mubr.f32.gmra.mxu0 %v4493
        %v5423 = vpop.f32.mrf.mxu0
        %v5424 = vadd.f32 0.0, %v5423
        %v5425 = vpop.f32.mrf.mxu0
        %5426 = vmatprep.mubr.f32.mxu0 0.0
        %5427 = vmatmul.mubr.f32.gmra.mxu0 %v4494
        %v5428 = vpop.f32.mrf.mxu0
        %v5429 = vadd.f32 0.0, %v5428
        %v5430 = vpop.f32.mrf.mxu0
        %5431 = vmatprep.mubr.f32.mxu0 0.0
        %5432 = vmatmul.mubr.f32.gmra.mxu0 %v4495
        %v5433 = vpop.f32.mrf.mxu0
        %v5434 = vadd.f32 0.0, %v5433
        %v5435 = vpop.f32.mrf.mxu0
        %5436 = vmatprep.mubr.f32.mxu0 0.0
        %5437 = vmatmul.mubr.f32.gmra.mxu0 %v4496
        %v5438 = vpop.f32.mrf.mxu0
        %v5439 = vadd.f32 0.0, %v5438
        %v5440 = vpop.f32.mrf.mxu0
        %5441 = vmatprep.mubr.f32.mxu0 0.0
        %5442 = vmatmul.mubr.f32.gmra.mxu0 %v4497
        %v5443 = vpop.f32.mrf.mxu0
        %v5444 = vadd.f32 0.0, %v5443
        %v5445 = vpop.f32.mrf.mxu0
        %5446 = vdwg.mxu0
        %v5447 = vadd.f32 %v5173, %v5289
        %v5448 = vadd.f32 %v5174, %v5294
        %v5449 = vadd.f32 %v5175, %v5299
        %v5450 = vadd.f32 %v5176, %v5304
        %v5451 = vadd.f32 %v5177, %v5309
        %v5452 = vadd.f32 %v5178, %v5314
        %v5453 = vadd.f32 %v5179, %v5319
        %v5454 = vadd.f32 %v5180, %v5324
        %v5455 = vadd.f32 %v5181, %v5329
        %v5456 = vadd.f32 %v5182, %v5334
        %v5457 = vadd.f32 %v5183, %v5339
        %v5458 = vadd.f32 %v5184, %v5344
        %v5459 = vadd.f32 %v5185, %v5349
        %v5460 = vadd.f32 %v5186, %v5354
        %v5461 = vadd.f32 %v5187, %v5359
        %v5462 = vadd.f32 %v5188, %v5364
        %v5463 = vadd.f32 %v5189, %v5369
        %v5464 = vadd.f32 %v5190, %v5374
        %v5465 = vadd.f32 %v5191, %v5379
        %v5466 = vadd.f32 %v5192, %v5384
        %v5467 = vadd.f32 %v5193, %v5389
        %v5468 = vadd.f32 %v5194, %v5394
        %v5469 = vadd.f32 %v5195, %v5399
        %v5470 = vadd.f32 %v5196, %v5404
        %v5471 = vadd.f32 %v5197, %v5409
        %v5472 = vadd.f32 %v5198, %v5414
        %v5473 = vadd.f32 %v5199, %v5419
        %v5474 = vadd.f32 %v5200, %v5424
        %v5475 = vadd.f32 %v5201, %v5429
        %v5476 = vadd.f32 %v5202, %v5434
        %v5477 = vadd.f32 %v5203, %v5439
        %v5478 = vadd.f32 %v5204, %v5444
        %5479 = vst [vmem:[#allocation4] sm:$0xff] %v5447
        %5480 = vst [vmem:[#allocation4 + $0x8] sm:$0xff] %v5448
        %5481 = vst [vmem:[#allocation4 + $0x10] sm:$0xff] %v5449
        %5482 = vst [vmem:[#allocation4 + $0x18] sm:$0xff] %v5450
        %5483 = vst [vmem:[#allocation4 + $0x20] sm:$0xff] %v5451
        %5484 = vst [vmem:[#allocation4 + $0x28] sm:$0xff] %v5452
        %5485 = vst [vmem:[#allocation4 + $0x30] sm:$0xff] %v5453
        %5486 = vst [vmem:[#allocation4 + $0x38] sm:$0xff] %v5454
        %5487 = vst [vmem:[#allocation4 + $0x40] sm:$0xff] %v5455
        %5488 = vst [vmem:[#allocation4 + $0x48] sm:$0xff] %v5456
        %5489 = vst [vmem:[#allocation4 + $0x50] sm:$0xff] %v5457
        %5490 = vst [vmem:[#allocation4 + $0x58] sm:$0xff] %v5458
        %5491 = vst [vmem:[#allocation4 + $0x60] sm:$0xff] %v5459
        %5492 = vst [vmem:[#allocation4 + $0x68] sm:$0xff] %v5460
        %5493 = vst [vmem:[#allocation4 + $0x70] sm:$0xff] %v5461
        %5494 = vst [vmem:[#allocation4 + $0x78] sm:$0xff] %v5462
        %5495 = vst [vmem:[#allocation4 + $0x80] sm:$0xff] %v5463
        %5496 = vst [vmem:[#allocation4 + $0x88] sm:$0xff] %v5464
        %5497 = vst [vmem:[#allocation4 + $0x90] sm:$0xff] %v5465
        %5498 = vst [vmem:[#allocation4 + $0x98] sm:$0xff] %v5466
        %5499 = vst [vmem:[#allocation4 + $0xa0] sm:$0xff] %v5467
        %5500 = vst [vmem:[#allocation4 + $0xa8] sm:$0xff] %v5468
        %5501 = vst [vmem:[#allocation4 + $0xb0] sm:$0xff] %v5469
        %5502 = vst [vmem:[#allocation4 + $0xb8] sm:$0xff] %v5470
        %5503 = vst [vmem:[#allocation4 + $0xc0] sm:$0xff] %v5471
        %5504 = vst [vmem:[#allocation4 + $0xc8] sm:$0xff] %v5472
        %5505 = vst [vmem:[#allocation4 + $0xd0] sm:$0xff] %v5473
        %5506 = vst [vmem:[#allocation4 + $0xd8] sm:$0xff] %v5474
        %5507 = vst [vmem:[#allocation4 + $0xe0] sm:$0xff] %v5475
        %5508 = vst [vmem:[#allocation4 + $0xe8] sm:$0xff] %v5476
        %5509 = vst [vmem:[#allocation4 + $0xf0] sm:$0xff] %v5477
        %5510 = vst [vmem:[#allocation4 + $0xf8] sm:$0xff] %v5478
        %v5511 = vld [vmem:[#allocation3 + $0x1] sm:$0xff]
        %v5512 = vld [vmem:[#allocation3 + $0x9] sm:$0xff]
        %v5513 = vld [vmem:[#allocation3 + $0x19] sm:$0xff]
        %v5514 = vld [vmem:[#allocation3 + $0x21] sm:$0xff]
        %v5515 = vld [vmem:[#allocation3 + $0x31] sm:$0xff]
        %v5516 = vld [vmem:[#allocation3 + $0x39] sm:$0xff]
        %v5517 = vld [vmem:[#allocation3 + $0x49] sm:$0xff]
        %v5518 = vld [vmem:[#allocation3 + $0x51] sm:$0xff]
        %v5519 = vld [vmem:[#allocation3 + $0x61] sm:$0xff]
        %v5520 = vld [vmem:[#allocation3 + $0x69] sm:$0xff]
        %v5521 = vld [vmem:[#allocation3 + $0x79] sm:$0xff]
        %v5522 = vld [vmem:[#allocation3 + $0x81] sm:$0xff]
        %v5523 = vld [vmem:[#allocation3 + $0x91] sm:$0xff]
        %v5524 = vld [vmem:[#allocation3 + $0x99] sm:$0xff]
        %v5525 = vld [vmem:[#allocation3 + $0xa9] sm:$0xff]
        %v5526 = vld [vmem:[#allocation3 + $0xb1] sm:$0xff]
        %v5527 = vld [vmem:[#allocation3 + $0xc1] sm:$0xff]
        %v5528 = vld [vmem:[#allocation3 + $0xc9] sm:$0xff]
        %v5529 = vld [vmem:[#allocation3 + $0xd9] sm:$0xff]
        %v5530 = vld [vmem:[#allocation3 + $0xe1] sm:$0xff]
        %v5531 = vld [vmem:[#allocation3 + $0xf1] sm:$0xff]
        %v5532 = vld [vmem:[#allocation3 + $0xf9] sm:$0xff]
        %v5533 = vld [vmem:[#allocation3 + $0x109] sm:$0xff]
        %v5534 = vld [vmem:[#allocation3 + $0x111] sm:$0xff]
        %v5535 = vld [vmem:[#allocation3 + $0x121] sm:$0xff]
        %v5536 = vld [vmem:[#allocation3 + $0x129] sm:$0xff]
        %v5537 = vld [vmem:[#allocation3 + $0x139] sm:$0xff]
        %v5538 = vld [vmem:[#allocation3 + $0x141] sm:$0xff]
        %v5539 = vld [vmem:[#allocation3 + $0x151] sm:$0xff]
        %v5540 = vld [vmem:[#allocation3 + $0x159] sm:$0xff]
        %v5541 = vld [vmem:[#allocation3 + $0x169] sm:$0xff]
        %v5542 = vld [vmem:[#allocation3 + $0x171] sm:$0xff]
        %v5543 = vld [vmem:[#allocation3 + $0x181] sm:$0xff]
        %v5544 = vld [vmem:[#allocation3 + $0x189] sm:$0xff]
        %v5545 = vld [vmem:[#allocation3 + $0x199] sm:$0xff]
        %v5546 = vld [vmem:[#allocation3 + $0x1a1] sm:$0xff]
        %v5547 = vld [vmem:[#allocation4] sm:$0xff]
        %v5548 = vld [vmem:[#allocation4 + $0x8] sm:$0xff]
        %v5549 = vld [vmem:[#allocation4 + $0x10] sm:$0xff]
        %v5550 = vld [vmem:[#allocation4 + $0x18] sm:$0xff]
        %v5551 = vld [vmem:[#allocation4 + $0x20] sm:$0xff]
        %v5552 = vld [vmem:[#allocation4 + $0x28] sm:$0xff]
        %v5553 = vld [vmem:[#allocation4 + $0x30] sm:$0xff]
        %v5554 = vld [vmem:[#allocation4 + $0x38] sm:$0xff]
        %v5555 = vld [vmem:[#allocation4 + $0x40] sm:$0xff]
        %v5556 = vld [vmem:[#allocation4 + $0x48] sm:$0xff]
        %v5557 = vld [vmem:[#allocation4 + $0x50] sm:$0xff]
        %v5558 = vld [vmem:[#allocation4 + $0x58] sm:$0xff]
        %v5559 = vld [vmem:[#allocation4 + $0x60] sm:$0xff]
        %v5560 = vld [vmem:[#allocation4 + $0x68] sm:$0xff]
        %v5561 = vld [vmem:[#allocation4 + $0x70] sm:$0xff]
        %v5562 = vld [vmem:[#allocation4 + $0x78] sm:$0xff]
        %v5563 = vld [vmem:[#allocation4 + $0x80] sm:$0xff]
        %v5564 = vld [vmem:[#allocation4 + $0x88] sm:$0xff]
        %v5565 = vld [vmem:[#allocation4 + $0x90] sm:$0xff]
        %v5566 = vld [vmem:[#allocation4 + $0x98] sm:$0xff]
        %v5567 = vld [vmem:[#allocation4 + $0xa0] sm:$0xff]
        %v5568 = vld [vmem:[#allocation4 + $0xa8] sm:$0xff]
        %v5569 = vld [vmem:[#allocation4 + $0xb0] sm:$0xff]
        %v5570 = vld [vmem:[#allocation4 + $0xb8] sm:$0xff]
        %v5571 = vld [vmem:[#allocation4 + $0xc0] sm:$0xff]
        %v5572 = vld [vmem:[#allocation4 + $0xc8] sm:$0xff]
        %v5573 = vld [vmem:[#allocation4 + $0xd0] sm:$0xff]
        %v5574 = vld [vmem:[#allocation4 + $0xd8] sm:$0xff]
        %v5575 = vld [vmem:[#allocation4 + $0xe0] sm:$0xff]
        %v5576 = vld [vmem:[#allocation4 + $0xe8] sm:$0xff]
        %v5577 = vld [vmem:[#allocation4 + $0xf0] sm:$0xff]
        %v5578 = vld [vmem:[#allocation4 + $0xf8] sm:$0xff]
        %s5579 = scalar_lea.vmem [#allocation10], 128
        %v5580 = vld [vmem:[%s5579] sm:$0xff]
        %v5581 = vld [vmem:[%s5579 + $0x8] sm:$0xff]
        %v5582 = vld [vmem:[%s5579 + $0x10] sm:$0xff]
        %v5583 = vld [vmem:[%s5579 + $0x18] sm:$0xff]
        %v5584 = vld [vmem:[%s5579 + $0x20] sm:$0xff]
        %v5585 = vld [vmem:[%s5579 + $0x28] sm:$0xff]
        %v5586 = vld [vmem:[%s5579 + $0x30] sm:$0xff]
        %v5587 = vld [vmem:[%s5579 + $0x38] sm:$0xff]
        %v5588 = vld [vmem:[%s5579 + $0x40] sm:$0xff]
        %v5589 = vld [vmem:[%s5579 + $0x48] sm:$0xff]
        %v5590 = vld [vmem:[%s5579 + $0x50] sm:$0xff]
        %v5591 = vld [vmem:[%s5579 + $0x58] sm:$0xff]
        %v5592 = vld [vmem:[%s5579 + $0x60] sm:$0xff]
        %v5593 = vld [vmem:[%s5579 + $0x68] sm:$0xff]
        %v5594 = vld [vmem:[%s5579 + $0x70] sm:$0xff]
        %v5595 = vld [vmem:[%s5579 + $0x78] sm:$0xff]
        %5596 = vmatprep.subr.mxu0 0.0
        %5597 = vmatpush1.msra.mxu0 %v5595
        %5598 = vmatprep.subr.mxu0 0.0
        %5599 = vmatpush1.msra.mxu0 %v5594
        %5600 = vmatprep.subr.mxu0 0.0
        %5601 = vmatpush1.msra.mxu0 %v5593
        %5602 = vmatprep.subr.mxu0 0.0
        %5603 = vmatpush1.msra.mxu0 %v5592
        %5604 = vmatprep.subr.mxu0 0.0
        %5605 = vmatpush1.msra.mxu0 %v5591
        %5606 = vmatprep.subr.mxu0 0.0
        %5607 = vmatpush1.msra.mxu0 %v5590
        %5608 = vmatprep.subr.mxu0 0.0
        %5609 = vmatpush1.msra.mxu0 %v5589
        %5610 = vmatprep.subr.mxu0 0.0
        %5611 = vmatpush1.msra.mxu0 %v5588
        %5612 = vmatprep.subr.mxu0 0.0
        %5613 = vmatpush1.msra.mxu0 %v5587
        %5614 = vmatprep.subr.mxu0 0.0
        %5615 = vmatpush1.msra.mxu0 %v5586
        %5616 = vmatprep.subr.mxu0 0.0
        %5617 = vmatpush1.msra.mxu0 %v5585
        %5618 = vmatprep.subr.mxu0 0.0
        %5619 = vmatpush1.msra.mxu0 %v5584
        %5620 = vmatprep.subr.mxu0 0.0
        %5621 = vmatpush1.msra.mxu0 %v5583
        %5622 = vmatprep.subr.mxu0 0.0
        %5623 = vmatpush1.msra.mxu0 %v5582
        %5624 = vmatprep.subr.mxu0 0.0
        %5625 = vmatpush1.msra.mxu0 %v5581
        %5626 = vmatprep.subr.mxu0 0.0
        %5627 = vmatpush1.msra.mxu0 %v5580
        %5628 = vmatprep.subr.mxu0 0.0
        %5629 = vmatpush2.msra.mxu0 0.0
        %5630 = vmatprep.subr.mxu0 0.0
        %5631 = vmatpush2.msra.mxu0 0.0
        %5632 = vmatprep.subr.mxu0 0.0
        %5633 = vmatpush2.msra.mxu0 0.0
        %5634 = vmatprep.subr.mxu0 0.0
        %5635 = vmatpush2.msra.mxu0 0.0
        %5636 = vmatprep.subr.mxu0 0.0
        %5637 = vmatpush2.msra.mxu0 0.0
        %5638 = vmatprep.subr.mxu0 0.0
        %5639 = vmatpush2.msra.mxu0 0.0
        %5640 = vmatprep.subr.mxu0 0.0
        %5641 = vmatpush2.msra.mxu0 0.0
        %5642 = vmatprep.subr.mxu0 0.0
        %5643 = vmatpush2.msra.mxu0 0.0
        %5644 = vmatprep.subr.mxu0 0.0
        %5645 = vmatpush2.msra.mxu0 0.0
        %5646 = vmatprep.subr.mxu0 0.0
        %5647 = vmatpush2.msra.mxu0 0.0
        %5648 = vmatprep.subr.mxu0 0.0
        %5649 = vmatpush2.msra.mxu0 0.0
        %5650 = vmatprep.subr.mxu0 0.0
        %5651 = vmatpush2.msra.mxu0 0.0
        %5652 = vmatprep.subr.mxu0 0.0
        %5653 = vmatpush2.msra.mxu0 0.0
        %5654 = vmatprep.subr.mxu0 0.0
        %5655 = vmatpush2.msra.mxu0 0.0
        %5656 = vmatprep.subr.mxu0 0.0
        %5657 = vmatpush2.msra.mxu0 0.0
        %5658 = vmatprep.subr.mxu0 0.0
        %5659 = vmatpush2.msra.mxu0 0.0
        %5660 = vmatprep.mubr.f32.mxu0 0.0
        %5661 = vmatmul.mubr.f32.gmra.mxu0 %v5511
        %v5662 = vpop.f32.mrf.mxu0
        %v5663 = vadd.f32 0.0, %v5662
        %v5664 = vpop.f32.mrf.mxu0
        %5665 = vmatprep.mubr.f32.mxu0 0.0
        %5666 = vmatmul.mubr.f32.gmra.mxu0 %v5512
        %v5667 = vpop.f32.mrf.mxu0
        %v5668 = vadd.f32 0.0, %v5667
        %v5669 = vpop.f32.mrf.mxu0
        %5670 = vmatprep.mubr.f32.mxu0 0.0
        %5671 = vmatmul.mubr.f32.gmra.mxu0 %v5513
        %v5672 = vpop.f32.mrf.mxu0
        %v5673 = vadd.f32 0.0, %v5672
        %v5674 = vpop.f32.mrf.mxu0
        %5675 = vmatprep.mubr.f32.mxu0 0.0
        %5676 = vmatmul.mubr.f32.gmra.mxu0 %v5514
        %v5677 = vpop.f32.mrf.mxu0
        %v5678 = vadd.f32 0.0, %v5677
        %v5679 = vpop.f32.mrf.mxu0
        %5680 = vmatprep.mubr.f32.mxu0 0.0
        %5681 = vmatmul.mubr.f32.gmra.mxu0 %v5515
        %v5682 = vpop.f32.mrf.mxu0
        %v5683 = vadd.f32 0.0, %v5682
        %v5684 = vpop.f32.mrf.mxu0
        %5685 = vmatprep.mubr.f32.mxu0 0.0
        %5686 = vmatmul.mubr.f32.gmra.mxu0 %v5516
        %v5687 = vpop.f32.mrf.mxu0
        %v5688 = vadd.f32 0.0, %v5687
        %v5689 = vpop.f32.mrf.mxu0
        %5690 = vmatprep.mubr.f32.mxu0 0.0
        %5691 = vmatmul.mubr.f32.gmra.mxu0 %v5517
        %v5692 = vpop.f32.mrf.mxu0
        %v5693 = vadd.f32 0.0, %v5692
        %v5694 = vpop.f32.mrf.mxu0
        %5695 = vmatprep.mubr.f32.mxu0 0.0
        %5696 = vmatmul.mubr.f32.gmra.mxu0 %v5518
        %v5697 = vpop.f32.mrf.mxu0
        %v5698 = vadd.f32 0.0, %v5697
        %v5699 = vpop.f32.mrf.mxu0
        %5700 = vmatprep.mubr.f32.mxu0 0.0
        %5701 = vmatmul.mubr.f32.gmra.mxu0 %v5519
        %v5702 = vpop.f32.mrf.mxu0
        %v5703 = vadd.f32 0.0, %v5702
        %v5704 = vpop.f32.mrf.mxu0
        %5705 = vmatprep.mubr.f32.mxu0 0.0
        %5706 = vmatmul.mubr.f32.gmra.mxu0 %v5520
        %v5707 = vpop.f32.mrf.mxu0
        %v5708 = vadd.f32 0.0, %v5707
        %v5709 = vpop.f32.mrf.mxu0
        %5710 = vmatprep.mubr.f32.mxu0 0.0
        %5711 = vmatmul.mubr.f32.gmra.mxu0 %v5521
        %v5712 = vpop.f32.mrf.mxu0
        %v5713 = vadd.f32 0.0, %v5712
        %v5714 = vpop.f32.mrf.mxu0
        %5715 = vmatprep.mubr.f32.mxu0 0.0
        %5716 = vmatmul.mubr.f32.gmra.mxu0 %v5522
        %v5717 = vpop.f32.mrf.mxu0
        %v5718 = vadd.f32 0.0, %v5717
        %v5719 = vpop.f32.mrf.mxu0
        %5720 = vmatprep.mubr.f32.mxu0 0.0
        %5721 = vmatmul.mubr.f32.gmra.mxu0 %v5523
        %v5722 = vpop.f32.mrf.mxu0
        %v5723 = vadd.f32 0.0, %v5722
        %v5724 = vpop.f32.mrf.mxu0
        %5725 = vmatprep.mubr.f32.mxu0 0.0
        %5726 = vmatmul.mubr.f32.gmra.mxu0 %v5524
        %v5727 = vpop.f32.mrf.mxu0
        %v5728 = vadd.f32 0.0, %v5727
        %v5729 = vpop.f32.mrf.mxu0
        %5730 = vmatprep.mubr.f32.mxu0 0.0
        %5731 = vmatmul.mubr.f32.gmra.mxu0 %v5525
        %v5732 = vpop.f32.mrf.mxu0
        %v5733 = vadd.f32 0.0, %v5732
        %v5734 = vpop.f32.mrf.mxu0
        %5735 = vmatprep.mubr.f32.mxu0 0.0
        %5736 = vmatmul.mubr.f32.gmra.mxu0 %v5526
        %v5737 = vpop.f32.mrf.mxu0
        %v5738 = vadd.f32 0.0, %v5737
        %v5739 = vpop.f32.mrf.mxu0
        %5740 = vmatprep.mubr.f32.mxu0 0.0
        %5741 = vmatmul.mubr.f32.gmra.mxu0 %v5527
        %v5742 = vpop.f32.mrf.mxu0
        %v5743 = vadd.f32 0.0, %v5742
        %v5744 = vpop.f32.mrf.mxu0
        %5745 = vmatprep.mubr.f32.mxu0 0.0
        %5746 = vmatmul.mubr.f32.gmra.mxu0 %v5528
        %v5747 = vpop.f32.mrf.mxu0
        %v5748 = vadd.f32 0.0, %v5747
        %v5749 = vpop.f32.mrf.mxu0
        %5750 = vmatprep.mubr.f32.mxu0 0.0
        %5751 = vmatmul.mubr.f32.gmra.mxu0 %v5529
        %v5752 = vpop.f32.mrf.mxu0
        %v5753 = vadd.f32 0.0, %v5752
        %v5754 = vpop.f32.mrf.mxu0
        %5755 = vmatprep.mubr.f32.mxu0 0.0
        %5756 = vmatmul.mubr.f32.gmra.mxu0 %v5530
        %v5757 = vpop.f32.mrf.mxu0
        %v5758 = vadd.f32 0.0, %v5757
        %v5759 = vpop.f32.mrf.mxu0
        %5760 = vmatprep.mubr.f32.mxu0 0.0
        %5761 = vmatmul.mubr.f32.gmra.mxu0 %v5531
        %v5762 = vpop.f32.mrf.mxu0
        %v5763 = vadd.f32 0.0, %v5762
        %v5764 = vpop.f32.mrf.mxu0
        %5765 = vmatprep.mubr.f32.mxu0 0.0
        %5766 = vmatmul.mubr.f32.gmra.mxu0 %v5532
        %v5767 = vpop.f32.mrf.mxu0
        %v5768 = vadd.f32 0.0, %v5767
        %v5769 = vpop.f32.mrf.mxu0
        %5770 = vmatprep.mubr.f32.mxu0 0.0
        %5771 = vmatmul.mubr.f32.gmra.mxu0 %v5533
        %v5772 = vpop.f32.mrf.mxu0
        %v5773 = vadd.f32 0.0, %v5772
        %v5774 = vpop.f32.mrf.mxu0
        %5775 = vmatprep.mubr.f32.mxu0 0.0
        %5776 = vmatmul.mubr.f32.gmra.mxu0 %v5534
        %v5777 = vpop.f32.mrf.mxu0
        %v5778 = vadd.f32 0.0, %v5777
        %v5779 = vpop.f32.mrf.mxu0
        %5780 = vmatprep.mubr.f32.mxu0 0.0
        %5781 = vmatmul.mubr.f32.gmra.mxu0 %v5535
        %v5782 = vpop.f32.mrf.mxu0
        %v5783 = vadd.f32 0.0, %v5782
        %v5784 = vpop.f32.mrf.mxu0
        %5785 = vmatprep.mubr.f32.mxu0 0.0
        %5786 = vmatmul.mubr.f32.gmra.mxu0 %v5536
        %v5787 = vpop.f32.mrf.mxu0
        %v5788 = vadd.f32 0.0, %v5787
        %v5789 = vpop.f32.mrf.mxu0
        %5790 = vmatprep.mubr.f32.mxu0 0.0
        %5791 = vmatmul.mubr.f32.gmra.mxu0 %v5537
        %v5792 = vpop.f32.mrf.mxu0
        %v5793 = vadd.f32 0.0, %v5792
        %v5794 = vpop.f32.mrf.mxu0
        %5795 = vmatprep.mubr.f32.mxu0 0.0
        %5796 = vmatmul.mubr.f32.gmra.mxu0 %v5538
        %v5797 = vpop.f32.mrf.mxu0
        %v5798 = vadd.f32 0.0, %v5797
        %v5799 = vpop.f32.mrf.mxu0
        %5800 = vmatprep.mubr.f32.mxu0 0.0
        %5801 = vmatmul.mubr.f32.gmra.mxu0 %v5539
        %v5802 = vpop.f32.mrf.mxu0
        %v5803 = vadd.f32 0.0, %v5802
        %v5804 = vpop.f32.mrf.mxu0
        %5805 = vmatprep.mubr.f32.mxu0 0.0
        %5806 = vmatmul.mubr.f32.gmra.mxu0 %v5540
        %v5807 = vpop.f32.mrf.mxu0
        %v5808 = vadd.f32 0.0, %v5807
        %v5809 = vpop.f32.mrf.mxu0
        %5810 = vmatprep.mubr.f32.mxu0 0.0
        %5811 = vmatmul.mubr.f32.gmra.mxu0 %v5541
        %v5812 = vpop.f32.mrf.mxu0
        %v5813 = vadd.f32 0.0, %v5812
        %v5814 = vpop.f32.mrf.mxu0
        %5815 = vmatprep.mubr.f32.mxu0 0.0
        %5816 = vmatmul.mubr.f32.gmra.mxu0 %v5542
        %v5817 = vpop.f32.mrf.mxu0
        %v5818 = vadd.f32 0.0, %v5817
        %v5819 = vpop.f32.mrf.mxu0
        %5820 = vdwg.mxu0
        %v5821 = vadd.f32 %v5547, %v5663
        %v5822 = vadd.f32 %v5548, %v5668
        %v5823 = vadd.f32 %v5549, %v5673
        %v5824 = vadd.f32 %v5550, %v5678
        %v5825 = vadd.f32 %v5551, %v5683
        %v5826 = vadd.f32 %v5552, %v5688
        %v5827 = vadd.f32 %v5553, %v5693
        %v5828 = vadd.f32 %v5554, %v5698
        %v5829 = vadd.f32 %v5555, %v5703
        %v5830 = vadd.f32 %v5556, %v5708
        %v5831 = vadd.f32 %v5557, %v5713
        %v5832 = vadd.f32 %v5558, %v5718
        %v5833 = vadd.f32 %v5559, %v5723
        %v5834 = vadd.f32 %v5560, %v5728
        %v5835 = vadd.f32 %v5561, %v5733
        %v5836 = vadd.f32 %v5562, %v5738
        %v5837 = vadd.f32 %v5563, %v5743
        %v5838 = vadd.f32 %v5564, %v5748
        %v5839 = vadd.f32 %v5565, %v5753
        %v5840 = vadd.f32 %v5566, %v5758
        %v5841 = vadd.f32 %v5567, %v5763
        %v5842 = vadd.f32 %v5568, %v5768
        %v5843 = vadd.f32 %v5569, %v5773
        %v5844 = vadd.f32 %v5570, %v5778
        %v5845 = vadd.f32 %v5571, %v5783
        %v5846 = vadd.f32 %v5572, %v5788
        %v5847 = vadd.f32 %v5573, %v5793
        %v5848 = vadd.f32 %v5574, %v5798
        %v5849 = vadd.f32 %v5575, %v5803
        %v5850 = vadd.f32 %v5576, %v5808
        %v5851 = vadd.f32 %v5577, %v5813
        %v5852 = vadd.f32 %v5578, %v5818
        %5853 = vst [vmem:[#allocation4] sm:$0xff] %v5821
        %5854 = vst [vmem:[#allocation4 + $0x8] sm:$0xff] %v5822
        %5855 = vst [vmem:[#allocation4 + $0x10] sm:$0xff] %v5823
        %5856 = vst [vmem:[#allocation4 + $0x18] sm:$0xff] %v5824
        %5857 = vst [vmem:[#allocation4 + $0x20] sm:$0xff] %v5825
        %5858 = vst [vmem:[#allocation4 + $0x28] sm:$0xff] %v5826
        %5859 = vst [vmem:[#allocation4 + $0x30] sm:$0xff] %v5827
        %5860 = vst [vmem:[#allocation4 + $0x38] sm:$0xff] %v5828
        %5861 = vst [vmem:[#allocation4 + $0x40] sm:$0xff] %v5829
        %5862 = vst [vmem:[#allocation4 + $0x48] sm:$0xff] %v5830
        %5863 = vst [vmem:[#allocation4 + $0x50] sm:$0xff] %v5831
        %5864 = vst [vmem:[#allocation4 + $0x58] sm:$0xff] %v5832
        %5865 = vst [vmem:[#allocation4 + $0x60] sm:$0xff] %v5833
        %5866 = vst [vmem:[#allocation4 + $0x68] sm:$0xff] %v5834
        %5867 = vst [vmem:[#allocation4 + $0x70] sm:$0xff] %v5835
        %5868 = vst [vmem:[#allocation4 + $0x78] sm:$0xff] %v5836
        %5869 = vst [vmem:[#allocation4 + $0x80] sm:$0xff] %v5837
        %5870 = vst [vmem:[#allocation4 + $0x88] sm:$0xff] %v5838
        %5871 = vst [vmem:[#allocation4 + $0x90] sm:$0xff] %v5839
        %5872 = vst [vmem:[#allocation4 + $0x98] sm:$0xff] %v5840
        %5873 = vst [vmem:[#allocation4 + $0xa0] sm:$0xff] %v5841
        %5874 = vst [vmem:[#allocation4 + $0xa8] sm:$0xff] %v5842
        %5875 = vst [vmem:[#allocation4 + $0xb0] sm:$0xff] %v5843
        %5876 = vst [vmem:[#allocation4 + $0xb8] sm:$0xff] %v5844
        %5877 = vst [vmem:[#allocation4 + $0xc0] sm:$0xff] %v5845
        %5878 = vst [vmem:[#allocation4 + $0xc8] sm:$0xff] %v5846
        %5879 = vst [vmem:[#allocation4 + $0xd0] sm:$0xff] %v5847
        %5880 = vst [vmem:[#allocation4 + $0xd8] sm:$0xff] %v5848
        %5881 = vst [vmem:[#allocation4 + $0xe0] sm:$0xff] %v5849
        %5882 = vst [vmem:[#allocation4 + $0xe8] sm:$0xff] %v5850
        %5883 = vst [vmem:[#allocation4 + $0xf0] sm:$0xff] %v5851
        %5884 = vst [vmem:[#allocation4 + $0xf8] sm:$0xff] %v5852
        %v5885 = vld [vmem:[#allocation4] sm:$0xff]
        %v5886 = vld [vmem:[#allocation4 + $0x8] sm:$0xff]
        %v5887 = vld [vmem:[#allocation4 + $0x10] sm:$0xff]
        %v5888 = vld [vmem:[#allocation4 + $0x18] sm:$0xff]
        %v5889 = vld [vmem:[#allocation4 + $0x20] sm:$0xff]
        %v5890 = vld [vmem:[#allocation4 + $0x28] sm:$0xff]
        %v5891 = vld [vmem:[#allocation4 + $0x30] sm:$0xff]
        %v5892 = vld [vmem:[#allocation4 + $0x38] sm:$0xff]
        %v5893 = vld [vmem:[#allocation4 + $0x40] sm:$0xff]
        %v5894 = vld [vmem:[#allocation4 + $0x48] sm:$0xff]
        %v5895 = vld [vmem:[#allocation4 + $0x50] sm:$0xff]
        %v5896 = vld [vmem:[#allocation4 + $0x58] sm:$0xff]
        %v5897 = vld [vmem:[#allocation4 + $0x60] sm:$0xff]
        %v5898 = vld [vmem:[#allocation4 + $0x68] sm:$0xff]
        %v5899 = vld [vmem:[#allocation4 + $0x70] sm:$0xff]
        %v5900 = vld [vmem:[#allocation4 + $0x78] sm:$0xff]
        %v5901 = vld [vmem:[#allocation4 + $0x80] sm:$0xff]
        %v5902 = vld [vmem:[#allocation4 + $0x88] sm:$0xff]
        %v5903 = vld [vmem:[#allocation4 + $0x90] sm:$0xff]
        %v5904 = vld [vmem:[#allocation4 + $0x98] sm:$0xff]
        %v5905 = vld [vmem:[#allocation4 + $0xa0] sm:$0xff]
        %v5906 = vld [vmem:[#allocation4 + $0xa8] sm:$0xff]
        %v5907 = vld [vmem:[#allocation4 + $0xb0] sm:$0xff]
        %v5908 = vld [vmem:[#allocation4 + $0xb8] sm:$0xff]
        %v5909 = vld [vmem:[#allocation4 + $0xc0] sm:$0xff]
        %v5910 = vld [vmem:[#allocation4 + $0xc8] sm:$0xff]
        %v5911 = vld [vmem:[#allocation4 + $0xd0] sm:$0xff]
        %v5912 = vld [vmem:[#allocation4 + $0xd8] sm:$0xff]
        %v5913 = vld [vmem:[#allocation4 + $0xe0] sm:$0xff]
        %v5914 = vld [vmem:[#allocation4 + $0xe8] sm:$0xff]
        %v5915 = vld [vmem:[#allocation4 + $0xf0] sm:$0xff]
        %v5916 = vld [vmem:[#allocation4 + $0xf8] sm:$0xff]
        %s5917 = scalar_lea.vmem [#allocation10], 512
        %v5918 = vld [vmem:[%s5917] sm:$0xff]
        %v5919 = vld [vmem:[%s5917 + $0x8] sm:$0xff]
        %v5920 = vld [vmem:[%s5917 + $0x10] sm:$0xff]
        %v5921 = vld [vmem:[%s5917 + $0x18] sm:$0xff]
        %v5922 = vld [vmem:[%s5917 + $0x20] sm:$0xff]
        %v5923 = vld [vmem:[%s5917 + $0x28] sm:$0xff]
        %v5924 = vld [vmem:[%s5917 + $0x30] sm:$0xff]
        %v5925 = vld [vmem:[%s5917 + $0x38] sm:$0xff]
        %v5926 = vld [vmem:[%s5917 + $0x40] sm:$0xff]
        %v5927 = vld [vmem:[%s5917 + $0x48] sm:$0xff]
        %v5928 = vld [vmem:[%s5917 + $0x50] sm:$0xff]
        %v5929 = vld [vmem:[%s5917 + $0x58] sm:$0xff]
        %v5930 = vld [vmem:[%s5917 + $0x60] sm:$0xff]
        %v5931 = vld [vmem:[%s5917 + $0x68] sm:$0xff]
        %v5932 = vld [vmem:[%s5917 + $0x70] sm:$0xff]
        %v5933 = vld [vmem:[%s5917 + $0x78] sm:$0xff]
        %5934 = vmatprep.subr.mxu0 0.0
        %5935 = vmatpush1.msra.mxu0 %v5933
        %5936 = vmatprep.subr.mxu0 0.0
        %5937 = vmatpush1.msra.mxu0 %v5932
        %5938 = vmatprep.subr.mxu0 0.0
        %5939 = vmatpush1.msra.mxu0 %v5931
        %5940 = vmatprep.subr.mxu0 0.0
        %5941 = vmatpush1.msra.mxu0 %v5930
        %5942 = vmatprep.subr.mxu0 0.0
        %5943 = vmatpush1.msra.mxu0 %v5929
        %5944 = vmatprep.subr.mxu0 0.0
        %5945 = vmatpush1.msra.mxu0 %v5928
        %5946 = vmatprep.subr.mxu0 0.0
        %5947 = vmatpush1.msra.mxu0 %v5927
        %5948 = vmatprep.subr.mxu0 0.0
        %5949 = vmatpush1.msra.mxu0 %v5926
        %5950 = vmatprep.subr.mxu0 0.0
        %5951 = vmatpush1.msra.mxu0 %v5925
        %5952 = vmatprep.subr.mxu0 0.0
        %5953 = vmatpush1.msra.mxu0 %v5924
        %5954 = vmatprep.subr.mxu0 0.0
        %5955 = vmatpush1.msra.mxu0 %v5923
        %5956 = vmatprep.subr.mxu0 0.0
        %5957 = vmatpush1.msra.mxu0 %v5922
        %5958 = vmatprep.subr.mxu0 0.0
        %5959 = vmatpush1.msra.mxu0 %v5921
        %5960 = vmatprep.subr.mxu0 0.0
        %5961 = vmatpush1.msra.mxu0 %v5920
        %5962 = vmatprep.subr.mxu0 0.0
        %5963 = vmatpush1.msra.mxu0 %v5919
        %5964 = vmatprep.subr.mxu0 0.0
        %5965 = vmatpush1.msra.mxu0 %v5918
        %5966 = vmatprep.subr.mxu0 0.0
        %5967 = vmatpush2.msra.mxu0 0.0
        %5968 = vmatprep.subr.mxu0 0.0
        %5969 = vmatpush2.msra.mxu0 0.0
        %5970 = vmatprep.subr.mxu0 0.0
        %5971 = vmatpush2.msra.mxu0 0.0
        %5972 = vmatprep.subr.mxu0 0.0
        %5973 = vmatpush2.msra.mxu0 0.0
        %5974 = vmatprep.subr.mxu0 0.0
        %5975 = vmatpush2.msra.mxu0 0.0
        %5976 = vmatprep.subr.mxu0 0.0
        %5977 = vmatpush2.msra.mxu0 0.0
        %5978 = vmatprep.subr.mxu0 0.0
        %5979 = vmatpush2.msra.mxu0 0.0
        %5980 = vmatprep.subr.mxu0 0.0
        %5981 = vmatpush2.msra.mxu0 0.0
        %5982 = vmatprep.subr.mxu0 0.0
        %5983 = vmatpush2.msra.mxu0 0.0
        %5984 = vmatprep.subr.mxu0 0.0
        %5985 = vmatpush2.msra.mxu0 0.0
        %5986 = vmatprep.subr.mxu0 0.0
        %5987 = vmatpush2.msra.mxu0 0.0
        %5988 = vmatprep.subr.mxu0 0.0
        %5989 = vmatpush2.msra.mxu0 0.0
        %5990 = vmatprep.subr.mxu0 0.0
        %5991 = vmatpush2.msra.mxu0 0.0
        %5992 = vmatprep.subr.mxu0 0.0
        %5993 = vmatpush2.msra.mxu0 0.0
        %5994 = vmatprep.subr.mxu0 0.0
        %5995 = vmatpush2.msra.mxu0 0.0
        %5996 = vmatprep.subr.mxu0 0.0
        %5997 = vmatpush2.msra.mxu0 0.0
        %5998 = vmatprep.mubr.f32.mxu0 0.0
        %5999 = vmatmul.mubr.f32.gmra.mxu0 %v5513
        %v6000 = vpop.f32.mrf.mxu0
        %v6001 = vadd.f32 0.0, %v6000
        %v6002 = vpop.f32.mrf.mxu0
        %6003 = vmatprep.mubr.f32.mxu0 0.0
        %6004 = vmatmul.mubr.f32.gmra.mxu0 %v5514
        %v6005 = vpop.f32.mrf.mxu0
        %v6006 = vadd.f32 0.0, %v6005
        %v6007 = vpop.f32.mrf.mxu0
        %6008 = vmatprep.mubr.f32.mxu0 0.0
        %6009 = vmatmul.mubr.f32.gmra.mxu0 %v5515
        %v6010 = vpop.f32.mrf.mxu0
        %v6011 = vadd.f32 0.0, %v6010
        %v6012 = vpop.f32.mrf.mxu0
        %6013 = vmatprep.mubr.f32.mxu0 0.0
        %6014 = vmatmul.mubr.f32.gmra.mxu0 %v5516
        %v6015 = vpop.f32.mrf.mxu0
        %v6016 = vadd.f32 0.0, %v6015
        %v6017 = vpop.f32.mrf.mxu0
        %6018 = vmatprep.mubr.f32.mxu0 0.0
        %6019 = vmatmul.mubr.f32.gmra.mxu0 %v5517
        %v6020 = vpop.f32.mrf.mxu0
        %v6021 = vadd.f32 0.0, %v6020
        %v6022 = vpop.f32.mrf.mxu0
        %6023 = vmatprep.mubr.f32.mxu0 0.0
        %6024 = vmatmul.mubr.f32.gmra.mxu0 %v5518
        %v6025 = vpop.f32.mrf.mxu0
        %v6026 = vadd.f32 0.0, %v6025
        %v6027 = vpop.f32.mrf.mxu0
        %6028 = vmatprep.mubr.f32.mxu0 0.0
        %6029 = vmatmul.mubr.f32.gmra.mxu0 %v5519
        %v6030 = vpop.f32.mrf.mxu0
        %v6031 = vadd.f32 0.0, %v6030
        %v6032 = vpop.f32.mrf.mxu0
        %6033 = vmatprep.mubr.f32.mxu0 0.0
        %6034 = vmatmul.mubr.f32.gmra.mxu0 %v5520
        %v6035 = vpop.f32.mrf.mxu0
        %v6036 = vadd.f32 0.0, %v6035
        %v6037 = vpop.f32.mrf.mxu0
        %6038 = vmatprep.mubr.f32.mxu0 0.0
        %6039 = vmatmul.mubr.f32.gmra.mxu0 %v5521
        %v6040 = vpop.f32.mrf.mxu0
        %v6041 = vadd.f32 0.0, %v6040
        %v6042 = vpop.f32.mrf.mxu0
        %6043 = vmatprep.mubr.f32.mxu0 0.0
        %6044 = vmatmul.mubr.f32.gmra.mxu0 %v5522
        %v6045 = vpop.f32.mrf.mxu0
        %v6046 = vadd.f32 0.0, %v6045
        %v6047 = vpop.f32.mrf.mxu0
        %6048 = vmatprep.mubr.f32.mxu0 0.0
        %6049 = vmatmul.mubr.f32.gmra.mxu0 %v5523
        %v6050 = vpop.f32.mrf.mxu0
        %v6051 = vadd.f32 0.0, %v6050
        %v6052 = vpop.f32.mrf.mxu0
        %6053 = vmatprep.mubr.f32.mxu0 0.0
        %6054 = vmatmul.mubr.f32.gmra.mxu0 %v5524
        %v6055 = vpop.f32.mrf.mxu0
        %v6056 = vadd.f32 0.0, %v6055
        %v6057 = vpop.f32.mrf.mxu0
        %6058 = vmatprep.mubr.f32.mxu0 0.0
        %6059 = vmatmul.mubr.f32.gmra.mxu0 %v5525
        %v6060 = vpop.f32.mrf.mxu0
        %v6061 = vadd.f32 0.0, %v6060
        %v6062 = vpop.f32.mrf.mxu0
        %6063 = vmatprep.mubr.f32.mxu0 0.0
        %6064 = vmatmul.mubr.f32.gmra.mxu0 %v5526
        %v6065 = vpop.f32.mrf.mxu0
        %v6066 = vadd.f32 0.0, %v6065
        %v6067 = vpop.f32.mrf.mxu0
        %6068 = vmatprep.mubr.f32.mxu0 0.0
        %6069 = vmatmul.mubr.f32.gmra.mxu0 %v5527
        %v6070 = vpop.f32.mrf.mxu0
        %v6071 = vadd.f32 0.0, %v6070
        %v6072 = vpop.f32.mrf.mxu0
        %6073 = vmatprep.mubr.f32.mxu0 0.0
        %6074 = vmatmul.mubr.f32.gmra.mxu0 %v5528
        %v6075 = vpop.f32.mrf.mxu0
        %v6076 = vadd.f32 0.0, %v6075
        %v6077 = vpop.f32.mrf.mxu0
        %6078 = vmatprep.mubr.f32.mxu0 0.0
        %6079 = vmatmul.mubr.f32.gmra.mxu0 %v5529
        %v6080 = vpop.f32.mrf.mxu0
        %v6081 = vadd.f32 0.0, %v6080
        %v6082 = vpop.f32.mrf.mxu0
        %6083 = vmatprep.mubr.f32.mxu0 0.0
        %6084 = vmatmul.mubr.f32.gmra.mxu0 %v5530
        %v6085 = vpop.f32.mrf.mxu0
        %v6086 = vadd.f32 0.0, %v6085
        %v6087 = vpop.f32.mrf.mxu0
        %6088 = vmatprep.mubr.f32.mxu0 0.0
        %6089 = vmatmul.mubr.f32.gmra.mxu0 %v5531
        %v6090 = vpop.f32.mrf.mxu0
        %v6091 = vadd.f32 0.0, %v6090
        %v6092 = vpop.f32.mrf.mxu0
        %6093 = vmatprep.mubr.f32.mxu0 0.0
        %6094 = vmatmul.mubr.f32.gmra.mxu0 %v5532
        %v6095 = vpop.f32.mrf.mxu0
        %v6096 = vadd.f32 0.0, %v6095
        %v6097 = vpop.f32.mrf.mxu0
        %6098 = vmatprep.mubr.f32.mxu0 0.0
        %6099 = vmatmul.mubr.f32.gmra.mxu0 %v5533
        %v6100 = vpop.f32.mrf.mxu0
        %v6101 = vadd.f32 0.0, %v6100
        %v6102 = vpop.f32.mrf.mxu0
        %6103 = vmatprep.mubr.f32.mxu0 0.0
        %6104 = vmatmul.mubr.f32.gmra.mxu0 %v5534
        %v6105 = vpop.f32.mrf.mxu0
        %v6106 = vadd.f32 0.0, %v6105
        %v6107 = vpop.f32.mrf.mxu0
        %6108 = vmatprep.mubr.f32.mxu0 0.0
        %6109 = vmatmul.mubr.f32.gmra.mxu0 %v5535
        %v6110 = vpop.f32.mrf.mxu0
        %v6111 = vadd.f32 0.0, %v6110
        %v6112 = vpop.f32.mrf.mxu0
        %6113 = vmatprep.mubr.f32.mxu0 0.0
        %6114 = vmatmul.mubr.f32.gmra.mxu0 %v5536
        %v6115 = vpop.f32.mrf.mxu0
        %v6116 = vadd.f32 0.0, %v6115
        %v6117 = vpop.f32.mrf.mxu0
        %6118 = vmatprep.mubr.f32.mxu0 0.0
        %6119 = vmatmul.mubr.f32.gmra.mxu0 %v5537
        %v6120 = vpop.f32.mrf.mxu0
        %v6121 = vadd.f32 0.0, %v6120
        %v6122 = vpop.f32.mrf.mxu0
        %6123 = vmatprep.mubr.f32.mxu0 0.0
        %6124 = vmatmul.mubr.f32.gmra.mxu0 %v5538
        %v6125 = vpop.f32.mrf.mxu0
        %v6126 = vadd.f32 0.0, %v6125
        %v6127 = vpop.f32.mrf.mxu0
        %6128 = vmatprep.mubr.f32.mxu0 0.0
        %6129 = vmatmul.mubr.f32.gmra.mxu0 %v5539
        %v6130 = vpop.f32.mrf.mxu0
        %v6131 = vadd.f32 0.0, %v6130
        %v6132 = vpop.f32.mrf.mxu0
        %6133 = vmatprep.mubr.f32.mxu0 0.0
        %6134 = vmatmul.mubr.f32.gmra.mxu0 %v5540
        %v6135 = vpop.f32.mrf.mxu0
        %v6136 = vadd.f32 0.0, %v6135
        %v6137 = vpop.f32.mrf.mxu0
        %6138 = vmatprep.mubr.f32.mxu0 0.0
        %6139 = vmatmul.mubr.f32.gmra.mxu0 %v5541
        %v6140 = vpop.f32.mrf.mxu0
        %v6141 = vadd.f32 0.0, %v6140
        %v6142 = vpop.f32.mrf.mxu0
        %6143 = vmatprep.mubr.f32.mxu0 0.0
        %6144 = vmatmul.mubr.f32.gmra.mxu0 %v5542
        %v6145 = vpop.f32.mrf.mxu0
        %v6146 = vadd.f32 0.0, %v6145
        %v6147 = vpop.f32.mrf.mxu0
        %6148 = vmatprep.mubr.f32.mxu0 0.0
        %6149 = vmatmul.mubr.f32.gmra.mxu0 %v5543
        %v6150 = vpop.f32.mrf.mxu0
        %v6151 = vadd.f32 0.0, %v6150
        %v6152 = vpop.f32.mrf.mxu0
        %6153 = vmatprep.mubr.f32.mxu0 0.0
        %6154 = vmatmul.mubr.f32.gmra.mxu0 %v5544
        %v6155 = vpop.f32.mrf.mxu0
        %v6156 = vadd.f32 0.0, %v6155
        %v6157 = vpop.f32.mrf.mxu0
        %6158 = vdwg.mxu0
        %v6159 = vadd.f32 %v5885, %v6001
        %v6160 = vadd.f32 %v5886, %v6006
        %v6161 = vadd.f32 %v5887, %v6011
        %v6162 = vadd.f32 %v5888, %v6016
        %v6163 = vadd.f32 %v5889, %v6021
        %v6164 = vadd.f32 %v5890, %v6026
        %v6165 = vadd.f32 %v5891, %v6031
        %v6166 = vadd.f32 %v5892, %v6036
        %v6167 = vadd.f32 %v5893, %v6041
        %v6168 = vadd.f32 %v5894, %v6046
        %v6169 = vadd.f32 %v5895, %v6051
        %v6170 = vadd.f32 %v5896, %v6056
        %v6171 = vadd.f32 %v5897, %v6061
        %v6172 = vadd.f32 %v5898, %v6066
        %v6173 = vadd.f32 %v5899, %v6071
        %v6174 = vadd.f32 %v5900, %v6076
        %v6175 = vadd.f32 %v5901, %v6081
        %v6176 = vadd.f32 %v5902, %v6086
        %v6177 = vadd.f32 %v5903, %v6091
        %v6178 = vadd.f32 %v5904, %v6096
        %v6179 = vadd.f32 %v5905, %v6101
        %v6180 = vadd.f32 %v5906, %v6106
        %v6181 = vadd.f32 %v5907, %v6111
        %v6182 = vadd.f32 %v5908, %v6116
        %v6183 = vadd.f32 %v5909, %v6121
        %v6184 = vadd.f32 %v5910, %v6126
        %v6185 = vadd.f32 %v5911, %v6131
        %v6186 = vadd.f32 %v5912, %v6136
        %v6187 = vadd.f32 %v5913, %v6141
        %v6188 = vadd.f32 %v5914, %v6146
        %v6189 = vadd.f32 %v5915, %v6151
        %v6190 = vadd.f32 %v5916, %v6156
        %6191 = vst [vmem:[#allocation4] sm:$0xff] %v6159
        %6192 = vst [vmem:[#allocation4 + $0x8] sm:$0xff] %v6160
        %6193 = vst [vmem:[#allocation4 + $0x10] sm:$0xff] %v6161
        %6194 = vst [vmem:[#allocation4 + $0x18] sm:$0xff] %v6162
        %6195 = vst [vmem:[#allocation4 + $0x20] sm:$0xff] %v6163
        %6196 = vst [vmem:[#allocation4 + $0x28] sm:$0xff] %v6164
        %6197 = vst [vmem:[#allocation4 + $0x30] sm:$0xff] %v6165
        %6198 = vst [vmem:[#allocation4 + $0x38] sm:$0xff] %v6166
        %6199 = vst [vmem:[#allocation4 + $0x40] sm:$0xff] %v6167
        %6200 = vst [vmem:[#allocation4 + $0x48] sm:$0xff] %v6168
        %6201 = vst [vmem:[#allocation4 + $0x50] sm:$0xff] %v6169
        %6202 = vst [vmem:[#allocation4 + $0x58] sm:$0xff] %v6170
        %6203 = vst [vmem:[#allocation4 + $0x60] sm:$0xff] %v6171
        %6204 = vst [vmem:[#allocation4 + $0x68] sm:$0xff] %v6172
        %6205 = vst [vmem:[#allocation4 + $0x70] sm:$0xff] %v6173
        %6206 = vst [vmem:[#allocation4 + $0x78] sm:$0xff] %v6174
        %6207 = vst [vmem:[#allocation4 + $0x80] sm:$0xff] %v6175
        %6208 = vst [vmem:[#allocation4 + $0x88] sm:$0xff] %v6176
        %6209 = vst [vmem:[#allocation4 + $0x90] sm:$0xff] %v6177
        %6210 = vst [vmem:[#allocation4 + $0x98] sm:$0xff] %v6178
        %6211 = vst [vmem:[#allocation4 + $0xa0] sm:$0xff] %v6179
        %6212 = vst [vmem:[#allocation4 + $0xa8] sm:$0xff] %v6180
        %6213 = vst [vmem:[#allocation4 + $0xb0] sm:$0xff] %v6181
        %6214 = vst [vmem:[#allocation4 + $0xb8] sm:$0xff] %v6182
        %6215 = vst [vmem:[#allocation4 + $0xc0] sm:$0xff] %v6183
        %6216 = vst [vmem:[#allocation4 + $0xc8] sm:$0xff] %v6184
        %6217 = vst [vmem:[#allocation4 + $0xd0] sm:$0xff] %v6185
        %6218 = vst [vmem:[#allocation4 + $0xd8] sm:$0xff] %v6186
        %6219 = vst [vmem:[#allocation4 + $0xe0] sm:$0xff] %v6187
        %6220 = vst [vmem:[#allocation4 + $0xe8] sm:$0xff] %v6188
        %6221 = vst [vmem:[#allocation4 + $0xf0] sm:$0xff] %v6189
        %6222 = vst [vmem:[#allocation4 + $0xf8] sm:$0xff] %v6190
        %v6223 = vld [vmem:[#allocation4] sm:$0xff]
        %v6224 = vld [vmem:[#allocation4 + $0x8] sm:$0xff]
        %v6225 = vld [vmem:[#allocation4 + $0x10] sm:$0xff]
        %v6226 = vld [vmem:[#allocation4 + $0x18] sm:$0xff]
        %v6227 = vld [vmem:[#allocation4 + $0x20] sm:$0xff]
        %v6228 = vld [vmem:[#allocation4 + $0x28] sm:$0xff]
        %v6229 = vld [vmem:[#allocation4 + $0x30] sm:$0xff]
        %v6230 = vld [vmem:[#allocation4 + $0x38] sm:$0xff]
        %v6231 = vld [vmem:[#allocation4 + $0x40] sm:$0xff]
        %v6232 = vld [vmem:[#allocation4 + $0x48] sm:$0xff]
        %v6233 = vld [vmem:[#allocation4 + $0x50] sm:$0xff]
        %v6234 = vld [vmem:[#allocation4 + $0x58] sm:$0xff]
        %v6235 = vld [vmem:[#allocation4 + $0x60] sm:$0xff]
        %v6236 = vld [vmem:[#allocation4 + $0x68] sm:$0xff]
        %v6237 = vld [vmem:[#allocation4 + $0x70] sm:$0xff]
        %v6238 = vld [vmem:[#allocation4 + $0x78] sm:$0xff]
        %v6239 = vld [vmem:[#allocation4 + $0x80] sm:$0xff]
        %v6240 = vld [vmem:[#allocation4 + $0x88] sm:$0xff]
        %v6241 = vld [vmem:[#allocation4 + $0x90] sm:$0xff]
        %v6242 = vld [vmem:[#allocation4 + $0x98] sm:$0xff]
        %v6243 = vld [vmem:[#allocation4 + $0xa0] sm:$0xff]
        %v6244 = vld [vmem:[#allocation4 + $0xa8] sm:$0xff]
        %v6245 = vld [vmem:[#allocation4 + $0xb0] sm:$0xff]
        %v6246 = vld [vmem:[#allocation4 + $0xb8] sm:$0xff]
        %v6247 = vld [vmem:[#allocation4 + $0xc0] sm:$0xff]
        %v6248 = vld [vmem:[#allocation4 + $0xc8] sm:$0xff]
        %v6249 = vld [vmem:[#allocation4 + $0xd0] sm:$0xff]
        %v6250 = vld [vmem:[#allocation4 + $0xd8] sm:$0xff]
        %v6251 = vld [vmem:[#allocation4 + $0xe0] sm:$0xff]
        %v6252 = vld [vmem:[#allocation4 + $0xe8] sm:$0xff]
        %v6253 = vld [vmem:[#allocation4 + $0xf0] sm:$0xff]
        %v6254 = vld [vmem:[#allocation4 + $0xf8] sm:$0xff]
        %s6255 = scalar_lea.vmem [#allocation10], 896
        %v6256 = vld [vmem:[%s6255] sm:$0xff]
        %v6257 = vld [vmem:[%s6255 + $0x8] sm:$0xff]
        %v6258 = vld [vmem:[%s6255 + $0x10] sm:$0xff]
        %v6259 = vld [vmem:[%s6255 + $0x18] sm:$0xff]
        %v6260 = vld [vmem:[%s6255 + $0x20] sm:$0xff]
        %v6261 = vld [vmem:[%s6255 + $0x28] sm:$0xff]
        %v6262 = vld [vmem:[%s6255 + $0x30] sm:$0xff]
        %v6263 = vld [vmem:[%s6255 + $0x38] sm:$0xff]
        %v6264 = vld [vmem:[%s6255 + $0x40] sm:$0xff]
        %v6265 = vld [vmem:[%s6255 + $0x48] sm:$0xff]
        %v6266 = vld [vmem:[%s6255 + $0x50] sm:$0xff]
        %v6267 = vld [vmem:[%s6255 + $0x58] sm:$0xff]
        %v6268 = vld [vmem:[%s6255 + $0x60] sm:$0xff]
        %v6269 = vld [vmem:[%s6255 + $0x68] sm:$0xff]
        %v6270 = vld [vmem:[%s6255 + $0x70] sm:$0xff]
        %v6271 = vld [vmem:[%s6255 + $0x78] sm:$0xff]
        %6272 = vmatprep.subr.mxu0 0.0
        %6273 = vmatpush1.msra.mxu0 %v6271
        %6274 = vmatprep.subr.mxu0 0.0
        %6275 = vmatpush1.msra.mxu0 %v6270
        %6276 = vmatprep.subr.mxu0 0.0
        %6277 = vmatpush1.msra.mxu0 %v6269
        %6278 = vmatprep.subr.mxu0 0.0
        %6279 = vmatpush1.msra.mxu0 %v6268
        %6280 = vmatprep.subr.mxu0 0.0
        %6281 = vmatpush1.msra.mxu0 %v6267
        %6282 = vmatprep.subr.mxu0 0.0
        %6283 = vmatpush1.msra.mxu0 %v6266
        %6284 = vmatprep.subr.mxu0 0.0
        %6285 = vmatpush1.msra.mxu0 %v6265
        %6286 = vmatprep.subr.mxu0 0.0
        %6287 = vmatpush1.msra.mxu0 %v6264
        %6288 = vmatprep.subr.mxu0 0.0
        %6289 = vmatpush1.msra.mxu0 %v6263
        %6290 = vmatprep.subr.mxu0 0.0
        %6291 = vmatpush1.msra.mxu0 %v6262
        %6292 = vmatprep.subr.mxu0 0.0
        %6293 = vmatpush1.msra.mxu0 %v6261
        %6294 = vmatprep.subr.mxu0 0.0
        %6295 = vmatpush1.msra.mxu0 %v6260
        %6296 = vmatprep.subr.mxu0 0.0
        %6297 = vmatpush1.msra.mxu0 %v6259
        %6298 = vmatprep.subr.mxu0 0.0
        %6299 = vmatpush1.msra.mxu0 %v6258
        %6300 = vmatprep.subr.mxu0 0.0
        %6301 = vmatpush1.msra.mxu0 %v6257
        %6302 = vmatprep.subr.mxu0 0.0
        %6303 = vmatpush1.msra.mxu0 %v6256
        %6304 = vmatprep.subr.mxu0 0.0
        %6305 = vmatpush2.msra.mxu0 0.0
        %6306 = vmatprep.subr.mxu0 0.0
        %6307 = vmatpush2.msra.mxu0 0.0
        %6308 = vmatprep.subr.mxu0 0.0
        %6309 = vmatpush2.msra.mxu0 0.0
        %6310 = vmatprep.subr.mxu0 0.0
        %6311 = vmatpush2.msra.mxu0 0.0
        %6312 = vmatprep.subr.mxu0 0.0
        %6313 = vmatpush2.msra.mxu0 0.0
        %6314 = vmatprep.subr.mxu0 0.0
        %6315 = vmatpush2.msra.mxu0 0.0
        %6316 = vmatprep.subr.mxu0 0.0
        %6317 = vmatpush2.msra.mxu0 0.0
        %6318 = vmatprep.subr.mxu0 0.0
        %6319 = vmatpush2.msra.mxu0 0.0
        %6320 = vmatprep.subr.mxu0 0.0
        %6321 = vmatpush2.msra.mxu0 0.0
        %6322 = vmatprep.subr.mxu0 0.0
        %6323 = vmatpush2.msra.mxu0 0.0
        %6324 = vmatprep.subr.mxu0 0.0
        %6325 = vmatpush2.msra.mxu0 0.0
        %6326 = vmatprep.subr.mxu0 0.0
        %6327 = vmatpush2.msra.mxu0 0.0
        %6328 = vmatprep.subr.mxu0 0.0
        %6329 = vmatpush2.msra.mxu0 0.0
        %6330 = vmatprep.subr.mxu0 0.0
        %6331 = vmatpush2.msra.mxu0 0.0
        %6332 = vmatprep.subr.mxu0 0.0
        %6333 = vmatpush2.msra.mxu0 0.0
        %6334 = vmatprep.subr.mxu0 0.0
        %6335 = vmatpush2.msra.mxu0 0.0
        %6336 = vmatprep.mubr.f32.mxu0 0.0
        %6337 = vmatmul.mubr.f32.gmra.mxu0 %v5515
        %v6338 = vpop.f32.mrf.mxu0
        %v6339 = vadd.f32 0.0, %v6338
        %v6340 = vpop.f32.mrf.mxu0
        %6341 = vmatprep.mubr.f32.mxu0 0.0
        %6342 = vmatmul.mubr.f32.gmra.mxu0 %v5516
        %v6343 = vpop.f32.mrf.mxu0
        %v6344 = vadd.f32 0.0, %v6343
        %v6345 = vpop.f32.mrf.mxu0
        %6346 = vmatprep.mubr.f32.mxu0 0.0
        %6347 = vmatmul.mubr.f32.gmra.mxu0 %v5517
        %v6348 = vpop.f32.mrf.mxu0
        %v6349 = vadd.f32 0.0, %v6348
        %v6350 = vpop.f32.mrf.mxu0
        %6351 = vmatprep.mubr.f32.mxu0 0.0
        %6352 = vmatmul.mubr.f32.gmra.mxu0 %v5518
        %v6353 = vpop.f32.mrf.mxu0
        %v6354 = vadd.f32 0.0, %v6353
        %v6355 = vpop.f32.mrf.mxu0
        %6356 = vmatprep.mubr.f32.mxu0 0.0
        %6357 = vmatmul.mubr.f32.gmra.mxu0 %v5519
        %v6358 = vpop.f32.mrf.mxu0
        %v6359 = vadd.f32 0.0, %v6358
        %v6360 = vpop.f32.mrf.mxu0
        %6361 = vmatprep.mubr.f32.mxu0 0.0
        %6362 = vmatmul.mubr.f32.gmra.mxu0 %v5520
        %v6363 = vpop.f32.mrf.mxu0
        %v6364 = vadd.f32 0.0, %v6363
        %v6365 = vpop.f32.mrf.mxu0
        %6366 = vmatprep.mubr.f32.mxu0 0.0
        %6367 = vmatmul.mubr.f32.gmra.mxu0 %v5521
        %v6368 = vpop.f32.mrf.mxu0
        %v6369 = vadd.f32 0.0, %v6368
        %v6370 = vpop.f32.mrf.mxu0
        %6371 = vmatprep.mubr.f32.mxu0 0.0
        %6372 = vmatmul.mubr.f32.gmra.mxu0 %v5522
        %v6373 = vpop.f32.mrf.mxu0
        %v6374 = vadd.f32 0.0, %v6373
        %v6375 = vpop.f32.mrf.mxu0
        %6376 = vmatprep.mubr.f32.mxu0 0.0
        %6377 = vmatmul.mubr.f32.gmra.mxu0 %v5523
        %v6378 = vpop.f32.mrf.mxu0
        %v6379 = vadd.f32 0.0, %v6378
        %v6380 = vpop.f32.mrf.mxu0
        %6381 = vmatprep.mubr.f32.mxu0 0.0
        %6382 = vmatmul.mubr.f32.gmra.mxu0 %v5524
        %v6383 = vpop.f32.mrf.mxu0
        %v6384 = vadd.f32 0.0, %v6383
        %v6385 = vpop.f32.mrf.mxu0
        %6386 = vmatprep.mubr.f32.mxu0 0.0
        %6387 = vmatmul.mubr.f32.gmra.mxu0 %v5525
        %v6388 = vpop.f32.mrf.mxu0
        %v6389 = vadd.f32 0.0, %v6388
        %v6390 = vpop.f32.mrf.mxu0
        %6391 = vmatprep.mubr.f32.mxu0 0.0
        %6392 = vmatmul.mubr.f32.gmra.mxu0 %v5526
        %v6393 = vpop.f32.mrf.mxu0
        %v6394 = vadd.f32 0.0, %v6393
        %v6395 = vpop.f32.mrf.mxu0
        %6396 = vmatprep.mubr.f32.mxu0 0.0
        %6397 = vmatmul.mubr.f32.gmra.mxu0 %v5527
        %v6398 = vpop.f32.mrf.mxu0
        %v6399 = vadd.f32 0.0, %v6398
        %v6400 = vpop.f32.mrf.mxu0
        %6401 = vmatprep.mubr.f32.mxu0 0.0
        %6402 = vmatmul.mubr.f32.gmra.mxu0 %v5528
        %v6403 = vpop.f32.mrf.mxu0
        %v6404 = vadd.f32 0.0, %v6403
        %v6405 = vpop.f32.mrf.mxu0
        %6406 = vmatprep.mubr.f32.mxu0 0.0
        %6407 = vmatmul.mubr.f32.gmra.mxu0 %v5529
        %v6408 = vpop.f32.mrf.mxu0
        %v6409 = vadd.f32 0.0, %v6408
        %v6410 = vpop.f32.mrf.mxu0
        %6411 = vmatprep.mubr.f32.mxu0 0.0
        %6412 = vmatmul.mubr.f32.gmra.mxu0 %v5530
        %v6413 = vpop.f32.mrf.mxu0
        %v6414 = vadd.f32 0.0, %v6413
        %v6415 = vpop.f32.mrf.mxu0
        %6416 = vmatprep.mubr.f32.mxu0 0.0
        %6417 = vmatmul.mubr.f32.gmra.mxu0 %v5531
        %v6418 = vpop.f32.mrf.mxu0
        %v6419 = vadd.f32 0.0, %v6418
        %v6420 = vpop.f32.mrf.mxu0
        %6421 = vmatprep.mubr.f32.mxu0 0.0
        %6422 = vmatmul.mubr.f32.gmra.mxu0 %v5532
        %v6423 = vpop.f32.mrf.mxu0
        %v6424 = vadd.f32 0.0, %v6423
        %v6425 = vpop.f32.mrf.mxu0
        %6426 = vmatprep.mubr.f32.mxu0 0.0
        %6427 = vmatmul.mubr.f32.gmra.mxu0 %v5533
        %v6428 = vpop.f32.mrf.mxu0
        %v6429 = vadd.f32 0.0, %v6428
        %v6430 = vpop.f32.mrf.mxu0
        %6431 = vmatprep.mubr.f32.mxu0 0.0
        %6432 = vmatmul.mubr.f32.gmra.mxu0 %v5534
        %v6433 = vpop.f32.mrf.mxu0
        %v6434 = vadd.f32 0.0, %v6433
        %v6435 = vpop.f32.mrf.mxu0
        %6436 = vmatprep.mubr.f32.mxu0 0.0
        %6437 = vmatmul.mubr.f32.gmra.mxu0 %v5535
        %v6438 = vpop.f32.mrf.mxu0
        %v6439 = vadd.f32 0.0, %v6438
        %v6440 = vpop.f32.mrf.mxu0
        %6441 = vmatprep.mubr.f32.mxu0 0.0
        %6442 = vmatmul.mubr.f32.gmra.mxu0 %v5536
        %v6443 = vpop.f32.mrf.mxu0
        %v6444 = vadd.f32 0.0, %v6443
        %v6445 = vpop.f32.mrf.mxu0
        %6446 = vmatprep.mubr.f32.mxu0 0.0
        %6447 = vmatmul.mubr.f32.gmra.mxu0 %v5537
        %v6448 = vpop.f32.mrf.mxu0
        %v6449 = vadd.f32 0.0, %v6448
        %v6450 = vpop.f32.mrf.mxu0
        %6451 = vmatprep.mubr.f32.mxu0 0.0
        %6452 = vmatmul.mubr.f32.gmra.mxu0 %v5538
        %v6453 = vpop.f32.mrf.mxu0
        %v6454 = vadd.f32 0.0, %v6453
        %v6455 = vpop.f32.mrf.mxu0
        %6456 = vmatprep.mubr.f32.mxu0 0.0
        %6457 = vmatmul.mubr.f32.gmra.mxu0 %v5539
        %v6458 = vpop.f32.mrf.mxu0
        %v6459 = vadd.f32 0.0, %v6458
        %v6460 = vpop.f32.mrf.mxu0
        %6461 = vmatprep.mubr.f32.mxu0 0.0
        %6462 = vmatmul.mubr.f32.gmra.mxu0 %v5540
        %v6463 = vpop.f32.mrf.mxu0
        %v6464 = vadd.f32 0.0, %v6463
        %v6465 = vpop.f32.mrf.mxu0
        %6466 = vmatprep.mubr.f32.mxu0 0.0
        %6467 = vmatmul.mubr.f32.gmra.mxu0 %v5541
        %v6468 = vpop.f32.mrf.mxu0
        %v6469 = vadd.f32 0.0, %v6468
        %v6470 = vpop.f32.mrf.mxu0
        %6471 = vmatprep.mubr.f32.mxu0 0.0
        %6472 = vmatmul.mubr.f32.gmra.mxu0 %v5542
        %v6473 = vpop.f32.mrf.mxu0
        %v6474 = vadd.f32 0.0, %v6473
        %v6475 = vpop.f32.mrf.mxu0
        %6476 = vmatprep.mubr.f32.mxu0 0.0
        %6477 = vmatmul.mubr.f32.gmra.mxu0 %v5543
        %v6478 = vpop.f32.mrf.mxu0
        %v6479 = vadd.f32 0.0, %v6478
        %v6480 = vpop.f32.mrf.mxu0
        %6481 = vmatprep.mubr.f32.mxu0 0.0
        %6482 = vmatmul.mubr.f32.gmra.mxu0 %v5544
        %v6483 = vpop.f32.mrf.mxu0
        %v6484 = vadd.f32 0.0, %v6483
        %v6485 = vpop.f32.mrf.mxu0
        %6486 = vmatprep.mubr.f32.mxu0 0.0
        %6487 = vmatmul.mubr.f32.gmra.mxu0 %v5545
        %v6488 = vpop.f32.mrf.mxu0
        %v6489 = vadd.f32 0.0, %v6488
        %v6490 = vpop.f32.mrf.mxu0
        %6491 = vmatprep.mubr.f32.mxu0 0.0
        %6492 = vmatmul.mubr.f32.gmra.mxu0 %v5546
        %v6493 = vpop.f32.mrf.mxu0
        %v6494 = vadd.f32 0.0, %v6493
        %v6495 = vpop.f32.mrf.mxu0
        %6496 = vdwg.mxu0
        %v6497 = vadd.f32 %v6223, %v6339
        %v6498 = vadd.f32 %v6224, %v6344
        %v6499 = vadd.f32 %v6225, %v6349
        %v6500 = vadd.f32 %v6226, %v6354
        %v6501 = vadd.f32 %v6227, %v6359
        %v6502 = vadd.f32 %v6228, %v6364
        %v6503 = vadd.f32 %v6229, %v6369
        %v6504 = vadd.f32 %v6230, %v6374
        %v6505 = vadd.f32 %v6231, %v6379
        %v6506 = vadd.f32 %v6232, %v6384
        %v6507 = vadd.f32 %v6233, %v6389
        %v6508 = vadd.f32 %v6234, %v6394
        %v6509 = vadd.f32 %v6235, %v6399
        %v6510 = vadd.f32 %v6236, %v6404
        %v6511 = vadd.f32 %v6237, %v6409
        %v6512 = vadd.f32 %v6238, %v6414
        %v6513 = vadd.f32 %v6239, %v6419
        %v6514 = vadd.f32 %v6240, %v6424
        %v6515 = vadd.f32 %v6241, %v6429
        %v6516 = vadd.f32 %v6242, %v6434
        %v6517 = vadd.f32 %v6243, %v6439
        %v6518 = vadd.f32 %v6244, %v6444
        %v6519 = vadd.f32 %v6245, %v6449
        %v6520 = vadd.f32 %v6246, %v6454
        %v6521 = vadd.f32 %v6247, %v6459
        %v6522 = vadd.f32 %v6248, %v6464
        %v6523 = vadd.f32 %v6249, %v6469
        %v6524 = vadd.f32 %v6250, %v6474
        %v6525 = vadd.f32 %v6251, %v6479
        %v6526 = vadd.f32 %v6252, %v6484
        %v6527 = vadd.f32 %v6253, %v6489
        %v6528 = vadd.f32 %v6254, %v6494
        %6529 = vst [vmem:[#allocation4] sm:$0xff] %v6497
        %6530 = vst [vmem:[#allocation4 + $0x8] sm:$0xff] %v6498
        %6531 = vst [vmem:[#allocation4 + $0x10] sm:$0xff] %v6499
        %6532 = vst [vmem:[#allocation4 + $0x18] sm:$0xff] %v6500
        %6533 = vst [vmem:[#allocation4 + $0x20] sm:$0xff] %v6501
        %6534 = vst [vmem:[#allocation4 + $0x28] sm:$0xff] %v6502
        %6535 = vst [vmem:[#allocation4 + $0x30] sm:$0xff] %v6503
        %6536 = vst [vmem:[#allocation4 + $0x38] sm:$0xff] %v6504
        %6537 = vst [vmem:[#allocation4 + $0x40] sm:$0xff] %v6505
        %6538 = vst [vmem:[#allocation4 + $0x48] sm:$0xff] %v6506
        %6539 = vst [vmem:[#allocation4 + $0x50] sm:$0xff] %v6507
        %6540 = vst [vmem:[#allocation4 + $0x58] sm:$0xff] %v6508
        %6541 = vst [vmem:[#allocation4 + $0x60] sm:$0xff] %v6509
        %6542 = vst [vmem:[#allocation4 + $0x68] sm:$0xff] %v6510
        %6543 = vst [vmem:[#allocation4 + $0x70] sm:$0xff] %v6511
        %6544 = vst [vmem:[#allocation4 + $0x78] sm:$0xff] %v6512
        %6545 = vst [vmem:[#allocation4 + $0x80] sm:$0xff] %v6513
        %6546 = vst [vmem:[#allocation4 + $0x88] sm:$0xff] %v6514
        %6547 = vst [vmem:[#allocation4 + $0x90] sm:$0xff] %v6515
        %6548 = vst [vmem:[#allocation4 + $0x98] sm:$0xff] %v6516
        %6549 = vst [vmem:[#allocation4 + $0xa0] sm:$0xff] %v6517
        %6550 = vst [vmem:[#allocation4 + $0xa8] sm:$0xff] %v6518
        %6551 = vst [vmem:[#allocation4 + $0xb0] sm:$0xff] %v6519
        %6552 = vst [vmem:[#allocation4 + $0xb8] sm:$0xff] %v6520
        %6553 = vst [vmem:[#allocation4 + $0xc0] sm:$0xff] %v6521
        %6554 = vst [vmem:[#allocation4 + $0xc8] sm:$0xff] %v6522
        %6555 = vst [vmem:[#allocation4 + $0xd0] sm:$0xff] %v6523
        %6556 = vst [vmem:[#allocation4 + $0xd8] sm:$0xff] %v6524
        %6557 = vst [vmem:[#allocation4 + $0xe0] sm:$0xff] %v6525
        %6558 = vst [vmem:[#allocation4 + $0xe8] sm:$0xff] %v6526
        %6559 = vst [vmem:[#allocation4 + $0xf0] sm:$0xff] %v6527
        %6560 = vst [vmem:[#allocation4 + $0xf8] sm:$0xff] %v6528
        %v6561 = vld [vmem:[#allocation3 + $0x2] sm:$0xff]
        %v6562 = vld [vmem:[#allocation3 + $0xa] sm:$0xff]
        %v6563 = vld [vmem:[#allocation3 + $0x1a] sm:$0xff]
        %v6564 = vld [vmem:[#allocation3 + $0x22] sm:$0xff]
        %v6565 = vld [vmem:[#allocation3 + $0x32] sm:$0xff]
        %v6566 = vld [vmem:[#allocation3 + $0x3a] sm:$0xff]
        %v6567 = vld [vmem:[#allocation3 + $0x4a] sm:$0xff]
        %v6568 = vld [vmem:[#allocation3 + $0x52] sm:$0xff]
        %v6569 = vld [vmem:[#allocation3 + $0x62] sm:$0xff]
        %v6570 = vld [vmem:[#allocation3 + $0x6a] sm:$0xff]
        %v6571 = vld [vmem:[#allocation3 + $0x7a] sm:$0xff]
        %v6572 = vld [vmem:[#allocation3 + $0x82] sm:$0xff]
        %v6573 = vld [vmem:[#allocation3 + $0x92] sm:$0xff]
        %v6574 = vld [vmem:[#allocation3 + $0x9a] sm:$0xff]
        %v6575 = vld [vmem:[#allocation3 + $0xaa] sm:$0xff]
        %v6576 = vld [vmem:[#allocation3 + $0xb2] sm:$0xff]
        %v6577 = vld [vmem:[#allocation3 + $0xc2] sm:$0xff]
        %v6578 = vld [vmem:[#allocation3 + $0xca] sm:$0xff]
        %v6579 = vld [vmem:[#allocation3 + $0xda] sm:$0xff]
        %v6580 = vld [vmem:[#allocation3 + $0xe2] sm:$0xff]
        %v6581 = vld [vmem:[#allocation3 + $0xf2] sm:$0xff]
        %v6582 = vld [vmem:[#allocation3 + $0xfa] sm:$0xff]
        %v6583 = vld [vmem:[#allocation3 + $0x10a] sm:$0xff]
        %v6584 = vld [vmem:[#allocation3 + $0x112] sm:$0xff]
        %v6585 = vld [vmem:[#allocation3 + $0x122] sm:$0xff]
        %v6586 = vld [vmem:[#allocation3 + $0x12a] sm:$0xff]
        %v6587 = vld [vmem:[#allocation3 + $0x13a] sm:$0xff]
        %v6588 = vld [vmem:[#allocation3 + $0x142] sm:$0xff]
        %v6589 = vld [vmem:[#allocation3 + $0x152] sm:$0xff]
        %v6590 = vld [vmem:[#allocation3 + $0x15a] sm:$0xff]
        %v6591 = vld [vmem:[#allocation3 + $0x16a] sm:$0xff]
        %v6592 = vld [vmem:[#allocation3 + $0x172] sm:$0xff]
        %v6593 = vld [vmem:[#allocation3 + $0x182] sm:$0xff]
        %v6594 = vld [vmem:[#allocation3 + $0x18a] sm:$0xff]
        %v6595 = vld [vmem:[#allocation3 + $0x19a] sm:$0xff]
        %v6596 = vld [vmem:[#allocation3 + $0x1a2] sm:$0xff]
        %v6597 = vld [vmem:[#allocation4] sm:$0xff]
        %v6598 = vld [vmem:[#allocation4 + $0x8] sm:$0xff]
        %v6599 = vld [vmem:[#allocation4 + $0x10] sm:$0xff]
        %v6600 = vld [vmem:[#allocation4 + $0x18] sm:$0xff]
        %v6601 = vld [vmem:[#allocation4 + $0x20] sm:$0xff]
        %v6602 = vld [vmem:[#allocation4 + $0x28] sm:$0xff]
        %v6603 = vld [vmem:[#allocation4 + $0x30] sm:$0xff]
        %v6604 = vld [vmem:[#allocation4 + $0x38] sm:$0xff]
        %v6605 = vld [vmem:[#allocation4 + $0x40] sm:$0xff]
        %v6606 = vld [vmem:[#allocation4 + $0x48] sm:$0xff]
        %v6607 = vld [vmem:[#allocation4 + $0x50] sm:$0xff]
        %v6608 = vld [vmem:[#allocation4 + $0x58] sm:$0xff]
        %v6609 = vld [vmem:[#allocation4 + $0x60] sm:$0xff]
        %v6610 = vld [vmem:[#allocation4 + $0x68] sm:$0xff]
        %v6611 = vld [vmem:[#allocation4 + $0x70] sm:$0xff]
        %v6612 = vld [vmem:[#allocation4 + $0x78] sm:$0xff]
        %v6613 = vld [vmem:[#allocation4 + $0x80] sm:$0xff]
        %v6614 = vld [vmem:[#allocation4 + $0x88] sm:$0xff]
        %v6615 = vld [vmem:[#allocation4 + $0x90] sm:$0xff]
        %v6616 = vld [vmem:[#allocation4 + $0x98] sm:$0xff]
        %v6617 = vld [vmem:[#allocation4 + $0xa0] sm:$0xff]
        %v6618 = vld [vmem:[#allocation4 + $0xa8] sm:$0xff]
        %v6619 = vld [vmem:[#allocation4 + $0xb0] sm:$0xff]
        %v6620 = vld [vmem:[#allocation4 + $0xb8] sm:$0xff]
        %v6621 = vld [vmem:[#allocation4 + $0xc0] sm:$0xff]
        %v6622 = vld [vmem:[#allocation4 + $0xc8] sm:$0xff]
        %v6623 = vld [vmem:[#allocation4 + $0xd0] sm:$0xff]
        %v6624 = vld [vmem:[#allocation4 + $0xd8] sm:$0xff]
        %v6625 = vld [vmem:[#allocation4 + $0xe0] sm:$0xff]
        %v6626 = vld [vmem:[#allocation4 + $0xe8] sm:$0xff]
        %v6627 = vld [vmem:[#allocation4 + $0xf0] sm:$0xff]
        %v6628 = vld [vmem:[#allocation4 + $0xf8] sm:$0xff]
        %s6629 = scalar_lea.vmem [#allocation10], 256
        %v6630 = vld [vmem:[%s6629] sm:$0xff]
        %v6631 = vld [vmem:[%s6629 + $0x8] sm:$0xff]
        %v6632 = vld [vmem:[%s6629 + $0x10] sm:$0xff]
        %v6633 = vld [vmem:[%s6629 + $0x18] sm:$0xff]
        %v6634 = vld [vmem:[%s6629 + $0x20] sm:$0xff]
        %v6635 = vld [vmem:[%s6629 + $0x28] sm:$0xff]
        %v6636 = vld [vmem:[%s6629 + $0x30] sm:$0xff]
        %v6637 = vld [vmem:[%s6629 + $0x38] sm:$0xff]
        %v6638 = vld [vmem:[%s6629 + $0x40] sm:$0xff]
        %v6639 = vld [vmem:[%s6629 + $0x48] sm:$0xff]
        %v6640 = vld [vmem:[%s6629 + $0x50] sm:$0xff]
        %v6641 = vld [vmem:[%s6629 + $0x58] sm:$0xff]
        %v6642 = vld [vmem:[%s6629 + $0x60] sm:$0xff]
        %v6643 = vld [vmem:[%s6629 + $0x68] sm:$0xff]
        %v6644 = vld [vmem:[%s6629 + $0x70] sm:$0xff]
        %v6645 = vld [vmem:[%s6629 + $0x78] sm:$0xff]
        %6646 = vmatprep.subr.mxu0 0.0
        %6647 = vmatpush1.msra.mxu0 %v6645
        %6648 = vmatprep.subr.mxu0 0.0
        %6649 = vmatpush1.msra.mxu0 %v6644
        %6650 = vmatprep.subr.mxu0 0.0
        %6651 = vmatpush1.msra.mxu0 %v6643
        %6652 = vmatprep.subr.mxu0 0.0
        %6653 = vmatpush1.msra.mxu0 %v6642
        %6654 = vmatprep.subr.mxu0 0.0
        %6655 = vmatpush1.msra.mxu0 %v6641
        %6656 = vmatprep.subr.mxu0 0.0
        %6657 = vmatpush1.msra.mxu0 %v6640
        %6658 = vmatprep.subr.mxu0 0.0
        %6659 = vmatpush1.msra.mxu0 %v6639
        %6660 = vmatprep.subr.mxu0 0.0
        %6661 = vmatpush1.msra.mxu0 %v6638
        %6662 = vmatprep.subr.mxu0 0.0
        %6663 = vmatpush1.msra.mxu0 %v6637
        %6664 = vmatprep.subr.mxu0 0.0
        %6665 = vmatpush1.msra.mxu0 %v6636
        %6666 = vmatprep.subr.mxu0 0.0
        %6667 = vmatpush1.msra.mxu0 %v6635
        %6668 = vmatprep.subr.mxu0 0.0
        %6669 = vmatpush1.msra.mxu0 %v6634
        %6670 = vmatprep.subr.mxu0 0.0
        %6671 = vmatpush1.msra.mxu0 %v6633
        %6672 = vmatprep.subr.mxu0 0.0
        %6673 = vmatpush1.msra.mxu0 %v6632
        %6674 = vmatprep.subr.mxu0 0.0
        %6675 = vmatpush1.msra.mxu0 %v6631
        %6676 = vmatprep.subr.mxu0 0.0
        %6677 = vmatpush1.msra.mxu0 %v6630
        %6678 = vmatprep.subr.mxu0 0.0
        %6679 = vmatpush2.msra.mxu0 0.0
        %6680 = vmatprep.subr.mxu0 0.0
        %6681 = vmatpush2.msra.mxu0 0.0
        %6682 = vmatprep.subr.mxu0 0.0
        %6683 = vmatpush2.msra.mxu0 0.0
        %6684 = vmatprep.subr.mxu0 0.0
        %6685 = vmatpush2.msra.mxu0 0.0
        %6686 = vmatprep.subr.mxu0 0.0
        %6687 = vmatpush2.msra.mxu0 0.0
        %6688 = vmatprep.subr.mxu0 0.0
        %6689 = vmatpush2.msra.mxu0 0.0
        %6690 = vmatprep.subr.mxu0 0.0
        %6691 = vmatpush2.msra.mxu0 0.0
        %6692 = vmatprep.subr.mxu0 0.0
        %6693 = vmatpush2.msra.mxu0 0.0
        %6694 = vmatprep.subr.mxu0 0.0
        %6695 = vmatpush2.msra.mxu0 0.0
        %6696 = vmatprep.subr.mxu0 0.0
        %6697 = vmatpush2.msra.mxu0 0.0
        %6698 = vmatprep.subr.mxu0 0.0
        %6699 = vmatpush2.msra.mxu0 0.0
        %6700 = vmatprep.subr.mxu0 0.0
        %6701 = vmatpush2.msra.mxu0 0.0
        %6702 = vmatprep.subr.mxu0 0.0
        %6703 = vmatpush2.msra.mxu0 0.0
        %6704 = vmatprep.subr.mxu0 0.0
        %6705 = vmatpush2.msra.mxu0 0.0
        %6706 = vmatprep.subr.mxu0 0.0
        %6707 = vmatpush2.msra.mxu0 0.0
        %6708 = vmatprep.subr.mxu0 0.0
        %6709 = vmatpush2.msra.mxu0 0.0
        %6710 = vmatprep.mubr.f32.mxu0 0.0
        %6711 = vmatmul.mubr.f32.gmra.mxu0 %v6561
        %v6712 = vpop.f32.mrf.mxu0
        %v6713 = vadd.f32 0.0, %v6712
        %v6714 = vpop.f32.mrf.mxu0
        %6715 = vmatprep.mubr.f32.mxu0 0.0
        %6716 = vmatmul.mubr.f32.gmra.mxu0 %v6562
        %v6717 = vpop.f32.mrf.mxu0
        %v6718 = vadd.f32 0.0, %v6717
        %v6719 = vpop.f32.mrf.mxu0
        %6720 = vmatprep.mubr.f32.mxu0 0.0
        %6721 = vmatmul.mubr.f32.gmra.mxu0 %v6563
        %v6722 = vpop.f32.mrf.mxu0
        %v6723 = vadd.f32 0.0, %v6722
        %v6724 = vpop.f32.mrf.mxu0
        %6725 = vmatprep.mubr.f32.mxu0 0.0
        %6726 = vmatmul.mubr.f32.gmra.mxu0 %v6564
        %v6727 = vpop.f32.mrf.mxu0
        %v6728 = vadd.f32 0.0, %v6727
        %v6729 = vpop.f32.mrf.mxu0
        %6730 = vmatprep.mubr.f32.mxu0 0.0
        %6731 = vmatmul.mubr.f32.gmra.mxu0 %v6565
        %v6732 = vpop.f32.mrf.mxu0
        %v6733 = vadd.f32 0.0, %v6732
        %v6734 = vpop.f32.mrf.mxu0
        %6735 = vmatprep.mubr.f32.mxu0 0.0
        %6736 = vmatmul.mubr.f32.gmra.mxu0 %v6566
        %v6737 = vpop.f32.mrf.mxu0
        %v6738 = vadd.f32 0.0, %v6737
        %v6739 = vpop.f32.mrf.mxu0
        %6740 = vmatprep.mubr.f32.mxu0 0.0
        %6741 = vmatmul.mubr.f32.gmra.mxu0 %v6567
        %v6742 = vpop.f32.mrf.mxu0
        %v6743 = vadd.f32 0.0, %v6742
        %v6744 = vpop.f32.mrf.mxu0
        %6745 = vmatprep.mubr.f32.mxu0 0.0
        %6746 = vmatmul.mubr.f32.gmra.mxu0 %v6568
        %v6747 = vpop.f32.mrf.mxu0
        %v6748 = vadd.f32 0.0, %v6747
        %v6749 = vpop.f32.mrf.mxu0
        %6750 = vmatprep.mubr.f32.mxu0 0.0
        %6751 = vmatmul.mubr.f32.gmra.mxu0 %v6569
        %v6752 = vpop.f32.mrf.mxu0
        %v6753 = vadd.f32 0.0, %v6752
        %v6754 = vpop.f32.mrf.mxu0
        %6755 = vmatprep.mubr.f32.mxu0 0.0
        %6756 = vmatmul.mubr.f32.gmra.mxu0 %v6570
        %v6757 = vpop.f32.mrf.mxu0
        %v6758 = vadd.f32 0.0, %v6757
        %v6759 = vpop.f32.mrf.mxu0
        %6760 = vmatprep.mubr.f32.mxu0 0.0
        %6761 = vmatmul.mubr.f32.gmra.mxu0 %v6571
        %v6762 = vpop.f32.mrf.mxu0
        %v6763 = vadd.f32 0.0, %v6762
        %v6764 = vpop.f32.mrf.mxu0
        %6765 = vmatprep.mubr.f32.mxu0 0.0
        %6766 = vmatmul.mubr.f32.gmra.mxu0 %v6572
        %v6767 = vpop.f32.mrf.mxu0
        %v6768 = vadd.f32 0.0, %v6767
        %v6769 = vpop.f32.mrf.mxu0
        %6770 = vmatprep.mubr.f32.mxu0 0.0
        %6771 = vmatmul.mubr.f32.gmra.mxu0 %v6573
        %v6772 = vpop.f32.mrf.mxu0
        %v6773 = vadd.f32 0.0, %v6772
        %v6774 = vpop.f32.mrf.mxu0
        %6775 = vmatprep.mubr.f32.mxu0 0.0
        %6776 = vmatmul.mubr.f32.gmra.mxu0 %v6574
        %v6777 = vpop.f32.mrf.mxu0
        %v6778 = vadd.f32 0.0, %v6777
        %v6779 = vpop.f32.mrf.mxu0
        %6780 = vmatprep.mubr.f32.mxu0 0.0
        %6781 = vmatmul.mubr.f32.gmra.mxu0 %v6575
        %v6782 = vpop.f32.mrf.mxu0
        %v6783 = vadd.f32 0.0, %v6782
        %v6784 = vpop.f32.mrf.mxu0
        %6785 = vmatprep.mubr.f32.mxu0 0.0
        %6786 = vmatmul.mubr.f32.gmra.mxu0 %v6576
        %v6787 = vpop.f32.mrf.mxu0
        %v6788 = vadd.f32 0.0, %v6787
        %v6789 = vpop.f32.mrf.mxu0
        %6790 = vmatprep.mubr.f32.mxu0 0.0
        %6791 = vmatmul.mubr.f32.gmra.mxu0 %v6577
        %v6792 = vpop.f32.mrf.mxu0
        %v6793 = vadd.f32 0.0, %v6792
        %v6794 = vpop.f32.mrf.mxu0
        %6795 = vmatprep.mubr.f32.mxu0 0.0
        %6796 = vmatmul.mubr.f32.gmra.mxu0 %v6578
        %v6797 = vpop.f32.mrf.mxu0
        %v6798 = vadd.f32 0.0, %v6797
        %v6799 = vpop.f32.mrf.mxu0
        %6800 = vmatprep.mubr.f32.mxu0 0.0
        %6801 = vmatmul.mubr.f32.gmra.mxu0 %v6579
        %v6802 = vpop.f32.mrf.mxu0
        %v6803 = vadd.f32 0.0, %v6802
        %v6804 = vpop.f32.mrf.mxu0
        %6805 = vmatprep.mubr.f32.mxu0 0.0
        %6806 = vmatmul.mubr.f32.gmra.mxu0 %v6580
        %v6807 = vpop.f32.mrf.mxu0
        %v6808 = vadd.f32 0.0, %v6807
        %v6809 = vpop.f32.mrf.mxu0
        %6810 = vmatprep.mubr.f32.mxu0 0.0
        %6811 = vmatmul.mubr.f32.gmra.mxu0 %v6581
        %v6812 = vpop.f32.mrf.mxu0
        %v6813 = vadd.f32 0.0, %v6812
        %v6814 = vpop.f32.mrf.mxu0
        %6815 = vmatprep.mubr.f32.mxu0 0.0
        %6816 = vmatmul.mubr.f32.gmra.mxu0 %v6582
        %v6817 = vpop.f32.mrf.mxu0
        %v6818 = vadd.f32 0.0, %v6817
        %v6819 = vpop.f32.mrf.mxu0
        %6820 = vmatprep.mubr.f32.mxu0 0.0
        %6821 = vmatmul.mubr.f32.gmra.mxu0 %v6583
        %v6822 = vpop.f32.mrf.mxu0
        %v6823 = vadd.f32 0.0, %v6822
        %v6824 = vpop.f32.mrf.mxu0
        %6825 = vmatprep.mubr.f32.mxu0 0.0
        %6826 = vmatmul.mubr.f32.gmra.mxu0 %v6584
        %v6827 = vpop.f32.mrf.mxu0
        %v6828 = vadd.f32 0.0, %v6827
        %v6829 = vpop.f32.mrf.mxu0
        %6830 = vmatprep.mubr.f32.mxu0 0.0
        %6831 = vmatmul.mubr.f32.gmra.mxu0 %v6585
        %v6832 = vpop.f32.mrf.mxu0
        %v6833 = vadd.f32 0.0, %v6832
        %v6834 = vpop.f32.mrf.mxu0
        %6835 = vmatprep.mubr.f32.mxu0 0.0
        %6836 = vmatmul.mubr.f32.gmra.mxu0 %v6586
        %v6837 = vpop.f32.mrf.mxu0
        %v6838 = vadd.f32 0.0, %v6837
        %v6839 = vpop.f32.mrf.mxu0
        %6840 = vmatprep.mubr.f32.mxu0 0.0
        %6841 = vmatmul.mubr.f32.gmra.mxu0 %v6587
        %v6842 = vpop.f32.mrf.mxu0
        %v6843 = vadd.f32 0.0, %v6842
        %v6844 = vpop.f32.mrf.mxu0
        %6845 = vmatprep.mubr.f32.mxu0 0.0
        %6846 = vmatmul.mubr.f32.gmra.mxu0 %v6588
        %v6847 = vpop.f32.mrf.mxu0
        %v6848 = vadd.f32 0.0, %v6847
        %v6849 = vpop.f32.mrf.mxu0
        %6850 = vmatprep.mubr.f32.mxu0 0.0
        %6851 = vmatmul.mubr.f32.gmra.mxu0 %v6589
        %v6852 = vpop.f32.mrf.mxu0
        %v6853 = vadd.f32 0.0, %v6852
        %v6854 = vpop.f32.mrf.mxu0
        %6855 = vmatprep.mubr.f32.mxu0 0.0
        %6856 = vmatmul.mubr.f32.gmra.mxu0 %v6590
        %v6857 = vpop.f32.mrf.mxu0
        %v6858 = vadd.f32 0.0, %v6857
        %v6859 = vpop.f32.mrf.mxu0
        %6860 = vmatprep.mubr.f32.mxu0 0.0
        %6861 = vmatmul.mubr.f32.gmra.mxu0 %v6591
        %v6862 = vpop.f32.mrf.mxu0
        %v6863 = vadd.f32 0.0, %v6862
        %v6864 = vpop.f32.mrf.mxu0
        %6865 = vmatprep.mubr.f32.mxu0 0.0
        %6866 = vmatmul.mubr.f32.gmra.mxu0 %v6592
        %v6867 = vpop.f32.mrf.mxu0
        %v6868 = vadd.f32 0.0, %v6867
        %v6869 = vpop.f32.mrf.mxu0
        %6870 = vdwg.mxu0
        %v6871 = vadd.f32 %v6597, %v6713
        %v6872 = vadd.f32 %v6598, %v6718
        %v6873 = vadd.f32 %v6599, %v6723
        %v6874 = vadd.f32 %v6600, %v6728
        %v6875 = vadd.f32 %v6601, %v6733
        %v6876 = vadd.f32 %v6602, %v6738
        %v6877 = vadd.f32 %v6603, %v6743
        %v6878 = vadd.f32 %v6604, %v6748
        %v6879 = vadd.f32 %v6605, %v6753
        %v6880 = vadd.f32 %v6606, %v6758
        %v6881 = vadd.f32 %v6607, %v6763
        %v6882 = vadd.f32 %v6608, %v6768
        %v6883 = vadd.f32 %v6609, %v6773
        %v6884 = vadd.f32 %v6610, %v6778
        %v6885 = vadd.f32 %v6611, %v6783
        %v6886 = vadd.f32 %v6612, %v6788
        %v6887 = vadd.f32 %v6613, %v6793
        %v6888 = vadd.f32 %v6614, %v6798
        %v6889 = vadd.f32 %v6615, %v6803
        %v6890 = vadd.f32 %v6616, %v6808
        %v6891 = vadd.f32 %v6617, %v6813
        %v6892 = vadd.f32 %v6618, %v6818
        %v6893 = vadd.f32 %v6619, %v6823
        %v6894 = vadd.f32 %v6620, %v6828
        %v6895 = vadd.f32 %v6621, %v6833
        %v6896 = vadd.f32 %v6622, %v6838
        %v6897 = vadd.f32 %v6623, %v6843
        %v6898 = vadd.f32 %v6624, %v6848
        %v6899 = vadd.f32 %v6625, %v6853
        %v6900 = vadd.f32 %v6626, %v6858
        %v6901 = vadd.f32 %v6627, %v6863
        %v6902 = vadd.f32 %v6628, %v6868
        %6903 = vst [vmem:[#allocation4] sm:$0xff] %v6871
        %6904 = vst [vmem:[#allocation4 + $0x8] sm:$0xff] %v6872
        %6905 = vst [vmem:[#allocation4 + $0x10] sm:$0xff] %v6873
        %6906 = vst [vmem:[#allocation4 + $0x18] sm:$0xff] %v6874
        %6907 = vst [vmem:[#allocation4 + $0x20] sm:$0xff] %v6875
        %6908 = vst [vmem:[#allocation4 + $0x28] sm:$0xff] %v6876
        %6909 = vst [vmem:[#allocation4 + $0x30] sm:$0xff] %v6877
        %6910 = vst [vmem:[#allocation4 + $0x38] sm:$0xff] %v6878
        %6911 = vst [vmem:[#allocation4 + $0x40] sm:$0xff] %v6879
        %6912 = vst [vmem:[#allocation4 + $0x48] sm:$0xff] %v6880
        %6913 = vst [vmem:[#allocation4 + $0x50] sm:$0xff] %v6881
        %6914 = vst [vmem:[#allocation4 + $0x58] sm:$0xff] %v6882
        %6915 = vst [vmem:[#allocation4 + $0x60] sm:$0xff] %v6883
        %6916 = vst [vmem:[#allocation4 + $0x68] sm:$0xff] %v6884
        %6917 = vst [vmem:[#allocation4 + $0x70] sm:$0xff] %v6885
        %6918 = vst [vmem:[#allocation4 + $0x78] sm:$0xff] %v6886
        %6919 = vst [vmem:[#allocation4 + $0x80] sm:$0xff] %v6887
        %6920 = vst [vmem:[#allocation4 + $0x88] sm:$0xff] %v6888
        %6921 = vst [vmem:[#allocation4 + $0x90] sm:$0xff] %v6889
        %6922 = vst [vmem:[#allocation4 + $0x98] sm:$0xff] %v6890
        %6923 = vst [vmem:[#allocation4 + $0xa0] sm:$0xff] %v6891
        %6924 = vst [vmem:[#allocation4 + $0xa8] sm:$0xff] %v6892
        %6925 = vst [vmem:[#allocation4 + $0xb0] sm:$0xff] %v6893
        %6926 = vst [vmem:[#allocation4 + $0xb8] sm:$0xff] %v6894
        %6927 = vst [vmem:[#allocation4 + $0xc0] sm:$0xff] %v6895
        %6928 = vst [vmem:[#allocation4 + $0xc8] sm:$0xff] %v6896
        %6929 = vst [vmem:[#allocation4 + $0xd0] sm:$0xff] %v6897
        %6930 = vst [vmem:[#allocation4 + $0xd8] sm:$0xff] %v6898
        %6931 = vst [vmem:[#allocation4 + $0xe0] sm:$0xff] %v6899
        %6932 = vst [vmem:[#allocation4 + $0xe8] sm:$0xff] %v6900
        %6933 = vst [vmem:[#allocation4 + $0xf0] sm:$0xff] %v6901
        %6934 = vst [vmem:[#allocation4 + $0xf8] sm:$0xff] %v6902
        %v6935 = vld [vmem:[#allocation4] sm:$0xff]
        %v6936 = vld [vmem:[#allocation4 + $0x8] sm:$0xff]
        %v6937 = vld [vmem:[#allocation4 + $0x10] sm:$0xff]
        %v6938 = vld [vmem:[#allocation4 + $0x18] sm:$0xff]
        %v6939 = vld [vmem:[#allocation4 + $0x20] sm:$0xff]
        %v6940 = vld [vmem:[#allocation4 + $0x28] sm:$0xff]
        %v6941 = vld [vmem:[#allocation4 + $0x30] sm:$0xff]
        %v6942 = vld [vmem:[#allocation4 + $0x38] sm:$0xff]
        %v6943 = vld [vmem:[#allocation4 + $0x40] sm:$0xff]
        %v6944 = vld [vmem:[#allocation4 + $0x48] sm:$0xff]
        %v6945 = vld [vmem:[#allocation4 + $0x50] sm:$0xff]
        %v6946 = vld [vmem:[#allocation4 + $0x58] sm:$0xff]
        %v6947 = vld [vmem:[#allocation4 + $0x60] sm:$0xff]
        %v6948 = vld [vmem:[#allocation4 + $0x68] sm:$0xff]
        %v6949 = vld [vmem:[#allocation4 + $0x70] sm:$0xff]
        %v6950 = vld [vmem:[#allocation4 + $0x78] sm:$0xff]
        %v6951 = vld [vmem:[#allocation4 + $0x80] sm:$0xff]
        %v6952 = vld [vmem:[#allocation4 + $0x88] sm:$0xff]
        %v6953 = vld [vmem:[#allocation4 + $0x90] sm:$0xff]
        %v6954 = vld [vmem:[#allocation4 + $0x98] sm:$0xff]
        %v6955 = vld [vmem:[#allocation4 + $0xa0] sm:$0xff]
        %v6956 = vld [vmem:[#allocation4 + $0xa8] sm:$0xff]
        %v6957 = vld [vmem:[#allocation4 + $0xb0] sm:$0xff]
        %v6958 = vld [vmem:[#allocation4 + $0xb8] sm:$0xff]
        %v6959 = vld [vmem:[#allocation4 + $0xc0] sm:$0xff]
        %v6960 = vld [vmem:[#allocation4 + $0xc8] sm:$0xff]
        %v6961 = vld [vmem:[#allocation4 + $0xd0] sm:$0xff]
        %v6962 = vld [vmem:[#allocation4 + $0xd8] sm:$0xff]
        %v6963 = vld [vmem:[#allocation4 + $0xe0] sm:$0xff]
        %v6964 = vld [vmem:[#allocation4 + $0xe8] sm:$0xff]
        %v6965 = vld [vmem:[#allocation4 + $0xf0] sm:$0xff]
        %v6966 = vld [vmem:[#allocation4 + $0xf8] sm:$0xff]
        %s6967 = scalar_lea.vmem [#allocation10], 640
        %v6968 = vld [vmem:[%s6967] sm:$0xff]
        %v6969 = vld [vmem:[%s6967 + $0x8] sm:$0xff]
        %v6970 = vld [vmem:[%s6967 + $0x10] sm:$0xff]
        %v6971 = vld [vmem:[%s6967 + $0x18] sm:$0xff]
        %v6972 = vld [vmem:[%s6967 + $0x20] sm:$0xff]
        %v6973 = vld [vmem:[%s6967 + $0x28] sm:$0xff]
        %v6974 = vld [vmem:[%s6967 + $0x30] sm:$0xff]
        %v6975 = vld [vmem:[%s6967 + $0x38] sm:$0xff]
        %v6976 = vld [vmem:[%s6967 + $0x40] sm:$0xff]
        %v6977 = vld [vmem:[%s6967 + $0x48] sm:$0xff]
        %v6978 = vld [vmem:[%s6967 + $0x50] sm:$0xff]
        %v6979 = vld [vmem:[%s6967 + $0x58] sm:$0xff]
        %v6980 = vld [vmem:[%s6967 + $0x60] sm:$0xff]
        %v6981 = vld [vmem:[%s6967 + $0x68] sm:$0xff]
        %v6982 = vld [vmem:[%s6967 + $0x70] sm:$0xff]
        %v6983 = vld [vmem:[%s6967 + $0x78] sm:$0xff]
        %6984 = vmatprep.subr.mxu0 0.0
        %6985 = vmatpush1.msra.mxu0 %v6983
        %6986 = vmatprep.subr.mxu0 0.0
        %6987 = vmatpush1.msra.mxu0 %v6982
        %6988 = vmatprep.subr.mxu0 0.0
        %6989 = vmatpush1.msra.mxu0 %v6981
        %6990 = vmatprep.subr.mxu0 0.0
        %6991 = vmatpush1.msra.mxu0 %v6980
        %6992 = vmatprep.subr.mxu0 0.0
        %6993 = vmatpush1.msra.mxu0 %v6979
        %6994 = vmatprep.subr.mxu0 0.0
        %6995 = vmatpush1.msra.mxu0 %v6978
        %6996 = vmatprep.subr.mxu0 0.0
        %6997 = vmatpush1.msra.mxu0 %v6977
        %6998 = vmatprep.subr.mxu0 0.0
        %6999 = vmatpush1.msra.mxu0 %v6976
        %7000 = vmatprep.subr.mxu0 0.0
        %7001 = vmatpush1.msra.mxu0 %v6975
        %7002 = vmatprep.subr.mxu0 0.0
        %7003 = vmatpush1.msra.mxu0 %v6974
        %7004 = vmatprep.subr.mxu0 0.0
        %7005 = vmatpush1.msra.mxu0 %v6973
        %7006 = vmatprep.subr.mxu0 0.0
        %7007 = vmatpush1.msra.mxu0 %v6972
        %7008 = vmatprep.subr.mxu0 0.0
        %7009 = vmatpush1.msra.mxu0 %v6971
        %7010 = vmatprep.subr.mxu0 0.0
        %7011 = vmatpush1.msra.mxu0 %v6970
        %7012 = vmatprep.subr.mxu0 0.0
        %7013 = vmatpush1.msra.mxu0 %v6969
        %7014 = vmatprep.subr.mxu0 0.0
        %7015 = vmatpush1.msra.mxu0 %v6968
        %7016 = vmatprep.subr.mxu0 0.0
        %7017 = vmatpush2.msra.mxu0 0.0
        %7018 = vmatprep.subr.mxu0 0.0
        %7019 = vmatpush2.msra.mxu0 0.0
        %7020 = vmatprep.subr.mxu0 0.0
        %7021 = vmatpush2.msra.mxu0 0.0
        %7022 = vmatprep.subr.mxu0 0.0
        %7023 = vmatpush2.msra.mxu0 0.0
        %7024 = vmatprep.subr.mxu0 0.0
        %7025 = vmatpush2.msra.mxu0 0.0
        %7026 = vmatprep.subr.mxu0 0.0
        %7027 = vmatpush2.msra.mxu0 0.0
        %7028 = vmatprep.subr.mxu0 0.0
        %7029 = vmatpush2.msra.mxu0 0.0
        %7030 = vmatprep.subr.mxu0 0.0
        %7031 = vmatpush2.msra.mxu0 0.0
        %7032 = vmatprep.subr.mxu0 0.0
        %7033 = vmatpush2.msra.mxu0 0.0
        %7034 = vmatprep.subr.mxu0 0.0
        %7035 = vmatpush2.msra.mxu0 0.0
        %7036 = vmatprep.subr.mxu0 0.0
        %7037 = vmatpush2.msra.mxu0 0.0
        %7038 = vmatprep.subr.mxu0 0.0
        %7039 = vmatpush2.msra.mxu0 0.0
        %7040 = vmatprep.subr.mxu0 0.0
        %7041 = vmatpush2.msra.mxu0 0.0
        %7042 = vmatprep.subr.mxu0 0.0
        %7043 = vmatpush2.msra.mxu0 0.0
        %7044 = vmatprep.subr.mxu0 0.0
        %7045 = vmatpush2.msra.mxu0 0.0
        %7046 = vmatprep.subr.mxu0 0.0
        %7047 = vmatpush2.msra.mxu0 0.0
        %7048 = vmatprep.mubr.f32.mxu0 0.0
        %7049 = vmatmul.mubr.f32.gmra.mxu0 %v6563
        %v7050 = vpop.f32.mrf.mxu0
        %v7051 = vadd.f32 0.0, %v7050
        %v7052 = vpop.f32.mrf.mxu0
        %7053 = vmatprep.mubr.f32.mxu0 0.0
        %7054 = vmatmul.mubr.f32.gmra.mxu0 %v6564
        %v7055 = vpop.f32.mrf.mxu0
        %v7056 = vadd.f32 0.0, %v7055
        %v7057 = vpop.f32.mrf.mxu0
        %7058 = vmatprep.mubr.f32.mxu0 0.0
        %7059 = vmatmul.mubr.f32.gmra.mxu0 %v6565
        %v7060 = vpop.f32.mrf.mxu0
        %v7061 = vadd.f32 0.0, %v7060
        %v7062 = vpop.f32.mrf.mxu0
        %7063 = vmatprep.mubr.f32.mxu0 0.0
        %7064 = vmatmul.mubr.f32.gmra.mxu0 %v6566
        %v7065 = vpop.f32.mrf.mxu0
        %v7066 = vadd.f32 0.0, %v7065
        %v7067 = vpop.f32.mrf.mxu0
        %7068 = vmatprep.mubr.f32.mxu0 0.0
        %7069 = vmatmul.mubr.f32.gmra.mxu0 %v6567
        %v7070 = vpop.f32.mrf.mxu0
        %v7071 = vadd.f32 0.0, %v7070
        %v7072 = vpop.f32.mrf.mxu0
        %7073 = vmatprep.mubr.f32.mxu0 0.0
        %7074 = vmatmul.mubr.f32.gmra.mxu0 %v6568
        %v7075 = vpop.f32.mrf.mxu0
        %v7076 = vadd.f32 0.0, %v7075
        %v7077 = vpop.f32.mrf.mxu0
        %7078 = vmatprep.mubr.f32.mxu0 0.0
        %7079 = vmatmul.mubr.f32.gmra.mxu0 %v6569
        %v7080 = vpop.f32.mrf.mxu0
        %v7081 = vadd.f32 0.0, %v7080
        %v7082 = vpop.f32.mrf.mxu0
        %7083 = vmatprep.mubr.f32.mxu0 0.0
        %7084 = vmatmul.mubr.f32.gmra.mxu0 %v6570
        %v7085 = vpop.f32.mrf.mxu0
        %v7086 = vadd.f32 0.0, %v7085
        %v7087 = vpop.f32.mrf.mxu0
        %7088 = vmatprep.mubr.f32.mxu0 0.0
        %7089 = vmatmul.mubr.f32.gmra.mxu0 %v6571
        %v7090 = vpop.f32.mrf.mxu0
        %v7091 = vadd.f32 0.0, %v7090
        %v7092 = vpop.f32.mrf.mxu0
        %7093 = vmatprep.mubr.f32.mxu0 0.0
        %7094 = vmatmul.mubr.f32.gmra.mxu0 %v6572
        %v7095 = vpop.f32.mrf.mxu0
        %v7096 = vadd.f32 0.0, %v7095
        %v7097 = vpop.f32.mrf.mxu0
        %7098 = vmatprep.mubr.f32.mxu0 0.0
        %7099 = vmatmul.mubr.f32.gmra.mxu0 %v6573
        %v7100 = vpop.f32.mrf.mxu0
        %v7101 = vadd.f32 0.0, %v7100
        %v7102 = vpop.f32.mrf.mxu0
        %7103 = vmatprep.mubr.f32.mxu0 0.0
        %7104 = vmatmul.mubr.f32.gmra.mxu0 %v6574
        %v7105 = vpop.f32.mrf.mxu0
        %v7106 = vadd.f32 0.0, %v7105
        %v7107 = vpop.f32.mrf.mxu0
        %7108 = vmatprep.mubr.f32.mxu0 0.0
        %7109 = vmatmul.mubr.f32.gmra.mxu0 %v6575
        %v7110 = vpop.f32.mrf.mxu0
        %v7111 = vadd.f32 0.0, %v7110
        %v7112 = vpop.f32.mrf.mxu0
        %7113 = vmatprep.mubr.f32.mxu0 0.0
        %7114 = vmatmul.mubr.f32.gmra.mxu0 %v6576
        %v7115 = vpop.f32.mrf.mxu0
        %v7116 = vadd.f32 0.0, %v7115
        %v7117 = vpop.f32.mrf.mxu0
        %7118 = vmatprep.mubr.f32.mxu0 0.0
        %7119 = vmatmul.mubr.f32.gmra.mxu0 %v6577
        %v7120 = vpop.f32.mrf.mxu0
        %v7121 = vadd.f32 0.0, %v7120
        %v7122 = vpop.f32.mrf.mxu0
        %7123 = vmatprep.mubr.f32.mxu0 0.0
        %7124 = vmatmul.mubr.f32.gmra.mxu0 %v6578
        %v7125 = vpop.f32.mrf.mxu0
        %v7126 = vadd.f32 0.0, %v7125
        %v7127 = vpop.f32.mrf.mxu0
        %7128 = vmatprep.mubr.f32.mxu0 0.0
        %7129 = vmatmul.mubr.f32.gmra.mxu0 %v6579
        %v7130 = vpop.f32.mrf.mxu0
        %v7131 = vadd.f32 0.0, %v7130
        %v7132 = vpop.f32.mrf.mxu0
        %7133 = vmatprep.mubr.f32.mxu0 0.0
        %7134 = vmatmul.mubr.f32.gmra.mxu0 %v6580
        %v7135 = vpop.f32.mrf.mxu0
        %v7136 = vadd.f32 0.0, %v7135
        %v7137 = vpop.f32.mrf.mxu0
        %7138 = vmatprep.mubr.f32.mxu0 0.0
        %7139 = vmatmul.mubr.f32.gmra.mxu0 %v6581
        %v7140 = vpop.f32.mrf.mxu0
        %v7141 = vadd.f32 0.0, %v7140
        %v7142 = vpop.f32.mrf.mxu0
        %7143 = vmatprep.mubr.f32.mxu0 0.0
        %7144 = vmatmul.mubr.f32.gmra.mxu0 %v6582
        %v7145 = vpop.f32.mrf.mxu0
        %v7146 = vadd.f32 0.0, %v7145
        %v7147 = vpop.f32.mrf.mxu0
        %7148 = vmatprep.mubr.f32.mxu0 0.0
        %7149 = vmatmul.mubr.f32.gmra.mxu0 %v6583
        %v7150 = vpop.f32.mrf.mxu0
        %v7151 = vadd.f32 0.0, %v7150
        %v7152 = vpop.f32.mrf.mxu0
        %7153 = vmatprep.mubr.f32.mxu0 0.0
        %7154 = vmatmul.mubr.f32.gmra.mxu0 %v6584
        %v7155 = vpop.f32.mrf.mxu0
        %v7156 = vadd.f32 0.0, %v7155
        %v7157 = vpop.f32.mrf.mxu0
        %7158 = vmatprep.mubr.f32.mxu0 0.0
        %7159 = vmatmul.mubr.f32.gmra.mxu0 %v6585
        %v7160 = vpop.f32.mrf.mxu0
        %v7161 = vadd.f32 0.0, %v7160
        %v7162 = vpop.f32.mrf.mxu0
        %7163 = vmatprep.mubr.f32.mxu0 0.0
        %7164 = vmatmul.mubr.f32.gmra.mxu0 %v6586
        %v7165 = vpop.f32.mrf.mxu0
        %v7166 = vadd.f32 0.0, %v7165
        %v7167 = vpop.f32.mrf.mxu0
        %7168 = vmatprep.mubr.f32.mxu0 0.0
        %7169 = vmatmul.mubr.f32.gmra.mxu0 %v6587
        %v7170 = vpop.f32.mrf.mxu0
        %v7171 = vadd.f32 0.0, %v7170
        %v7172 = vpop.f32.mrf.mxu0
        %7173 = vmatprep.mubr.f32.mxu0 0.0
        %7174 = vmatmul.mubr.f32.gmra.mxu0 %v6588
        %v7175 = vpop.f32.mrf.mxu0
        %v7176 = vadd.f32 0.0, %v7175
        %v7177 = vpop.f32.mrf.mxu0
        %7178 = vmatprep.mubr.f32.mxu0 0.0
        %7179 = vmatmul.mubr.f32.gmra.mxu0 %v6589
        %v7180 = vpop.f32.mrf.mxu0
        %v7181 = vadd.f32 0.0, %v7180
        %v7182 = vpop.f32.mrf.mxu0
        %7183 = vmatprep.mubr.f32.mxu0 0.0
        %7184 = vmatmul.mubr.f32.gmra.mxu0 %v6590
        %v7185 = vpop.f32.mrf.mxu0
        %v7186 = vadd.f32 0.0, %v7185
        %v7187 = vpop.f32.mrf.mxu0
        %7188 = vmatprep.mubr.f32.mxu0 0.0
        %7189 = vmatmul.mubr.f32.gmra.mxu0 %v6591
        %v7190 = vpop.f32.mrf.mxu0
        %v7191 = vadd.f32 0.0, %v7190
        %v7192 = vpop.f32.mrf.mxu0
        %7193 = vmatprep.mubr.f32.mxu0 0.0
        %7194 = vmatmul.mubr.f32.gmra.mxu0 %v6592
        %v7195 = vpop.f32.mrf.mxu0
        %v7196 = vadd.f32 0.0, %v7195
        %v7197 = vpop.f32.mrf.mxu0
        %7198 = vmatprep.mubr.f32.mxu0 0.0
        %7199 = vmatmul.mubr.f32.gmra.mxu0 %v6593
        %v7200 = vpop.f32.mrf.mxu0
        %v7201 = vadd.f32 0.0, %v7200
        %v7202 = vpop.f32.mrf.mxu0
        %7203 = vmatprep.mubr.f32.mxu0 0.0
        %7204 = vmatmul.mubr.f32.gmra.mxu0 %v6594
        %v7205 = vpop.f32.mrf.mxu0
        %v7206 = vadd.f32 0.0, %v7205
        %v7207 = vpop.f32.mrf.mxu0
        %7208 = vdwg.mxu0
        %v7209 = vadd.f32 %v6935, %v7051
        %v7210 = vadd.f32 %v6936, %v7056
        %v7211 = vadd.f32 %v6937, %v7061
        %v7212 = vadd.f32 %v6938, %v7066
        %v7213 = vadd.f32 %v6939, %v7071
        %v7214 = vadd.f32 %v6940, %v7076
        %v7215 = vadd.f32 %v6941, %v7081
        %v7216 = vadd.f32 %v6942, %v7086
        %v7217 = vadd.f32 %v6943, %v7091
        %v7218 = vadd.f32 %v6944, %v7096
        %v7219 = vadd.f32 %v6945, %v7101
        %v7220 = vadd.f32 %v6946, %v7106
        %v7221 = vadd.f32 %v6947, %v7111
        %v7222 = vadd.f32 %v6948, %v7116
        %v7223 = vadd.f32 %v6949, %v7121
        %v7224 = vadd.f32 %v6950, %v7126
        %v7225 = vadd.f32 %v6951, %v7131
        %v7226 = vadd.f32 %v6952, %v7136
        %v7227 = vadd.f32 %v6953, %v7141
        %v7228 = vadd.f32 %v6954, %v7146
        %v7229 = vadd.f32 %v6955, %v7151
        %v7230 = vadd.f32 %v6956, %v7156
        %v7231 = vadd.f32 %v6957, %v7161
        %v7232 = vadd.f32 %v6958, %v7166
        %v7233 = vadd.f32 %v6959, %v7171
        %v7234 = vadd.f32 %v6960, %v7176
        %v7235 = vadd.f32 %v6961, %v7181
        %v7236 = vadd.f32 %v6962, %v7186
        %v7237 = vadd.f32 %v6963, %v7191
        %v7238 = vadd.f32 %v6964, %v7196
        %v7239 = vadd.f32 %v6965, %v7201
        %v7240 = vadd.f32 %v6966, %v7206
        %7241 = vst [vmem:[#allocation4] sm:$0xff] %v7209
        %7242 = vst [vmem:[#allocation4 + $0x8] sm:$0xff] %v7210
        %7243 = vst [vmem:[#allocation4 + $0x10] sm:$0xff] %v7211
        %7244 = vst [vmem:[#allocation4 + $0x18] sm:$0xff] %v7212
        %7245 = vst [vmem:[#allocation4 + $0x20] sm:$0xff] %v7213
        %7246 = vst [vmem:[#allocation4 + $0x28] sm:$0xff] %v7214
        %7247 = vst [vmem:[#allocation4 + $0x30] sm:$0xff] %v7215
        %7248 = vst [vmem:[#allocation4 + $0x38] sm:$0xff] %v7216
        %7249 = vst [vmem:[#allocation4 + $0x40] sm:$0xff] %v7217
        %7250 = vst [vmem:[#allocation4 + $0x48] sm:$0xff] %v7218
        %7251 = vst [vmem:[#allocation4 + $0x50] sm:$0xff] %v7219
        %7252 = vst [vmem:[#allocation4 + $0x58] sm:$0xff] %v7220
        %7253 = vst [vmem:[#allocation4 + $0x60] sm:$0xff] %v7221
        %7254 = vst [vmem:[#allocation4 + $0x68] sm:$0xff] %v7222
        %7255 = vst [vmem:[#allocation4 + $0x70] sm:$0xff] %v7223
        %7256 = vst [vmem:[#allocation4 + $0x78] sm:$0xff] %v7224
        %7257 = vst [vmem:[#allocation4 + $0x80] sm:$0xff] %v7225
        %7258 = vst [vmem:[#allocation4 + $0x88] sm:$0xff] %v7226
        %7259 = vst [vmem:[#allocation4 + $0x90] sm:$0xff] %v7227
        %7260 = vst [vmem:[#allocation4 + $0x98] sm:$0xff] %v7228
        %7261 = vst [vmem:[#allocation4 + $0xa0] sm:$0xff] %v7229
        %7262 = vst [vmem:[#allocation4 + $0xa8] sm:$0xff] %v7230
        %7263 = vst [vmem:[#allocation4 + $0xb0] sm:$0xff] %v7231
        %7264 = vst [vmem:[#allocation4 + $0xb8] sm:$0xff] %v7232
        %7265 = vst [vmem:[#allocation4 + $0xc0] sm:$0xff] %v7233
        %7266 = vst [vmem:[#allocation4 + $0xc8] sm:$0xff] %v7234
        %7267 = vst [vmem:[#allocation4 + $0xd0] sm:$0xff] %v7235
        %7268 = vst [vmem:[#allocation4 + $0xd8] sm:$0xff] %v7236
        %7269 = vst [vmem:[#allocation4 + $0xe0] sm:$0xff] %v7237
        %7270 = vst [vmem:[#allocation4 + $0xe8] sm:$0xff] %v7238
        %7271 = vst [vmem:[#allocation4 + $0xf0] sm:$0xff] %v7239
        %7272 = vst [vmem:[#allocation4 + $0xf8] sm:$0xff] %v7240
        %v7273 = vld [vmem:[#allocation4] sm:$0xff]
        %v7274 = vld [vmem:[#allocation4 + $0x8] sm:$0xff]
        %v7275 = vld [vmem:[#allocation4 + $0x10] sm:$0xff]
        %v7276 = vld [vmem:[#allocation4 + $0x18] sm:$0xff]
        %v7277 = vld [vmem:[#allocation4 + $0x20] sm:$0xff]
        %v7278 = vld [vmem:[#allocation4 + $0x28] sm:$0xff]
        %v7279 = vld [vmem:[#allocation4 + $0x30] sm:$0xff]
        %v7280 = vld [vmem:[#allocation4 + $0x38] sm:$0xff]
        %v7281 = vld [vmem:[#allocation4 + $0x40] sm:$0xff]
        %v7282 = vld [vmem:[#allocation4 + $0x48] sm:$0xff]
        %v7283 = vld [vmem:[#allocation4 + $0x50] sm:$0xff]
        %v7284 = vld [vmem:[#allocation4 + $0x58] sm:$0xff]
        %v7285 = vld [vmem:[#allocation4 + $0x60] sm:$0xff]
        %v7286 = vld [vmem:[#allocation4 + $0x68] sm:$0xff]
        %v7287 = vld [vmem:[#allocation4 + $0x70] sm:$0xff]
        %v7288 = vld [vmem:[#allocation4 + $0x78] sm:$0xff]
        %v7289 = vld [vmem:[#allocation4 + $0x80] sm:$0xff]
        %v7290 = vld [vmem:[#allocation4 + $0x88] sm:$0xff]
        %v7291 = vld [vmem:[#allocation4 + $0x90] sm:$0xff]
        %v7292 = vld [vmem:[#allocation4 + $0x98] sm:$0xff]
        %v7293 = vld [vmem:[#allocation4 + $0xa0] sm:$0xff]
        %v7294 = vld [vmem:[#allocation4 + $0xa8] sm:$0xff]
        %v7295 = vld [vmem:[#allocation4 + $0xb0] sm:$0xff]
        %v7296 = vld [vmem:[#allocation4 + $0xb8] sm:$0xff]
        %v7297 = vld [vmem:[#allocation4 + $0xc0] sm:$0xff]
        %v7298 = vld [vmem:[#allocation4 + $0xc8] sm:$0xff]
        %v7299 = vld [vmem:[#allocation4 + $0xd0] sm:$0xff]
        %v7300 = vld [vmem:[#allocation4 + $0xd8] sm:$0xff]
        %v7301 = vld [vmem:[#allocation4 + $0xe0] sm:$0xff]
        %v7302 = vld [vmem:[#allocation4 + $0xe8] sm:$0xff]
        %v7303 = vld [vmem:[#allocation4 + $0xf0] sm:$0xff]
        %v7304 = vld [vmem:[#allocation4 + $0xf8] sm:$0xff]
        %s7305 = scalar_lea.vmem [#allocation10], 1024
        %v7306 = vld [vmem:[%s7305] sm:$0xff]
        %v7307 = vld [vmem:[%s7305 + $0x8] sm:$0xff]
        %v7308 = vld [vmem:[%s7305 + $0x10] sm:$0xff]
        %v7309 = vld [vmem:[%s7305 + $0x18] sm:$0xff]
        %v7310 = vld [vmem:[%s7305 + $0x20] sm:$0xff]
        %v7311 = vld [vmem:[%s7305 + $0x28] sm:$0xff]
        %v7312 = vld [vmem:[%s7305 + $0x30] sm:$0xff]
        %v7313 = vld [vmem:[%s7305 + $0x38] sm:$0xff]
        %v7314 = vld [vmem:[%s7305 + $0x40] sm:$0xff]
        %v7315 = vld [vmem:[%s7305 + $0x48] sm:$0xff]
        %v7316 = vld [vmem:[%s7305 + $0x50] sm:$0xff]
        %v7317 = vld [vmem:[%s7305 + $0x58] sm:$0xff]
        %v7318 = vld [vmem:[%s7305 + $0x60] sm:$0xff]
        %v7319 = vld [vmem:[%s7305 + $0x68] sm:$0xff]
        %v7320 = vld [vmem:[%s7305 + $0x70] sm:$0xff]
        %v7321 = vld [vmem:[%s7305 + $0x78] sm:$0xff]
        %7322 = vmatprep.subr.mxu0 0.0
        %7323 = vmatpush1.msra.mxu0 %v7321
        %7324 = vmatprep.subr.mxu0 0.0
        %7325 = vmatpush1.msra.mxu0 %v7320
        %7326 = vmatprep.subr.mxu0 0.0
        %7327 = vmatpush1.msra.mxu0 %v7319
        %7328 = vmatprep.subr.mxu0 0.0
        %7329 = vmatpush1.msra.mxu0 %v7318
        %7330 = vmatprep.subr.mxu0 0.0
        %7331 = vmatpush1.msra.mxu0 %v7317
        %7332 = vmatprep.subr.mxu0 0.0
        %7333 = vmatpush1.msra.mxu0 %v7316
        %7334 = vmatprep.subr.mxu0 0.0
        %7335 = vmatpush1.msra.mxu0 %v7315
        %7336 = vmatprep.subr.mxu0 0.0
        %7337 = vmatpush1.msra.mxu0 %v7314
        %7338 = vmatprep.subr.mxu0 0.0
        %7339 = vmatpush1.msra.mxu0 %v7313
        %7340 = vmatprep.subr.mxu0 0.0
        %7341 = vmatpush1.msra.mxu0 %v7312
        %7342 = vmatprep.subr.mxu0 0.0
        %7343 = vmatpush1.msra.mxu0 %v7311
        %7344 = vmatprep.subr.mxu0 0.0
        %7345 = vmatpush1.msra.mxu0 %v7310
        %7346 = vmatprep.subr.mxu0 0.0
        %7347 = vmatpush1.msra.mxu0 %v7309
        %7348 = vmatprep.subr.mxu0 0.0
        %7349 = vmatpush1.msra.mxu0 %v7308
        %7350 = vmatprep.subr.mxu0 0.0
        %7351 = vmatpush1.msra.mxu0 %v7307
        %7352 = vmatprep.subr.mxu0 0.0
        %7353 = vmatpush1.msra.mxu0 %v7306
        %7354 = vmatprep.subr.mxu0 0.0
        %7355 = vmatpush2.msra.mxu0 0.0
        %7356 = vmatprep.subr.mxu0 0.0
        %7357 = vmatpush2.msra.mxu0 0.0
        %7358 = vmatprep.subr.mxu0 0.0
        %7359 = vmatpush2.msra.mxu0 0.0
        %7360 = vmatprep.subr.mxu0 0.0
        %7361 = vmatpush2.msra.mxu0 0.0
        %7362 = vmatprep.subr.mxu0 0.0
        %7363 = vmatpush2.msra.mxu0 0.0
        %7364 = vmatprep.subr.mxu0 0.0
        %7365 = vmatpush2.msra.mxu0 0.0
        %7366 = vmatprep.subr.mxu0 0.0
        %7367 = vmatpush2.msra.mxu0 0.0
        %7368 = vmatprep.subr.mxu0 0.0
        %7369 = vmatpush2.msra.mxu0 0.0
        %7370 = vmatprep.subr.mxu0 0.0
        %7371 = vmatpush2.msra.mxu0 0.0
        %7372 = vmatprep.subr.mxu0 0.0
        %7373 = vmatpush2.msra.mxu0 0.0
        %7374 = vmatprep.subr.mxu0 0.0
        %7375 = vmatpush2.msra.mxu0 0.0
        %7376 = vmatprep.subr.mxu0 0.0
        %7377 = vmatpush2.msra.mxu0 0.0
        %7378 = vmatprep.subr.mxu0 0.0
        %7379 = vmatpush2.msra.mxu0 0.0
        %7380 = vmatprep.subr.mxu0 0.0
        %7381 = vmatpush2.msra.mxu0 0.0
        %7382 = vmatprep.subr.mxu0 0.0
        %7383 = vmatpush2.msra.mxu0 0.0
        %7384 = vmatprep.subr.mxu0 0.0
        %7385 = vmatpush2.msra.mxu0 0.0
        %7386 = vmatprep.mubr.f32.mxu0 0.0
        %7387 = vmatmul.mubr.f32.gmra.mxu0 %v6565
        %v7388 = vpop.f32.mrf.mxu0
        %v7389 = vadd.f32 0.0, %v7388
        %v7390 = vpop.f32.mrf.mxu0
        %7391 = vmatprep.mubr.f32.mxu0 0.0
        %7392 = vmatmul.mubr.f32.gmra.mxu0 %v6566
        %v7393 = vpop.f32.mrf.mxu0
        %v7394 = vadd.f32 0.0, %v7393
        %v7395 = vpop.f32.mrf.mxu0
        %7396 = vmatprep.mubr.f32.mxu0 0.0
        %7397 = vmatmul.mubr.f32.gmra.mxu0 %v6567
        %v7398 = vpop.f32.mrf.mxu0
        %v7399 = vadd.f32 0.0, %v7398
        %v7400 = vpop.f32.mrf.mxu0
        %7401 = vmatprep.mubr.f32.mxu0 0.0
        %7402 = vmatmul.mubr.f32.gmra.mxu0 %v6568
        %v7403 = vpop.f32.mrf.mxu0
        %v7404 = vadd.f32 0.0, %v7403
        %v7405 = vpop.f32.mrf.mxu0
        %7406 = vmatprep.mubr.f32.mxu0 0.0
        %7407 = vmatmul.mubr.f32.gmra.mxu0 %v6569
        %v7408 = vpop.f32.mrf.mxu0
        %v7409 = vadd.f32 0.0, %v7408
        %v7410 = vpop.f32.mrf.mxu0
        %7411 = vmatprep.mubr.f32.mxu0 0.0
        %7412 = vmatmul.mubr.f32.gmra.mxu0 %v6570
        %v7413 = vpop.f32.mrf.mxu0
        %v7414 = vadd.f32 0.0, %v7413
        %v7415 = vpop.f32.mrf.mxu0
        %7416 = vmatprep.mubr.f32.mxu0 0.0
        %7417 = vmatmul.mubr.f32.gmra.mxu0 %v6571
        %v7418 = vpop.f32.mrf.mxu0
        %v7419 = vadd.f32 0.0, %v7418
        %v7420 = vpop.f32.mrf.mxu0
        %7421 = vmatprep.mubr.f32.mxu0 0.0
        %7422 = vmatmul.mubr.f32.gmra.mxu0 %v6572
        %v7423 = vpop.f32.mrf.mxu0
        %v7424 = vadd.f32 0.0, %v7423
        %v7425 = vpop.f32.mrf.mxu0
        %7426 = vmatprep.mubr.f32.mxu0 0.0
        %7427 = vmatmul.mubr.f32.gmra.mxu0 %v6573
        %v7428 = vpop.f32.mrf.mxu0
        %v7429 = vadd.f32 0.0, %v7428
        %v7430 = vpop.f32.mrf.mxu0
        %7431 = vmatprep.mubr.f32.mxu0 0.0
        %7432 = vmatmul.mubr.f32.gmra.mxu0 %v6574
        %v7433 = vpop.f32.mrf.mxu0
        %v7434 = vadd.f32 0.0, %v7433
        %v7435 = vpop.f32.mrf.mxu0
        %7436 = vmatprep.mubr.f32.mxu0 0.0
        %7437 = vmatmul.mubr.f32.gmra.mxu0 %v6575
        %v7438 = vpop.f32.mrf.mxu0
        %v7439 = vadd.f32 0.0, %v7438
        %v7440 = vpop.f32.mrf.mxu0
        %7441 = vmatprep.mubr.f32.mxu0 0.0
        %7442 = vmatmul.mubr.f32.gmra.mxu0 %v6576
        %v7443 = vpop.f32.mrf.mxu0
        %v7444 = vadd.f32 0.0, %v7443
        %v7445 = vpop.f32.mrf.mxu0
        %7446 = vmatprep.mubr.f32.mxu0 0.0
        %7447 = vmatmul.mubr.f32.gmra.mxu0 %v6577
        %v7448 = vpop.f32.mrf.mxu0
        %v7449 = vadd.f32 0.0, %v7448
        %v7450 = vpop.f32.mrf.mxu0
        %7451 = vmatprep.mubr.f32.mxu0 0.0
        %7452 = vmatmul.mubr.f32.gmra.mxu0 %v6578
        %v7453 = vpop.f32.mrf.mxu0
        %v7454 = vadd.f32 0.0, %v7453
        %v7455 = vpop.f32.mrf.mxu0
        %7456 = vmatprep.mubr.f32.mxu0 0.0
        %7457 = vmatmul.mubr.f32.gmra.mxu0 %v6579
        %v7458 = vpop.f32.mrf.mxu0
        %v7459 = vadd.f32 0.0, %v7458
        %v7460 = vpop.f32.mrf.mxu0
        %7461 = vmatprep.mubr.f32.mxu0 0.0
        %7462 = vmatmul.mubr.f32.gmra.mxu0 %v6580
        %v7463 = vpop.f32.mrf.mxu0
        %v7464 = vadd.f32 0.0, %v7463
        %v7465 = vpop.f32.mrf.mxu0
        %7466 = vmatprep.mubr.f32.mxu0 0.0
        %7467 = vmatmul.mubr.f32.gmra.mxu0 %v6581
        %v7468 = vpop.f32.mrf.mxu0
        %v7469 = vadd.f32 0.0, %v7468
        %v7470 = vpop.f32.mrf.mxu0
        %7471 = vmatprep.mubr.f32.mxu0 0.0
        %7472 = vmatmul.mubr.f32.gmra.mxu0 %v6582
        %v7473 = vpop.f32.mrf.mxu0
        %v7474 = vadd.f32 0.0, %v7473
        %v7475 = vpop.f32.mrf.mxu0
        %7476 = vmatprep.mubr.f32.mxu0 0.0
        %7477 = vmatmul.mubr.f32.gmra.mxu0 %v6583
        %v7478 = vpop.f32.mrf.mxu0
        %v7479 = vadd.f32 0.0, %v7478
        %v7480 = vpop.f32.mrf.mxu0
        %7481 = vmatprep.mubr.f32.mxu0 0.0
        %7482 = vmatmul.mubr.f32.gmra.mxu0 %v6584
        %v7483 = vpop.f32.mrf.mxu0
        %v7484 = vadd.f32 0.0, %v7483
        %v7485 = vpop.f32.mrf.mxu0
        %7486 = vmatprep.mubr.f32.mxu0 0.0
        %7487 = vmatmul.mubr.f32.gmra.mxu0 %v6585
        %v7488 = vpop.f32.mrf.mxu0
        %v7489 = vadd.f32 0.0, %v7488
        %v7490 = vpop.f32.mrf.mxu0
        %7491 = vmatprep.mubr.f32.mxu0 0.0
        %7492 = vmatmul.mubr.f32.gmra.mxu0 %v6586
        %v7493 = vpop.f32.mrf.mxu0
        %v7494 = vadd.f32 0.0, %v7493
        %v7495 = vpop.f32.mrf.mxu0
        %7496 = vmatprep.mubr.f32.mxu0 0.0
        %7497 = vmatmul.mubr.f32.gmra.mxu0 %v6587
        %v7498 = vpop.f32.mrf.mxu0
        %v7499 = vadd.f32 0.0, %v7498
        %v7500 = vpop.f32.mrf.mxu0
        %7501 = vmatprep.mubr.f32.mxu0 0.0
        %7502 = vmatmul.mubr.f32.gmra.mxu0 %v6588
        %v7503 = vpop.f32.mrf.mxu0
        %v7504 = vadd.f32 0.0, %v7503
        %v7505 = vpop.f32.mrf.mxu0
        %7506 = vmatprep.mubr.f32.mxu0 0.0
        %7507 = vmatmul.mubr.f32.gmra.mxu0 %v6589
        %v7508 = vpop.f32.mrf.mxu0
        %v7509 = vadd.f32 0.0, %v7508
        %v7510 = vpop.f32.mrf.mxu0
        %7511 = vmatprep.mubr.f32.mxu0 0.0
        %7512 = vmatmul.mubr.f32.gmra.mxu0 %v6590
        %v7513 = vpop.f32.mrf.mxu0
        %v7514 = vadd.f32 0.0, %v7513
        %v7515 = vpop.f32.mrf.mxu0
        %7516 = vmatprep.mubr.f32.mxu0 0.0
        %7517 = vmatmul.mubr.f32.gmra.mxu0 %v6591
        %v7518 = vpop.f32.mrf.mxu0
        %v7519 = vadd.f32 0.0, %v7518
        %v7520 = vpop.f32.mrf.mxu0
        %7521 = vmatprep.mubr.f32.mxu0 0.0
        %7522 = vmatmul.mubr.f32.gmra.mxu0 %v6592
        %v7523 = vpop.f32.mrf.mxu0
        %v7524 = vadd.f32 0.0, %v7523
        %v7525 = vpop.f32.mrf.mxu0
        %7526 = vmatprep.mubr.f32.mxu0 0.0
        %7527 = vmatmul.mubr.f32.gmra.mxu0 %v6593
        %v7528 = vpop.f32.mrf.mxu0
        %v7529 = vadd.f32 0.0, %v7528
        %v7530 = vpop.f32.mrf.mxu0
        %7531 = vmatprep.mubr.f32.mxu0 0.0
        %7532 = vmatmul.mubr.f32.gmra.mxu0 %v6594
        %v7533 = vpop.f32.mrf.mxu0
        %v7534 = vadd.f32 0.0, %v7533
        %v7535 = vpop.f32.mrf.mxu0
        %7536 = vmatprep.mubr.f32.mxu0 0.0
        %7537 = vmatmul.mubr.f32.gmra.mxu0 %v6595
        %v7538 = vpop.f32.mrf.mxu0
        %v7539 = vadd.f32 0.0, %v7538
        %v7540 = vpop.f32.mrf.mxu0
        %7541 = vmatprep.mubr.f32.mxu0 0.0
        %7542 = vmatmul.mubr.f32.gmra.mxu0 %v6596
        %v7543 = vpop.f32.mrf.mxu0
        %v7544 = vadd.f32 0.0, %v7543
        %v7545 = vpop.f32.mrf.mxu0
        %7546 = vdwg.mxu0
        %v7547 = vadd.f32 %v7273, %v7389
        %v7548 = vadd.f32 %v7274, %v7394
        %v7549 = vadd.f32 %v7275, %v7399
        %v7550 = vadd.f32 %v7276, %v7404
        %v7551 = vadd.f32 %v7277, %v7409
        %v7552 = vadd.f32 %v7278, %v7414
        %v7553 = vadd.f32 %v7279, %v7419
        %v7554 = vadd.f32 %v7280, %v7424
        %v7555 = vadd.f32 %v7281, %v7429
        %v7556 = vadd.f32 %v7282, %v7434
        %v7557 = vadd.f32 %v7283, %v7439
        %v7558 = vadd.f32 %v7284, %v7444
        %v7559 = vadd.f32 %v7285, %v7449
        %v7560 = vadd.f32 %v7286, %v7454
        %v7561 = vadd.f32 %v7287, %v7459
        %v7562 = vadd.f32 %v7288, %v7464
        %v7563 = vadd.f32 %v7289, %v7469
        %v7564 = vadd.f32 %v7290, %v7474
        %v7565 = vadd.f32 %v7291, %v7479
        %v7566 = vadd.f32 %v7292, %v7484
        %v7567 = vadd.f32 %v7293, %v7489
        %v7568 = vadd.f32 %v7294, %v7494
        %v7569 = vadd.f32 %v7295, %v7499
        %v7570 = vadd.f32 %v7296, %v7504
        %v7571 = vadd.f32 %v7297, %v7509
        %v7572 = vadd.f32 %v7298, %v7514
        %v7573 = vadd.f32 %v7299, %v7519
        %v7574 = vadd.f32 %v7300, %v7524
        %v7575 = vadd.f32 %v7301, %v7529
        %v7576 = vadd.f32 %v7302, %v7534
        %v7577 = vadd.f32 %v7303, %v7539
        %v7578 = vadd.f32 %v7304, %v7544
        %7579 = vst [vmem:[#allocation4] sm:$0xff] %v7547
        %7580 = vst [vmem:[#allocation4 + $0x8] sm:$0xff] %v7548
        %7581 = vst [vmem:[#allocation4 + $0x10] sm:$0xff] %v7549
        %7582 = vst [vmem:[#allocation4 + $0x18] sm:$0xff] %v7550
        %7583 = vst [vmem:[#allocation4 + $0x20] sm:$0xff] %v7551
        %7584 = vst [vmem:[#allocation4 + $0x28] sm:$0xff] %v7552
        %7585 = vst [vmem:[#allocation4 + $0x30] sm:$0xff] %v7553
        %7586 = vst [vmem:[#allocation4 + $0x38] sm:$0xff] %v7554
        %7587 = vst [vmem:[#allocation4 + $0x40] sm:$0xff] %v7555
        %7588 = vst [vmem:[#allocation4 + $0x48] sm:$0xff] %v7556
        %7589 = vst [vmem:[#allocation4 + $0x50] sm:$0xff] %v7557
        %7590 = vst [vmem:[#allocation4 + $0x58] sm:$0xff] %v7558
        %7591 = vst [vmem:[#allocation4 + $0x60] sm:$0xff] %v7559
        %7592 = vst [vmem:[#allocation4 + $0x68] sm:$0xff] %v7560
        %7593 = vst [vmem:[#allocation4 + $0x70] sm:$0xff] %v7561
        %7594 = vst [vmem:[#allocation4 + $0x78] sm:$0xff] %v7562
        %7595 = vst [vmem:[#allocation4 + $0x80] sm:$0xff] %v7563
        %7596 = vst [vmem:[#allocation4 + $0x88] sm:$0xff] %v7564
        %7597 = vst [vmem:[#allocation4 + $0x90] sm:$0xff] %v7565
        %7598 = vst [vmem:[#allocation4 + $0x98] sm:$0xff] %v7566
        %7599 = vst [vmem:[#allocation4 + $0xa0] sm:$0xff] %v7567
        %7600 = vst [vmem:[#allocation4 + $0xa8] sm:$0xff] %v7568
        %7601 = vst [vmem:[#allocation4 + $0xb0] sm:$0xff] %v7569
        %7602 = vst [vmem:[#allocation4 + $0xb8] sm:$0xff] %v7570
        %7603 = vst [vmem:[#allocation4 + $0xc0] sm:$0xff] %v7571
        %7604 = vst [vmem:[#allocation4 + $0xc8] sm:$0xff] %v7572
        %7605 = vst [vmem:[#allocation4 + $0xd0] sm:$0xff] %v7573
        %7606 = vst [vmem:[#allocation4 + $0xd8] sm:$0xff] %v7574
        %7607 = vst [vmem:[#allocation4 + $0xe0] sm:$0xff] %v7575
        %7608 = vst [vmem:[#allocation4 + $0xe8] sm:$0xff] %v7576
        %7609 = vst [vmem:[#allocation4 + $0xf0] sm:$0xff] %v7577
        %7610 = vst [vmem:[#allocation4 + $0xf8] sm:$0xff] %v7578
        %v7611 = vld [vmem:[#allocation4] sm:$0xff]
        %v7612 = vld [vmem:[#allocation4 + $0x8] sm:$0xff]
        %v7613 = vld [vmem:[#allocation4 + $0x10] sm:$0xff]
        %v7614 = vld [vmem:[#allocation4 + $0x18] sm:$0xff]
        %v7615 = vld [vmem:[#allocation4 + $0x20] sm:$0xff]
        %v7616 = vld [vmem:[#allocation4 + $0x28] sm:$0xff]
        %v7617 = vld [vmem:[#allocation4 + $0x30] sm:$0xff]
        %v7618 = vld [vmem:[#allocation4 + $0x38] sm:$0xff]
        %v7619 = vld [vmem:[#allocation4 + $0x40] sm:$0xff]
        %v7620 = vld [vmem:[#allocation4 + $0x48] sm:$0xff]
        %v7621 = vld [vmem:[#allocation4 + $0x50] sm:$0xff]
        %v7622 = vld [vmem:[#allocation4 + $0x58] sm:$0xff]
        %v7623 = vld [vmem:[#allocation4 + $0x60] sm:$0xff]
        %v7624 = vld [vmem:[#allocation4 + $0x68] sm:$0xff]
        %v7625 = vld [vmem:[#allocation4 + $0x70] sm:$0xff]
        %v7626 = vld [vmem:[#allocation4 + $0x78] sm:$0xff]
        %v7627 = vld [vmem:[#allocation4 + $0x80] sm:$0xff]
        %v7628 = vld [vmem:[#allocation4 + $0x88] sm:$0xff]
        %v7629 = vld [vmem:[#allocation4 + $0x90] sm:$0xff]
        %v7630 = vld [vmem:[#allocation4 + $0x98] sm:$0xff]
        %v7631 = vld [vmem:[#allocation4 + $0xa0] sm:$0xff]
        %v7632 = vld [vmem:[#allocation4 + $0xa8] sm:$0xff]
        %v7633 = vld [vmem:[#allocation4 + $0xb0] sm:$0xff]
        %v7634 = vld [vmem:[#allocation4 + $0xb8] sm:$0xff]
        %v7635 = vld [vmem:[#allocation4 + $0xc0] sm:$0xff]
        %v7636 = vld [vmem:[#allocation4 + $0xc8] sm:$0xff]
        %v7637 = vld [vmem:[#allocation4 + $0xd0] sm:$0xff]
        %v7638 = vld [vmem:[#allocation4 + $0xd8] sm:$0xff]
        %v7639 = vld [vmem:[#allocation4 + $0xe0] sm:$0xff]
        %v7640 = vld [vmem:[#allocation4 + $0xe8] sm:$0xff]
        %v7641 = vld [vmem:[#allocation4 + $0xf0] sm:$0xff]
        %v7642 = vld [vmem:[#allocation4 + $0xf8] sm:$0xff]
        %v7643 = vld [vmem:[#allocation11] sm:$0xff]
        %v7644 = vld [vmem:[#allocation11 + $0x8] sm:$0xff]
        %v7645 = vld [vmem:[#allocation11 + $0x10] sm:$0xff]
        %v7646 = vld [vmem:[#allocation11 + $0x18] sm:$0xff]
        %v7647 = vld [vmem:[#allocation11 + $0x20] sm:$0xff]
        %v7648 = vld [vmem:[#allocation11 + $0x28] sm:$0xff]
        %v7649 = vld [vmem:[#allocation11 + $0x30] sm:$0xff]
        %v7650 = vld [vmem:[#allocation11 + $0x38] sm:$0xff]
        %v7651 = vld [vmem:[#allocation11 + $0x40] sm:$0xff]
        %v7652 = vld [vmem:[#allocation11 + $0x48] sm:$0xff]
        %v7653 = vld [vmem:[#allocation11 + $0x50] sm:$0xff]
        %v7654 = vld [vmem:[#allocation11 + $0x58] sm:$0xff]
        %v7655 = vld [vmem:[#allocation11 + $0x60] sm:$0xff]
        %v7656 = vld [vmem:[#allocation11 + $0x68] sm:$0xff]
        %v7657 = vld [vmem:[#allocation11 + $0x70] sm:$0xff]
        %v7658 = vld [vmem:[#allocation11 + $0x78] sm:$0xff]
        %v7659 = vld [vmem:[%s10] sm:$0x1]
        %v7661 = vlaneseq
        %v7662 = vshrl.u32 %v7661, 7
        %v7663 = vsub.s32 0, %v7662
        %v7664 = vrot.slane %v7659, %v7663
        %7666 = vmatprep.subr.mxu0 0.0
        %7667 = vmatpush1.msra.mxu0 %v7658
        %7668 = vmatprep.subr.mxu0 0.0
        %7669 = vmatpush1.msra.mxu0 %v7657
        %7670 = vmatprep.subr.mxu0 0.0
        %7671 = vmatpush1.msra.mxu0 %v7656
        %7672 = vmatprep.subr.mxu0 0.0
        %7673 = vmatpush1.msra.mxu0 %v7655
        %7674 = vmatprep.subr.mxu0 0.0
        %7675 = vmatpush1.msra.mxu0 %v7654
        %7676 = vmatprep.subr.mxu0 0.0
        %7677 = vmatpush1.msra.mxu0 %v7653
        %7678 = vmatprep.subr.mxu0 0.0
        %7679 = vmatpush1.msra.mxu0 %v7652
        %7680 = vmatprep.subr.mxu0 0.0
        %7681 = vmatpush1.msra.mxu0 %v7651
        %7682 = vmatprep.subr.mxu0 0.0
        %7683 = vmatpush1.msra.mxu0 %v7650
        %7684 = vmatprep.subr.mxu0 0.0
        %7685 = vmatpush1.msra.mxu0 %v7649
        %7686 = vmatprep.subr.mxu0 0.0
        %7687 = vmatpush1.msra.mxu0 %v7648
        %7688 = vmatprep.subr.mxu0 0.0
        %7689 = vmatpush1.msra.mxu0 %v7647
        %7690 = vmatprep.subr.mxu0 0.0
        %7691 = vmatpush1.msra.mxu0 %v7646
        %7692 = vmatprep.subr.mxu0 0.0
        %7693 = vmatpush1.msra.mxu0 %v7645
        %7694 = vmatprep.subr.mxu0 0.0
        %7695 = vmatpush1.msra.mxu0 %v7644
        %7696 = vmatprep.subr.mxu0 0.0
        %7697 = vmatpush1.msra.mxu0 %v7643
        %7698 = vmatprep.subr.mxu0 0.0
        %7699 = vmatpush2.msra.mxu0 0.0
        %7700 = vmatprep.subr.mxu0 0.0
        %7701 = vmatpush2.msra.mxu0 0.0
        %7702 = vmatprep.subr.mxu0 0.0
        %7703 = vmatpush2.msra.mxu0 0.0
        %7704 = vmatprep.subr.mxu0 0.0
        %7705 = vmatpush2.msra.mxu0 0.0
        %7706 = vmatprep.subr.mxu0 0.0
        %7707 = vmatpush2.msra.mxu0 0.0
        %7708 = vmatprep.subr.mxu0 0.0
        %7709 = vmatpush2.msra.mxu0 0.0
        %7710 = vmatprep.subr.mxu0 0.0
        %7711 = vmatpush2.msra.mxu0 0.0
        %7712 = vmatprep.subr.mxu0 0.0
        %7713 = vmatpush2.msra.mxu0 0.0
        %7714 = vmatprep.subr.mxu0 0.0
        %7715 = vmatpush2.msra.mxu0 0.0
        %7716 = vmatprep.subr.mxu0 0.0
        %7717 = vmatpush2.msra.mxu0 0.0
        %7718 = vmatprep.subr.mxu0 0.0
        %7719 = vmatpush2.msra.mxu0 0.0
        %7720 = vmatprep.subr.mxu0 0.0
        %7721 = vmatpush2.msra.mxu0 0.0
        %7722 = vmatprep.subr.mxu0 0.0
        %7723 = vmatpush2.msra.mxu0 0.0
        %7724 = vmatprep.subr.mxu0 0.0
        %7725 = vmatpush2.msra.mxu0 0.0
        %7726 = vmatprep.subr.mxu0 0.0
        %7727 = vmatpush2.msra.mxu0 0.0
        %7728 = vmatprep.subr.mxu0 0.0
        %7729 = vmatpush2.msra.mxu0 0.0
        %7730 = vmatprep.mubr.f32.mxu0 0.0
        %7731 = vmatmul.mubr.f32.gmra.mxu0 %v449
        %v7732 = vpop.f32.mrf.mxu0
        %v7733 = vadd.f32 %v7664, %v7732
        %v7734 = vpop.f32.mrf.mxu0
        %7735 = vmatprep.mubr.f32.mxu0 0.0
        %7736 = vmatmul.mubr.f32.gmra.mxu0 %v450
        %v7737 = vpop.f32.mrf.mxu0
        %v7738 = vadd.f32 %v7664, %v7737
        %v7739 = vpop.f32.mrf.mxu0
        %7740 = vmatprep.mubr.f32.mxu0 0.0
        %7741 = vmatmul.mubr.f32.gmra.mxu0 %v451
        %v7742 = vpop.f32.mrf.mxu0
        %v7743 = vadd.f32 %v7664, %v7742
        %v7744 = vpop.f32.mrf.mxu0
        %7745 = vmatprep.mubr.f32.mxu0 0.0
        %7746 = vmatmul.mubr.f32.gmra.mxu0 %v452
        %v7747 = vpop.f32.mrf.mxu0
        %v7748 = vadd.f32 %v7664, %v7747
        %v7749 = vpop.f32.mrf.mxu0
        %7750 = vmatprep.mubr.f32.mxu0 0.0
        %7751 = vmatmul.mubr.f32.gmra.mxu0 %v453
        %v7752 = vpop.f32.mrf.mxu0
        %v7753 = vadd.f32 %v7664, %v7752
        %v7754 = vpop.f32.mrf.mxu0
        %7755 = vmatprep.mubr.f32.mxu0 0.0
        %7756 = vmatmul.mubr.f32.gmra.mxu0 %v454
        %v7757 = vpop.f32.mrf.mxu0
        %v7758 = vadd.f32 %v7664, %v7757
        %v7759 = vpop.f32.mrf.mxu0
        %7760 = vmatprep.mubr.f32.mxu0 0.0
        %7761 = vmatmul.mubr.f32.gmra.mxu0 %v455
        %v7762 = vpop.f32.mrf.mxu0
        %v7763 = vadd.f32 %v7664, %v7762
        %v7764 = vpop.f32.mrf.mxu0
        %7765 = vmatprep.mubr.f32.mxu0 0.0
        %7766 = vmatmul.mubr.f32.gmra.mxu0 %v456
        %v7767 = vpop.f32.mrf.mxu0
        %v7768 = vadd.f32 %v7664, %v7767
        %v7769 = vpop.f32.mrf.mxu0
        %7770 = vmatprep.mubr.f32.mxu0 0.0
        %7771 = vmatmul.mubr.f32.gmra.mxu0 %v457
        %v7772 = vpop.f32.mrf.mxu0
        %v7773 = vadd.f32 %v7664, %v7772
        %v7774 = vpop.f32.mrf.mxu0
        %7775 = vmatprep.mubr.f32.mxu0 0.0
        %7776 = vmatmul.mubr.f32.gmra.mxu0 %v458
        %v7777 = vpop.f32.mrf.mxu0
        %v7778 = vadd.f32 %v7664, %v7777
        %v7779 = vpop.f32.mrf.mxu0
        %7780 = vmatprep.mubr.f32.mxu0 0.0
        %7781 = vmatmul.mubr.f32.gmra.mxu0 %v459
        %v7782 = vpop.f32.mrf.mxu0
        %v7783 = vadd.f32 %v7664, %v7782
        %v7784 = vpop.f32.mrf.mxu0
        %7785 = vmatprep.mubr.f32.mxu0 0.0
        %7786 = vmatmul.mubr.f32.gmra.mxu0 %v460
        %v7787 = vpop.f32.mrf.mxu0
        %v7788 = vadd.f32 %v7664, %v7787
        %v7789 = vpop.f32.mrf.mxu0
        %7790 = vmatprep.mubr.f32.mxu0 0.0
        %7791 = vmatmul.mubr.f32.gmra.mxu0 %v461
        %v7792 = vpop.f32.mrf.mxu0
        %v7793 = vadd.f32 %v7664, %v7792
        %v7794 = vpop.f32.mrf.mxu0
        %7795 = vmatprep.mubr.f32.mxu0 0.0
        %7796 = vmatmul.mubr.f32.gmra.mxu0 %v462
        %v7797 = vpop.f32.mrf.mxu0
        %v7798 = vadd.f32 %v7664, %v7797
        %v7799 = vpop.f32.mrf.mxu0
        %7800 = vmatprep.mubr.f32.mxu0 0.0
        %7801 = vmatmul.mubr.f32.gmra.mxu0 %v463
        %v7802 = vpop.f32.mrf.mxu0
        %v7803 = vadd.f32 %v7664, %v7802
        %v7804 = vpop.f32.mrf.mxu0
        %7805 = vmatprep.mubr.f32.mxu0 0.0
        %7806 = vmatmul.mubr.f32.gmra.mxu0 %v464
        %v7807 = vpop.f32.mrf.mxu0
        %v7808 = vadd.f32 %v7664, %v7807
        %v7809 = vpop.f32.mrf.mxu0
        %7810 = vmatprep.mubr.f32.mxu0 0.0
        %7811 = vmatmul.mubr.f32.gmra.mxu0 %v465
        %v7812 = vpop.f32.mrf.mxu0
        %v7813 = vadd.f32 %v7664, %v7812
        %v7814 = vpop.f32.mrf.mxu0
        %7815 = vmatprep.mubr.f32.mxu0 0.0
        %7816 = vmatmul.mubr.f32.gmra.mxu0 %v466
        %v7817 = vpop.f32.mrf.mxu0
        %v7818 = vadd.f32 %v7664, %v7817
        %v7819 = vpop.f32.mrf.mxu0
        %7820 = vmatprep.mubr.f32.mxu0 0.0
        %7821 = vmatmul.mubr.f32.gmra.mxu0 %v467
        %v7822 = vpop.f32.mrf.mxu0
        %v7823 = vadd.f32 %v7664, %v7822
        %v7824 = vpop.f32.mrf.mxu0
        %7825 = vmatprep.mubr.f32.mxu0 0.0
        %7826 = vmatmul.mubr.f32.gmra.mxu0 %v468
        %v7827 = vpop.f32.mrf.mxu0
        %v7828 = vadd.f32 %v7664, %v7827
        %v7829 = vpop.f32.mrf.mxu0
        %7830 = vmatprep.mubr.f32.mxu0 0.0
        %7831 = vmatmul.mubr.f32.gmra.mxu0 %v469
        %v7832 = vpop.f32.mrf.mxu0
        %v7833 = vadd.f32 %v7664, %v7832
        %v7834 = vpop.f32.mrf.mxu0
        %7835 = vmatprep.mubr.f32.mxu0 0.0
        %7836 = vmatmul.mubr.f32.gmra.mxu0 %v470
        %v7837 = vpop.f32.mrf.mxu0
        %v7838 = vadd.f32 %v7664, %v7837
        %v7839 = vpop.f32.mrf.mxu0
        %7840 = vmatprep.mubr.f32.mxu0 0.0
        %7841 = vmatmul.mubr.f32.gmra.mxu0 %v471
        %v7842 = vpop.f32.mrf.mxu0
        %v7843 = vadd.f32 %v7664, %v7842
        %v7844 = vpop.f32.mrf.mxu0
        %7845 = vmatprep.mubr.f32.mxu0 0.0
        %7846 = vmatmul.mubr.f32.gmra.mxu0 %v472
        %v7847 = vpop.f32.mrf.mxu0
        %v7848 = vadd.f32 %v7664, %v7847
        %v7849 = vpop.f32.mrf.mxu0
        %7850 = vmatprep.mubr.f32.mxu0 0.0
        %7851 = vmatmul.mubr.f32.gmra.mxu0 %v473
        %v7852 = vpop.f32.mrf.mxu0
        %v7853 = vadd.f32 %v7664, %v7852
        %v7854 = vpop.f32.mrf.mxu0
        %7855 = vmatprep.mubr.f32.mxu0 0.0
        %7856 = vmatmul.mubr.f32.gmra.mxu0 %v474
        %v7857 = vpop.f32.mrf.mxu0
        %v7858 = vadd.f32 %v7664, %v7857
        %v7859 = vpop.f32.mrf.mxu0
        %7860 = vmatprep.mubr.f32.mxu0 0.0
        %7861 = vmatmul.mubr.f32.gmra.mxu0 %v475
        %v7862 = vpop.f32.mrf.mxu0
        %v7863 = vadd.f32 %v7664, %v7862
        %v7864 = vpop.f32.mrf.mxu0
        %7865 = vmatprep.mubr.f32.mxu0 0.0
        %7866 = vmatmul.mubr.f32.gmra.mxu0 %v476
        %v7867 = vpop.f32.mrf.mxu0
        %v7868 = vadd.f32 %v7664, %v7867
        %v7869 = vpop.f32.mrf.mxu0
        %7870 = vmatprep.mubr.f32.mxu0 0.0
        %7871 = vmatmul.mubr.f32.gmra.mxu0 %v477
        %v7872 = vpop.f32.mrf.mxu0
        %v7873 = vadd.f32 %v7664, %v7872
        %v7874 = vpop.f32.mrf.mxu0
        %7875 = vmatprep.mubr.f32.mxu0 0.0
        %7876 = vmatmul.mubr.f32.gmra.mxu0 %v478
        %v7877 = vpop.f32.mrf.mxu0
        %v7878 = vadd.f32 %v7664, %v7877
        %v7879 = vpop.f32.mrf.mxu0
        %7880 = vmatprep.mubr.f32.mxu0 0.0
        %7881 = vmatmul.mubr.f32.gmra.mxu0 %v479
        %v7882 = vpop.f32.mrf.mxu0
        %v7883 = vadd.f32 %v7664, %v7882
        %v7884 = vpop.f32.mrf.mxu0
        %7885 = vmatprep.mubr.f32.mxu0 0.0
        %7886 = vmatmul.mubr.f32.gmra.mxu0 %v480
        %v7887 = vpop.f32.mrf.mxu0
        %v7888 = vadd.f32 %v7664, %v7887
        %v7889 = vpop.f32.mrf.mxu0
        %7890 = vdwg.mxu0
        %v7891 = vadd.f32 %v7611, %v7733
        %v7892 = vadd.f32 %v7612, %v7738
        %v7893 = vadd.f32 %v7613, %v7743
        %v7894 = vadd.f32 %v7614, %v7748
        %v7895 = vadd.f32 %v7615, %v7753
        %v7896 = vadd.f32 %v7616, %v7758
        %v7897 = vadd.f32 %v7617, %v7763
        %v7898 = vadd.f32 %v7618, %v7768
        %v7899 = vadd.f32 %v7619, %v7773
        %v7900 = vadd.f32 %v7620, %v7778
        %v7901 = vadd.f32 %v7621, %v7783
        %v7902 = vadd.f32 %v7622, %v7788
        %v7903 = vadd.f32 %v7623, %v7793
        %v7904 = vadd.f32 %v7624, %v7798
        %v7905 = vadd.f32 %v7625, %v7803
        %v7906 = vadd.f32 %v7626, %v7808
        %v7907 = vadd.f32 %v7627, %v7813
        %v7908 = vadd.f32 %v7628, %v7818
        %v7909 = vadd.f32 %v7629, %v7823
        %v7910 = vadd.f32 %v7630, %v7828
        %v7911 = vadd.f32 %v7631, %v7833
        %v7912 = vadd.f32 %v7632, %v7838
        %v7913 = vadd.f32 %v7633, %v7843
        %v7914 = vadd.f32 %v7634, %v7848
        %v7915 = vadd.f32 %v7635, %v7853
        %v7916 = vadd.f32 %v7636, %v7858
        %v7917 = vadd.f32 %v7637, %v7863
        %v7918 = vadd.f32 %v7638, %v7868
        %v7919 = vadd.f32 %v7639, %v7873
        %v7920 = vadd.f32 %v7640, %v7878
        %v7921 = vadd.f32 %v7641, %v7883
        %v7922 = vadd.f32 %v7642, %v7888
        %v7923 = vmax.f32 %v7891, 0.0
        %v7924 = vmax.f32 %v7892, 0.0
        %v7925 = vmax.f32 %v7893, 0.0
        %v7926 = vmax.f32 %v7894, 0.0
        %v7927 = vmax.f32 %v7895, 0.0
        %v7928 = vmax.f32 %v7896, 0.0
        %v7929 = vmax.f32 %v7897, 0.0
        %v7930 = vmax.f32 %v7898, 0.0
        %v7931 = vmax.f32 %v7899, 0.0
        %v7932 = vmax.f32 %v7900, 0.0
        %v7933 = vmax.f32 %v7901, 0.0
        %v7934 = vmax.f32 %v7902, 0.0
        %v7935 = vmax.f32 %v7903, 0.0
        %v7936 = vmax.f32 %v7904, 0.0
        %v7937 = vmax.f32 %v7905, 0.0
        %v7938 = vmax.f32 %v7906, 0.0
        %v7939 = vmax.f32 %v7907, 0.0
        %v7940 = vmax.f32 %v7908, 0.0
        %v7941 = vmax.f32 %v7909, 0.0
        %v7942 = vmax.f32 %v7910, 0.0
        %v7943 = vmax.f32 %v7911, 0.0
        %v7944 = vmax.f32 %v7912, 0.0
        %v7945 = vmax.f32 %v7913, 0.0
        %v7946 = vmax.f32 %v7914, 0.0
        %v7947 = vmax.f32 %v7915, 0.0
        %v7948 = vmax.f32 %v7916, 0.0
        %v7949 = vmax.f32 %v7917, 0.0
        %v7950 = vmax.f32 %v7918, 0.0
        %v7951 = vmax.f32 %v7919, 0.0
        %v7952 = vmax.f32 %v7920, 0.0
        %v7953 = vmax.f32 %v7921, 0.0
        %v7954 = vmax.f32 %v7922, 0.0
        %7955 = vst [vmem:[%s448] sm:$0xff] %v7923
        %7956 = vst [vmem:[%s448 + $0x8] sm:$0xff] %v7924
        %7957 = vst [vmem:[%s448 + $0x10] sm:$0xff] %v7925
        %7958 = vst [vmem:[%s448 + $0x18] sm:$0xff] %v7926
        %7959 = vst [vmem:[%s448 + $0x20] sm:$0xff] %v7927
        %7960 = vst [vmem:[%s448 + $0x28] sm:$0xff] %v7928
        %7961 = vst [vmem:[%s448 + $0x30] sm:$0xff] %v7929
        %7962 = vst [vmem:[%s448 + $0x38] sm:$0xff] %v7930
        %7963 = vst [vmem:[%s448 + $0x40] sm:$0xff] %v7931
        %7964 = vst [vmem:[%s448 + $0x48] sm:$0xff] %v7932
        %7965 = vst [vmem:[%s448 + $0x50] sm:$0xff] %v7933
        %7966 = vst [vmem:[%s448 + $0x58] sm:$0xff] %v7934
        %7967 = vst [vmem:[%s448 + $0x60] sm:$0xff] %v7935
        %7968 = vst [vmem:[%s448 + $0x68] sm:$0xff] %v7936
        %7969 = vst [vmem:[%s448 + $0x70] sm:$0xff] %v7937
        %7970 = vst [vmem:[%s448 + $0x78] sm:$0xff] %v7938
        %7971 = vst [vmem:[%s448 + $0x80] sm:$0xff] %v7939
        %7972 = vst [vmem:[%s448 + $0x88] sm:$0xff] %v7940
        %7973 = vst [vmem:[%s448 + $0x90] sm:$0xff] %v7941
        %7974 = vst [vmem:[%s448 + $0x98] sm:$0xff] %v7942
        %7975 = vst [vmem:[%s448 + $0xa0] sm:$0xff] %v7943
        %7976 = vst [vmem:[%s448 + $0xa8] sm:$0xff] %v7944
        %7977 = vst [vmem:[%s448 + $0xb0] sm:$0xff] %v7945
        %7978 = vst [vmem:[%s448 + $0xb8] sm:$0xff] %v7946
        %7979 = vst [vmem:[%s448 + $0xc0] sm:$0xff] %v7947
        %7980 = vst [vmem:[%s448 + $0xc8] sm:$0xff] %v7948
        %7981 = vst [vmem:[%s448 + $0xd0] sm:$0xff] %v7949
        %7982 = vst [vmem:[%s448 + $0xd8] sm:$0xff] %v7950
        %7983 = vst [vmem:[%s448 + $0xe0] sm:$0xff] %v7951
        %7984 = vst [vmem:[%s448 + $0xe8] sm:$0xff] %v7952
        %7985 = vst [vmem:[%s448 + $0xf0] sm:$0xff] %v7953
        %7986 = vst [vmem:[%s448 + $0xf8] sm:$0xff] %v7954
        %s7987 = sand.u32 %s274, 1
        %s7988 = scalar_lea.sflag [#allocation7], %s7987
        %s7989 = sand.u32 %s274, 1
        %s7990 = smul.addr %s7989, 256
        %s7991 = scalar_lea.vmem [#allocation13], %s7990
        // Predicated region
        $region81: #{tpu_custom_call.1} parent=63 // pred_check
          %p7992 = pneg %p284
        $region82: #{tpu_custom_call.1} parent=63 // pred_check_branch
          %7994 = sbr.rel (%p7992) target = $region84
        $region83: #{tpu_custom_call.1} parent=63 // pred_region
          %s7996 = ssub.s32 4096, 4096
          %7997 = vsyncadd %s7988, %s7996
          %s7998 = smul.addr %s30, 32
          %s7999 = smul.addr %s7998, 128
          %s8000 = scalar_lea.hbm %s11, %s7999
          %s8001 = sshll.u32 %s7991, 4
          %s8002 = int_to_ptr.vmem [resolvable:$true] %s8001
          %8007 = dma.vmem_to_hbm [thread:$0]  %s8002, 4096, %s8000, %s7988, 128, 128, 8
        $region84: #{tpu_custom_call.1} parent=63 // pred_fallthru
          _
      $region64: #{tpu_custom_call.1} parent=5 // pred_fallthru
        _
      %p8008 = scmp.le.s32.totalorder 2, %s25
      // Predicated region
      $region85: #{tpu_custom_call.1} parent=5 // pred_check
        %p8009 = pneg %p8008
      $region86: #{tpu_custom_call.1} parent=5 // pred_check_branch
        %8011 = sbr.rel (%p8009) target = $region88
      $region87: #{tpu_custom_call.1} parent=5 // pred_region
        %s8012 = ssub.s32 %s25, 2
        // Predicated region
        $region89: #{tpu_custom_call.1} parent=87 // pred_check
          %p8013 = pneg %p290
        $region90: #{tpu_custom_call.1} parent=87 // pred_check_branch
          %8015 = sbr.rel (%p8013) target = $region92
        $region91: #{tpu_custom_call.1} parent=87 // pred_region
          %s8016 = sand.u32 %s275, 1
          %s8017 = scalar_lea.sflag [#allocation7], %s8016
          %s8018 = sand.u32 %s275, 1
          %s8019 = smul.addr %s8018, 256
          %s8020 = scalar_lea.vmem [#allocation13], %s8019
          %8021 = dma.done %s8017, 4096
        $region92: #{tpu_custom_call.1} parent=87 // pred_fallthru
          _
      $region88: #{tpu_custom_call.1} parent=5 // pred_fallthru
        _
    $region6: #{tpu_custom_call.1} parent=1 // loop_footer
      %s29 = sadd.s32 1, %s25
    $region7: #{tpu_custom_call.1} parent=1 // loop_footer_branch
      %24 = sbr.rel target = $region3
    $region8: #{tpu_custom_call.1} parent=1 // loop_exit
      _
    %8022 = vsyncpa [#allocation6], 1
    %s8023 = scalar_lea.sflag [#allocation6], 1
    %8024 = vsyncpa %s8023, 1
    %8025 = vsyncpa [#allocation9], 1
    %8026 = vsyncpa [#allocation12], 1
    %8027 = vsyncpa [#allocation7], 1
    %s8028 = scalar_lea.sflag [#allocation7], 1
    %8029 = vsyncpa %s8028, 1

</llo_original>
